<compile_context>
chip_gen: v5e
topology: v5e:2x2
jax: 0.10.0
libtpu: 0.0.40
codegen_flags: <defaults>
</compile_context>

<pallas_src>
import numpy as np

import jax
import jax.numpy as jnp
from jax import lax
from jax.experimental import pallas as pl
from jax.experimental.pallas import tpu as pltpu


_SELU_SCALE = 1.0507009873554805
_SELU_ALPHA = 1.6732632423543772


def _selu(x):
    # exp(min(x,0)) avoids overflow in the discarded branch of the where().
    return _SELU_SCALE * jnp.where(
        x > 0, x, _SELU_ALPHA * (jnp.exp(jnp.minimum(x, 0.0)) - 1.0))


def _round_up(n, m):
    return ((n + m - 1) // m) * m


# --------------------------------------------------------------------------------------
# Kernel
# --------------------------------------------------------------------------------------
def _conv_ae_kernel(xcat_ref,   # (24, Bt, 140) bf16 : row y = concat of image rows y..y+4
                    t1_ref,     # (140, 256)    bf16 : conv1 Toeplitz, cols = [x even | x odd]
                    t2_ref,     # (640, 256)    bf16 : conv2 fused Toeplitz (5 ky blocks of 128)
                    wfc1_ref,   # (4, 128, 128) bf16 : enc_linear_1, zero-padded per pooled row
                    wfc2_ref,   # (128, 128)    bf16 : enc_linear_2, zero-padded
                    wd1_ref,    # (128, 160)    bf16 : dec_linear_1, zero-padded rows
                    wd2_ref,    # (160, 784)    bf16
                    b1_ref,     # (1, 128) f32 : conv1 bias tiled over pooled lanes (120 valid)
                    b2_ref,     # (1, 128) f32 : conv2 bias tiled over pooled lanes (80 valid)
                    bfc1_ref,   # (1, 128) f32
                    bfc2_ref,   # (1, 128) f32
                    bd1_ref,    # (1, 160) f32
                    bd2_ref,    # (1, 784) f32
                    out_ref,    # (Bt, 784) f32
                    code_ref,   # (Bt, 128) f32 (lane-dense, first code_size lanes valid)
                    p1_ref,     # scratch (Bt, 12*128) bf16 : pooled+SELU conv1 rows, 128-aligned
                    fc1_ref):   # scratch (Bt, 128) f32    : enc_linear_1 accumulator
    f32 = jnp.float32
    bf16 = jnp.bfloat16

    # ---------------- conv1 -> maxpool(2) -> SELU ------------------------------------
    # dx-pool each row immediately (aligned half-width max) so only one full-width f32
    # matmul result is live at a time; the pooled rows land 128-aligned in p1_ref.
    b1v = b1_ref[...]                                        # hoisted out of the loop
    for yp in range(12):
        r0 = jnp.dot(xcat_ref[2 * yp], t1_ref[...], preferred_element_type=f32)
        m0 = jnp.maximum(r0[:, :128], r0[:, 128:])           # pool over dx (even|odd halves)
        r1 = jnp.dot(xcat_ref[2 * yp + 1], t1_ref[...], preferred_element_type=f32)
        m1 = jnp.maximum(r1[:, :128], r1[:, 128:])
        pm = jnp.maximum(m0, m1)                             # pool over dy
        # per-channel bias commutes with max-pool; padding lanes stay exactly 0 (SELU(0)=0)
        p1_ref[:, 128 * yp:128 * (yp + 1)] = _selu(pm + b1v).astype(bf16)

    # ---------------- conv2 (fused 5-ky matmul) -> maxpool(2) -> SELU -> enc_linear_1 --
    b2v = b2_ref[...]
    fc1_ref[...] = jnp.zeros_like(fc1_ref)

    def conv2_row(y2):
        # all 5 ky taps accumulate inside one MXU matmul: (Bt, 640) @ (640, 256)
        return jnp.dot(p1_ref[:, 128 * y2:128 * y2 + 640], t2_ref[...],
                       preferred_element_type=f32)

    for yp2 in range(4):
        ra = conv2_row(2 * yp2)
        ma = jnp.maximum(ra[:, :128], ra[:, 128:])
        rb = conv2_row(2 * yp2 + 1)
        mb = jnp.maximum(rb[:, :128], rb[:, 128:])
        act = _selu(jnp.maximum(ma, mb) + b2v).astype(bf16)  # (Bt,128), lanes >=80 are 0
        fc1_ref[...] += jnp.dot(act, wfc1_ref[yp2], preferred_element_type=f32)

    # ---------------- encoder head ------------------------------------------------------
    h = _selu(fc1_ref[...] + bfc1_ref[...])                  # (Bt, 128), lanes >=50 are 0
    code = jnp.dot(h.astype(bf16), wfc2_ref[...],
                   preferred_element_type=f32) + bfc2_ref[...]
    code_ref[...] = code                                     # lane-dense (Bt, 128) store

    # ---------------- decoder -----------------------------------------------------------
    d = _selu(jnp.dot(code.astype(bf16), wd1_ref[...],
                      preferred_element_type=f32) + bd1_ref[...])
    logits = jnp.dot(d.astype(bf16), wd2_ref[...],
                     preferred_element_type=f32) + bd2_ref[...]
    # sigmoid(x) = 0.5*tanh(0.5*x) + 0.5  -> single EUP transcendental, no VALU divide
    out_ref[...] = 0.5 * jnp.tanh(0.5 * logits) + 0.5


# --------------------------------------------------------------------------------------
# Parameter init (PyTorch nn.Conv2d / nn.Linear default: U(+-1/sqrt(fan_in)))
# --------------------------------------------------------------------------------------
def init_params(key, code_size=32):
    def u(k, shape, fan_in):
        b = 1.0 / float(np.sqrt(fan_in))
        return jax.random.uniform(k, shape, jnp.float32, -b, b)

    ks = jax.random.split(key, 12)
    w1 = u(ks[0], (5, 5, 1, 10), 25);            b1 = u(ks[1], (10,), 25)
    w2 = u(ks[2], (5, 5, 10, 20), 250);          b2 = u(ks[3], (20,), 250)
    wf1 = u(ks[4], (320, 50), 320);              bf1 = u(ks[5], (50,), 320)
    wf2 = u(ks[6], (50, code_size), 50);         bf2 = u(ks[7], (code_size,), 50)
    wd1 = u(ks[8], (code_size, 160), code_size); bd1 = u(ks[9], (160,), code_size)
    wd2 = u(ks[10], (160, 784), 160);            bd2 = u(ks[11], (784,), 160)
    return [(w1, b1), (w2, b2), (wf1, bf1), (wf2, bf2), (wd1, bd1), (wd2, bd2)]


# --------------------------------------------------------------------------------------
# Host-side packing: Toeplitz expansion with even/odd lane halves, zero padding, bf16 cast.
# --------------------------------------------------------------------------------------
def pack_params(params):
    (w1, b1), (w2, b2), (wf1, bf1), (wf2, bf2), (wd1, bd1), (wd2, bd2) = [
        (np.asarray(w, np.float32), np.asarray(b, np.float32)) for (w, b) in params]
    code_size = wf2.shape[1]

    # conv1 Toeplitz along W; output column = (x%2)*128 + (x//2)*10 + c  (cols 120..127 and
    # 248..255 stay zero so the pooled rows are exactly 0 in their padding lanes).
    t1 = np.zeros((5 * 28, 256), np.float32)
    for ky in range(5):
        for x in range(24):
            col0 = (x % 2) * 128 + (x // 2) * 10
            for kx in range(5):
                t1[ky * 28 + x + kx, col0:col0 + 10] = w1[ky, kx, 0, :]

    # conv2 fused Toeplitz: row = ky*128 + x_in*10 + ci (matches p1 lane layout),
    # col = (x2%2)*128 + (x2//2)*20 + co.
    t2 = np.zeros((5 * 128, 256), np.float32)
    for ky in range(5):
        for x2 in range(8):
            col0 = (x2 % 2) * 128 + (x2 // 2) * 20
            for kx in range(5):
                row0 = ky * 128 + (x2 + kx) * 10
                t2[row0:row0 + 10, col0:col0 + 20] = w2[ky, kx, :, :]

    # enc_linear_1 split per pooled conv2 row; flatten order (h, w, c); padded to 128x128.
    wfc1 = np.zeros((4, 128, 128), np.float32)
    for yp2 in range(4):
        for xp2 in range(4):
            feat = (yp2 * 4 + xp2) * 20
            wfc1[yp2, xp2 * 20:xp2 * 20 + 20, :50] = wf1[feat:feat + 20, :]

    wfc2p = np.zeros((128, 128), np.float32); wfc2p[:50, :code_size] = wf2
    wd1p = np.zeros((128, 160), np.float32);  wd1p[:code_size, :] = wd1

    b1t = np.zeros((1, 128), np.float32);  b1t[0, :120] = np.tile(b1, 12)
    b2t = np.zeros((1, 128), np.float32);  b2t[0, :80] = np.tile(b2, 4)
    bf1p = np.zeros((1, 128), np.float32); bf1p[0, :50] = bf1
    bf2p = np.zeros((1, 128), np.float32); bf2p[0, :code_size] = bf2

    bf16 = jnp.bfloat16
    return {
        "t1": jnp.asarray(t1, bf16),
        "t2": jnp.asarray(t2, bf16),
        "wfc1": jnp.asarray(wfc1, bf16),
        "wfc2": jnp.asarray(wfc2p, bf16),
        "wd1": jnp.asarray(wd1p, bf16),
        "wd2": jnp.asarray(wd2, bf16),
        "b1": jnp.asarray(b1t, jnp.float32),
        "b2": jnp.asarray(b2t, jnp.float32),
        "bf1": jnp.asarray(bf1p, jnp.float32),
        "bf2": jnp.asarray(bf2p, jnp.float32),
        "bd1": jnp.asarray(bd1.reshape(1, -1), jnp.float32),
        "bd2": jnp.asarray(bd2.reshape(1, -1), jnp.float32),
        "code_size": int(code_size),
    }


# --------------------------------------------------------------------------------------
# Forward wrapper
# --------------------------------------------------------------------------------------
def conv_autoencoder_forward(images, packed, *, batch_tile=128):
    """images: (B, 1, 28, 28) f32. Returns (out (B,1,28,28), code (B, code_size))."""
    assert batch_tile % 8 == 0 and batch_tile >= 8
    B = images.shape[0]
    code_size = packed["code_size"]

    # At least 2 grid steps when the batch allows it (both v7x TCs busy, DMA/compute
    # overlap); capped at batch_tile (default 128) to bound vreg pressure per step.
    bt = max(8, min(batch_tile, _round_up((B + 1) // 2, 8)))
    Bp = _round_up(B, bt)

    x = images.reshape(B, 28, 28).astype(jnp.float32)
    if Bp != B:
        x = jnp.pad(x, ((0, Bp - B), (0, 0), (0, 0)))
    # layout plumbing in the wrapper: (H, B, W) with batch on sublanes, W on lanes,
    # plus the 5-row concat so each conv1 output row is a single (Bt, 140) matmul operand.
    # TODO(synk): on v5e this replication pass is ~10% of wall time for large batches;
    # fusing it into the pallas_call input DMA is not expressible with BlockSpec alone.
    x_t = jnp.transpose(x, (1, 0, 2)).astype(jnp.bfloat16)                 # (28, Bp, 28)
    xcat = jnp.concatenate([x_t[k:k + 24] for k in range(5)], axis=-1)     # (24, Bp, 140)

    weight_names = ("t1", "t2", "wfc1", "wfc2", "wd1", "wd2",
                    "b1", "b2", "bf1", "bf2", "bd1", "bd2")
    weights = [packed[n] for n in weight_names]

    def _whole_spec(a):
        nd = a.ndim
        return pl.BlockSpec(a.shape, lambda i, _nd=nd: (0,) * _nd)

    in_specs = [pl.BlockSpec((24, bt, 140), lambda i: (0, i, 0))]
    in_specs += [_whole_spec(a) for a in weights]

    out_specs = [pl.BlockSpec((bt, 784), lambda i: (i, 0)),
                 pl.BlockSpec((bt, 128), lambda i: (i, 0))]
    out_shape = (jax.ShapeDtypeStruct((Bp, 784), jnp.float32),
                 jax.ShapeDtypeStruct((Bp, 128), jnp.float32))

    macs_per_img = (24 * 140 * 256 + 8 * 640 * 256 + 4 * 128 * 128
                    + 128 * 128 + 128 * 160 + 160 * 784)
    weight_bytes = sum(int(a.size) * a.dtype.itemsize for a in weights)
    cost = pl.CostEstimate(
        flops=int(2 * Bp * macs_per_img),
        transcendentals=int(Bp * (12 * 128 + 4 * 128 + 128 + 160 + 784)),
        bytes_accessed=int(xcat.size * 2 + weight_bytes + Bp * (784 + 128) * 4),
    )

    out2d, code2d = pl.pallas_call(
        _conv_ae_kernel,
        out_shape=out_shape,
        grid_spec=pltpu.PrefetchScalarGridSpec(
            num_scalar_prefetch=0,
            grid=(Bp // bt,),
            in_specs=in_specs,
            out_specs=out_specs,
            scratch_shapes=[pltpu.VMEM((bt, 12 * 128), jnp.bfloat16),   # pooled conv1 rows
                            pltpu.VMEM((bt, 128), jnp.float32)],        # fc1 accumulator
        ),
        compiler_params=pltpu.CompilerParams(
            dimension_semantics=("parallel",),
            vmem_limit_bytes=32 * 1024 * 1024,
        ),
        cost_estimate=cost,
    )(xcat, *weights)

    out = out2d[:B].reshape(B, 1, 28, 28)
    return out, code2d[:B, :code_size]


# --------------------------------------------------------------------------------------
# Pure-JAX reference (f32) for correctness checking
# --------------------------------------------------------------------------------------
def _maxpool2(a):
    return lax.reduce_window(a, -jnp.inf, lax.max, (1, 2, 2, 1), (1, 2, 2, 1), "VALID")


def reference_forward(images, params):
    (w1, b1), (w2, b2), (wf1, bf1), (wf2, bf2), (wd1, bd1), (wd2, bd2) = params
    B = images.shape[0]
    dn = ("NHWC", "HWIO", "NHWC")
    a = images.reshape(B, 28, 28, 1)
    a = lax.conv_general_dilated(a, w1, (1, 1), "VALID", dimension_numbers=dn) + b1
    a = _selu(_maxpool2(a))
    a = lax.conv_general_dilated(a, w2, (1, 1), "VALID", dimension_numbers=dn) + b2
    a = _selu(_maxpool2(a))
    flat = a.reshape(B, -1)                  # (h, w, c) flatten order (matches kernel packing)
    h = _selu(flat @ wf1 + bf1)
    code = h @ wf2 + bf2
    d = _selu(code @ wd1 + bd1)
    out = jax.nn.sigmoid(d @ wd2 + bd2)
    return out.reshape(B, 1, 28, 28), code


if __name__ == "__main__":
    code_size = 32
    batch = 24   # exercises batch padding and a 2-step grid

    key = jax.random.PRNGKey(0)
    kx, kp = jax.random.split(key)
    images = jax.random.normal(kx, (batch, 1, 28, 28), dtype=jnp.float32)
    params = init_params(kp, code_size=code_size)
    packed = pack_params(params)

    fwd = jax.jit(lambda imgs: conv_autoencoder_forward(imgs, packed))
    out, code = fwd(images)
    out = jax.block_until_ready(out)
    code = jax.block_until_ready(code)

    ref_out, ref_code = reference_forward(images, params)
    assert out.shape == (batch, 1, 28, 28)
    assert code.shape == (batch, code_size)
    # bf16 matmul operands with f32 accumulation vs. an all-f32 reference.
    err_out = float(jnp.max(jnp.abs(out - ref_out)))
    err_code = float(jnp.max(jnp.abs(code - ref_code)))
    assert err_out < 4e-2, f"out mismatch: max abs err {err_out}"
    assert err_code < 6e-2, f"code mismatch: max abs err {err_code}"

    print("KERNEL_OK")
</pallas_src>

<mosaic_0001>
module attributes {stable_mosaic.version = 11 : i64} {
  func.func @_conv_ae_kernel(%arg0: i32, %arg1: memref<24x16x140xbf16, #tpu.memory_space<vmem>>, %arg2: memref<140x256xbf16, #tpu.memory_space<vmem>>, %arg3: memref<640x256xbf16, #tpu.memory_space<vmem>>, %arg4: memref<4x128x128xbf16, #tpu.memory_space<vmem>>, %arg5: memref<128x128xbf16, #tpu.memory_space<vmem>>, %arg6: memref<128x160xbf16, #tpu.memory_space<vmem>>, %arg7: memref<160x784xbf16, #tpu.memory_space<vmem>>, %arg8: memref<1x128xf32, #tpu.memory_space<vmem>>, %arg9: memref<1x128xf32, #tpu.memory_space<vmem>>, %arg10: memref<1x128xf32, #tpu.memory_space<vmem>>, %arg11: memref<1x128xf32, #tpu.memory_space<vmem>>, %arg12: memref<1x160xf32, #tpu.memory_space<vmem>>, %arg13: memref<1x784xf32, #tpu.memory_space<vmem>>, %arg14: memref<16x784xf32, #tpu.memory_space<vmem>>, %arg15: memref<16x128xf32, #tpu.memory_space<vmem>>, %arg16: memref<16x1536xbf16, #tpu.memory_space<vmem>>, %arg17: memref<16x128xf32, #tpu.memory_space<vmem>>) attributes {dimension_semantics = [#tpu.dimension_semantics<parallel>], iteration_bounds = array<i64: 2>, scalar_prefetch = 0 : i64, scratch_operands = 2 : i64, tpu.core_type = #tpu.core_type<tc>, window_params = [{transform_indices = @transform_0, window_bounds = array<i64: 24, 16, 140>}, {pipeline_mode = #tpu.pipeline_mode<synchronous>, transform_indices = @transform_1, window_bounds = array<i64: 140, 256>}, {pipeline_mode = #tpu.pipeline_mode<synchronous>, transform_indices = @transform_2, window_bounds = array<i64: 640, 256>}, {pipeline_mode = #tpu.pipeline_mode<synchronous>, transform_indices = @transform_3, window_bounds = array<i64: 4, 128, 128>}, {pipeline_mode = #tpu.pipeline_mode<synchronous>, transform_indices = @transform_4, window_bounds = array<i64: 128, 128>}, {pipeline_mode = #tpu.pipeline_mode<synchronous>, transform_indices = @transform_5, window_bounds = array<i64: 128, 160>}, {pipeline_mode = #tpu.pipeline_mode<synchronous>, transform_indices = @transform_6, window_bounds = array<i64: 160, 784>}, {pipeline_mode = #tpu.pipeline_mode<synchronous>, transform_indices = @transform_7, window_bounds = array<i64: 1, 128>}, {pipeline_mode = #tpu.pipeline_mode<synchronous>, transform_indices = @transform_8, window_bounds = array<i64: 1, 128>}, {pipeline_mode = #tpu.pipeline_mode<synchronous>, transform_indices = @transform_9, window_bounds = array<i64: 1, 128>}, {pipeline_mode = #tpu.pipeline_mode<synchronous>, transform_indices = @transform_10, window_bounds = array<i64: 1, 128>}, {pipeline_mode = #tpu.pipeline_mode<synchronous>, transform_indices = @transform_11, window_bounds = array<i64: 1, 160>}, {pipeline_mode = #tpu.pipeline_mode<synchronous>, transform_indices = @transform_12, window_bounds = array<i64: 1, 784>}, {transform_indices = @transform_13, window_bounds = array<i64: 16, 784>}, {transform_indices = @transform_14, window_bounds = array<i64: 16, 128>}]} {
    %c0 = arith.constant 0 : index
    %c0_0 = arith.constant 0 : index
    %0 = vector.load %arg8[%c0, %c0_0] : memref<1x128xf32, #tpu.memory_space<vmem>>, vector<1x128xf32>
    %c0_1 = arith.constant 0 : index
    %c0_2 = arith.constant 0 : index
    %c0_3 = arith.constant 0 : index
    %1 = vector.load %arg1[%c0_1, %c0_2, %c0_3] : memref<24x16x140xbf16, #tpu.memory_space<vmem>>, vector<1x16x140xbf16>
    %2 = vector.shape_cast %1 : vector<1x16x140xbf16> to vector<16x140xbf16>
    %c0_4 = arith.constant 0 : index
    %c0_5 = arith.constant 0 : index
    %3 = vector.load %arg2[%c0_4, %c0_5] : memref<140x256xbf16, #tpu.memory_space<vmem>>, vector<140x256xbf16>
    %cst = arith.constant dense<0.000000e+00> : vector<16x256xf32>
    %4 = tpu.matmul %2, %3, %cst {dimension_numbers = #tpu.dot_dimension_numbers<[1], [0], [0], [1], [0, 0, 1, 1], [], []>} : vector<16x140xbf16>, vector<140x256xbf16>, vector<16x256xf32> -> vector<16x256xf32>
    %5 = vector.extract_strided_slice %4 {offsets = [0, 0], sizes = [16, 128], strides = [1, 1]} : vector<16x256xf32> to vector<16x128xf32>
    %6 = vector.extract_strided_slice %4 {offsets = [0, 128], sizes = [16, 128], strides = [1, 1]} : vector<16x256xf32> to vector<16x128xf32>
    %7 = arith.maximumf %5, %6 : vector<16x128xf32>
    %c1 = arith.constant 1 : index
    %c0_6 = arith.constant 0 : index
    %c0_7 = arith.constant 0 : index
    %8 = vector.load %arg1[%c1, %c0_6, %c0_7] : memref<24x16x140xbf16, #tpu.memory_space<vmem>>, vector<1x16x140xbf16>
    %9 = vector.shape_cast %8 : vector<1x16x140xbf16> to vector<16x140xbf16>
    %c0_8 = arith.constant 0 : index
    %c0_9 = arith.constant 0 : index
    %10 = vector.load %arg2[%c0_8, %c0_9] : memref<140x256xbf16, #tpu.memory_space<vmem>>, vector<140x256xbf16>
    %cst_10 = arith.constant dense<0.000000e+00> : vector<16x256xf32>
    %11 = tpu.matmul %9, %10, %cst_10 {dimension_numbers = #tpu.dot_dimension_numbers<[1], [0], [0], [1], [0, 0, 1, 1], [], []>} : vector<16x140xbf16>, vector<140x256xbf16>, vector<16x256xf32> -> vector<16x256xf32>
    %12 = vector.extract_strided_slice %11 {offsets = [0, 0], sizes = [16, 128], strides = [1, 1]} : vector<16x256xf32> to vector<16x128xf32>
    %13 = vector.extract_strided_slice %11 {offsets = [0, 128], sizes = [16, 128], strides = [1, 1]} : vector<16x256xf32> to vector<16x128xf32>
    %14 = arith.maximumf %12, %13 : vector<16x128xf32>
    %15 = arith.maximumf %7, %14 : vector<16x128xf32>
    %16 = vector.broadcast %0 : vector<1x128xf32> to vector<16x128xf32>
    %17 = arith.addf %15, %16 : vector<16x128xf32>
    %cst_11 = arith.constant 0.000000e+00 : f32
    %18 = vector.broadcast %cst_11 : f32 to vector<16x128xf32>
    %19 = arith.cmpf ogt, %17, %18 : vector<16x128xf32>
    %cst_12 = arith.constant 0.000000e+00 : f32
    %20 = vector.broadcast %cst_12 : f32 to vector<16x128xf32>
    %21 = arith.minimumf %17, %20 : vector<16x128xf32>
    %22 = math.exp %21 : vector<16x128xf32>
    %cst_13 = arith.constant 1.000000e+00 : f32
    %23 = vector.broadcast %cst_13 : f32 to vector<16x128xf32>
    %24 = arith.subf %22, %23 : vector<16x128xf32>
    %cst_14 = arith.constant 1.67326319 : f32
    %25 = vector.broadcast %cst_14 : f32 to vector<16x128xf32>
    %26 = arith.mulf %25, %24 : vector<16x128xf32>
    %27 = arith.select %19, %17, %26 : vector<16x128xi1>, vector<16x128xf32>
    %cst_15 = arith.constant 1.05070102 : f32
    %28 = vector.broadcast %cst_15 : f32 to vector<16x128xf32>
    %29 = arith.mulf %28, %27 : vector<16x128xf32>
    %30 = arith.truncf %29 : vector<16x128xf32> to vector<16x128xbf16>
    %c0_16 = arith.constant 0 : index
    %c0_17 = arith.constant 0 : index
    %31 = vector.load %arg16[%c0_16, %c0_17] : memref<16x1536xbf16, #tpu.memory_space<vmem>>, vector<16x128xbf16>
    tpu.vector_store %arg16[%c0_16, %c0_17], %30 {strides = array<i32>} : memref<16x1536xbf16, #tpu.memory_space<vmem>>, vector<16x128xbf16>,
    %c2 = arith.constant 2 : index
    %c0_18 = arith.constant 0 : index
    %c0_19 = arith.constant 0 : index
    %32 = vector.load %arg1[%c2, %c0_18, %c0_19] : memref<24x16x140xbf16, #tpu.memory_space<vmem>>, vector<1x16x140xbf16>
    %33 = vector.shape_cast %32 : vector<1x16x140xbf16> to vector<16x140xbf16>
    %c0_20 = arith.constant 0 : index
    %c0_21 = arith.constant 0 : index
    %34 = vector.load %arg2[%c0_20, %c0_21] : memref<140x256xbf16, #tpu.memory_space<vmem>>, vector<140x256xbf16>
    %cst_22 = arith.constant dense<0.000000e+00> : vector<16x256xf32>
    %35 = tpu.matmul %33, %34, %cst_22 {dimension_numbers = #tpu.dot_dimension_numbers<[1], [0], [0], [1], [0, 0, 1, 1], [], []>} : vector<16x140xbf16>, vector<140x256xbf16>, vector<16x256xf32> -> vector<16x256xf32>
    %36 = vector.extract_strided_slice %35 {offsets = [0, 0], sizes = [16, 128], strides = [1, 1]} : vector<16x256xf32> to vector<16x128xf32>
    %37 = vector.extract_strided_slice %35 {offsets = [0, 128], sizes = [16, 128], strides = [1, 1]} : vector<16x256xf32> to vector<16x128xf32>
    %38 = arith.maximumf %36, %37 : vector<16x128xf32>
    %c3 = arith.constant 3 : index
    %c0_23 = arith.constant 0 : index
    %c0_24 = arith.constant 0 : index
    %39 = vector.load %arg1[%c3, %c0_23, %c0_24] : memref<24x16x140xbf16, #tpu.memory_space<vmem>>, vector<1x16x140xbf16>
    %40 = vector.shape_cast %39 : vector<1x16x140xbf16> to vector<16x140xbf16>
    %c0_25 = arith.constant 0 : index
    %c0_26 = arith.constant 0 : index
    %41 = vector.load %arg2[%c0_25, %c0_26] : memref<140x256xbf16, #tpu.memory_space<vmem>>, vector<140x256xbf16>
    %cst_27 = arith.constant dense<0.000000e+00> : vector<16x256xf32>
    %42 = tpu.matmul %40, %41, %cst_27 {dimension_numbers = #tpu.dot_dimension_numbers<[1], [0], [0], [1], [0, 0, 1, 1], [], []>} : vector<16x140xbf16>, vector<140x256xbf16>, vector<16x256xf32> -> vector<16x256xf32>
    %43 = vector.extract_strided_slice %42 {offsets = [0, 0], sizes = [16, 128], strides = [1, 1]} : vector<16x256xf32> to vector<16x128xf32>
    %44 = vector.extract_strided_slice %42 {offsets = [0, 128], sizes = [16, 128], strides = [1, 1]} : vector<16x256xf32> to vector<16x128xf32>
    %45 = arith.maximumf %43, %44 : vector<16x128xf32>
    %46 = arith.maximumf %38, %45 : vector<16x128xf32>
    %47 = vector.broadcast %0 : vector<1x128xf32> to vector<16x128xf32>
    %48 = arith.addf %46, %47 : vector<16x128xf32>
    %cst_28 = arith.constant 0.000000e+00 : f32
    %49 = vector.broadcast %cst_28 : f32 to vector<16x128xf32>
    %50 = arith.cmpf ogt, %48, %49 : vector<16x128xf32>
    %cst_29 = arith.constant 0.000000e+00 : f32
    %51 = vector.broadcast %cst_29 : f32 to vector<16x128xf32>
    %52 = arith.minimumf %48, %51 : vector<16x128xf32>
    %53 = math.exp %52 : vector<16x128xf32>
    %cst_30 = arith.constant 1.000000e+00 : f32
    %54 = vector.broadcast %cst_30 : f32 to vector<16x128xf32>
    %55 = arith.subf %53, %54 : vector<16x128xf32>
    %cst_31 = arith.constant 1.67326319 : f32
    %56 = vector.broadcast %cst_31 : f32 to vector<16x128xf32>
    %57 = arith.mulf %56, %55 : vector<16x128xf32>
    %58 = arith.select %50, %48, %57 : vector<16x128xi1>, vector<16x128xf32>
    %cst_32 = arith.constant 1.05070102 : f32
    %59 = vector.broadcast %cst_32 : f32 to vector<16x128xf32>
    %60 = arith.mulf %59, %58 : vector<16x128xf32>
    %61 = arith.truncf %60 : vector<16x128xf32> to vector<16x128xbf16>
    %c0_33 = arith.constant 0 : index
    %c128 = arith.constant 128 : index
    %62 = vector.load %arg16[%c0_33, %c128] : memref<16x1536xbf16, #tpu.memory_space<vmem>>, vector<16x128xbf16>
    tpu.vector_store %arg16[%c0_33, %c128], %61 {strides = array<i32>} : memref<16x1536xbf16, #tpu.memory_space<vmem>>, vector<16x128xbf16>,
    %c4 = arith.constant 4 : index
    %c0_34 = arith.constant 0 : index
    %c0_35 = arith.constant 0 : index
    %63 = vector.load %arg1[%c4, %c0_34, %c0_35] : memref<24x16x140xbf16, #tpu.memory_space<vmem>>, vector<1x16x140xbf16>
    %64 = vector.shape_cast %63 : vector<1x16x140xbf16> to vector<16x140xbf16>
    %c0_36 = arith.constant 0 : index
    %c0_37 = arith.constant 0 : index
    %65 = vector.load %arg2[%c0_36, %c0_37] : memref<140x256xbf16, #tpu.memory_space<vmem>>, vector<140x256xbf16>
    %cst_38 = arith.constant dense<0.000000e+00> : vector<16x256xf32>
    %66 = tpu.matmul %64, %65, %cst_38 {dimension_numbers = #tpu.dot_dimension_numbers<[1], [0], [0], [1], [0, 0, 1, 1], [], []>} : vector<16x140xbf16>, vector<140x256xbf16>, vector<16x256xf32> -> vector<16x256xf32>
    %67 = vector.extract_strided_slice %66 {offsets = [0, 0], sizes = [16, 128], strides = [1, 1]} : vector<16x256xf32> to vector<16x128xf32>
    %68 = vector.extract_strided_slice %66 {offsets = [0, 128], sizes = [16, 128], strides = [1, 1]} : vector<16x256xf32> to vector<16x128xf32>
    %69 = arith.maximumf %67, %68 : vector<16x128xf32>
    %c5 = arith.constant 5 : index
    %c0_39 = arith.constant 0 : index
    %c0_40 = arith.constant 0 : index
    %70 = vector.load %arg1[%c5, %c0_39, %c0_40] : memref<24x16x140xbf16, #tpu.memory_space<vmem>>, vector<1x16x140xbf16>
    %71 = vector.shape_cast %70 : vector<1x16x140xbf16> to vector<16x140xbf16>
    %c0_41 = arith.constant 0 : index
    %c0_42 = arith.constant 0 : index
    %72 = vector.load %arg2[%c0_41, %c0_42] : memref<140x256xbf16, #tpu.memory_space<vmem>>, vector<140x256xbf16>
    %cst_43 = arith.constant dense<0.000000e+00> : vector<16x256xf32>
    %73 = tpu.matmul %71, %72, %cst_43 {dimension_numbers = #tpu.dot_dimension_numbers<[1], [0], [0], [1], [0, 0, 1, 1], [], []>} : vector<16x140xbf16>, vector<140x256xbf16>, vector<16x256xf32> -> vector<16x256xf32>
    %74 = vector.extract_strided_slice %73 {offsets = [0, 0], sizes = [16, 128], strides = [1, 1]} : vector<16x256xf32> to vector<16x128xf32>
    %75 = vector.extract_strided_slice %73 {offsets = [0, 128], sizes = [16, 128], strides = [1, 1]} : vector<16x256xf32> to vector<16x128xf32>
    %76 = arith.maximumf %74, %75 : vector<16x128xf32>
    %77 = arith.maximumf %69, %76 : vector<16x128xf32>
    %78 = vector.broadcast %0 : vector<1x128xf32> to vector<16x128xf32>
    %79 = arith.addf %77, %78 : vector<16x128xf32>
    %cst_44 = arith.constant 0.000000e+00 : f32
    %80 = vector.broadcast %cst_44 : f32 to vector<16x128xf32>
    %81 = arith.cmpf ogt, %79, %80 : vector<16x128xf32>
    %cst_45 = arith.constant 0.000000e+00 : f32
    %82 = vector.broadcast %cst_45 : f32 to vector<16x128xf32>
    %83 = arith.minimumf %79, %82 : vector<16x128xf32>
    %84 = math.exp %83 : vector<16x128xf32>
    %cst_46 = arith.constant 1.000000e+00 : f32
    %85 = vector.broadcast %cst_46 : f32 to vector<16x128xf32>
    %86 = arith.subf %84, %85 : vector<16x128xf32>
    %cst_47 = arith.constant 1.67326319 : f32
    %87 = vector.broadcast %cst_47 : f32 to vector<16x128xf32>
    %88 = arith.mulf %87, %86 : vector<16x128xf32>
    %89 = arith.select %81, %79, %88 : vector<16x128xi1>, vector<16x128xf32>
    %cst_48 = arith.constant 1.05070102 : f32
    %90 = vector.broadcast %cst_48 : f32 to vector<16x128xf32>
    %91 = arith.mulf %90, %89 : vector<16x128xf32>
    %92 = arith.truncf %91 : vector<16x128xf32> to vector<16x128xbf16>
    %c0_49 = arith.constant 0 : index
    %c256 = arith.constant 256 : index
    %93 = vector.load %arg16[%c0_49, %c256] : memref<16x1536xbf16, #tpu.memory_space<vmem>>, vector<16x128xbf16>
    tpu.vector_store %arg16[%c0_49, %c256], %92 {strides = array<i32>} : memref<16x1536xbf16, #tpu.memory_space<vmem>>, vector<16x128xbf16>,
    %c6 = arith.constant 6 : index
    %c0_50 = arith.constant 0 : index
    %c0_51 = arith.constant 0 : index
    %94 = vector.load %arg1[%c6, %c0_50, %c0_51] : memref<24x16x140xbf16, #tpu.memory_space<vmem>>, vector<1x16x140xbf16>
    %95 = vector.shape_cast %94 : vector<1x16x140xbf16> to vector<16x140xbf16>
    %c0_52 = arith.constant 0 : index
    %c0_53 = arith.constant 0 : index
    %96 = vector.load %arg2[%c0_52, %c0_53] : memref<140x256xbf16, #tpu.memory_space<vmem>>, vector<140x256xbf16>
    %cst_54 = arith.constant dense<0.000000e+00> : vector<16x256xf32>
    %97 = tpu.matmul %95, %96, %cst_54 {dimension_numbers = #tpu.dot_dimension_numbers<[1], [0], [0], [1], [0, 0, 1, 1], [], []>} : vector<16x140xbf16>, vector<140x256xbf16>, vector<16x256xf32> -> vector<16x256xf32>
    %98 = vector.extract_strided_slice %97 {offsets = [0, 0], sizes = [16, 128], strides = [1, 1]} : vector<16x256xf32> to vector<16x128xf32>
    %99 = vector.extract_strided_slice %97 {offsets = [0, 128], sizes = [16, 128], strides = [1, 1]} : vector<16x256xf32> to vector<16x128xf32>
    %100 = arith.maximumf %98, %99 : vector<16x128xf32>
    %c7 = arith.constant 7 : index
    %c0_55 = arith.constant 0 : index
    %c0_56 = arith.constant 0 : index
    %101 = vector.load %arg1[%c7, %c0_55, %c0_56] : memref<24x16x140xbf16, #tpu.memory_space<vmem>>, vector<1x16x140xbf16>
    %102 = vector.shape_cast %101 : vector<1x16x140xbf16> to vector<16x140xbf16>
    %c0_57 = arith.constant 0 : index
    %c0_58 = arith.constant 0 : index
    %103 = vector.load %arg2[%c0_57, %c0_58] : memref<140x256xbf16, #tpu.memory_space<vmem>>, vector<140x256xbf16>
    %cst_59 = arith.constant dense<0.000000e+00> : vector<16x256xf32>
    %104 = tpu.matmul %102, %103, %cst_59 {dimension_numbers = #tpu.dot_dimension_numbers<[1], [0], [0], [1], [0, 0, 1, 1], [], []>} : vector<16x140xbf16>, vector<140x256xbf16>, vector<16x256xf32> -> vector<16x256xf32>
    %105 = vector.extract_strided_slice %104 {offsets = [0, 0], sizes = [16, 128], strides = [1, 1]} : vector<16x256xf32> to vector<16x128xf32>
    %106 = vector.extract_strided_slice %104 {offsets = [0, 128], sizes = [16, 128], strides = [1, 1]} : vector<16x256xf32> to vector<16x128xf32>
    %107 = arith.maximumf %105, %106 : vector<16x128xf32>
    %108 = arith.maximumf %100, %107 : vector<16x128xf32>
    %109 = vector.broadcast %0 : vector<1x128xf32> to vector<16x128xf32>
    %110 = arith.addf %108, %109 : vector<16x128xf32>
    %cst_60 = arith.constant 0.000000e+00 : f32
    %111 = vector.broadcast %cst_60 : f32 to vector<16x128xf32>
    %112 = arith.cmpf ogt, %110, %111 : vector<16x128xf32>
    %cst_61 = arith.constant 0.000000e+00 : f32
    %113 = vector.broadcast %cst_61 : f32 to vector<16x128xf32>
    %114 = arith.minimumf %110, %113 : vector<16x128xf32>
    %115 = math.exp %114 : vector<16x128xf32>
    %cst_62 = arith.constant 1.000000e+00 : f32
    %116 = vector.broadcast %cst_62 : f32 to vector<16x128xf32>
    %117 = arith.subf %115, %116 : vector<16x128xf32>
    %cst_63 = arith.constant 1.67326319 : f32
    %118 = vector.broadcast %cst_63 : f32 to vector<16x128xf32>
    %119 = arith.mulf %118, %117 : vector<16x128xf32>
    %120 = arith.select %112, %110, %119 : vector<16x128xi1>, vector<16x128xf32>
    %cst_64 = arith.constant 1.05070102 : f32
    %121 = vector.broadcast %cst_64 : f32 to vector<16x128xf32>
    %122 = arith.mulf %121, %120 : vector<16x128xf32>
    %123 = arith.truncf %122 : vector<16x128xf32> to vector<16x128xbf16>
    %c0_65 = arith.constant 0 : index
    %c384 = arith.constant 384 : index
    %124 = vector.load %arg16[%c0_65, %c384] : memref<16x1536xbf16, #tpu.memory_space<vmem>>, vector<16x128xbf16>
    tpu.vector_store %arg16[%c0_65, %c384], %123 {strides = array<i32>} : memref<16x1536xbf16, #tpu.memory_space<vmem>>, vector<16x128xbf16>,
    %c8 = arith.constant 8 : index
    %c0_66 = arith.constant 0 : index
    %c0_67 = arith.constant 0 : index
    %125 = vector.load %arg1[%c8, %c0_66, %c0_67] : memref<24x16x140xbf16, #tpu.memory_space<vmem>>, vector<1x16x140xbf16>
    %126 = vector.shape_cast %125 : vector<1x16x140xbf16> to vector<16x140xbf16>
    %c0_68 = arith.constant 0 : index
    %c0_69 = arith.constant 0 : index
    %127 = vector.load %arg2[%c0_68, %c0_69] : memref<140x256xbf16, #tpu.memory_space<vmem>>, vector<140x256xbf16>
    %cst_70 = arith.constant dense<0.000000e+00> : vector<16x256xf32>
    %128 = tpu.matmul %126, %127, %cst_70 {dimension_numbers = #tpu.dot_dimension_numbers<[1], [0], [0], [1], [0, 0, 1, 1], [], []>} : vector<16x140xbf16>, vector<140x256xbf16>, vector<16x256xf32> -> vector<16x256xf32>
    %129 = vector.extract_strided_slice %128 {offsets = [0, 0], sizes = [16, 128], strides = [1, 1]} : vector<16x256xf32> to vector<16x128xf32>
    %130 = vector.extract_strided_slice %128 {offsets = [0, 128], sizes = [16, 128], strides = [1, 1]} : vector<16x256xf32> to vector<16x128xf32>
    %131 = arith.maximumf %129, %130 : vector<16x128xf32>
    %c9 = arith.constant 9 : index
    %c0_71 = arith.constant 0 : index
    %c0_72 = arith.constant 0 : index
    %132 = vector.load %arg1[%c9, %c0_71, %c0_72] : memref<24x16x140xbf16, #tpu.memory_space<vmem>>, vector<1x16x140xbf16>
    %133 = vector.shape_cast %132 : vector<1x16x140xbf16> to vector<16x140xbf16>
    %c0_73 = arith.constant 0 : index
    %c0_74 = arith.constant 0 : index
    %134 = vector.load %arg2[%c0_73, %c0_74] : memref<140x256xbf16, #tpu.memory_space<vmem>>, vector<140x256xbf16>
    %cst_75 = arith.constant dense<0.000000e+00> : vector<16x256xf32>
    %135 = tpu.matmul %133, %134, %cst_75 {dimension_numbers = #tpu.dot_dimension_numbers<[1], [0], [0], [1], [0, 0, 1, 1], [], []>} : vector<16x140xbf16>, vector<140x256xbf16>, vector<16x256xf32> -> vector<16x256xf32>
    %136 = vector.extract_strided_slice %135 {offsets = [0, 0], sizes = [16, 128], strides = [1, 1]} : vector<16x256xf32> to vector<16x128xf32>
    %137 = vector.extract_strided_slice %135 {offsets = [0, 128], sizes = [16, 128], strides = [1, 1]} : vector<16x256xf32> to vector<16x128xf32>
    %138 = arith.maximumf %136, %137 : vector<16x128xf32>
    %139 = arith.maximumf %131, %138 : vector<16x128xf32>
    %140 = vector.broadcast %0 : vector<1x128xf32> to vector<16x128xf32>
    %141 = arith.addf %139, %140 : vector<16x128xf32>
    %cst_76 = arith.constant 0.000000e+00 : f32
    %142 = vector.broadcast %cst_76 : f32 to vector<16x128xf32>
    %143 = arith.cmpf ogt, %141, %142 : vector<16x128xf32>
    %cst_77 = arith.constant 0.000000e+00 : f32
    %144 = vector.broadcast %cst_77 : f32 to vector<16x128xf32>
    %145 = arith.minimumf %141, %144 : vector<16x128xf32>
    %146 = math.exp %145 : vector<16x128xf32>
    %cst_78 = arith.constant 1.000000e+00 : f32
    %147 = vector.broadcast %cst_78 : f32 to vector<16x128xf32>
    %148 = arith.subf %146, %147 : vector<16x128xf32>
    %cst_79 = arith.constant 1.67326319 : f32
    %149 = vector.broadcast %cst_79 : f32 to vector<16x128xf32>
    %150 = arith.mulf %149, %148 : vector<16x128xf32>
    %151 = arith.select %143, %141, %150 : vector<16x128xi1>, vector<16x128xf32>
    %cst_80 = arith.constant 1.05070102 : f32
    %152 = vector.broadcast %cst_80 : f32 to vector<16x128xf32>
    %153 = arith.mulf %152, %151 : vector<16x128xf32>
    %154 = arith.truncf %153 : vector<16x128xf32> to vector<16x128xbf16>
    %c0_81 = arith.constant 0 : index
    %c512 = arith.constant 512 : index
    %155 = vector.load %arg16[%c0_81, %c512] : memref<16x1536xbf16, #tpu.memory_space<vmem>>, vector<16x128xbf16>
    tpu.vector_store %arg16[%c0_81, %c512], %154 {strides = array<i32>} : memref<16x1536xbf16, #tpu.memory_space<vmem>>, vector<16x128xbf16>,
    %c10 = arith.constant 10 : index
    %c0_82 = arith.constant 0 : index
    %c0_83 = arith.constant 0 : index
    %156 = vector.load %arg1[%c10, %c0_82, %c0_83] : memref<24x16x140xbf16, #tpu.memory_space<vmem>>, vector<1x16x140xbf16>
    %157 = vector.shape_cast %156 : vector<1x16x140xbf16> to vector<16x140xbf16>
    %c0_84 = arith.constant 0 : index
    %c0_85 = arith.constant 0 : index
    %158 = vector.load %arg2[%c0_84, %c0_85] : memref<140x256xbf16, #tpu.memory_space<vmem>>, vector<140x256xbf16>
    %cst_86 = arith.constant dense<0.000000e+00> : vector<16x256xf32>
    %159 = tpu.matmul %157, %158, %cst_86 {dimension_numbers = #tpu.dot_dimension_numbers<[1], [0], [0], [1], [0, 0, 1, 1], [], []>} : vector<16x140xbf16>, vector<140x256xbf16>, vector<16x256xf32> -> vector<16x256xf32>
    %160 = vector.extract_strided_slice %159 {offsets = [0, 0], sizes = [16, 128], strides = [1, 1]} : vector<16x256xf32> to vector<16x128xf32>
    %161 = vector.extract_strided_slice %159 {offsets = [0, 128], sizes = [16, 128], strides = [1, 1]} : vector<16x256xf32> to vector<16x128xf32>
    %162 = arith.maximumf %160, %161 : vector<16x128xf32>
    %c11 = arith.constant 11 : index
    %c0_87 = arith.constant 0 : index
    %c0_88 = arith.constant 0 : index
    %163 = vector.load %arg1[%c11, %c0_87, %c0_88] : memref<24x16x140xbf16, #tpu.memory_space<vmem>>, vector<1x16x140xbf16>
    %164 = vector.shape_cast %163 : vector<1x16x140xbf16> to vector<16x140xbf16>
    %c0_89 = arith.constant 0 : index
    %c0_90 = arith.constant 0 : index
    %165 = vector.load %arg2[%c0_89, %c0_90] : memref<140x256xbf16, #tpu.memory_space<vmem>>, vector<140x256xbf16>
    %cst_91 = arith.constant dense<0.000000e+00> : vector<16x256xf32>
    %166 = tpu.matmul %164, %165, %cst_91 {dimension_numbers = #tpu.dot_dimension_numbers<[1], [0], [0], [1], [0, 0, 1, 1], [], []>} : vector<16x140xbf16>, vector<140x256xbf16>, vector<16x256xf32> -> vector<16x256xf32>
    %167 = vector.extract_strided_slice %166 {offsets = [0, 0], sizes = [16, 128], strides = [1, 1]} : vector<16x256xf32> to vector<16x128xf32>
    %168 = vector.extract_strided_slice %166 {offsets = [0, 128], sizes = [16, 128], strides = [1, 1]} : vector<16x256xf32> to vector<16x128xf32>
    %169 = arith.maximumf %167, %168 : vector<16x128xf32>
    %170 = arith.maximumf %162, %169 : vector<16x128xf32>
    %171 = vector.broadcast %0 : vector<1x128xf32> to vector<16x128xf32>
    %172 = arith.addf %170, %171 : vector<16x128xf32>
    %cst_92 = arith.constant 0.000000e+00 : f32
    %173 = vector.broadcast %cst_92 : f32 to vector<16x128xf32>
    %174 = arith.cmpf ogt, %172, %173 : vector<16x128xf32>
    %cst_93 = arith.constant 0.000000e+00 : f32
    %175 = vector.broadcast %cst_93 : f32 to vector<16x128xf32>
    %176 = arith.minimumf %172, %175 : vector<16x128xf32>
    %177 = math.exp %176 : vector<16x128xf32>
    %cst_94 = arith.constant 1.000000e+00 : f32
    %178 = vector.broadcast %cst_94 : f32 to vector<16x128xf32>
    %179 = arith.subf %177, %178 : vector<16x128xf32>
    %cst_95 = arith.constant 1.67326319 : f32
    %180 = vector.broadcast %cst_95 : f32 to vector<16x128xf32>
    %181 = arith.mulf %180, %179 : vector<16x128xf32>
    %182 = arith.select %174, %172, %181 : vector<16x128xi1>, vector<16x128xf32>
    %cst_96 = arith.constant 1.05070102 : f32
    %183 = vector.broadcast %cst_96 : f32 to vector<16x128xf32>
    %184 = arith.mulf %183, %182 : vector<16x128xf32>
    %185 = arith.truncf %184 : vector<16x128xf32> to vector<16x128xbf16>
    %c0_97 = arith.constant 0 : index
    %c640 = arith.constant 640 : index
    %186 = vector.load %arg16[%c0_97, %c640] : memref<16x1536xbf16, #tpu.memory_space<vmem>>, vector<16x128xbf16>
    tpu.vector_store %arg16[%c0_97, %c640], %185 {strides = array<i32>} : memref<16x1536xbf16, #tpu.memory_space<vmem>>, vector<16x128xbf16>,
    %c12 = arith.constant 12 : index
    %c0_98 = arith.constant 0 : index
    %c0_99 = arith.constant 0 : index
    %187 = vector.load %arg1[%c12, %c0_98, %c0_99] : memref<24x16x140xbf16, #tpu.memory_space<vmem>>, vector<1x16x140xbf16>
    %188 = vector.shape_cast %187 : vector<1x16x140xbf16> to vector<16x140xbf16>
    %c0_100 = arith.constant 0 : index
    %c0_101 = arith.constant 0 : index
    %189 = vector.load %arg2[%c0_100, %c0_101] : memref<140x256xbf16, #tpu.memory_space<vmem>>, vector<140x256xbf16>
    %cst_102 = arith.constant dense<0.000000e+00> : vector<16x256xf32>
    %190 = tpu.matmul %188, %189, %cst_102 {dimension_numbers = #tpu.dot_dimension_numbers<[1], [0], [0], [1], [0, 0, 1, 1], [], []>} : vector<16x140xbf16>, vector<140x256xbf16>, vector<16x256xf32> -> vector<16x256xf32>
    %191 = vector.extract_strided_slice %190 {offsets = [0, 0], sizes = [16, 128], strides = [1, 1]} : vector<16x256xf32> to vector<16x128xf32>
    %192 = vector.extract_strided_slice %190 {offsets = [0, 128], sizes = [16, 128], strides = [1, 1]} : vector<16x256xf32> to vector<16x128xf32>
    %193 = arith.maximumf %191, %192 : vector<16x128xf32>
    %c13 = arith.constant 13 : index
    %c0_103 = arith.constant 0 : index
    %c0_104 = arith.constant 0 : index
    %194 = vector.load %arg1[%c13, %c0_103, %c0_104] : memref<24x16x140xbf16, #tpu.memory_space<vmem>>, vector<1x16x140xbf16>
    %195 = vector.shape_cast %194 : vector<1x16x140xbf16> to vector<16x140xbf16>
    %c0_105 = arith.constant 0 : index
    %c0_106 = arith.constant 0 : index
    %196 = vector.load %arg2[%c0_105, %c0_106] : memref<140x256xbf16, #tpu.memory_space<vmem>>, vector<140x256xbf16>
    %cst_107 = arith.constant dense<0.000000e+00> : vector<16x256xf32>
    %197 = tpu.matmul %195, %196, %cst_107 {dimension_numbers = #tpu.dot_dimension_numbers<[1], [0], [0], [1], [0, 0, 1, 1], [], []>} : vector<16x140xbf16>, vector<140x256xbf16>, vector<16x256xf32> -> vector<16x256xf32>
    %198 = vector.extract_strided_slice %197 {offsets = [0, 0], sizes = [16, 128], strides = [1, 1]} : vector<16x256xf32> to vector<16x128xf32>
    %199 = vector.extract_strided_slice %197 {offsets = [0, 128], sizes = [16, 128], strides = [1, 1]} : vector<16x256xf32> to vector<16x128xf32>
    %200 = arith.maximumf %198, %199 : vector<16x128xf32>
    %201 = arith.maximumf %193, %200 : vector<16x128xf32>
    %202 = vector.broadcast %0 : vector<1x128xf32> to vector<16x128xf32>
    %203 = arith.addf %201, %202 : vector<16x128xf32>
    %cst_108 = arith.constant 0.000000e+00 : f32
    %204 = vector.broadcast %cst_108 : f32 to vector<16x128xf32>
    %205 = arith.cmpf ogt, %203, %204 : vector<16x128xf32>
    %cst_109 = arith.constant 0.000000e+00 : f32
    %206 = vector.broadcast %cst_109 : f32 to vector<16x128xf32>
    %207 = arith.minimumf %203, %206 : vector<16x128xf32>
    %208 = math.exp %207 : vector<16x128xf32>
    %cst_110 = arith.constant 1.000000e+00 : f32
    %209 = vector.broadcast %cst_110 : f32 to vector<16x128xf32>
    %210 = arith.subf %208, %209 : vector<16x128xf32>
    %cst_111 = arith.constant 1.67326319 : f32
    %211 = vector.broadcast %cst_111 : f32 to vector<16x128xf32>
    %212 = arith.mulf %211, %210 : vector<16x128xf32>
    %213 = arith.select %205, %203, %212 : vector<16x128xi1>, vector<16x128xf32>
    %cst_112 = arith.constant 1.05070102 : f32
    %214 = vector.broadcast %cst_112 : f32 to vector<16x128xf32>
    %215 = arith.mulf %214, %213 : vector<16x128xf32>
    %216 = arith.truncf %215 : vector<16x128xf32> to vector<16x128xbf16>
    %c0_113 = arith.constant 0 : index
    %c768 = arith.constant 768 : index
    %217 = vector.load %arg16[%c0_113, %c768] : memref<16x1536xbf16, #tpu.memory_space<vmem>>, vector<16x128xbf16>
    tpu.vector_store %arg16[%c0_113, %c768], %216 {strides = array<i32>} : memref<16x1536xbf16, #tpu.memory_space<vmem>>, vector<16x128xbf16>,
    %c14 = arith.constant 14 : index
    %c0_114 = arith.constant 0 : index
    %c0_115 = arith.constant 0 : index
    %218 = vector.load %arg1[%c14, %c0_114, %c0_115] : memref<24x16x140xbf16, #tpu.memory_space<vmem>>, vector<1x16x140xbf16>
    %219 = vector.shape_cast %218 : vector<1x16x140xbf16> to vector<16x140xbf16>
    %c0_116 = arith.constant 0 : index
    %c0_117 = arith.constant 0 : index
    %220 = vector.load %arg2[%c0_116, %c0_117] : memref<140x256xbf16, #tpu.memory_space<vmem>>, vector<140x256xbf16>
    %cst_118 = arith.constant dense<0.000000e+00> : vector<16x256xf32>
    %221 = tpu.matmul %219, %220, %cst_118 {dimension_numbers = #tpu.dot_dimension_numbers<[1], [0], [0], [1], [0, 0, 1, 1], [], []>} : vector<16x140xbf16>, vector<140x256xbf16>, vector<16x256xf32> -> vector<16x256xf32>
    %222 = vector.extract_strided_slice %221 {offsets = [0, 0], sizes = [16, 128], strides = [1, 1]} : vector<16x256xf32> to vector<16x128xf32>
    %223 = vector.extract_strided_slice %221 {offsets = [0, 128], sizes = [16, 128], strides = [1, 1]} : vector<16x256xf32> to vector<16x128xf32>
    %224 = arith.maximumf %222, %223 : vector<16x128xf32>
    %c15 = arith.constant 15 : index
    %c0_119 = arith.constant 0 : index
    %c0_120 = arith.constant 0 : index
    %225 = vector.load %arg1[%c15, %c0_119, %c0_120] : memref<24x16x140xbf16, #tpu.memory_space<vmem>>, vector<1x16x140xbf16>
    %226 = vector.shape_cast %225 : vector<1x16x140xbf16> to vector<16x140xbf16>
    %c0_121 = arith.constant 0 : index
    %c0_122 = arith.constant 0 : index
    %227 = vector.load %arg2[%c0_121, %c0_122] : memref<140x256xbf16, #tpu.memory_space<vmem>>, vector<140x256xbf16>
    %cst_123 = arith.constant dense<0.000000e+00> : vector<16x256xf32>
    %228 = tpu.matmul %226, %227, %cst_123 {dimension_numbers = #tpu.dot_dimension_numbers<[1], [0], [0], [1], [0, 0, 1, 1], [], []>} : vector<16x140xbf16>, vector<140x256xbf16>, vector<16x256xf32> -> vector<16x256xf32>
    %229 = vector.extract_strided_slice %228 {offsets = [0, 0], sizes = [16, 128], strides = [1, 1]} : vector<16x256xf32> to vector<16x128xf32>
    %230 = vector.extract_strided_slice %228 {offsets = [0, 128], sizes = [16, 128], strides = [1, 1]} : vector<16x256xf32> to vector<16x128xf32>
    %231 = arith.maximumf %229, %230 : vector<16x128xf32>
    %232 = arith.maximumf %224, %231 : vector<16x128xf32>
    %233 = vector.broadcast %0 : vector<1x128xf32> to vector<16x128xf32>
    %234 = arith.addf %232, %233 : vector<16x128xf32>
    %cst_124 = arith.constant 0.000000e+00 : f32
    %235 = vector.broadcast %cst_124 : f32 to vector<16x128xf32>
    %236 = arith.cmpf ogt, %234, %235 : vector<16x128xf32>
    %cst_125 = arith.constant 0.000000e+00 : f32
    %237 = vector.broadcast %cst_125 : f32 to vector<16x128xf32>
    %238 = arith.minimumf %234, %237 : vector<16x128xf32>
    %239 = math.exp %238 : vector<16x128xf32>
    %cst_126 = arith.constant 1.000000e+00 : f32
    %240 = vector.broadcast %cst_126 : f32 to vector<16x128xf32>
    %241 = arith.subf %239, %240 : vector<16x128xf32>
    %cst_127 = arith.constant 1.67326319 : f32
    %242 = vector.broadcast %cst_127 : f32 to vector<16x128xf32>
    %243 = arith.mulf %242, %241 : vector<16x128xf32>
    %244 = arith.select %236, %234, %243 : vector<16x128xi1>, vector<16x128xf32>
    %cst_128 = arith.constant 1.05070102 : f32
    %245 = vector.broadcast %cst_128 : f32 to vector<16x128xf32>
    %246 = arith.mulf %245, %244 : vector<16x128xf32>
    %247 = arith.truncf %246 : vector<16x128xf32> to vector<16x128xbf16>
    %c0_129 = arith.constant 0 : index
    %c896 = arith.constant 896 : index
    %248 = vector.load %arg16[%c0_129, %c896] : memref<16x1536xbf16, #tpu.memory_space<vmem>>, vector<16x128xbf16>
    tpu.vector_store %arg16[%c0_129, %c896], %247 {strides = array<i32>} : memref<16x1536xbf16, #tpu.memory_space<vmem>>, vector<16x128xbf16>,
    %c16 = arith.constant 16 : index
    %c0_130 = arith.constant 0 : index
    %c0_131 = arith.constant 0 : index
    %249 = vector.load %arg1[%c16, %c0_130, %c0_131] : memref<24x16x140xbf16, #tpu.memory_space<vmem>>, vector<1x16x140xbf16>
    %250 = vector.shape_cast %249 : vector<1x16x140xbf16> to vector<16x140xbf16>
    %c0_132 = arith.constant 0 : index
    %c0_133 = arith.constant 0 : index
    %251 = vector.load %arg2[%c0_132, %c0_133] : memref<140x256xbf16, #tpu.memory_space<vmem>>, vector<140x256xbf16>
    %cst_134 = arith.constant dense<0.000000e+00> : vector<16x256xf32>
    %252 = tpu.matmul %250, %251, %cst_134 {dimension_numbers = #tpu.dot_dimension_numbers<[1], [0], [0], [1], [0, 0, 1, 1], [], []>} : vector<16x140xbf16>, vector<140x256xbf16>, vector<16x256xf32> -> vector<16x256xf32>
    %253 = vector.extract_strided_slice %252 {offsets = [0, 0], sizes = [16, 128], strides = [1, 1]} : vector<16x256xf32> to vector<16x128xf32>
    %254 = vector.extract_strided_slice %252 {offsets = [0, 128], sizes = [16, 128], strides = [1, 1]} : vector<16x256xf32> to vector<16x128xf32>
    %255 = arith.maximumf %253, %254 : vector<16x128xf32>
    %c17 = arith.constant 17 : index
    %c0_135 = arith.constant 0 : index
    %c0_136 = arith.constant 0 : index
    %256 = vector.load %arg1[%c17, %c0_135, %c0_136] : memref<24x16x140xbf16, #tpu.memory_space<vmem>>, vector<1x16x140xbf16>
    %257 = vector.shape_cast %256 : vector<1x16x140xbf16> to vector<16x140xbf16>
    %c0_137 = arith.constant 0 : index
    %c0_138 = arith.constant 0 : index
    %258 = vector.load %arg2[%c0_137, %c0_138] : memref<140x256xbf16, #tpu.memory_space<vmem>>, vector<140x256xbf16>
    %cst_139 = arith.constant dense<0.000000e+00> : vector<16x256xf32>
    %259 = tpu.matmul %257, %258, %cst_139 {dimension_numbers = #tpu.dot_dimension_numbers<[1], [0], [0], [1], [0, 0, 1, 1], [], []>} : vector<16x140xbf16>, vector<140x256xbf16>, vector<16x256xf32> -> vector<16x256xf32>
    %260 = vector.extract_strided_slice %259 {offsets = [0, 0], sizes = [16, 128], strides = [1, 1]} : vector<16x256xf32> to vector<16x128xf32>
    %261 = vector.extract_strided_slice %259 {offsets = [0, 128], sizes = [16, 128], strides = [1, 1]} : vector<16x256xf32> to vector<16x128xf32>
    %262 = arith.maximumf %260, %261 : vector<16x128xf32>
    %263 = arith.maximumf %255, %262 : vector<16x128xf32>
    %264 = vector.broadcast %0 : vector<1x128xf32> to vector<16x128xf32>
    %265 = arith.addf %263, %264 : vector<16x128xf32>
    %cst_140 = arith.constant 0.000000e+00 : f32
    %266 = vector.broadcast %cst_140 : f32 to vector<16x128xf32>
    %267 = arith.cmpf ogt, %265, %266 : vector<16x128xf32>
    %cst_141 = arith.constant 0.000000e+00 : f32
    %268 = vector.broadcast %cst_141 : f32 to vector<16x128xf32>
    %269 = arith.minimumf %265, %268 : vector<16x128xf32>
    %270 = math.exp %269 : vector<16x128xf32>
    %cst_142 = arith.constant 1.000000e+00 : f32
    %271 = vector.broadcast %cst_142 : f32 to vector<16x128xf32>
    %272 = arith.subf %270, %271 : vector<16x128xf32>
    %cst_143 = arith.constant 1.67326319 : f32
    %273 = vector.broadcast %cst_143 : f32 to vector<16x128xf32>
    %274 = arith.mulf %273, %272 : vector<16x128xf32>
    %275 = arith.select %267, %265, %274 : vector<16x128xi1>, vector<16x128xf32>
    %cst_144 = arith.constant 1.05070102 : f32
    %276 = vector.broadcast %cst_144 : f32 to vector<16x128xf32>
    %277 = arith.mulf %276, %275 : vector<16x128xf32>
    %278 = arith.truncf %277 : vector<16x128xf32> to vector<16x128xbf16>
    %c0_145 = arith.constant 0 : index
    %c1024 = arith.constant 1024 : index
    %279 = vector.load %arg16[%c0_145, %c1024] : memref<16x1536xbf16, #tpu.memory_space<vmem>>, vector<16x128xbf16>
    tpu.vector_store %arg16[%c0_145, %c1024], %278 {strides = array<i32>} : memref<16x1536xbf16, #tpu.memory_space<vmem>>, vector<16x128xbf16>,
    %c18 = arith.constant 18 : index
    %c0_146 = arith.constant 0 : index
    %c0_147 = arith.constant 0 : index
    %280 = vector.load %arg1[%c18, %c0_146, %c0_147] : memref<24x16x140xbf16, #tpu.memory_space<vmem>>, vector<1x16x140xbf16>
    %281 = vector.shape_cast %280 : vector<1x16x140xbf16> to vector<16x140xbf16>
    %c0_148 = arith.constant 0 : index
    %c0_149 = arith.constant 0 : index
    %282 = vector.load %arg2[%c0_148, %c0_149] : memref<140x256xbf16, #tpu.memory_space<vmem>>, vector<140x256xbf16>
    %cst_150 = arith.constant dense<0.000000e+00> : vector<16x256xf32>
    %283 = tpu.matmul %281, %282, %cst_150 {dimension_numbers = #tpu.dot_dimension_numbers<[1], [0], [0], [1], [0, 0, 1, 1], [], []>} : vector<16x140xbf16>, vector<140x256xbf16>, vector<16x256xf32> -> vector<16x256xf32>
    %284 = vector.extract_strided_slice %283 {offsets = [0, 0], sizes = [16, 128], strides = [1, 1]} : vector<16x256xf32> to vector<16x128xf32>
    %285 = vector.extract_strided_slice %283 {offsets = [0, 128], sizes = [16, 128], strides = [1, 1]} : vector<16x256xf32> to vector<16x128xf32>
    %286 = arith.maximumf %284, %285 : vector<16x128xf32>
    %c19 = arith.constant 19 : index
    %c0_151 = arith.constant 0 : index
    %c0_152 = arith.constant 0 : index
    %287 = vector.load %arg1[%c19, %c0_151, %c0_152] : memref<24x16x140xbf16, #tpu.memory_space<vmem>>, vector<1x16x140xbf16>
    %288 = vector.shape_cast %287 : vector<1x16x140xbf16> to vector<16x140xbf16>
    %c0_153 = arith.constant 0 : index
    %c0_154 = arith.constant 0 : index
    %289 = vector.load %arg2[%c0_153, %c0_154] : memref<140x256xbf16, #tpu.memory_space<vmem>>, vector<140x256xbf16>
    %cst_155 = arith.constant dense<0.000000e+00> : vector<16x256xf32>
    %290 = tpu.matmul %288, %289, %cst_155 {dimension_numbers = #tpu.dot_dimension_numbers<[1], [0], [0], [1], [0, 0, 1, 1], [], []>} : vector<16x140xbf16>, vector<140x256xbf16>, vector<16x256xf32> -> vector<16x256xf32>
    %291 = vector.extract_strided_slice %290 {offsets = [0, 0], sizes = [16, 128], strides = [1, 1]} : vector<16x256xf32> to vector<16x128xf32>
    %292 = vector.extract_strided_slice %290 {offsets = [0, 128], sizes = [16, 128], strides = [1, 1]} : vector<16x256xf32> to vector<16x128xf32>
    %293 = arith.maximumf %291, %292 : vector<16x128xf32>
    %294 = arith.maximumf %286, %293 : vector<16x128xf32>
    %295 = vector.broadcast %0 : vector<1x128xf32> to vector<16x128xf32>
    %296 = arith.addf %294, %295 : vector<16x128xf32>
    %cst_156 = arith.constant 0.000000e+00 : f32
    %297 = vector.broadcast %cst_156 : f32 to vector<16x128xf32>
    %298 = arith.cmpf ogt, %296, %297 : vector<16x128xf32>
    %cst_157 = arith.constant 0.000000e+00 : f32
    %299 = vector.broadcast %cst_157 : f32 to vector<16x128xf32>
    %300 = arith.minimumf %296, %299 : vector<16x128xf32>
    %301 = math.exp %300 : vector<16x128xf32>
    %cst_158 = arith.constant 1.000000e+00 : f32
    %302 = vector.broadcast %cst_158 : f32 to vector<16x128xf32>
    %303 = arith.subf %301, %302 : vector<16x128xf32>
    %cst_159 = arith.constant 1.67326319 : f32
    %304 = vector.broadcast %cst_159 : f32 to vector<16x128xf32>
    %305 = arith.mulf %304, %303 : vector<16x128xf32>
    %306 = arith.select %298, %296, %305 : vector<16x128xi1>, vector<16x128xf32>
    %cst_160 = arith.constant 1.05070102 : f32
    %307 = vector.broadcast %cst_160 : f32 to vector<16x128xf32>
    %308 = arith.mulf %307, %306 : vector<16x128xf32>
    %309 = arith.truncf %308 : vector<16x128xf32> to vector<16x128xbf16>
    %c0_161 = arith.constant 0 : index
    %c1152 = arith.constant 1152 : index
    %310 = vector.load %arg16[%c0_161, %c1152] : memref<16x1536xbf16, #tpu.memory_space<vmem>>, vector<16x128xbf16>
    tpu.vector_store %arg16[%c0_161, %c1152], %309 {strides = array<i32>} : memref<16x1536xbf16, #tpu.memory_space<vmem>>, vector<16x128xbf16>,
    %c20 = arith.constant 20 : index
    %c0_162 = arith.constant 0 : index
    %c0_163 = arith.constant 0 : index
    %311 = vector.load %arg1[%c20, %c0_162, %c0_163] : memref<24x16x140xbf16, #tpu.memory_space<vmem>>, vector<1x16x140xbf16>
    %312 = vector.shape_cast %311 : vector<1x16x140xbf16> to vector<16x140xbf16>
    %c0_164 = arith.constant 0 : index
    %c0_165 = arith.constant 0 : index
    %313 = vector.load %arg2[%c0_164, %c0_165] : memref<140x256xbf16, #tpu.memory_space<vmem>>, vector<140x256xbf16>
    %cst_166 = arith.constant dense<0.000000e+00> : vector<16x256xf32>
    %314 = tpu.matmul %312, %313, %cst_166 {dimension_numbers = #tpu.dot_dimension_numbers<[1], [0], [0], [1], [0, 0, 1, 1], [], []>} : vector<16x140xbf16>, vector<140x256xbf16>, vector<16x256xf32> -> vector<16x256xf32>
    %315 = vector.extract_strided_slice %314 {offsets = [0, 0], sizes = [16, 128], strides = [1, 1]} : vector<16x256xf32> to vector<16x128xf32>
    %316 = vector.extract_strided_slice %314 {offsets = [0, 128], sizes = [16, 128], strides = [1, 1]} : vector<16x256xf32> to vector<16x128xf32>
    %317 = arith.maximumf %315, %316 : vector<16x128xf32>
    %c21 = arith.constant 21 : index
    %c0_167 = arith.constant 0 : index
    %c0_168 = arith.constant 0 : index
    %318 = vector.load %arg1[%c21, %c0_167, %c0_168] : memref<24x16x140xbf16, #tpu.memory_space<vmem>>, vector<1x16x140xbf16>
    %319 = vector.shape_cast %318 : vector<1x16x140xbf16> to vector<16x140xbf16>
    %c0_169 = arith.constant 0 : index
    %c0_170 = arith.constant 0 : index
    %320 = vector.load %arg2[%c0_169, %c0_170] : memref<140x256xbf16, #tpu.memory_space<vmem>>, vector<140x256xbf16>
    %cst_171 = arith.constant dense<0.000000e+00> : vector<16x256xf32>
    %321 = tpu.matmul %319, %320, %cst_171 {dimension_numbers = #tpu.dot_dimension_numbers<[1], [0], [0], [1], [0, 0, 1, 1], [], []>} : vector<16x140xbf16>, vector<140x256xbf16>, vector<16x256xf32> -> vector<16x256xf32>
    %322 = vector.extract_strided_slice %321 {offsets = [0, 0], sizes = [16, 128], strides = [1, 1]} : vector<16x256xf32> to vector<16x128xf32>
    %323 = vector.extract_strided_slice %321 {offsets = [0, 128], sizes = [16, 128], strides = [1, 1]} : vector<16x256xf32> to vector<16x128xf32>
    %324 = arith.maximumf %322, %323 : vector<16x128xf32>
    %325 = arith.maximumf %317, %324 : vector<16x128xf32>
    %326 = vector.broadcast %0 : vector<1x128xf32> to vector<16x128xf32>
    %327 = arith.addf %325, %326 : vector<16x128xf32>
    %cst_172 = arith.constant 0.000000e+00 : f32
    %328 = vector.broadcast %cst_172 : f32 to vector<16x128xf32>
    %329 = arith.cmpf ogt, %327, %328 : vector<16x128xf32>
    %cst_173 = arith.constant 0.000000e+00 : f32
    %330 = vector.broadcast %cst_173 : f32 to vector<16x128xf32>
    %331 = arith.minimumf %327, %330 : vector<16x128xf32>
    %332 = math.exp %331 : vector<16x128xf32>
    %cst_174 = arith.constant 1.000000e+00 : f32
    %333 = vector.broadcast %cst_174 : f32 to vector<16x128xf32>
    %334 = arith.subf %332, %333 : vector<16x128xf32>
    %cst_175 = arith.constant 1.67326319 : f32
    %335 = vector.broadcast %cst_175 : f32 to vector<16x128xf32>
    %336 = arith.mulf %335, %334 : vector<16x128xf32>
    %337 = arith.select %329, %327, %336 : vector<16x128xi1>, vector<16x128xf32>
    %cst_176 = arith.constant 1.05070102 : f32
    %338 = vector.broadcast %cst_176 : f32 to vector<16x128xf32>
    %339 = arith.mulf %338, %337 : vector<16x128xf32>
    %340 = arith.truncf %339 : vector<16x128xf32> to vector<16x128xbf16>
    %c0_177 = arith.constant 0 : index
    %c1280 = arith.constant 1280 : index
    %341 = vector.load %arg16[%c0_177, %c1280] : memref<16x1536xbf16, #tpu.memory_space<vmem>>, vector<16x128xbf16>
    tpu.vector_store %arg16[%c0_177, %c1280], %340 {strides = array<i32>} : memref<16x1536xbf16, #tpu.memory_space<vmem>>, vector<16x128xbf16>,
    %c22 = arith.constant 22 : index
    %c0_178 = arith.constant 0 : index
    %c0_179 = arith.constant 0 : index
    %342 = vector.load %arg1[%c22, %c0_178, %c0_179] : memref<24x16x140xbf16, #tpu.memory_space<vmem>>, vector<1x16x140xbf16>
    %343 = vector.shape_cast %342 : vector<1x16x140xbf16> to vector<16x140xbf16>
    %c0_180 = arith.constant 0 : index
    %c0_181 = arith.constant 0 : index
    %344 = vector.load %arg2[%c0_180, %c0_181] : memref<140x256xbf16, #tpu.memory_space<vmem>>, vector<140x256xbf16>
    %cst_182 = arith.constant dense<0.000000e+00> : vector<16x256xf32>
    %345 = tpu.matmul %343, %344, %cst_182 {dimension_numbers = #tpu.dot_dimension_numbers<[1], [0], [0], [1], [0, 0, 1, 1], [], []>} : vector<16x140xbf16>, vector<140x256xbf16>, vector<16x256xf32> -> vector<16x256xf32>
    %346 = vector.extract_strided_slice %345 {offsets = [0, 0], sizes = [16, 128], strides = [1, 1]} : vector<16x256xf32> to vector<16x128xf32>
    %347 = vector.extract_strided_slice %345 {offsets = [0, 128], sizes = [16, 128], strides = [1, 1]} : vector<16x256xf32> to vector<16x128xf32>
    %348 = arith.maximumf %346, %347 : vector<16x128xf32>
    %c23 = arith.constant 23 : index
    %c0_183 = arith.constant 0 : index
    %c0_184 = arith.constant 0 : index
    %349 = vector.load %arg1[%c23, %c0_183, %c0_184] : memref<24x16x140xbf16, #tpu.memory_space<vmem>>, vector<1x16x140xbf16>
    %350 = vector.shape_cast %349 : vector<1x16x140xbf16> to vector<16x140xbf16>
    %c0_185 = arith.constant 0 : index
    %c0_186 = arith.constant 0 : index
    %351 = vector.load %arg2[%c0_185, %c0_186] : memref<140x256xbf16, #tpu.memory_space<vmem>>, vector<140x256xbf16>
    %cst_187 = arith.constant dense<0.000000e+00> : vector<16x256xf32>
    %352 = tpu.matmul %350, %351, %cst_187 {dimension_numbers = #tpu.dot_dimension_numbers<[1], [0], [0], [1], [0, 0, 1, 1], [], []>} : vector<16x140xbf16>, vector<140x256xbf16>, vector<16x256xf32> -> vector<16x256xf32>
    %353 = vector.extract_strided_slice %352 {offsets = [0, 0], sizes = [16, 128], strides = [1, 1]} : vector<16x256xf32> to vector<16x128xf32>
    %354 = vector.extract_strided_slice %352 {offsets = [0, 128], sizes = [16, 128], strides = [1, 1]} : vector<16x256xf32> to vector<16x128xf32>
    %355 = arith.maximumf %353, %354 : vector<16x128xf32>
    %356 = arith.maximumf %348, %355 : vector<16x128xf32>
    %357 = vector.broadcast %0 : vector<1x128xf32> to vector<16x128xf32>
    %358 = arith.addf %356, %357 : vector<16x128xf32>
    %cst_188 = arith.constant 0.000000e+00 : f32
    %359 = vector.broadcast %cst_188 : f32 to vector<16x128xf32>
    %360 = arith.cmpf ogt, %358, %359 : vector<16x128xf32>
    %cst_189 = arith.constant 0.000000e+00 : f32
    %361 = vector.broadcast %cst_189 : f32 to vector<16x128xf32>
    %362 = arith.minimumf %358, %361 : vector<16x128xf32>
    %363 = math.exp %362 : vector<16x128xf32>
    %cst_190 = arith.constant 1.000000e+00 : f32
    %364 = vector.broadcast %cst_190 : f32 to vector<16x128xf32>
    %365 = arith.subf %363, %364 : vector<16x128xf32>
    %cst_191 = arith.constant 1.67326319 : f32
    %366 = vector.broadcast %cst_191 : f32 to vector<16x128xf32>
    %367 = arith.mulf %366, %365 : vector<16x128xf32>
    %368 = arith.select %360, %358, %367 : vector<16x128xi1>, vector<16x128xf32>
    %cst_192 = arith.constant 1.05070102 : f32
    %369 = vector.broadcast %cst_192 : f32 to vector<16x128xf32>
    %370 = arith.mulf %369, %368 : vector<16x128xf32>
    %371 = arith.truncf %370 : vector<16x128xf32> to vector<16x128xbf16>
    %c0_193 = arith.constant 0 : index
    %c1408 = arith.constant 1408 : index
    %372 = vector.load %arg16[%c0_193, %c1408] : memref<16x1536xbf16, #tpu.memory_space<vmem>>, vector<16x128xbf16>
    tpu.vector_store %arg16[%c0_193, %c1408], %371 {strides = array<i32>} : memref<16x1536xbf16, #tpu.memory_space<vmem>>, vector<16x128xbf16>,
    %c0_194 = arith.constant 0 : index
    %c0_195 = arith.constant 0 : index
    %373 = vector.load %arg9[%c0_194, %c0_195] : memref<1x128xf32, #tpu.memory_space<vmem>>, vector<1x128xf32>
    %cst_196 = arith.constant 0.000000e+00 : f32
    %374 = vector.broadcast %cst_196 : f32 to vector<16x128xf32>
    %c0_197 = arith.constant 0 : index
    %c0_198 = arith.constant 0 : index
    %375 = vector.load %arg17[%c0_197, %c0_198] : memref<16x128xf32, #tpu.memory_space<vmem>>, vector<16x128xf32>
    tpu.vector_store %arg17[%c0_197, %c0_198], %374 {strides = array<i32>} : memref<16x128xf32, #tpu.memory_space<vmem>>, vector<16x128xf32>,
    %c0_199 = arith.constant 0 : index
    %c0_200 = arith.constant 0 : index
    %376 = vector.load %arg16[%c0_199, %c0_200] : memref<16x1536xbf16, #tpu.memory_space<vmem>>, vector<16x640xbf16>
    %c0_201 = arith.constant 0 : index
    %c0_202 = arith.constant 0 : index
    %377 = vector.load %arg3[%c0_201, %c0_202] : memref<640x256xbf16, #tpu.memory_space<vmem>>, vector<640x256xbf16>
    %cst_203 = arith.constant dense<0.000000e+00> : vector<16x256xf32>
    %378 = tpu.matmul %376, %377, %cst_203 {dimension_numbers = #tpu.dot_dimension_numbers<[1], [0], [0], [1], [0, 0, 1, 1], [], []>} : vector<16x640xbf16>, vector<640x256xbf16>, vector<16x256xf32> -> vector<16x256xf32>
    %379 = vector.extract_strided_slice %378 {offsets = [0, 0], sizes = [16, 128], strides = [1, 1]} : vector<16x256xf32> to vector<16x128xf32>
    %380 = vector.extract_strided_slice %378 {offsets = [0, 128], sizes = [16, 128], strides = [1, 1]} : vector<16x256xf32> to vector<16x128xf32>
    %381 = arith.maximumf %379, %380 : vector<16x128xf32>
    %c0_204 = arith.constant 0 : index
    %c128_205 = arith.constant 128 : index
    %382 = vector.load %arg16[%c0_204, %c128_205] : memref<16x1536xbf16, #tpu.memory_space<vmem>>, vector<16x640xbf16>
    %c0_206 = arith.constant 0 : index
    %c0_207 = arith.constant 0 : index
    %383 = vector.load %arg3[%c0_206, %c0_207] : memref<640x256xbf16, #tpu.memory_space<vmem>>, vector<640x256xbf16>
    %cst_208 = arith.constant dense<0.000000e+00> : vector<16x256xf32>
    %384 = tpu.matmul %382, %383, %cst_208 {dimension_numbers = #tpu.dot_dimension_numbers<[1], [0], [0], [1], [0, 0, 1, 1], [], []>} : vector<16x640xbf16>, vector<640x256xbf16>, vector<16x256xf32> -> vector<16x256xf32>
    %385 = vector.extract_strided_slice %384 {offsets = [0, 0], sizes = [16, 128], strides = [1, 1]} : vector<16x256xf32> to vector<16x128xf32>
    %386 = vector.extract_strided_slice %384 {offsets = [0, 128], sizes = [16, 128], strides = [1, 1]} : vector<16x256xf32> to vector<16x128xf32>
    %387 = arith.maximumf %385, %386 : vector<16x128xf32>
    %388 = arith.maximumf %381, %387 : vector<16x128xf32>
    %389 = vector.broadcast %373 : vector<1x128xf32> to vector<16x128xf32>
    %390 = arith.addf %388, %389 : vector<16x128xf32>
    %cst_209 = arith.constant 0.000000e+00 : f32
    %391 = vector.broadcast %cst_209 : f32 to vector<16x128xf32>
    %392 = arith.cmpf ogt, %390, %391 : vector<16x128xf32>
    %cst_210 = arith.constant 0.000000e+00 : f32
    %393 = vector.broadcast %cst_210 : f32 to vector<16x128xf32>
    %394 = arith.minimumf %390, %393 : vector<16x128xf32>
    %395 = math.exp %394 : vector<16x128xf32>
    %cst_211 = arith.constant 1.000000e+00 : f32
    %396 = vector.broadcast %cst_211 : f32 to vector<16x128xf32>
    %397 = arith.subf %395, %396 : vector<16x128xf32>
    %cst_212 = arith.constant 1.67326319 : f32
    %398 = vector.broadcast %cst_212 : f32 to vector<16x128xf32>
    %399 = arith.mulf %398, %397 : vector<16x128xf32>
    %400 = arith.select %392, %390, %399 : vector<16x128xi1>, vector<16x128xf32>
    %cst_213 = arith.constant 1.05070102 : f32
    %401 = vector.broadcast %cst_213 : f32 to vector<16x128xf32>
    %402 = arith.mulf %401, %400 : vector<16x128xf32>
    %403 = arith.truncf %402 : vector<16x128xf32> to vector<16x128xbf16>
    %c0_214 = arith.constant 0 : index
    %c0_215 = arith.constant 0 : index
    %404 = vector.load %arg17[%c0_214, %c0_215] : memref<16x128xf32, #tpu.memory_space<vmem>>, vector<16x128xf32>
    %c0_216 = arith.constant 0 : index
    %c0_217 = arith.constant 0 : index
    %c0_218 = arith.constant 0 : index
    %405 = vector.load %arg4[%c0_216, %c0_217, %c0_218] : memref<4x128x128xbf16, #tpu.memory_space<vmem>>, vector<1x128x128xbf16>
    %406 = vector.shape_cast %405 : vector<1x128x128xbf16> to vector<128x128xbf16>
    %cst_219 = arith.constant dense<0.000000e+00> : vector<16x128xf32>
    %407 = tpu.matmul %403, %406, %cst_219 {dimension_numbers = #tpu.dot_dimension_numbers<[1], [0], [0], [1], [0, 0, 1, 1], [], []>} : vector<16x128xbf16>, vector<128x128xbf16>, vector<16x128xf32> -> vector<16x128xf32>
    %408 = arith.addf %404, %407 : vector<16x128xf32>
    %c0_220 = arith.constant 0 : index
    %c0_221 = arith.constant 0 : index
    %409 = vector.load %arg17[%c0_220, %c0_221] : memref<16x128xf32, #tpu.memory_space<vmem>>, vector<16x128xf32>
    tpu.vector_store %arg17[%c0_220, %c0_221], %408 {strides = array<i32>} : memref<16x128xf32, #tpu.memory_space<vmem>>, vector<16x128xf32>,
    %c0_222 = arith.constant 0 : index
    %c256_223 = arith.constant 256 : index
    %410 = vector.load %arg16[%c0_222, %c256_223] : memref<16x1536xbf16, #tpu.memory_space<vmem>>, vector<16x640xbf16>
    %c0_224 = arith.constant 0 : index
    %c0_225 = arith.constant 0 : index
    %411 = vector.load %arg3[%c0_224, %c0_225] : memref<640x256xbf16, #tpu.memory_space<vmem>>, vector<640x256xbf16>
    %cst_226 = arith.constant dense<0.000000e+00> : vector<16x256xf32>
    %412 = tpu.matmul %410, %411, %cst_226 {dimension_numbers = #tpu.dot_dimension_numbers<[1], [0], [0], [1], [0, 0, 1, 1], [], []>} : vector<16x640xbf16>, vector<640x256xbf16>, vector<16x256xf32> -> vector<16x256xf32>
    %413 = vector.extract_strided_slice %412 {offsets = [0, 0], sizes = [16, 128], strides = [1, 1]} : vector<16x256xf32> to vector<16x128xf32>
    %414 = vector.extract_strided_slice %412 {offsets = [0, 128], sizes = [16, 128], strides = [1, 1]} : vector<16x256xf32> to vector<16x128xf32>
    %415 = arith.maximumf %413, %414 : vector<16x128xf32>
    %c0_227 = arith.constant 0 : index
    %c384_228 = arith.constant 384 : index
    %416 = vector.load %arg16[%c0_227, %c384_228] : memref<16x1536xbf16, #tpu.memory_space<vmem>>, vector<16x640xbf16>
    %c0_229 = arith.constant 0 : index
    %c0_230 = arith.constant 0 : index
    %417 = vector.load %arg3[%c0_229, %c0_230] : memref<640x256xbf16, #tpu.memory_space<vmem>>, vector<640x256xbf16>
    %cst_231 = arith.constant dense<0.000000e+00> : vector<16x256xf32>
    %418 = tpu.matmul %416, %417, %cst_231 {dimension_numbers = #tpu.dot_dimension_numbers<[1], [0], [0], [1], [0, 0, 1, 1], [], []>} : vector<16x640xbf16>, vector<640x256xbf16>, vector<16x256xf32> -> vector<16x256xf32>
    %419 = vector.extract_strided_slice %418 {offsets = [0, 0], sizes = [16, 128], strides = [1, 1]} : vector<16x256xf32> to vector<16x128xf32>
    %420 = vector.extract_strided_slice %418 {offsets = [0, 128], sizes = [16, 128], strides = [1, 1]} : vector<16x256xf32> to vector<16x128xf32>
    %421 = arith.maximumf %419, %420 : vector<16x128xf32>
    %422 = arith.maximumf %415, %421 : vector<16x128xf32>
    %423 = vector.broadcast %373 : vector<1x128xf32> to vector<16x128xf32>
    %424 = arith.addf %422, %423 : vector<16x128xf32>
    %cst_232 = arith.constant 0.000000e+00 : f32
    %425 = vector.broadcast %cst_232 : f32 to vector<16x128xf32>
    %426 = arith.cmpf ogt, %424, %425 : vector<16x128xf32>
    %cst_233 = arith.constant 0.000000e+00 : f32
    %427 = vector.broadcast %cst_233 : f32 to vector<16x128xf32>
    %428 = arith.minimumf %424, %427 : vector<16x128xf32>
    %429 = math.exp %428 : vector<16x128xf32>
    %cst_234 = arith.constant 1.000000e+00 : f32
    %430 = vector.broadcast %cst_234 : f32 to vector<16x128xf32>
    %431 = arith.subf %429, %430 : vector<16x128xf32>
    %cst_235 = arith.constant 1.67326319 : f32
    %432 = vector.broadcast %cst_235 : f32 to vector<16x128xf32>
    %433 = arith.mulf %432, %431 : vector<16x128xf32>
    %434 = arith.select %426, %424, %433 : vector<16x128xi1>, vector<16x128xf32>
    %cst_236 = arith.constant 1.05070102 : f32
    %435 = vector.broadcast %cst_236 : f32 to vector<16x128xf32>
    %436 = arith.mulf %435, %434 : vector<16x128xf32>
    %437 = arith.truncf %436 : vector<16x128xf32> to vector<16x128xbf16>
    %c0_237 = arith.constant 0 : index
    %c0_238 = arith.constant 0 : index
    %438 = vector.load %arg17[%c0_237, %c0_238] : memref<16x128xf32, #tpu.memory_space<vmem>>, vector<16x128xf32>
    %c1_239 = arith.constant 1 : index
    %c0_240 = arith.constant 0 : index
    %c0_241 = arith.constant 0 : index
    %439 = vector.load %arg4[%c1_239, %c0_240, %c0_241] : memref<4x128x128xbf16, #tpu.memory_space<vmem>>, vector<1x128x128xbf16>
    %440 = vector.shape_cast %439 : vector<1x128x128xbf16> to vector<128x128xbf16>
    %cst_242 = arith.constant dense<0.000000e+00> : vector<16x128xf32>
    %441 = tpu.matmul %437, %440, %cst_242 {dimension_numbers = #tpu.dot_dimension_numbers<[1], [0], [0], [1], [0, 0, 1, 1], [], []>} : vector<16x128xbf16>, vector<128x128xbf16>, vector<16x128xf32> -> vector<16x128xf32>
    %442 = arith.addf %438, %441 : vector<16x128xf32>
    %c0_243 = arith.constant 0 : index
    %c0_244 = arith.constant 0 : index
    %443 = vector.load %arg17[%c0_243, %c0_244] : memref<16x128xf32, #tpu.memory_space<vmem>>, vector<16x128xf32>
    tpu.vector_store %arg17[%c0_243, %c0_244], %442 {strides = array<i32>} : memref<16x128xf32, #tpu.memory_space<vmem>>, vector<16x128xf32>,
    %c0_245 = arith.constant 0 : index
    %c512_246 = arith.constant 512 : index
    %444 = vector.load %arg16[%c0_245, %c512_246] : memref<16x1536xbf16, #tpu.memory_space<vmem>>, vector<16x640xbf16>
    %c0_247 = arith.constant 0 : index
    %c0_248 = arith.constant 0 : index
    %445 = vector.load %arg3[%c0_247, %c0_248] : memref<640x256xbf16, #tpu.memory_space<vmem>>, vector<640x256xbf16>
    %cst_249 = arith.constant dense<0.000000e+00> : vector<16x256xf32>
    %446 = tpu.matmul %444, %445, %cst_249 {dimension_numbers = #tpu.dot_dimension_numbers<[1], [0], [0], [1], [0, 0, 1, 1], [], []>} : vector<16x640xbf16>, vector<640x256xbf16>, vector<16x256xf32> -> vector<16x256xf32>
    %447 = vector.extract_strided_slice %446 {offsets = [0, 0], sizes = [16, 128], strides = [1, 1]} : vector<16x256xf32> to vector<16x128xf32>
    %448 = vector.extract_strided_slice %446 {offsets = [0, 128], sizes = [16, 128], strides = [1, 1]} : vector<16x256xf32> to vector<16x128xf32>
    %449 = arith.maximumf %447, %448 : vector<16x128xf32>
    %c0_250 = arith.constant 0 : index
    %c640_251 = arith.constant 640 : index
    %450 = vector.load %arg16[%c0_250, %c640_251] : memref<16x1536xbf16, #tpu.memory_space<vmem>>, vector<16x640xbf16>
    %c0_252 = arith.constant 0 : index
    %c0_253 = arith.constant 0 : index
    %451 = vector.load %arg3[%c0_252, %c0_253] : memref<640x256xbf16, #tpu.memory_space<vmem>>, vector<640x256xbf16>
    %cst_254 = arith.constant dense<0.000000e+00> : vector<16x256xf32>
    %452 = tpu.matmul %450, %451, %cst_254 {dimension_numbers = #tpu.dot_dimension_numbers<[1], [0], [0], [1], [0, 0, 1, 1], [], []>} : vector<16x640xbf16>, vector<640x256xbf16>, vector<16x256xf32> -> vector<16x256xf32>
    %453 = vector.extract_strided_slice %452 {offsets = [0, 0], sizes = [16, 128], strides = [1, 1]} : vector<16x256xf32> to vector<16x128xf32>
    %454 = vector.extract_strided_slice %452 {offsets = [0, 128], sizes = [16, 128], strides = [1, 1]} : vector<16x256xf32> to vector<16x128xf32>
    %455 = arith.maximumf %453, %454 : vector<16x128xf32>
    %456 = arith.maximumf %449, %455 : vector<16x128xf32>
    %457 = vector.broadcast %373 : vector<1x128xf32> to vector<16x128xf32>
    %458 = arith.addf %456, %457 : vector<16x128xf32>
    %cst_255 = arith.constant 0.000000e+00 : f32
    %459 = vector.broadcast %cst_255 : f32 to vector<16x128xf32>
    %460 = arith.cmpf ogt, %458, %459 : vector<16x128xf32>
    %cst_256 = arith.constant 0.000000e+00 : f32
    %461 = vector.broadcast %cst_256 : f32 to vector<16x128xf32>
    %462 = arith.minimumf %458, %461 : vector<16x128xf32>
    %463 = math.exp %462 : vector<16x128xf32>
    %cst_257 = arith.constant 1.000000e+00 : f32
    %464 = vector.broadcast %cst_257 : f32 to vector<16x128xf32>
    %465 = arith.subf %463, %464 : vector<16x128xf32>
    %cst_258 = arith.constant 1.67326319 : f32
    %466 = vector.broadcast %cst_258 : f32 to vector<16x128xf32>
    %467 = arith.mulf %466, %465 : vector<16x128xf32>
    %468 = arith.select %460, %458, %467 : vector<16x128xi1>, vector<16x128xf32>
    %cst_259 = arith.constant 1.05070102 : f32
    %469 = vector.broadcast %cst_259 : f32 to vector<16x128xf32>
    %470 = arith.mulf %469, %468 : vector<16x128xf32>
    %471 = arith.truncf %470 : vector<16x128xf32> to vector<16x128xbf16>
    %c0_260 = arith.constant 0 : index
    %c0_261 = arith.constant 0 : index
    %472 = vector.load %arg17[%c0_260, %c0_261] : memref<16x128xf32, #tpu.memory_space<vmem>>, vector<16x128xf32>
    %c2_262 = arith.constant 2 : index
    %c0_263 = arith.constant 0 : index
    %c0_264 = arith.constant 0 : index
    %473 = vector.load %arg4[%c2_262, %c0_263, %c0_264] : memref<4x128x128xbf16, #tpu.memory_space<vmem>>, vector<1x128x128xbf16>
    %474 = vector.shape_cast %473 : vector<1x128x128xbf16> to vector<128x128xbf16>
    %cst_265 = arith.constant dense<0.000000e+00> : vector<16x128xf32>
    %475 = tpu.matmul %471, %474, %cst_265 {dimension_numbers = #tpu.dot_dimension_numbers<[1], [0], [0], [1], [0, 0, 1, 1], [], []>} : vector<16x128xbf16>, vector<128x128xbf16>, vector<16x128xf32> -> vector<16x128xf32>
    %476 = arith.addf %472, %475 : vector<16x128xf32>
    %c0_266 = arith.constant 0 : index
    %c0_267 = arith.constant 0 : index
    %477 = vector.load %arg17[%c0_266, %c0_267] : memref<16x128xf32, #tpu.memory_space<vmem>>, vector<16x128xf32>
    tpu.vector_store %arg17[%c0_266, %c0_267], %476 {strides = array<i32>} : memref<16x128xf32, #tpu.memory_space<vmem>>, vector<16x128xf32>,
    %c0_268 = arith.constant 0 : index
    %c768_269 = arith.constant 768 : index
    %478 = vector.load %arg16[%c0_268, %c768_269] : memref<16x1536xbf16, #tpu.memory_space<vmem>>, vector<16x640xbf16>
    %c0_270 = arith.constant 0 : index
    %c0_271 = arith.constant 0 : index
    %479 = vector.load %arg3[%c0_270, %c0_271] : memref<640x256xbf16, #tpu.memory_space<vmem>>, vector<640x256xbf16>
    %cst_272 = arith.constant dense<0.000000e+00> : vector<16x256xf32>
    %480 = tpu.matmul %478, %479, %cst_272 {dimension_numbers = #tpu.dot_dimension_numbers<[1], [0], [0], [1], [0, 0, 1, 1], [], []>} : vector<16x640xbf16>, vector<640x256xbf16>, vector<16x256xf32> -> vector<16x256xf32>
    %481 = vector.extract_strided_slice %480 {offsets = [0, 0], sizes = [16, 128], strides = [1, 1]} : vector<16x256xf32> to vector<16x128xf32>
    %482 = vector.extract_strided_slice %480 {offsets = [0, 128], sizes = [16, 128], strides = [1, 1]} : vector<16x256xf32> to vector<16x128xf32>
    %483 = arith.maximumf %481, %482 : vector<16x128xf32>
    %c0_273 = arith.constant 0 : index
    %c896_274 = arith.constant 896 : index
    %484 = vector.load %arg16[%c0_273, %c896_274] : memref<16x1536xbf16, #tpu.memory_space<vmem>>, vector<16x640xbf16>
    %c0_275 = arith.constant 0 : index
    %c0_276 = arith.constant 0 : index
    %485 = vector.load %arg3[%c0_275, %c0_276] : memref<640x256xbf16, #tpu.memory_space<vmem>>, vector<640x256xbf16>
    %cst_277 = arith.constant dense<0.000000e+00> : vector<16x256xf32>
    %486 = tpu.matmul %484, %485, %cst_277 {dimension_numbers = #tpu.dot_dimension_numbers<[1], [0], [0], [1], [0, 0, 1, 1], [], []>} : vector<16x640xbf16>, vector<640x256xbf16>, vector<16x256xf32> -> vector<16x256xf32>
    %487 = vector.extract_strided_slice %486 {offsets = [0, 0], sizes = [16, 128], strides = [1, 1]} : vector<16x256xf32> to vector<16x128xf32>
    %488 = vector.extract_strided_slice %486 {offsets = [0, 128], sizes = [16, 128], strides = [1, 1]} : vector<16x256xf32> to vector<16x128xf32>
    %489 = arith.maximumf %487, %488 : vector<16x128xf32>
    %490 = arith.maximumf %483, %489 : vector<16x128xf32>
    %491 = vector.broadcast %373 : vector<1x128xf32> to vector<16x128xf32>
    %492 = arith.addf %490, %491 : vector<16x128xf32>
    %cst_278 = arith.constant 0.000000e+00 : f32
    %493 = vector.broadcast %cst_278 : f32 to vector<16x128xf32>
    %494 = arith.cmpf ogt, %492, %493 : vector<16x128xf32>
    %cst_279 = arith.constant 0.000000e+00 : f32
    %495 = vector.broadcast %cst_279 : f32 to vector<16x128xf32>
    %496 = arith.minimumf %492, %495 : vector<16x128xf32>
    %497 = math.exp %496 : vector<16x128xf32>
    %cst_280 = arith.constant 1.000000e+00 : f32
    %498 = vector.broadcast %cst_280 : f32 to vector<16x128xf32>
    %499 = arith.subf %497, %498 : vector<16x128xf32>
    %cst_281 = arith.constant 1.67326319 : f32
    %500 = vector.broadcast %cst_281 : f32 to vector<16x128xf32>
    %501 = arith.mulf %500, %499 : vector<16x128xf32>
    %502 = arith.select %494, %492, %501 : vector<16x128xi1>, vector<16x128xf32>
    %cst_282 = arith.constant 1.05070102 : f32
    %503 = vector.broadcast %cst_282 : f32 to vector<16x128xf32>
    %504 = arith.mulf %503, %502 : vector<16x128xf32>
    %505 = arith.truncf %504 : vector<16x128xf32> to vector<16x128xbf16>
    %c0_283 = arith.constant 0 : index
    %c0_284 = arith.constant 0 : index
    %506 = vector.load %arg17[%c0_283, %c0_284] : memref<16x128xf32, #tpu.memory_space<vmem>>, vector<16x128xf32>
    %c3_285 = arith.constant 3 : index
    %c0_286 = arith.constant 0 : index
    %c0_287 = arith.constant 0 : index
    %507 = vector.load %arg4[%c3_285, %c0_286, %c0_287] : memref<4x128x128xbf16, #tpu.memory_space<vmem>>, vector<1x128x128xbf16>
    %508 = vector.shape_cast %507 : vector<1x128x128xbf16> to vector<128x128xbf16>
    %cst_288 = arith.constant dense<0.000000e+00> : vector<16x128xf32>
    %509 = tpu.matmul %505, %508, %cst_288 {dimension_numbers = #tpu.dot_dimension_numbers<[1], [0], [0], [1], [0, 0, 1, 1], [], []>} : vector<16x128xbf16>, vector<128x128xbf16>, vector<16x128xf32> -> vector<16x128xf32>
    %510 = arith.addf %506, %509 : vector<16x128xf32>
    %c0_289 = arith.constant 0 : index
    %c0_290 = arith.constant 0 : index
    %511 = vector.load %arg17[%c0_289, %c0_290] : memref<16x128xf32, #tpu.memory_space<vmem>>, vector<16x128xf32>
    tpu.vector_store %arg17[%c0_289, %c0_290], %510 {strides = array<i32>} : memref<16x128xf32, #tpu.memory_space<vmem>>, vector<16x128xf32>,
    %c0_291 = arith.constant 0 : index
    %c0_292 = arith.constant 0 : index
    %512 = vector.load %arg17[%c0_291, %c0_292] : memref<16x128xf32, #tpu.memory_space<vmem>>, vector<16x128xf32>
    %c0_293 = arith.constant 0 : index
    %c0_294 = arith.constant 0 : index
    %513 = vector.load %arg10[%c0_293, %c0_294] : memref<1x128xf32, #tpu.memory_space<vmem>>, vector<1x128xf32>
    %514 = vector.broadcast %513 : vector<1x128xf32> to vector<16x128xf32>
    %515 = arith.addf %512, %514 : vector<16x128xf32>
    %cst_295 = arith.constant 0.000000e+00 : f32
    %516 = vector.broadcast %cst_295 : f32 to vector<16x128xf32>
    %517 = arith.cmpf ogt, %515, %516 : vector<16x128xf32>
    %cst_296 = arith.constant 0.000000e+00 : f32
    %518 = vector.broadcast %cst_296 : f32 to vector<16x128xf32>
    %519 = arith.minimumf %515, %518 : vector<16x128xf32>
    %520 = math.exp %519 : vector<16x128xf32>
    %cst_297 = arith.constant 1.000000e+00 : f32
    %521 = vector.broadcast %cst_297 : f32 to vector<16x128xf32>
    %522 = arith.subf %520, %521 : vector<16x128xf32>
    %cst_298 = arith.constant 1.67326319 : f32
    %523 = vector.broadcast %cst_298 : f32 to vector<16x128xf32>
    %524 = arith.mulf %523, %522 : vector<16x128xf32>
    %525 = arith.select %517, %515, %524 : vector<16x128xi1>, vector<16x128xf32>
    %cst_299 = arith.constant 1.05070102 : f32
    %526 = vector.broadcast %cst_299 : f32 to vector<16x128xf32>
    %527 = arith.mulf %526, %525 : vector<16x128xf32>
    %528 = arith.truncf %527 : vector<16x128xf32> to vector<16x128xbf16>
    %c0_300 = arith.constant 0 : index
    %c0_301 = arith.constant 0 : index
    %529 = vector.load %arg5[%c0_300, %c0_301] : memref<128x128xbf16, #tpu.memory_space<vmem>>, vector<128x128xbf16>
    %cst_302 = arith.constant dense<0.000000e+00> : vector<16x128xf32>
    %530 = tpu.matmul %528, %529, %cst_302 {dimension_numbers = #tpu.dot_dimension_numbers<[1], [0], [0], [1], [0, 0, 1, 1], [], []>} : vector<16x128xbf16>, vector<128x128xbf16>, vector<16x128xf32> -> vector<16x128xf32>
    %c0_303 = arith.constant 0 : index
    %c0_304 = arith.constant 0 : index
    %531 = vector.load %arg11[%c0_303, %c0_304] : memref<1x128xf32, #tpu.memory_space<vmem>>, vector<1x128xf32>
    %532 = vector.broadcast %531 : vector<1x128xf32> to vector<16x128xf32>
    %533 = arith.addf %530, %532 : vector<16x128xf32>
    %c0_305 = arith.constant 0 : index
    %c0_306 = arith.constant 0 : index
    %534 = vector.load %arg15[%c0_305, %c0_306] : memref<16x128xf32, #tpu.memory_space<vmem>>, vector<16x128xf32>
    tpu.vector_store %arg15[%c0_305, %c0_306], %533 {strides = array<i32>} : memref<16x128xf32, #tpu.memory_space<vmem>>, vector<16x128xf32>,
    %535 = arith.truncf %533 : vector<16x128xf32> to vector<16x128xbf16>
    %c0_307 = arith.constant 0 : index
    %c0_308 = arith.constant 0 : index
    %536 = vector.load %arg6[%c0_307, %c0_308] : memref<128x160xbf16, #tpu.memory_space<vmem>>, vector<128x160xbf16>
    %cst_309 = arith.constant dense<0.000000e+00> : vector<16x160xf32>
    %537 = tpu.matmul %535, %536, %cst_309 {dimension_numbers = #tpu.dot_dimension_numbers<[1], [0], [0], [1], [0, 0, 1, 1], [], []>} : vector<16x128xbf16>, vector<128x160xbf16>, vector<16x160xf32> -> vector<16x160xf32>
    %c0_310 = arith.constant 0 : index
    %c0_311 = arith.constant 0 : index
    %538 = vector.load %arg12[%c0_310, %c0_311] : memref<1x160xf32, #tpu.memory_space<vmem>>, vector<1x160xf32>
    %539 = vector.broadcast %538 : vector<1x160xf32> to vector<16x160xf32>
    %540 = arith.addf %537, %539 : vector<16x160xf32>
    %cst_312 = arith.constant 0.000000e+00 : f32
    %541 = vector.broadcast %cst_312 : f32 to vector<16x160xf32>
    %542 = arith.cmpf ogt, %540, %541 : vector<16x160xf32>
    %cst_313 = arith.constant 0.000000e+00 : f32
    %543 = vector.broadcast %cst_313 : f32 to vector<16x160xf32>
    %544 = arith.minimumf %540, %543 : vector<16x160xf32>
    %545 = math.exp %544 : vector<16x160xf32>
    %cst_314 = arith.constant 1.000000e+00 : f32
    %546 = vector.broadcast %cst_314 : f32 to vector<16x160xf32>
    %547 = arith.subf %545, %546 : vector<16x160xf32>
    %cst_315 = arith.constant 1.67326319 : f32
    %548 = vector.broadcast %cst_315 : f32 to vector<16x160xf32>
    %549 = arith.mulf %548, %547 : vector<16x160xf32>
    %550 = arith.select %542, %540, %549 : vector<16x160xi1>, vector<16x160xf32>
    %cst_316 = arith.constant 1.05070102 : f32
    %551 = vector.broadcast %cst_316 : f32 to vector<16x160xf32>
    %552 = arith.mulf %551, %550 : vector<16x160xf32>
    %553 = arith.truncf %552 : vector<16x160xf32> to vector<16x160xbf16>
    %c0_317 = arith.constant 0 : index
    %c0_318 = arith.constant 0 : index
    %554 = vector.load %arg7[%c0_317, %c0_318] : memref<160x784xbf16, #tpu.memory_space<vmem>>, vector<160x784xbf16>
    %cst_319 = arith.constant dense<0.000000e+00> : vector<16x784xf32>
    %555 = tpu.matmul %553, %554, %cst_319 {dimension_numbers = #tpu.dot_dimension_numbers<[1], [0], [0], [1], [0, 0, 1, 1], [], []>} : vector<16x160xbf16>, vector<160x784xbf16>, vector<16x784xf32> -> vector<16x784xf32>
    %c0_320 = arith.constant 0 : index
    %c0_321 = arith.constant 0 : index
    %556 = vector.load %arg13[%c0_320, %c0_321] : memref<1x784xf32, #tpu.memory_space<vmem>>, vector<1x784xf32>
    %557 = vector.broadcast %556 : vector<1x784xf32> to vector<16x784xf32>
    %558 = arith.addf %555, %557 : vector<16x784xf32>
    %cst_322 = arith.constant 5.000000e-01 : f32
    %559 = vector.broadcast %cst_322 : f32 to vector<16x784xf32>
    %560 = arith.mulf %559, %558 : vector<16x784xf32>
    %561 = math.tanh %560 : vector<16x784xf32>
    %cst_323 = arith.constant 5.000000e-01 : f32
    %562 = vector.broadcast %cst_323 : f32 to vector<16x784xf32>
    %563 = arith.mulf %562, %561 : vector<16x784xf32>
    %cst_324 = arith.constant 5.000000e-01 : f32
    %564 = vector.broadcast %cst_324 : f32 to vector<16x784xf32>
    %565 = arith.addf %563, %564 : vector<16x784xf32>
    %c0_325 = arith.constant 0 : index
    %c0_326 = arith.constant 0 : index
    %566 = vector.load %arg14[%c0_325, %c0_326] : memref<16x784xf32, #tpu.memory_space<vmem>>, vector<16x784xf32>
    tpu.vector_store %arg14[%c0_325, %c0_326], %565 {strides = array<i32>} : memref<16x784xf32, #tpu.memory_space<vmem>>, vector<16x784xf32>,
    return
  }
  func.func @transform_0(%arg0: i32) -> (i32, i32, i32) {
    %c0_i32 = arith.constant 0 : i32
    %c0_i32_0 = arith.constant 0 : i32
    %c0_i32_1 = arith.constant 0 : i32
    return %c0_i32, %arg0, %c0_i32_0 : i32, i32, i32
  }
  func.func @transform_1(%arg0: i32) -> (i32, i32) {
    %c0_i32 = arith.constant 0 : i32
    %c0_i32_0 = arith.constant 0 : i32
    %c0_i32_1 = arith.constant 0 : i32
    return %c0_i32, %c0_i32_0 : i32, i32
  }
  func.func @transform_2(%arg0: i32) -> (i32, i32) {
    %c0_i32 = arith.constant 0 : i32
    %c0_i32_0 = arith.constant 0 : i32
    %c0_i32_1 = arith.constant 0 : i32
    return %c0_i32, %c0_i32_0 : i32, i32
  }
  func.func @transform_3(%arg0: i32) -> (i32, i32, i32) {
    %c0_i32 = arith.constant 0 : i32
    %c0_i32_0 = arith.constant 0 : i32
    %c0_i32_1 = arith.constant 0 : i32
    %c0_i32_2 = arith.constant 0 : i32
    return %c0_i32, %c0_i32_0, %c0_i32_1 : i32, i32, i32
  }
  func.func @transform_4(%arg0: i32) -> (i32, i32) {
    %c0_i32 = arith.constant 0 : i32
    %c0_i32_0 = arith.constant 0 : i32
    %c0_i32_1 = arith.constant 0 : i32
    return %c0_i32, %c0_i32_0 : i32, i32
  }
  func.func @transform_5(%arg0: i32) -> (i32, i32) {
    %c0_i32 = arith.constant 0 : i32
    %c0_i32_0 = arith.constant 0 : i32
    %c0_i32_1 = arith.constant 0 : i32
    return %c0_i32, %c0_i32_0 : i32, i32
  }
  func.func @transform_6(%arg0: i32) -> (i32, i32) {
    %c0_i32 = arith.constant 0 : i32
    %c0_i32_0 = arith.constant 0 : i32
    %c0_i32_1 = arith.constant 0 : i32
    return %c0_i32, %c0_i32_0 : i32, i32
  }
  func.func @transform_7(%arg0: i32) -> (i32, i32) {
    %c0_i32 = arith.constant 0 : i32
    %c0_i32_0 = arith.constant 0 : i32
    %c0_i32_1 = arith.constant 0 : i32
    return %c0_i32, %c0_i32_0 : i32, i32
  }
  func.func @transform_8(%arg0: i32) -> (i32, i32) {
    %c0_i32 = arith.constant 0 : i32
    %c0_i32_0 = arith.constant 0 : i32
    %c0_i32_1 = arith.constant 0 : i32
    return %c0_i32, %c0_i32_0 : i32, i32
  }
  func.func @transform_9(%arg0: i32) -> (i32, i32) {
    %c0_i32 = arith.constant 0 : i32
    %c0_i32_0 = arith.constant 0 : i32
    %c0_i32_1 = arith.constant 0 : i32
    return %c0_i32, %c0_i32_0 : i32, i32
  }
  func.func @transform_10(%arg0: i32) -> (i32, i32) {
    %c0_i32 = arith.constant 0 : i32
    %c0_i32_0 = arith.constant 0 : i32
    %c0_i32_1 = arith.constant 0 : i32
    return %c0_i32, %c0_i32_0 : i32, i32
  }
  func.func @transform_11(%arg0: i32) -> (i32, i32) {
    %c0_i32 = arith.constant 0 : i32
    %c0_i32_0 = arith.constant 0 : i32
    %c0_i32_1 = arith.constant 0 : i32
    return %c0_i32, %c0_i32_0 : i32, i32
  }
  func.func @transform_12(%arg0: i32) -> (i32, i32) {
    %c0_i32 = arith.constant 0 : i32
    %c0_i32_0 = arith.constant 0 : i32
    %c0_i32_1 = arith.constant 0 : i32
    return %c0_i32, %c0_i32_0 : i32, i32
  }
  func.func @transform_13(%arg0: i32) -> (i32, i32) {
    %c0_i32 = arith.constant 0 : i32
    %c0_i32_0 = arith.constant 0 : i32
    return %arg0, %c0_i32 : i32, i32
  }
  func.func @transform_14(%arg0: i32) -> (i32, i32) {
    %c0_i32 = arith.constant 0 : i32
    %c0_i32_0 = arith.constant 0 : i32
    return %arg0, %c0_i32 : i32, i32
  }
}

</mosaic_0001>

<llo_original>
// kernel: _lambda_.1
$region0: #{_lambda_.1}
  #allocation0 [shape = 'u32[]', space=smem, size = 0x4, offset = 0x4, fixed_abs, tag = 'smem constant byte address 0x4 - core index']
  #allocation1 [shape = 'u32[72,128]{1,0:T(1,128)}', space=vmem, size = 0x9000, scoped, tag = 'internal scratch']
  #allocation2 [shape = 'bf16[16,1536]{1,0:T(8,128)(2,1)}', space=vmem, size = 0xc000, scoped, tag = 'scratch operand']
  #allocation3 [shape = 'f32[16,128]{1,0:T(8,128)}', space=vmem, size = 0x2000, scoped, tag = 'scratch operand']
  %s0 = inlined_call_operand.vmem [shape: bf16[24,32,140], index: 0, kind: input, shape index: {}]
  %s1 = inlined_call_operand.vmem [shape: bf16[140,256], index: 1, kind: input, shape index: {}]
  %s2 = inlined_call_operand.vmem [shape: bf16[640,256], index: 2, kind: input, shape index: {}]
  %s3 = inlined_call_operand.vmem [shape: bf16[4,128,128], index: 3, kind: input, shape index: {}]
  %s4 = inlined_call_operand.vmem [shape: bf16[128,128], index: 4, kind: input, shape index: {}]
  %s5 = inlined_call_operand.vmem [shape: bf16[128,160], index: 5, kind: input, shape index: {}]
  %s6 = inlined_call_operand.vmem [shape: bf16[160,784], index: 6, kind: input, shape index: {}]
  %s7 = inlined_call_operand.vmem [shape: f32[1,128], index: 7, kind: input, shape index: {}]
  %s8 = inlined_call_operand.vmem [shape: f32[1,128], index: 8, kind: input, shape index: {}]
  %s9 = inlined_call_operand.vmem [shape: f32[1,128], index: 9, kind: input, shape index: {}]
  %s10 = inlined_call_operand.vmem [shape: f32[1,128], index: 10, kind: input, shape index: {}]
  %s11 = inlined_call_operand.vmem [shape: f32[1,160], index: 11, kind: input, shape index: {}]
  %s12 = inlined_call_operand.vmem [shape: f32[1,784], index: 12, kind: input, shape index: {}]
  %s13 = inlined_call_operand.vmem [shape: f32[32,784], index: 13, kind: output, shape index: {0}]
  %s14 = inlined_call_operand.vmem [shape: f32[32,128], index: 14, kind: output, shape index: {1}]
  %15 = xla_tuple %s13, %s14
  %s16 = sld [smem:[#allocation0]]
  $region131: #{_lambda_.1} parent=0
    _
  %s18 = ssub.s32 1, %s16
  %s19 = scalar_select 0, %s18, %s16
  $region1: #{_lambda_.1} parent=0
    #allocation4 [shape = 'u8[393216]{0}', space=vmem, size = 0x60000, scoped, tag = 'input window, operand 0']
    loop: start=0, step=1, limit=4
    $region2: #{_lambda_.1} parent=1 // loop_pre_header
      _
    $region3: #{_lambda_.1} parent=1 // loop_header
      %s21 = sphi 0, %s25
      %p22 = scmp.ge.s32.totalorder %s21, 4
      %s31 = sphi 0, %s33
      %s34 = sphi 0, %s31
      %s35 = sphi 0, %s34
      %s51 = sphi 0, %s35
      %s55 = sphi 0, %s55
      %s57 = sphi 0, %s55
      %s58 = sphi 0, %s57
      %s72 = sphi 0, %s58
      %s76 = sphi 0, %s76
      %s78 = sphi 0, %s76
      %s79 = sphi 0, %s78
      %s93 = sphi 0, %s79
      %s97 = sphi 0, %s97
      %s99 = sphi 0, %s97
      %s100 = sphi 0, %s99
      %s114 = sphi 0, %s100
      %s118 = sphi 0, %s118
      %s120 = sphi 0, %s118
      %s121 = sphi 0, %s120
      %s135 = sphi 0, %s121
      %s139 = sphi 0, %s139
      %s141 = sphi 0, %s139
      %s142 = sphi 0, %s141
      %s156 = sphi 0, %s142
      %s160 = sphi 0, %s160
      %s162 = sphi 0, %s160
      %s163 = sphi 0, %s162
      %s177 = sphi 0, %s163
      %s181 = sphi 0, %s181
      %s183 = sphi 0, %s181
      %s184 = sphi 0, %s183
      %s198 = sphi 0, %s184
      %s202 = sphi 0, %s202
      %s204 = sphi 0, %s202
      %s205 = sphi 0, %s204
      %s219 = sphi 0, %s205
      %s223 = sphi 0, %s223
      %s225 = sphi 0, %s223
      %s226 = sphi 0, %s225
      %s240 = sphi 0, %s226
      %s244 = sphi 0, %s244
      %s246 = sphi 0, %s244
      %s247 = sphi 0, %s246
      %s261 = sphi 0, %s247
      %s265 = sphi 0, %s265
      %s267 = sphi 0, %s265
      %s268 = sphi 0, %s267
      %s282 = sphi 0, %s268
      %s286 = sphi 0, %s286
      %s288 = sphi 0, %s286
      %s289 = sphi 0, %s288
      %s303 = sphi 0, %s289
      %s309 = sphi 0, %s311
      %s312 = sphi 0, %s309
      %s313 = sphi 0, %s312
      %s329 = sphi 0, %s313
      %s335 = sphi 0, %s337
      %s338 = sphi 0, %s335
      %s339 = sphi 0, %s338
      %s355 = sphi 0, %s339
    $region4: #{_lambda_.1} parent=1 // loop_header_branch
      %24 = sbr.rel (%p22) target = $region8
    $region5: #{_lambda_.1} parent=1 // loop_body
      %s26 = ssub.s32 %s21, 1
      %s27 = ssub.s32 %s21, 2
      %s28 = sadd.s32 %s21, 1
      %s29 = ssub.s32 %s21, %s28
      %p30 = scmp.eq.s32.totalorder %s29, 0
      %s32 = sadd.s32 %s31, 1
      %s33 = scalar_select %p30, %s31, %s32
      %p36 = pneg %p30
      %p37 = scmp.eq.s32.totalorder %s21, 1
      %p38 = por %p36, %p37
      %p39 = scmp.ne.s32.totalorder %s31, %s34
      %p40 = scmp.eq.s32.totalorder %s21, 0
      %p41 = por %p39, %p40
      %p42 = scmp.ne.s32.totalorder %s31, %s34
      %p43 = scmp.eq.s32.totalorder %s26, 1
      %p44 = por %p42, %p43
      %p45 = scmp.ne.s32.totalorder %s34, %s35
      %p46 = scmp.eq.s32.totalorder %s26, 0
      %p47 = por %p45, %p46
      %p48 = scmp.ne.s32.totalorder %s34, %s35
      %p49 = scmp.eq.s32.totalorder %s27, 1
      %p50 = por %p48, %p49
      %p52 = scmp.ne.s32.totalorder %s35, %s51
      %p53 = scmp.eq.s32.totalorder %s27, 0
      %p54 = por %p52, %p53
      %s56 = sadd.s32 %s55, 1
      %p59 = scmp.eq.s32.totalorder %s21, 1
      %p60 = scmp.ne.s32.totalorder %s55, %s57
      %p61 = scmp.eq.s32.totalorder %s21, 0
      %p62 = por %p60, %p61
      %p63 = scmp.ne.s32.totalorder %s55, %s57
      %p64 = scmp.eq.s32.totalorder %s26, 1
      %p65 = por %p63, %p64
      %p66 = scmp.ne.s32.totalorder %s57, %s58
      %p67 = scmp.eq.s32.totalorder %s26, 0
      %p68 = por %p66, %p67
      %p69 = scmp.ne.s32.totalorder %s57, %s58
      %p70 = scmp.eq.s32.totalorder %s27, 1
      %p71 = por %p69, %p70
      %p73 = scmp.ne.s32.totalorder %s58, %s72
      %p74 = scmp.eq.s32.totalorder %s27, 0
      %p75 = por %p73, %p74
      %s77 = sadd.s32 %s76, 1
      %p80 = scmp.eq.s32.totalorder %s21, 1
      %p81 = scmp.ne.s32.totalorder %s76, %s78
      %p82 = scmp.eq.s32.totalorder %s21, 0
      %p83 = por %p81, %p82
      %p84 = scmp.ne.s32.totalorder %s76, %s78
      %p85 = scmp.eq.s32.totalorder %s26, 1
      %p86 = por %p84, %p85
      %p87 = scmp.ne.s32.totalorder %s78, %s79
      %p88 = scmp.eq.s32.totalorder %s26, 0
      %p89 = por %p87, %p88
      %p90 = scmp.ne.s32.totalorder %s78, %s79
      %p91 = scmp.eq.s32.totalorder %s27, 1
      %p92 = por %p90, %p91
      %p94 = scmp.ne.s32.totalorder %s79, %s93
      %p95 = scmp.eq.s32.totalorder %s27, 0
      %p96 = por %p94, %p95
      %s98 = sadd.s32 %s97, 1
      %p101 = scmp.eq.s32.totalorder %s21, 1
      %p102 = scmp.ne.s32.totalorder %s97, %s99
      %p103 = scmp.eq.s32.totalorder %s21, 0
      %p104 = por %p102, %p103
      %p105 = scmp.ne.s32.totalorder %s97, %s99
      %p106 = scmp.eq.s32.totalorder %s26, 1
      %p107 = por %p105, %p106
      %p108 = scmp.ne.s32.totalorder %s99, %s100
      %p109 = scmp.eq.s32.totalorder %s26, 0
      %p110 = por %p108, %p109
      %p111 = scmp.ne.s32.totalorder %s99, %s100
      %p112 = scmp.eq.s32.totalorder %s27, 1
      %p113 = por %p111, %p112
      %p115 = scmp.ne.s32.totalorder %s100, %s114
      %p116 = scmp.eq.s32.totalorder %s27, 0
      %p117 = por %p115, %p116
      %s119 = sadd.s32 %s118, 1
      %p122 = scmp.eq.s32.totalorder %s21, 1
      %p123 = scmp.ne.s32.totalorder %s118, %s120
      %p124 = scmp.eq.s32.totalorder %s21, 0
      %p125 = por %p123, %p124
      %p126 = scmp.ne.s32.totalorder %s118, %s120
      %p127 = scmp.eq.s32.totalorder %s26, 1
      %p128 = por %p126, %p127
      %p129 = scmp.ne.s32.totalorder %s120, %s121
      %p130 = scmp.eq.s32.totalorder %s26, 0
      %p131 = por %p129, %p130
      %p132 = scmp.ne.s32.totalorder %s120, %s121
      %p133 = scmp.eq.s32.totalorder %s27, 1
      %p134 = por %p132, %p133
      %p136 = scmp.ne.s32.totalorder %s121, %s135
      %p137 = scmp.eq.s32.totalorder %s27, 0
      %p138 = por %p136, %p137
      %s140 = sadd.s32 %s139, 1
      %p143 = scmp.eq.s32.totalorder %s21, 1
      %p144 = scmp.ne.s32.totalorder %s139, %s141
      %p145 = scmp.eq.s32.totalorder %s21, 0
      %p146 = por %p144, %p145
      %p147 = scmp.ne.s32.totalorder %s139, %s141
      %p148 = scmp.eq.s32.totalorder %s26, 1
      %p149 = por %p147, %p148
      %p150 = scmp.ne.s32.totalorder %s141, %s142
      %p151 = scmp.eq.s32.totalorder %s26, 0
      %p152 = por %p150, %p151
      %p153 = scmp.ne.s32.totalorder %s141, %s142
      %p154 = scmp.eq.s32.totalorder %s27, 1
      %p155 = por %p153, %p154
      %p157 = scmp.ne.s32.totalorder %s142, %s156
      %p158 = scmp.eq.s32.totalorder %s27, 0
      %p159 = por %p157, %p158
      %s161 = sadd.s32 %s160, 1
      %p164 = scmp.eq.s32.totalorder %s21, 1
      %p165 = scmp.ne.s32.totalorder %s160, %s162
      %p166 = scmp.eq.s32.totalorder %s21, 0
      %p167 = por %p165, %p166
      %p168 = scmp.ne.s32.totalorder %s160, %s162
      %p169 = scmp.eq.s32.totalorder %s26, 1
      %p170 = por %p168, %p169
      %p171 = scmp.ne.s32.totalorder %s162, %s163
      %p172 = scmp.eq.s32.totalorder %s26, 0
      %p173 = por %p171, %p172
      %p174 = scmp.ne.s32.totalorder %s162, %s163
      %p175 = scmp.eq.s32.totalorder %s27, 1
      %p176 = por %p174, %p175
      %p178 = scmp.ne.s32.totalorder %s163, %s177
      %p179 = scmp.eq.s32.totalorder %s27, 0
      %p180 = por %p178, %p179
      %s182 = sadd.s32 %s181, 1
      %p185 = scmp.eq.s32.totalorder %s21, 1
      %p186 = scmp.ne.s32.totalorder %s181, %s183
      %p187 = scmp.eq.s32.totalorder %s21, 0
      %p188 = por %p186, %p187
      %p189 = scmp.ne.s32.totalorder %s181, %s183
      %p190 = scmp.eq.s32.totalorder %s26, 1
      %p191 = por %p189, %p190
      %p192 = scmp.ne.s32.totalorder %s183, %s184
      %p193 = scmp.eq.s32.totalorder %s26, 0
      %p194 = por %p192, %p193
      %p195 = scmp.ne.s32.totalorder %s183, %s184
      %p196 = scmp.eq.s32.totalorder %s27, 1
      %p197 = por %p195, %p196
      %p199 = scmp.ne.s32.totalorder %s184, %s198
      %p200 = scmp.eq.s32.totalorder %s27, 0
      %p201 = por %p199, %p200
      %s203 = sadd.s32 %s202, 1
      %p206 = scmp.eq.s32.totalorder %s21, 1
      %p207 = scmp.ne.s32.totalorder %s202, %s204
      %p208 = scmp.eq.s32.totalorder %s21, 0
      %p209 = por %p207, %p208
      %p210 = scmp.ne.s32.totalorder %s202, %s204
      %p211 = scmp.eq.s32.totalorder %s26, 1
      %p212 = por %p210, %p211
      %p213 = scmp.ne.s32.totalorder %s204, %s205
      %p214 = scmp.eq.s32.totalorder %s26, 0
      %p215 = por %p213, %p214
      %p216 = scmp.ne.s32.totalorder %s204, %s205
      %p217 = scmp.eq.s32.totalorder %s27, 1
      %p218 = por %p216, %p217
      %p220 = scmp.ne.s32.totalorder %s205, %s219
      %p221 = scmp.eq.s32.totalorder %s27, 0
      %p222 = por %p220, %p221
      %s224 = sadd.s32 %s223, 1
      %p227 = scmp.eq.s32.totalorder %s21, 1
      %p228 = scmp.ne.s32.totalorder %s223, %s225
      %p229 = scmp.eq.s32.totalorder %s21, 0
      %p230 = por %p228, %p229
      %p231 = scmp.ne.s32.totalorder %s223, %s225
      %p232 = scmp.eq.s32.totalorder %s26, 1
      %p233 = por %p231, %p232
      %p234 = scmp.ne.s32.totalorder %s225, %s226
      %p235 = scmp.eq.s32.totalorder %s26, 0
      %p236 = por %p234, %p235
      %p237 = scmp.ne.s32.totalorder %s225, %s226
      %p238 = scmp.eq.s32.totalorder %s27, 1
      %p239 = por %p237, %p238
      %p241 = scmp.ne.s32.totalorder %s226, %s240
      %p242 = scmp.eq.s32.totalorder %s27, 0
      %p243 = por %p241, %p242
      %s245 = sadd.s32 %s244, 1
      %p248 = scmp.eq.s32.totalorder %s21, 1
      %p249 = scmp.ne.s32.totalorder %s244, %s246
      %p250 = scmp.eq.s32.totalorder %s21, 0
      %p251 = por %p249, %p250
      %p252 = scmp.ne.s32.totalorder %s244, %s246
      %p253 = scmp.eq.s32.totalorder %s26, 1
      %p254 = por %p252, %p253
      %p255 = scmp.ne.s32.totalorder %s246, %s247
      %p256 = scmp.eq.s32.totalorder %s26, 0
      %p257 = por %p255, %p256
      %p258 = scmp.ne.s32.totalorder %s246, %s247
      %p259 = scmp.eq.s32.totalorder %s27, 1
      %p260 = por %p258, %p259
      %p262 = scmp.ne.s32.totalorder %s247, %s261
      %p263 = scmp.eq.s32.totalorder %s27, 0
      %p264 = por %p262, %p263
      %s266 = sadd.s32 %s265, 1
      %p269 = scmp.eq.s32.totalorder %s21, 1
      %p270 = scmp.ne.s32.totalorder %s265, %s267
      %p271 = scmp.eq.s32.totalorder %s21, 0
      %p272 = por %p270, %p271
      %p273 = scmp.ne.s32.totalorder %s265, %s267
      %p274 = scmp.eq.s32.totalorder %s26, 1
      %p275 = por %p273, %p274
      %p276 = scmp.ne.s32.totalorder %s267, %s268
      %p277 = scmp.eq.s32.totalorder %s26, 0
      %p278 = por %p276, %p277
      %p279 = scmp.ne.s32.totalorder %s267, %s268
      %p280 = scmp.eq.s32.totalorder %s27, 1
      %p281 = por %p279, %p280
      %p283 = scmp.ne.s32.totalorder %s268, %s282
      %p284 = scmp.eq.s32.totalorder %s27, 0
      %p285 = por %p283, %p284
      %s287 = sadd.s32 %s286, 1
      %p290 = scmp.eq.s32.totalorder %s21, 1
      %p291 = scmp.ne.s32.totalorder %s286, %s288
      %p292 = scmp.eq.s32.totalorder %s21, 0
      %p293 = por %p291, %p292
      %p294 = scmp.ne.s32.totalorder %s286, %s288
      %p295 = scmp.eq.s32.totalorder %s26, 1
      %p296 = por %p294, %p295
      %p297 = scmp.ne.s32.totalorder %s288, %s289
      %p298 = scmp.eq.s32.totalorder %s26, 0
      %p299 = por %p297, %p298
      %p300 = scmp.ne.s32.totalorder %s288, %s289
      %p301 = scmp.eq.s32.totalorder %s27, 1
      %p302 = por %p300, %p301
      %p304 = scmp.ne.s32.totalorder %s289, %s303
      %p305 = scmp.eq.s32.totalorder %s27, 0
      %p306 = por %p304, %p305
      %s307 = ssub.s32 %s21, %s28
      %p308 = scmp.eq.s32.totalorder %s307, 0
      %s310 = sadd.s32 %s309, 1
      %s311 = scalar_select %p308, %s309, %s310
      %p314 = pneg %p308
      %p315 = scmp.eq.s32.totalorder %s21, 1
      %p316 = por %p314, %p315
      %p317 = scmp.ne.s32.totalorder %s309, %s312
      %p318 = scmp.eq.s32.totalorder %s21, 0
      %p319 = por %p317, %p318
      %p320 = scmp.ne.s32.totalorder %s309, %s312
      %p321 = scmp.eq.s32.totalorder %s26, 1
      %p322 = por %p320, %p321
      %p323 = scmp.ne.s32.totalorder %s312, %s313
      %p324 = scmp.eq.s32.totalorder %s26, 0
      %p325 = por %p323, %p324
      %p326 = scmp.ne.s32.totalorder %s312, %s313
      %p327 = scmp.eq.s32.totalorder %s27, 1
      %p328 = por %p326, %p327
      %p330 = scmp.ne.s32.totalorder %s313, %s329
      %p331 = scmp.eq.s32.totalorder %s27, 0
      %p332 = por %p330, %p331
      %s333 = ssub.s32 %s21, %s28
      %p334 = scmp.eq.s32.totalorder %s333, 0
      %s336 = sadd.s32 %s335, 1
      %s337 = scalar_select %p334, %s335, %s336
      %p340 = pneg %p334
      %p341 = scmp.eq.s32.totalorder %s21, 1
      %p342 = por %p340, %p341
      %p343 = scmp.ne.s32.totalorder %s335, %s338
      %p344 = scmp.eq.s32.totalorder %s21, 0
      %p345 = por %p343, %p344
      %p346 = scmp.ne.s32.totalorder %s335, %s338
      %p347 = scmp.eq.s32.totalorder %s26, 1
      %p348 = por %p346, %p347
      %p349 = scmp.ne.s32.totalorder %s338, %s339
      %p350 = scmp.eq.s32.totalorder %s26, 0
      %p351 = por %p349, %p350
      %p352 = scmp.ne.s32.totalorder %s338, %s339
      %p353 = scmp.eq.s32.totalorder %s27, 1
      %p354 = por %p352, %p353
      %p356 = scmp.ne.s32.totalorder %s339, %s355
      %p357 = scmp.eq.s32.totalorder %s27, 0
      %p358 = por %p356, %p357
      %p359 = scmp.le.s32.totalorder 1, %s21
      %p360 = scmp.lt.s32.totalorder %s21, 3
      %p361 = pnand %p359, %p360
      %p362 = pneg %p361
      // Predicated region
      $region9: #{_lambda_.1} parent=5 // pred_check
        _
      $region10: #{_lambda_.1} parent=5 // pred_check_branch
        %364 = sbr.rel (%p361) target = $region12
      $region11: #{_lambda_.1} parent=5 // pred_region
        %s365 = ssub.s32 %s21, 1
        // Predicated region
        $region13: #{_lambda_.1} parent=11 // pred_check
          %p366 = pneg %p68
        $region14: #{_lambda_.1} parent=11 // pred_check_branch
          %368 = sbr.rel (%p366) target = $region16
        $region15: #{_lambda_.1} parent=11 // pred_region
          _
        $region16: #{_lambda_.1} parent=11 // pred_fallthru
          _
        // Predicated region
        $region17: #{_lambda_.1} parent=11 // pred_check
          %p369 = pneg %p89
        $region18: #{_lambda_.1} parent=11 // pred_check_branch
          %371 = sbr.rel (%p369) target = $region20
        $region19: #{_lambda_.1} parent=11 // pred_region
          _
        $region20: #{_lambda_.1} parent=11 // pred_fallthru
          _
        // Predicated region
        $region21: #{_lambda_.1} parent=11 // pred_check
          %p372 = pneg %p110
        $region22: #{_lambda_.1} parent=11 // pred_check_branch
          %374 = sbr.rel (%p372) target = $region24
        $region23: #{_lambda_.1} parent=11 // pred_region
          _
        $region24: #{_lambda_.1} parent=11 // pred_fallthru
          _
        // Predicated region
        $region25: #{_lambda_.1} parent=11 // pred_check
          %p375 = pneg %p131
        $region26: #{_lambda_.1} parent=11 // pred_check_branch
          %377 = sbr.rel (%p375) target = $region28
        $region27: #{_lambda_.1} parent=11 // pred_region
          _
        $region28: #{_lambda_.1} parent=11 // pred_fallthru
          _
        // Predicated region
        $region29: #{_lambda_.1} parent=11 // pred_check
          %p378 = pneg %p152
        $region30: #{_lambda_.1} parent=11 // pred_check_branch
          %380 = sbr.rel (%p378) target = $region32
        $region31: #{_lambda_.1} parent=11 // pred_region
          _
        $region32: #{_lambda_.1} parent=11 // pred_fallthru
          _
        // Predicated region
        $region33: #{_lambda_.1} parent=11 // pred_check
          %p381 = pneg %p173
        $region34: #{_lambda_.1} parent=11 // pred_check_branch
          %383 = sbr.rel (%p381) target = $region36
        $region35: #{_lambda_.1} parent=11 // pred_region
          _
        $region36: #{_lambda_.1} parent=11 // pred_fallthru
          _
        // Predicated region
        $region37: #{_lambda_.1} parent=11 // pred_check
          %p384 = pneg %p194
        $region38: #{_lambda_.1} parent=11 // pred_check_branch
          %386 = sbr.rel (%p384) target = $region40
        $region39: #{_lambda_.1} parent=11 // pred_region
          _
        $region40: #{_lambda_.1} parent=11 // pred_fallthru
          _
        // Predicated region
        $region41: #{_lambda_.1} parent=11 // pred_check
          %p387 = pneg %p215
        $region42: #{_lambda_.1} parent=11 // pred_check_branch
          %389 = sbr.rel (%p387) target = $region44
        $region43: #{_lambda_.1} parent=11 // pred_region
          _
        $region44: #{_lambda_.1} parent=11 // pred_fallthru
          _
        // Predicated region
        $region45: #{_lambda_.1} parent=11 // pred_check
          %p390 = pneg %p236
        $region46: #{_lambda_.1} parent=11 // pred_check_branch
          %392 = sbr.rel (%p390) target = $region48
        $region47: #{_lambda_.1} parent=11 // pred_region
          _
        $region48: #{_lambda_.1} parent=11 // pred_fallthru
          _
        // Predicated region
        $region49: #{_lambda_.1} parent=11 // pred_check
          %p393 = pneg %p257
        $region50: #{_lambda_.1} parent=11 // pred_check_branch
          %395 = sbr.rel (%p393) target = $region52
        $region51: #{_lambda_.1} parent=11 // pred_region
          _
        $region52: #{_lambda_.1} parent=11 // pred_fallthru
          _
        // Predicated region
        $region53: #{_lambda_.1} parent=11 // pred_check
          %p396 = pneg %p278
        $region54: #{_lambda_.1} parent=11 // pred_check_branch
          %398 = sbr.rel (%p396) target = $region56
        $region55: #{_lambda_.1} parent=11 // pred_region
          _
        $region56: #{_lambda_.1} parent=11 // pred_fallthru
          _
        // Predicated region
        $region57: #{_lambda_.1} parent=11 // pred_check
          %p399 = pneg %p299
        $region58: #{_lambda_.1} parent=11 // pred_check_branch
          %401 = sbr.rel (%p399) target = $region60
        $region59: #{_lambda_.1} parent=11 // pred_region
          _
        $region60: #{_lambda_.1} parent=11 // pred_fallthru
          _
      $region12: #{_lambda_.1} parent=5 // pred_fallthru
        _
      %p402 = scmp.lt.s32.totalorder %s21, 2
      // Predicated region
      $region61: #{_lambda_.1} parent=5 // pred_check
        %p403 = pneg %p402
      $region62: #{_lambda_.1} parent=5 // pred_check_branch
        %405 = sbr.rel (%p403) target = $region64
      $region63: #{_lambda_.1} parent=5 // pred_region
        // Predicated region
        $region65: #{_lambda_.1} parent=63 // pred_check
          %p406 = pneg %p41
        $region66: #{_lambda_.1} parent=63 // pred_check_branch
          %408 = sbr.rel (%p406) target = $region68
        $region67: #{_lambda_.1} parent=63 // pred_region
          %s409 = sand.u32 %s31, 1
          %s410 = sand.u32 %s31, 1
          %s411 = smul.addr %s410, 384
          %s412 = scalar_lea.vmem [#allocation4], %s411
          %s413 = smul.u32 2, %s21
          %s414 = smul.addr %s413, 2
          %s415 = smul.addr %s414, 4
          %s416 = scalar_lea.vmem %s0, %s415
          // Predicated region
          $region69: #{_lambda_.1} parent=67 // pred_check
            _
          $region70: #{_lambda_.1} parent=67 // pred_check_branch
            %418 = sbr.rel (0) target = $region72
          $region71: #{_lambda_.1} parent=67 // pred_region
            // Predicated region
            $region73: #{_lambda_.1} parent=71 // pred_check
              _
            $region74: #{_lambda_.1} parent=71 // pred_check_branch
              %420 = sbr.rel (0) target = $region76
            $region75: #{_lambda_.1} parent=71 // pred_region
              // Predicated region
              $region88: #{_lambda_.1} parent=75 // pred_check
                _
              $region89: #{_lambda_.1} parent=75 // pred_check_branch
                %530 = sbr.rel (0) target = $region91
              $region90: #{_lambda_.1} parent=75 // pred_region
                loop: start=0, step=1, limit=1
                $region92: #{_lambda_.1} parent=90 // loop_pre_header
                  _
                $region93: #{_lambda_.1} parent=90 // loop_header
                  %s532 = sphi 0, %s536
                  %p533 = scmp.ge.s32.totalorder %s532, 1
                  %s537 = sphi %s416, %s416
                  %s538 = sphi %s412, %s412
                $region94: #{_lambda_.1} parent=90 // loop_header_branch
                  %535 = sbr.rel (%p533) target = $region98
                $region95: #{_lambda_.1} parent=90 // loop_body
                  %v539 = vld [vmem:[%s537] sm:$0xff]
                  %540 = vst [vmem:[%s538] sm:$0xff] %v539
                  %v541 = vld [vmem:[%s537 + $0x8] sm:$0xff]
                  %542 = vst [vmem:[%s538 + $0x8] sm:$0xff] %v541
                  %v543 = vld [vmem:[%s537 + $0x20] sm:$0xff]
                  %544 = vst [vmem:[%s538 + $0x10] sm:$0xff] %v543
                  %v545 = vld [vmem:[%s537 + $0x28] sm:$0xff]
                  %546 = vst [vmem:[%s538 + $0x18] sm:$0xff] %v545
                  %v547 = vld [vmem:[%s537 + $0x40] sm:$0xff]
                  %548 = vst [vmem:[%s538 + $0x20] sm:$0xff] %v547
                  %v549 = vld [vmem:[%s537 + $0x48] sm:$0xff]
                  %550 = vst [vmem:[%s538 + $0x28] sm:$0xff] %v549
                  %v551 = vld [vmem:[%s537 + $0x60] sm:$0xff]
                  %552 = vst [vmem:[%s538 + $0x30] sm:$0xff] %v551
                  %v553 = vld [vmem:[%s537 + $0x68] sm:$0xff]
                  %554 = vst [vmem:[%s538 + $0x38] sm:$0xff] %v553
                  %v555 = vld [vmem:[%s537 + $0x80] sm:$0xff]
                  %556 = vst [vmem:[%s538 + $0x40] sm:$0xff] %v555
                  %v557 = vld [vmem:[%s537 + $0x88] sm:$0xff]
                  %558 = vst [vmem:[%s538 + $0x48] sm:$0xff] %v557
                  %v559 = vld [vmem:[%s537 + $0xa0] sm:$0xff]
                  %560 = vst [vmem:[%s538 + $0x50] sm:$0xff] %v559
                  %v561 = vld [vmem:[%s537 + $0xa8] sm:$0xff]
                  %562 = vst [vmem:[%s538 + $0x58] sm:$0xff] %v561
                  %v563 = vld [vmem:[%s537 + $0xc0] sm:$0xff]
                  %564 = vst [vmem:[%s538 + $0x60] sm:$0xff] %v563
                  %v565 = vld [vmem:[%s537 + $0xc8] sm:$0xff]
                  %566 = vst [vmem:[%s538 + $0x68] sm:$0xff] %v565
                  %v567 = vld [vmem:[%s537 + $0xe0] sm:$0xff]
                  %568 = vst [vmem:[%s538 + $0x70] sm:$0xff] %v567
                  %v569 = vld [vmem:[%s537 + $0xe8] sm:$0xff]
                  %570 = vst [vmem:[%s538 + $0x78] sm:$0xff] %v569
                  %v571 = vld [vmem:[%s537 + $0x100] sm:$0xff]
                  %572 = vst [vmem:[%s538 + $0x80] sm:$0xff] %v571
                  %v573 = vld [vmem:[%s537 + $0x108] sm:$0xff]
                  %574 = vst [vmem:[%s538 + $0x88] sm:$0xff] %v573
                  %v575 = vld [vmem:[%s537 + $0x120] sm:$0xff]
                  %576 = vst [vmem:[%s538 + $0x90] sm:$0xff] %v575
                  %v577 = vld [vmem:[%s537 + $0x128] sm:$0xff]
                  %578 = vst [vmem:[%s538 + $0x98] sm:$0xff] %v577
                  %v579 = vld [vmem:[%s537 + $0x140] sm:$0xff]
                  %580 = vst [vmem:[%s538 + $0xa0] sm:$0xff] %v579
                  %v581 = vld [vmem:[%s537 + $0x148] sm:$0xff]
                  %582 = vst [vmem:[%s538 + $0xa8] sm:$0xff] %v581
                  %v583 = vld [vmem:[%s537 + $0x160] sm:$0xff]
                  %584 = vst [vmem:[%s538 + $0xb0] sm:$0xff] %v583
                  %v585 = vld [vmem:[%s537 + $0x168] sm:$0xff]
                  %586 = vst [vmem:[%s538 + $0xb8] sm:$0xff] %v585
                  %v587 = vld [vmem:[%s537 + $0x180] sm:$0xff]
                  %588 = vst [vmem:[%s538 + $0xc0] sm:$0xff] %v587
                  %v589 = vld [vmem:[%s537 + $0x188] sm:$0xff]
                  %590 = vst [vmem:[%s538 + $0xc8] sm:$0xff] %v589
                  %v591 = vld [vmem:[%s537 + $0x1a0] sm:$0xff]
                  %592 = vst [vmem:[%s538 + $0xd0] sm:$0xff] %v591
                  %v593 = vld [vmem:[%s537 + $0x1a8] sm:$0xff]
                  %594 = vst [vmem:[%s538 + $0xd8] sm:$0xff] %v593
                  %v595 = vld [vmem:[%s537 + $0x1c0] sm:$0xff]
                  %596 = vst [vmem:[%s538 + $0xe0] sm:$0xff] %v595
                  %v597 = vld [vmem:[%s537 + $0x1c8] sm:$0xff]
                  %598 = vst [vmem:[%s538 + $0xe8] sm:$0xff] %v597
                  %v599 = vld [vmem:[%s537 + $0x1e0] sm:$0xff]
                  %600 = vst [vmem:[%s538 + $0xf0] sm:$0xff] %v599
                  %v601 = vld [vmem:[%s537 + $0x1e8] sm:$0xff]
                  %602 = vst [vmem:[%s538 + $0xf8] sm:$0xff] %v601
                  %v603 = vld [vmem:[%s537 + $0x200] sm:$0xff]
                  %604 = vst [vmem:[%s538 + $0x100] sm:$0xff] %v603
                  %v605 = vld [vmem:[%s537 + $0x208] sm:$0xff]
                  %606 = vst [vmem:[%s538 + $0x108] sm:$0xff] %v605
                  %v607 = vld [vmem:[%s537 + $0x220] sm:$0xff]
                  %608 = vst [vmem:[%s538 + $0x110] sm:$0xff] %v607
                  %v609 = vld [vmem:[%s537 + $0x228] sm:$0xff]
                  %610 = vst [vmem:[%s538 + $0x118] sm:$0xff] %v609
                  %v611 = vld [vmem:[%s537 + $0x240] sm:$0xff]
                  %612 = vst [vmem:[%s538 + $0x120] sm:$0xff] %v611
                  %v613 = vld [vmem:[%s537 + $0x248] sm:$0xff]
                  %614 = vst [vmem:[%s538 + $0x128] sm:$0xff] %v613
                  %v615 = vld [vmem:[%s537 + $0x260] sm:$0xff]
                  %616 = vst [vmem:[%s538 + $0x130] sm:$0xff] %v615
                  %v617 = vld [vmem:[%s537 + $0x268] sm:$0xff]
                  %618 = vst [vmem:[%s538 + $0x138] sm:$0xff] %v617
                  %v619 = vld [vmem:[%s537 + $0x280] sm:$0xff]
                  %620 = vst [vmem:[%s538 + $0x140] sm:$0xff] %v619
                  %v621 = vld [vmem:[%s537 + $0x288] sm:$0xff]
                  %622 = vst [vmem:[%s538 + $0x148] sm:$0xff] %v621
                  %v623 = vld [vmem:[%s537 + $0x2a0] sm:$0xff]
                  %624 = vst [vmem:[%s538 + $0x150] sm:$0xff] %v623
                  %v625 = vld [vmem:[%s537 + $0x2a8] sm:$0xff]
                  %626 = vst [vmem:[%s538 + $0x158] sm:$0xff] %v625
                  %v627 = vld [vmem:[%s537 + $0x2c0] sm:$0xff]
                  %628 = vst [vmem:[%s538 + $0x160] sm:$0xff] %v627
                  %v629 = vld [vmem:[%s537 + $0x2c8] sm:$0xff]
                  %630 = vst [vmem:[%s538 + $0x168] sm:$0xff] %v629
                  %v631 = vld [vmem:[%s537 + $0x2e0] sm:$0xff]
                  %632 = vst [vmem:[%s538 + $0x170] sm:$0xff] %v631
                  %v633 = vld [vmem:[%s537 + $0x2e8] sm:$0xff]
                  %634 = vst [vmem:[%s538 + $0x178] sm:$0xff] %v633
                $region96: #{_lambda_.1} parent=90 // loop_footer
                  %s536 = sadd.s32 1, %s532
                $region97: #{_lambda_.1} parent=90 // loop_footer_branch
                  %531 = sbr.rel target = $region93
                $region98: #{_lambda_.1} parent=90 // loop_exit
                  _
              $region91: #{_lambda_.1} parent=75 // pred_fallthru
                _
              // Predicated region
              $region99: #{_lambda_.1} parent=75 // pred_check
                _
              $region100: #{_lambda_.1} parent=75 // pred_check_branch
                %636 = sbr.rel target = $region102
              $region101: #{_lambda_.1} parent=75 // pred_region
                _
              $region102: #{_lambda_.1} parent=75 // pred_fallthru
                _
            $region76: #{_lambda_.1} parent=71 // pred_fallthru
              _
            // Predicated region
            $region77: #{_lambda_.1} parent=71 // pred_check
              _
            $region78: #{_lambda_.1} parent=71 // pred_check_branch
              %422 = sbr.rel target = $region80
            $region79: #{_lambda_.1} parent=71 // pred_region
              %s424 = ssub.s32 256, 1
              loop: start=0, step=1, limit=1
              $region81: #{_lambda_.1} parent=79 // loop_pre_header
                _
              $region82: #{_lambda_.1} parent=79 // loop_header
                %s426 = sphi 0, %s430
                %p427 = scmp.ge.s32.totalorder %s426, 1
                %s431 = sphi %s416, %s416
                %s432 = sphi %s412, %s412
              $region83: #{_lambda_.1} parent=79 // loop_header_branch
                %429 = sbr.rel (%p427) target = $region87
              $region84: #{_lambda_.1} parent=79 // loop_body
                %v433 = vld [vmem:[%s431] sm:%s424]
                %434 = vst [vmem:[%s432] sm:%s424] %v433
                %v435 = vld [vmem:[%s431 + $0x8] sm:%s424]
                %436 = vst [vmem:[%s432 + $0x8] sm:%s424] %v435
                %v437 = vld [vmem:[%s431 + $0x20] sm:%s424]
                %438 = vst [vmem:[%s432 + $0x10] sm:%s424] %v437
                %v439 = vld [vmem:[%s431 + $0x28] sm:%s424]
                %440 = vst [vmem:[%s432 + $0x18] sm:%s424] %v439
                %v441 = vld [vmem:[%s431 + $0x40] sm:%s424]
                %442 = vst [vmem:[%s432 + $0x20] sm:%s424] %v441
                %v443 = vld [vmem:[%s431 + $0x48] sm:%s424]
                %444 = vst [vmem:[%s432 + $0x28] sm:%s424] %v443
                %v445 = vld [vmem:[%s431 + $0x60] sm:%s424]
                %446 = vst [vmem:[%s432 + $0x30] sm:%s424] %v445
                %v447 = vld [vmem:[%s431 + $0x68] sm:%s424]
                %448 = vst [vmem:[%s432 + $0x38] sm:%s424] %v447
                %v449 = vld [vmem:[%s431 + $0x80] sm:%s424]
                %450 = vst [vmem:[%s432 + $0x40] sm:%s424] %v449
                %v451 = vld [vmem:[%s431 + $0x88] sm:%s424]
                %452 = vst [vmem:[%s432 + $0x48] sm:%s424] %v451
                %v453 = vld [vmem:[%s431 + $0xa0] sm:%s424]
                %454 = vst [vmem:[%s432 + $0x50] sm:%s424] %v453
                %v455 = vld [vmem:[%s431 + $0xa8] sm:%s424]
                %456 = vst [vmem:[%s432 + $0x58] sm:%s424] %v455
                %v457 = vld [vmem:[%s431 + $0xc0] sm:%s424]
                %458 = vst [vmem:[%s432 + $0x60] sm:%s424] %v457
                %v459 = vld [vmem:[%s431 + $0xc8] sm:%s424]
                %460 = vst [vmem:[%s432 + $0x68] sm:%s424] %v459
                %v461 = vld [vmem:[%s431 + $0xe0] sm:%s424]
                %462 = vst [vmem:[%s432 + $0x70] sm:%s424] %v461
                %v463 = vld [vmem:[%s431 + $0xe8] sm:%s424]
                %464 = vst [vmem:[%s432 + $0x78] sm:%s424] %v463
                %v465 = vld [vmem:[%s431 + $0x100] sm:%s424]
                %466 = vst [vmem:[%s432 + $0x80] sm:%s424] %v465
                %v467 = vld [vmem:[%s431 + $0x108] sm:%s424]
                %468 = vst [vmem:[%s432 + $0x88] sm:%s424] %v467
                %v469 = vld [vmem:[%s431 + $0x120] sm:%s424]
                %470 = vst [vmem:[%s432 + $0x90] sm:%s424] %v469
                %v471 = vld [vmem:[%s431 + $0x128] sm:%s424]
                %472 = vst [vmem:[%s432 + $0x98] sm:%s424] %v471
                %v473 = vld [vmem:[%s431 + $0x140] sm:%s424]
                %474 = vst [vmem:[%s432 + $0xa0] sm:%s424] %v473
                %v475 = vld [vmem:[%s431 + $0x148] sm:%s424]
                %476 = vst [vmem:[%s432 + $0xa8] sm:%s424] %v475
                %v477 = vld [vmem:[%s431 + $0x160] sm:%s424]
                %478 = vst [vmem:[%s432 + $0xb0] sm:%s424] %v477
                %v479 = vld [vmem:[%s431 + $0x168] sm:%s424]
                %480 = vst [vmem:[%s432 + $0xb8] sm:%s424] %v479
                %v481 = vld [vmem:[%s431 + $0x180] sm:%s424]
                %482 = vst [vmem:[%s432 + $0xc0] sm:%s424] %v481
                %v483 = vld [vmem:[%s431 + $0x188] sm:%s424]
                %484 = vst [vmem:[%s432 + $0xc8] sm:%s424] %v483
                %v485 = vld [vmem:[%s431 + $0x1a0] sm:%s424]
                %486 = vst [vmem:[%s432 + $0xd0] sm:%s424] %v485
                %v487 = vld [vmem:[%s431 + $0x1a8] sm:%s424]
                %488 = vst [vmem:[%s432 + $0xd8] sm:%s424] %v487
                %v489 = vld [vmem:[%s431 + $0x1c0] sm:%s424]
                %490 = vst [vmem:[%s432 + $0xe0] sm:%s424] %v489
                %v491 = vld [vmem:[%s431 + $0x1c8] sm:%s424]
                %492 = vst [vmem:[%s432 + $0xe8] sm:%s424] %v491
                %v493 = vld [vmem:[%s431 + $0x1e0] sm:%s424]
                %494 = vst [vmem:[%s432 + $0xf0] sm:%s424] %v493
                %v495 = vld [vmem:[%s431 + $0x1e8] sm:%s424]
                %496 = vst [vmem:[%s432 + $0xf8] sm:%s424] %v495
                %v497 = vld [vmem:[%s431 + $0x200] sm:%s424]
                %498 = vst [vmem:[%s432 + $0x100] sm:%s424] %v497
                %v499 = vld [vmem:[%s431 + $0x208] sm:%s424]
                %500 = vst [vmem:[%s432 + $0x108] sm:%s424] %v499
                %v501 = vld [vmem:[%s431 + $0x220] sm:%s424]
                %502 = vst [vmem:[%s432 + $0x110] sm:%s424] %v501
                %v503 = vld [vmem:[%s431 + $0x228] sm:%s424]
                %504 = vst [vmem:[%s432 + $0x118] sm:%s424] %v503
                %v505 = vld [vmem:[%s431 + $0x240] sm:%s424]
                %506 = vst [vmem:[%s432 + $0x120] sm:%s424] %v505
                %v507 = vld [vmem:[%s431 + $0x248] sm:%s424]
                %508 = vst [vmem:[%s432 + $0x128] sm:%s424] %v507
                %v509 = vld [vmem:[%s431 + $0x260] sm:%s424]
                %510 = vst [vmem:[%s432 + $0x130] sm:%s424] %v509
                %v511 = vld [vmem:[%s431 + $0x268] sm:%s424]
                %512 = vst [vmem:[%s432 + $0x138] sm:%s424] %v511
                %v513 = vld [vmem:[%s431 + $0x280] sm:%s424]
                %514 = vst [vmem:[%s432 + $0x140] sm:%s424] %v513
                %v515 = vld [vmem:[%s431 + $0x288] sm:%s424]
                %516 = vst [vmem:[%s432 + $0x148] sm:%s424] %v515
                %v517 = vld [vmem:[%s431 + $0x2a0] sm:%s424]
                %518 = vst [vmem:[%s432 + $0x150] sm:%s424] %v517
                %v519 = vld [vmem:[%s431 + $0x2a8] sm:%s424]
                %520 = vst [vmem:[%s432 + $0x158] sm:%s424] %v519
                %v521 = vld [vmem:[%s431 + $0x2c0] sm:%s424]
                %522 = vst [vmem:[%s432 + $0x160] sm:%s424] %v521
                %v523 = vld [vmem:[%s431 + $0x2c8] sm:%s424]
                %524 = vst [vmem:[%s432 + $0x168] sm:%s424] %v523
                %v525 = vld [vmem:[%s431 + $0x2e0] sm:%s424]
                %526 = vst [vmem:[%s432 + $0x170] sm:%s424] %v525
                %v527 = vld [vmem:[%s431 + $0x2e8] sm:%s424]
                %528 = vst [vmem:[%s432 + $0x178] sm:%s424] %v527
              $region85: #{_lambda_.1} parent=79 // loop_footer
                %s430 = sadd.s32 1, %s426
              $region86: #{_lambda_.1} parent=79 // loop_footer_branch
                %425 = sbr.rel target = $region82
              $region87: #{_lambda_.1} parent=79 // loop_exit
                _
            $region80: #{_lambda_.1} parent=71 // pred_fallthru
              _
          $region72: #{_lambda_.1} parent=67 // pred_fallthru
            _
          %637 = vnop
        $region68: #{_lambda_.1} parent=63 // pred_fallthru
          _
      $region64: #{_lambda_.1} parent=5 // pred_fallthru
        _
      %p638 = scmp.le.s32.totalorder 1, %s21
      %p639 = scmp.lt.s32.totalorder %s21, 3
      %p640 = pnand %p638, %p639
      %p641 = pneg %p640
      // Predicated region
      $region103: #{_lambda_.1} parent=5 // pred_check
        _
      $region104: #{_lambda_.1} parent=5 // pred_check_branch
        %643 = sbr.rel (%p640) target = $region106
      $region105: #{_lambda_.1} parent=5 // pred_region
        %s644 = ssub.s32 %s21, 1
        %s645 = sand.u32 %s34, 1
        %s646 = sand.u32 %s34, 1
        %s647 = smul.addr %s646, 384
        %s648 = scalar_lea.vmem [#allocation4], %s647
        // Predicated region
        $region107: #{_lambda_.1} parent=105 // pred_check
          %p649 = pneg %p47
        $region108: #{_lambda_.1} parent=105 // pred_check_branch
          %651 = sbr.rel (%p649) target = $region110
        $region109: #{_lambda_.1} parent=105 // pred_region
          _
        $region110: #{_lambda_.1} parent=105 // pred_fallthru
          _
        %s652 = sand.u32 %s34, 1
        %s653 = sand.u32 %s34, 1
        %s654 = smul.addr %s653, 384
        %s655 = scalar_lea.vmem [#allocation4], %s654
        %p656 = pneg %p47
        %p657 = pneg %p44
        %p658 = pneg %p68
        %p659 = pneg %p65
        %p660 = pneg %p89
        %p661 = pneg %p86
        %p662 = pneg %p110
        %p663 = pneg %p107
        %p664 = pneg %p131
        %p665 = pneg %p128
        %p666 = pneg %p152
        %p667 = pneg %p149
        %p668 = pneg %p173
        %p669 = pneg %p170
        %p670 = pneg %p194
        %p671 = pneg %p191
        %p672 = pneg %p215
        %p673 = pneg %p212
        %p674 = pneg %p236
        %p675 = pneg %p233
        %p676 = pneg %p257
        %p677 = pneg %p254
        %p678 = pneg %p278
        %p679 = pneg %p275
        %p680 = pneg %p299
        %p681 = pneg %p296
        %p682 = pneg %p325
        %p683 = pneg %p322
        %s684 = smul.u32 2, %s26
        %p685 = scmp.lt.s32.totalorder %s684, 3
        %s686 = scalar_select %p685, %s684, 3
        %s687 = smul.addr %s686, 7
        %s688 = smul.addr %s687, 8
        %s689 = scalar_lea.vmem %s13, %s688
        %p690 = pneg %p351
        %p691 = pneg %p348
        %s692 = smul.u32 2, %s26
        %p693 = scmp.lt.s32.totalorder %s692, 3
        %s694 = scalar_select %p693, %s692, 3
        %s695 = smul.addr %s694, 8
        %s696 = scalar_lea.vmem %s14, %s695
        %s697 = smul.u32 2, %s26
        %s698 = smul.u32 2, %s26
        %p699 = scmp.lt.s32.totalorder %s698, 3
        %s700 = scalar_select %p699, %s698, 3
        %s701 = smul.addr %s700, 7
        %s702 = smul.addr %s701, 8
        %s703 = scalar_lea.vmem %s13, %s702
        %s704 = smul.u32 2, %s26
        %s705 = smul.u32 2, %s26
        %p706 = scmp.lt.s32.totalorder %s705, 3
        %s707 = scalar_select %p706, %s705, 3
        %s708 = smul.addr %s707, 8
        %s709 = scalar_lea.vmem %s14, %s708
        %s710 = smul.u32 2, %s26
        %v712 = vld [vmem:[%s7] sm:$0x1]
        %v713 = vld [vmem:[%s648] sm:$0xff]
        %v714 = vld [vmem:[%s648 + $0x8] sm:$0xff]
        %v715 = vld [vmem:[%s1] sm:$0xff]
        %v716 = vld [vmem:[%s1 + $0x8] sm:$0xff]
        %v717 = vld [vmem:[%s1 + $0x10] sm:$0xff]
        %v718 = vld [vmem:[%s1 + $0x18] sm:$0xff]
        %v719 = vld [vmem:[%s1 + $0x20] sm:$0xff]
        %v720 = vld [vmem:[%s1 + $0x28] sm:$0xff]
        %v721 = vld [vmem:[%s1 + $0x30] sm:$0xff]
        %v722 = vld [vmem:[%s1 + $0x38] sm:$0xff]
        %v723 = vld [vmem:[%s1 + $0x40] sm:$0xff]
        %v724 = vld [vmem:[%s1 + $0x48] sm:$0xff]
        %v725 = vld [vmem:[%s1 + $0x50] sm:$0xff]
        %v726 = vld [vmem:[%s1 + $0x58] sm:$0xff]
        %v727 = vld [vmem:[%s1 + $0x60] sm:$0xff]
        %v728 = vld [vmem:[%s1 + $0x68] sm:$0xff]
        %v729 = vld [vmem:[%s1 + $0x70] sm:$0xff]
        %v730 = vld [vmem:[%s1 + $0x78] sm:$0xff]
        %v731 = vld [vmem:[%s1 + $0x80] sm:$0xff]
        %v732 = vld [vmem:[%s1 + $0x88] sm:$0x33]
        %v735 = vunpack.c.l.b16 %v713
        %v736 = vunpack.c.h.b16 %v713
        %v737 = vunpack.c.l.b16 %v714
        %v738 = vunpack.c.h.b16 %v714
        %v739 = vpack.c.b16 %v737, %v735
        %v740 = vpack.c.b16 %v738, %v736
        %v760 = vunpack.c.l.b16 %v715
        %v761 = vunpack.c.h.b16 %v715
        %v762 = vunpack.c.l.b16 %v716
        %v763 = vunpack.c.h.b16 %v716
        %v764 = vunpack.c.l.b16 %v717
        %v765 = vunpack.c.h.b16 %v717
        %v766 = vunpack.c.l.b16 %v718
        %v767 = vunpack.c.h.b16 %v718
        %v768 = vunpack.c.l.b16 %v719
        %v769 = vunpack.c.h.b16 %v719
        %v770 = vunpack.c.l.b16 %v720
        %v771 = vunpack.c.h.b16 %v720
        %v772 = vunpack.c.l.b16 %v721
        %v773 = vunpack.c.h.b16 %v721
        %v774 = vunpack.c.l.b16 %v722
        %v775 = vunpack.c.h.b16 %v722
        %v776 = vunpack.c.l.b16 %v723
        %v777 = vunpack.c.h.b16 %v723
        %v778 = vunpack.c.l.b16 %v724
        %v779 = vunpack.c.h.b16 %v724
        %v780 = vunpack.c.l.b16 %v725
        %v781 = vunpack.c.h.b16 %v725
        %v782 = vunpack.c.l.b16 %v726
        %v783 = vunpack.c.h.b16 %v726
        %v784 = vunpack.c.l.b16 %v727
        %v785 = vunpack.c.h.b16 %v727
        %v786 = vunpack.c.l.b16 %v728
        %v787 = vunpack.c.h.b16 %v728
        %v788 = vunpack.c.l.b16 %v729
        %v789 = vunpack.c.h.b16 %v729
        %v790 = vunpack.c.l.b16 %v730
        %v791 = vunpack.c.h.b16 %v730
        %v792 = vunpack.c.l.b16 %v731
        %v793 = vunpack.c.h.b16 %v731
        %v794 = vunpack.c.l.b16 %v732
        %v795 = vunpack.c.h.b16 %v732
        %v796 = vpack.c.b16 %v762, %v760
        %v797 = vpack.c.b16 %v763, %v761
        %v798 = vpack.c.b16 %v766, %v764
        %v799 = vpack.c.b16 %v767, %v765
        %v800 = vpack.c.b16 %v770, %v768
        %v801 = vpack.c.b16 %v771, %v769
        %v802 = vpack.c.b16 %v774, %v772
        %v803 = vpack.c.b16 %v775, %v773
        %v804 = vpack.c.b16 %v778, %v776
        %v805 = vpack.c.b16 %v779, %v777
        %v806 = vpack.c.b16 %v782, %v780
        %v807 = vpack.c.b16 %v783, %v781
        %v808 = vpack.c.b16 %v786, %v784
        %v809 = vpack.c.b16 %v787, %v785
        %v810 = vpack.c.b16 %v790, %v788
        %v811 = vpack.c.b16 %v791, %v789
        %v812 = vpack.c.b16 %v794, %v792
        %v813 = vpack.c.b16 %v795, %v793
        %vm830 = vcmask 97280
        %v832 = vsel %vm830, %v740, 0
        %vm834 = vcmask 1045504
        %v836 = vsel %vm834, %v812, 0
        %v839 = vsel %vm834, %v813, 0
        %841 = vmatpush.bf16.msra.mxu0 %v810
        %842 = vmatpush.bf16.msra.mxu0 %v808
        %843 = vmatpush.bf16.msra.mxu0 %v806
        %844 = vmatpush.bf16.msra.mxu0 %v804
        %845 = vmatpush.bf16.msra.mxu0 %v802
        %846 = vmatpush.bf16.msra.mxu0 %v800
        %847 = vmatpush.bf16.msra.mxu0 %v798
        %848 = vmatpush.bf16.msra.mxu0 %v796
        %849 = vmatmul.bf16.gmra.mxu0 %v739
        %v850 = vpop.f32.mrf.mxu0
        %v851 = vadd.f32 0.0, %v850
        %v852 = vpop.f32.mrf.mxu0
        %v853 = vadd.f32 0.0, %v852
        %854 = vdwg.mxu0
        %855 = vmatpush.bf16.msra.mxu0 0
        %856 = vmatpush.bf16.msra.mxu0 0
        %857 = vmatpush.bf16.msra.mxu0 0
        %858 = vmatpush.bf16.msra.mxu0 0
        %859 = vmatpush.bf16.msra.mxu0 0
        %860 = vmatpush.bf16.msra.mxu0 0
        %861 = vmatpush.bf16.msra.mxu0 0
        %862 = vmatpush.bf16.msra.mxu0 %v836
        %863 = vmatmul.bf16.gmra.mxu0 %v832
        %v864 = vpop.f32.mrf.mxu0
        %v865 = vadd.f32 %v851, %v864
        %v866 = vpop.f32.mrf.mxu0
        %v867 = vadd.f32 %v853, %v866
        %868 = vdwg.mxu0
        %869 = vmatpush.bf16.msra.mxu0 %v811
        %870 = vmatpush.bf16.msra.mxu0 %v809
        %871 = vmatpush.bf16.msra.mxu0 %v807
        %872 = vmatpush.bf16.msra.mxu0 %v805
        %873 = vmatpush.bf16.msra.mxu0 %v803
        %874 = vmatpush.bf16.msra.mxu0 %v801
        %875 = vmatpush.bf16.msra.mxu0 %v799
        %876 = vmatpush.bf16.msra.mxu0 %v797
        %877 = vmatmul.bf16.gmra.mxu0 %v739
        %v878 = vpop.f32.mrf.mxu0
        %v879 = vadd.f32 0.0, %v878
        %v880 = vpop.f32.mrf.mxu0
        %v881 = vadd.f32 0.0, %v880
        %882 = vdwg.mxu0
        %883 = vmatpush.bf16.msra.mxu0 0
        %884 = vmatpush.bf16.msra.mxu0 0
        %885 = vmatpush.bf16.msra.mxu0 0
        %886 = vmatpush.bf16.msra.mxu0 0
        %887 = vmatpush.bf16.msra.mxu0 0
        %888 = vmatpush.bf16.msra.mxu0 0
        %889 = vmatpush.bf16.msra.mxu0 0
        %890 = vmatpush.bf16.msra.mxu0 %v839
        %891 = vmatmul.bf16.gmra.mxu0 %v832
        %v892 = vpop.f32.mrf.mxu0
        %v893 = vadd.f32 %v879, %v892
        %v894 = vpop.f32.mrf.mxu0
        %v895 = vadd.f32 %v881, %v894
        %896 = vdwg.mxu0
        %v897 = vmax.f32 %v865, %v893
        %v898 = vmax.f32 %v867, %v895
        %s899 = scalar_lea.vmem %s648, 16 [#allocation4]
        %v900 = vld [vmem:[%s899] sm:$0xff]
        %v901 = vld [vmem:[%s899 + $0x8] sm:$0xff]
        %v904 = vunpack.c.l.b16 %v900
        %v905 = vunpack.c.h.b16 %v900
        %v906 = vunpack.c.l.b16 %v901
        %v907 = vunpack.c.h.b16 %v901
        %v908 = vpack.c.b16 %v906, %v904
        %v909 = vpack.c.b16 %v907, %v905
        %v912 = vsel %vm830, %v909, 0
        %914 = vmatpush.bf16.msra.mxu0 %v810
        %915 = vmatpush.bf16.msra.mxu0 %v808
        %916 = vmatpush.bf16.msra.mxu0 %v806
        %917 = vmatpush.bf16.msra.mxu0 %v804
        %918 = vmatpush.bf16.msra.mxu0 %v802
        %919 = vmatpush.bf16.msra.mxu0 %v800
        %920 = vmatpush.bf16.msra.mxu0 %v798
        %921 = vmatpush.bf16.msra.mxu0 %v796
        %922 = vmatmul.bf16.gmra.mxu0 %v908
        %v923 = vpop.f32.mrf.mxu0
        %v924 = vadd.f32 0.0, %v923
        %v925 = vpop.f32.mrf.mxu0
        %v926 = vadd.f32 0.0, %v925
        %927 = vdwg.mxu0
        %928 = vmatpush.bf16.msra.mxu0 0
        %929 = vmatpush.bf16.msra.mxu0 0
        %930 = vmatpush.bf16.msra.mxu0 0
        %931 = vmatpush.bf16.msra.mxu0 0
        %932 = vmatpush.bf16.msra.mxu0 0
        %933 = vmatpush.bf16.msra.mxu0 0
        %934 = vmatpush.bf16.msra.mxu0 0
        %935 = vmatpush.bf16.msra.mxu0 %v836
        %936 = vmatmul.bf16.gmra.mxu0 %v912
        %v937 = vpop.f32.mrf.mxu0
        %v938 = vadd.f32 %v924, %v937
        %v939 = vpop.f32.mrf.mxu0
        %v940 = vadd.f32 %v926, %v939
        %941 = vdwg.mxu0
        %942 = vmatpush.bf16.msra.mxu0 %v811
        %943 = vmatpush.bf16.msra.mxu0 %v809
        %944 = vmatpush.bf16.msra.mxu0 %v807
        %945 = vmatpush.bf16.msra.mxu0 %v805
        %946 = vmatpush.bf16.msra.mxu0 %v803
        %947 = vmatpush.bf16.msra.mxu0 %v801
        %948 = vmatpush.bf16.msra.mxu0 %v799
        %949 = vmatpush.bf16.msra.mxu0 %v797
        %950 = vmatmul.bf16.gmra.mxu0 %v908
        %v951 = vpop.f32.mrf.mxu0
        %v952 = vadd.f32 0.0, %v951
        %v953 = vpop.f32.mrf.mxu0
        %v954 = vadd.f32 0.0, %v953
        %955 = vdwg.mxu0
        %956 = vmatpush.bf16.msra.mxu0 0
        %957 = vmatpush.bf16.msra.mxu0 0
        %958 = vmatpush.bf16.msra.mxu0 0
        %959 = vmatpush.bf16.msra.mxu0 0
        %960 = vmatpush.bf16.msra.mxu0 0
        %961 = vmatpush.bf16.msra.mxu0 0
        %962 = vmatpush.bf16.msra.mxu0 0
        %963 = vmatpush.bf16.msra.mxu0 %v839
        %964 = vmatmul.bf16.gmra.mxu0 %v912
        %v965 = vpop.f32.mrf.mxu0
        %v966 = vadd.f32 %v952, %v965
        %v967 = vpop.f32.mrf.mxu0
        %v968 = vadd.f32 %v954, %v967
        %969 = vdwg.mxu0
        %v970 = vmax.f32 %v938, %v966
        %v971 = vmax.f32 %v940, %v968
        %v972 = vmax.f32 %v897, %v970
        %v973 = vmax.f32 %v898, %v971
        %v975 = vperm.slane %v712, 0
        %v977 = vadd.f32 %v972, %v975
        %v978 = vadd.f32 %v973, %v975
        %vm979 = vcmp.gt.f32.partialorder %v977, 0.0
        %vm980 = vcmp.gt.f32.partialorder %v978, 0.0
        %v981 = vmin.f32 %v977, 0.0
        %v982 = vmin.f32 %v978, 0.0
        %v983 = vmul.f32 %v981, 1.442695
        %v984 = vpow.pop %v983
        %v985 = vmul.f32 %v982, 1.442695
        %v986 = vpow.pop %v985
        %v987 = vsub.f32 %v984, 1.0
        %v988 = vsub.f32 %v986, 1.0
        %v989 = vmul.f32 %v987, 1.6732632
        %v990 = vmul.f32 %v988, 1.6732632
        %v991 = vsel %vm979, %v977, %v989
        %v992 = vsel %vm980, %v978, %v990
        %v993 = vmul.f32 %v991, 1.050701
        %v994 = vmul.f32 %v992, 1.050701
        %v995 = vpack.c.bf16 %v993, %v993
        %v996 = vpack.c.bf16 %v994, %v994
        %997 = vst [vmem:[#allocation2] sm:$0xf] %v995
        %998 = vst [vmem:[#allocation2 + $0x30] sm:$0xf] %v996
        %s999 = scalar_lea.vmem %s648, 32 [#allocation4]
        %v1000 = vld [vmem:[%s999] sm:$0xff]
        %v1001 = vld [vmem:[%s999 + $0x8] sm:$0xff]
        %v1002 = vld [vmem:[%s1] sm:$0xff]
        %v1003 = vld [vmem:[%s1 + $0x8] sm:$0xff]
        %v1004 = vld [vmem:[%s1 + $0x10] sm:$0xff]
        %v1005 = vld [vmem:[%s1 + $0x18] sm:$0xff]
        %v1006 = vld [vmem:[%s1 + $0x20] sm:$0xff]
        %v1007 = vld [vmem:[%s1 + $0x28] sm:$0xff]
        %v1008 = vld [vmem:[%s1 + $0x30] sm:$0xff]
        %v1009 = vld [vmem:[%s1 + $0x38] sm:$0xff]
        %v1010 = vld [vmem:[%s1 + $0x40] sm:$0xff]
        %v1011 = vld [vmem:[%s1 + $0x48] sm:$0xff]
        %v1012 = vld [vmem:[%s1 + $0x50] sm:$0xff]
        %v1013 = vld [vmem:[%s1 + $0x58] sm:$0xff]
        %v1014 = vld [vmem:[%s1 + $0x60] sm:$0xff]
        %v1015 = vld [vmem:[%s1 + $0x68] sm:$0xff]
        %v1016 = vld [vmem:[%s1 + $0x70] sm:$0xff]
        %v1017 = vld [vmem:[%s1 + $0x78] sm:$0xff]
        %v1018 = vld [vmem:[%s1 + $0x80] sm:$0xff]
        %v1019 = vld [vmem:[%s1 + $0x88] sm:$0x33]
        %v1022 = vunpack.c.l.b16 %v1000
        %v1023 = vunpack.c.h.b16 %v1000
        %v1024 = vunpack.c.l.b16 %v1001
        %v1025 = vunpack.c.h.b16 %v1001
        %v1026 = vpack.c.b16 %v1024, %v1022
        %v1027 = vpack.c.b16 %v1025, %v1023
        %v1047 = vunpack.c.l.b16 %v1002
        %v1048 = vunpack.c.h.b16 %v1002
        %v1049 = vunpack.c.l.b16 %v1003
        %v1050 = vunpack.c.h.b16 %v1003
        %v1051 = vunpack.c.l.b16 %v1004
        %v1052 = vunpack.c.h.b16 %v1004
        %v1053 = vunpack.c.l.b16 %v1005
        %v1054 = vunpack.c.h.b16 %v1005
        %v1055 = vunpack.c.l.b16 %v1006
        %v1056 = vunpack.c.h.b16 %v1006
        %v1057 = vunpack.c.l.b16 %v1007
        %v1058 = vunpack.c.h.b16 %v1007
        %v1059 = vunpack.c.l.b16 %v1008
        %v1060 = vunpack.c.h.b16 %v1008
        %v1061 = vunpack.c.l.b16 %v1009
        %v1062 = vunpack.c.h.b16 %v1009
        %v1063 = vunpack.c.l.b16 %v1010
        %v1064 = vunpack.c.h.b16 %v1010
        %v1065 = vunpack.c.l.b16 %v1011
        %v1066 = vunpack.c.h.b16 %v1011
        %v1067 = vunpack.c.l.b16 %v1012
        %v1068 = vunpack.c.h.b16 %v1012
        %v1069 = vunpack.c.l.b16 %v1013
        %v1070 = vunpack.c.h.b16 %v1013
        %v1071 = vunpack.c.l.b16 %v1014
        %v1072 = vunpack.c.h.b16 %v1014
        %v1073 = vunpack.c.l.b16 %v1015
        %v1074 = vunpack.c.h.b16 %v1015
        %v1075 = vunpack.c.l.b16 %v1016
        %v1076 = vunpack.c.h.b16 %v1016
        %v1077 = vunpack.c.l.b16 %v1017
        %v1078 = vunpack.c.h.b16 %v1017
        %v1079 = vunpack.c.l.b16 %v1018
        %v1080 = vunpack.c.h.b16 %v1018
        %v1081 = vunpack.c.l.b16 %v1019
        %v1082 = vunpack.c.h.b16 %v1019
        %v1083 = vpack.c.b16 %v1049, %v1047
        %v1084 = vpack.c.b16 %v1050, %v1048
        %v1085 = vpack.c.b16 %v1053, %v1051
        %v1086 = vpack.c.b16 %v1054, %v1052
        %v1087 = vpack.c.b16 %v1057, %v1055
        %v1088 = vpack.c.b16 %v1058, %v1056
        %v1089 = vpack.c.b16 %v1061, %v1059
        %v1090 = vpack.c.b16 %v1062, %v1060
        %v1091 = vpack.c.b16 %v1065, %v1063
        %v1092 = vpack.c.b16 %v1066, %v1064
        %v1093 = vpack.c.b16 %v1069, %v1067
        %v1094 = vpack.c.b16 %v1070, %v1068
        %v1095 = vpack.c.b16 %v1073, %v1071
        %v1096 = vpack.c.b16 %v1074, %v1072
        %v1097 = vpack.c.b16 %v1077, %v1075
        %v1098 = vpack.c.b16 %v1078, %v1076
        %v1099 = vpack.c.b16 %v1081, %v1079
        %v1100 = vpack.c.b16 %v1082, %v1080
        %v1118 = vsel %vm830, %v1027, 0
        %v1121 = vsel %vm834, %v1099, 0
        %v1124 = vsel %vm834, %v1100, 0
        %1126 = vmatpush.bf16.msra.mxu0 %v1097
        %1127 = vmatpush.bf16.msra.mxu0 %v1095
        %1128 = vmatpush.bf16.msra.mxu0 %v1093
        %1129 = vmatpush.bf16.msra.mxu0 %v1091
        %1130 = vmatpush.bf16.msra.mxu0 %v1089
        %1131 = vmatpush.bf16.msra.mxu0 %v1087
        %1132 = vmatpush.bf16.msra.mxu0 %v1085
        %1133 = vmatpush.bf16.msra.mxu0 %v1083
        %1134 = vmatmul.bf16.gmra.mxu0 %v1026
        %v1135 = vpop.f32.mrf.mxu0
        %v1136 = vadd.f32 0.0, %v1135
        %v1137 = vpop.f32.mrf.mxu0
        %v1138 = vadd.f32 0.0, %v1137
        %1139 = vdwg.mxu0
        %1140 = vmatpush.bf16.msra.mxu0 0
        %1141 = vmatpush.bf16.msra.mxu0 0
        %1142 = vmatpush.bf16.msra.mxu0 0
        %1143 = vmatpush.bf16.msra.mxu0 0
        %1144 = vmatpush.bf16.msra.mxu0 0
        %1145 = vmatpush.bf16.msra.mxu0 0
        %1146 = vmatpush.bf16.msra.mxu0 0
        %1147 = vmatpush.bf16.msra.mxu0 %v1121
        %1148 = vmatmul.bf16.gmra.mxu0 %v1118
        %v1149 = vpop.f32.mrf.mxu0
        %v1150 = vadd.f32 %v1136, %v1149
        %v1151 = vpop.f32.mrf.mxu0
        %v1152 = vadd.f32 %v1138, %v1151
        %1153 = vdwg.mxu0
        %1154 = vmatpush.bf16.msra.mxu0 %v1098
        %1155 = vmatpush.bf16.msra.mxu0 %v1096
        %1156 = vmatpush.bf16.msra.mxu0 %v1094
        %1157 = vmatpush.bf16.msra.mxu0 %v1092
        %1158 = vmatpush.bf16.msra.mxu0 %v1090
        %1159 = vmatpush.bf16.msra.mxu0 %v1088
        %1160 = vmatpush.bf16.msra.mxu0 %v1086
        %1161 = vmatpush.bf16.msra.mxu0 %v1084
        %1162 = vmatmul.bf16.gmra.mxu0 %v1026
        %v1163 = vpop.f32.mrf.mxu0
        %v1164 = vadd.f32 0.0, %v1163
        %v1165 = vpop.f32.mrf.mxu0
        %v1166 = vadd.f32 0.0, %v1165
        %1167 = vdwg.mxu0
        %1168 = vmatpush.bf16.msra.mxu0 0
        %1169 = vmatpush.bf16.msra.mxu0 0
        %1170 = vmatpush.bf16.msra.mxu0 0
        %1171 = vmatpush.bf16.msra.mxu0 0
        %1172 = vmatpush.bf16.msra.mxu0 0
        %1173 = vmatpush.bf16.msra.mxu0 0
        %1174 = vmatpush.bf16.msra.mxu0 0
        %1175 = vmatpush.bf16.msra.mxu0 %v1124
        %1176 = vmatmul.bf16.gmra.mxu0 %v1118
        %v1177 = vpop.f32.mrf.mxu0
        %v1178 = vadd.f32 %v1164, %v1177
        %v1179 = vpop.f32.mrf.mxu0
        %v1180 = vadd.f32 %v1166, %v1179
        %1181 = vdwg.mxu0
        %v1182 = vmax.f32 %v1150, %v1178
        %v1183 = vmax.f32 %v1152, %v1180
        %s1184 = scalar_lea.vmem %s648, 48 [#allocation4]
        %v1185 = vld [vmem:[%s1184] sm:$0xff]
        %v1186 = vld [vmem:[%s1184 + $0x8] sm:$0xff]
        %v1189 = vunpack.c.l.b16 %v1185
        %v1190 = vunpack.c.h.b16 %v1185
        %v1191 = vunpack.c.l.b16 %v1186
        %v1192 = vunpack.c.h.b16 %v1186
        %v1193 = vpack.c.b16 %v1191, %v1189
        %v1194 = vpack.c.b16 %v1192, %v1190
        %v1197 = vsel %vm830, %v1194, 0
        %1199 = vmatpush.bf16.msra.mxu0 %v1097
        %1200 = vmatpush.bf16.msra.mxu0 %v1095
        %1201 = vmatpush.bf16.msra.mxu0 %v1093
        %1202 = vmatpush.bf16.msra.mxu0 %v1091
        %1203 = vmatpush.bf16.msra.mxu0 %v1089
        %1204 = vmatpush.bf16.msra.mxu0 %v1087
        %1205 = vmatpush.bf16.msra.mxu0 %v1085
        %1206 = vmatpush.bf16.msra.mxu0 %v1083
        %1207 = vmatmul.bf16.gmra.mxu0 %v1193
        %v1208 = vpop.f32.mrf.mxu0
        %v1209 = vadd.f32 0.0, %v1208
        %v1210 = vpop.f32.mrf.mxu0
        %v1211 = vadd.f32 0.0, %v1210
        %1212 = vdwg.mxu0
        %1213 = vmatpush.bf16.msra.mxu0 0
        %1214 = vmatpush.bf16.msra.mxu0 0
        %1215 = vmatpush.bf16.msra.mxu0 0
        %1216 = vmatpush.bf16.msra.mxu0 0
        %1217 = vmatpush.bf16.msra.mxu0 0
        %1218 = vmatpush.bf16.msra.mxu0 0
        %1219 = vmatpush.bf16.msra.mxu0 0
        %1220 = vmatpush.bf16.msra.mxu0 %v1121
        %1221 = vmatmul.bf16.gmra.mxu0 %v1197
        %v1222 = vpop.f32.mrf.mxu0
        %v1223 = vadd.f32 %v1209, %v1222
        %v1224 = vpop.f32.mrf.mxu0
        %v1225 = vadd.f32 %v1211, %v1224
        %1226 = vdwg.mxu0
        %1227 = vmatpush.bf16.msra.mxu0 %v1098
        %1228 = vmatpush.bf16.msra.mxu0 %v1096
        %1229 = vmatpush.bf16.msra.mxu0 %v1094
        %1230 = vmatpush.bf16.msra.mxu0 %v1092
        %1231 = vmatpush.bf16.msra.mxu0 %v1090
        %1232 = vmatpush.bf16.msra.mxu0 %v1088
        %1233 = vmatpush.bf16.msra.mxu0 %v1086
        %1234 = vmatpush.bf16.msra.mxu0 %v1084
        %1235 = vmatmul.bf16.gmra.mxu0 %v1193
        %v1236 = vpop.f32.mrf.mxu0
        %v1237 = vadd.f32 0.0, %v1236
        %v1238 = vpop.f32.mrf.mxu0
        %v1239 = vadd.f32 0.0, %v1238
        %1240 = vdwg.mxu0
        %1241 = vmatpush.bf16.msra.mxu0 0
        %1242 = vmatpush.bf16.msra.mxu0 0
        %1243 = vmatpush.bf16.msra.mxu0 0
        %1244 = vmatpush.bf16.msra.mxu0 0
        %1245 = vmatpush.bf16.msra.mxu0 0
        %1246 = vmatpush.bf16.msra.mxu0 0
        %1247 = vmatpush.bf16.msra.mxu0 0
        %1248 = vmatpush.bf16.msra.mxu0 %v1124
        %1249 = vmatmul.bf16.gmra.mxu0 %v1197
        %v1250 = vpop.f32.mrf.mxu0
        %v1251 = vadd.f32 %v1237, %v1250
        %v1252 = vpop.f32.mrf.mxu0
        %v1253 = vadd.f32 %v1239, %v1252
        %1254 = vdwg.mxu0
        %v1255 = vmax.f32 %v1223, %v1251
        %v1256 = vmax.f32 %v1225, %v1253
        %v1257 = vmax.f32 %v1182, %v1255
        %v1258 = vmax.f32 %v1183, %v1256
        %v1259 = vadd.f32 %v1257, %v975
        %v1260 = vadd.f32 %v1258, %v975
        %vm1261 = vcmp.gt.f32.partialorder %v1259, 0.0
        %vm1262 = vcmp.gt.f32.partialorder %v1260, 0.0
        %v1263 = vmin.f32 %v1259, 0.0
        %v1264 = vmin.f32 %v1260, 0.0
        %v1265 = vmul.f32 %v1263, 1.442695
        %v1266 = vpow.pop %v1265
        %v1267 = vmul.f32 %v1264, 1.442695
        %v1268 = vpow.pop %v1267
        %v1269 = vsub.f32 %v1266, 1.0
        %v1270 = vsub.f32 %v1268, 1.0
        %v1271 = vmul.f32 %v1269, 1.6732632
        %v1272 = vmul.f32 %v1270, 1.6732632
        %v1273 = vsel %vm1261, %v1259, %v1271
        %v1274 = vsel %vm1262, %v1260, %v1272
        %v1275 = vmul.f32 %v1273, 1.050701
        %v1276 = vmul.f32 %v1274, 1.050701
        %v1277 = vpack.c.bf16 %v1275, %v1275
        %v1278 = vpack.c.bf16 %v1276, %v1276
        %1279 = vst [vmem:[#allocation2 + $0x4] sm:$0xf] %v1277
        %1280 = vst [vmem:[#allocation2 + $0x34] sm:$0xf] %v1278
        %s1281 = scalar_lea.vmem %s648, 64 [#allocation4]
        %v1282 = vld [vmem:[%s1281] sm:$0xff]
        %v1283 = vld [vmem:[%s1281 + $0x8] sm:$0xff]
        %v1284 = vld [vmem:[%s1] sm:$0xff]
        %v1285 = vld [vmem:[%s1 + $0x8] sm:$0xff]
        %v1286 = vld [vmem:[%s1 + $0x10] sm:$0xff]
        %v1287 = vld [vmem:[%s1 + $0x18] sm:$0xff]
        %v1288 = vld [vmem:[%s1 + $0x20] sm:$0xff]
        %v1289 = vld [vmem:[%s1 + $0x28] sm:$0xff]
        %v1290 = vld [vmem:[%s1 + $0x30] sm:$0xff]
        %v1291 = vld [vmem:[%s1 + $0x38] sm:$0xff]
        %v1292 = vld [vmem:[%s1 + $0x40] sm:$0xff]
        %v1293 = vld [vmem:[%s1 + $0x48] sm:$0xff]
        %v1294 = vld [vmem:[%s1 + $0x50] sm:$0xff]
        %v1295 = vld [vmem:[%s1 + $0x58] sm:$0xff]
        %v1296 = vld [vmem:[%s1 + $0x60] sm:$0xff]
        %v1297 = vld [vmem:[%s1 + $0x68] sm:$0xff]
        %v1298 = vld [vmem:[%s1 + $0x70] sm:$0xff]
        %v1299 = vld [vmem:[%s1 + $0x78] sm:$0xff]
        %v1300 = vld [vmem:[%s1 + $0x80] sm:$0xff]
        %v1301 = vld [vmem:[%s1 + $0x88] sm:$0x33]
        %v1304 = vunpack.c.l.b16 %v1282
        %v1305 = vunpack.c.h.b16 %v1282
        %v1306 = vunpack.c.l.b16 %v1283
        %v1307 = vunpack.c.h.b16 %v1283
        %v1308 = vpack.c.b16 %v1306, %v1304
        %v1309 = vpack.c.b16 %v1307, %v1305
        %v1329 = vunpack.c.l.b16 %v1284
        %v1330 = vunpack.c.h.b16 %v1284
        %v1331 = vunpack.c.l.b16 %v1285
        %v1332 = vunpack.c.h.b16 %v1285
        %v1333 = vunpack.c.l.b16 %v1286
        %v1334 = vunpack.c.h.b16 %v1286
        %v1335 = vunpack.c.l.b16 %v1287
        %v1336 = vunpack.c.h.b16 %v1287
        %v1337 = vunpack.c.l.b16 %v1288
        %v1338 = vunpack.c.h.b16 %v1288
        %v1339 = vunpack.c.l.b16 %v1289
        %v1340 = vunpack.c.h.b16 %v1289
        %v1341 = vunpack.c.l.b16 %v1290
        %v1342 = vunpack.c.h.b16 %v1290
        %v1343 = vunpack.c.l.b16 %v1291
        %v1344 = vunpack.c.h.b16 %v1291
        %v1345 = vunpack.c.l.b16 %v1292
        %v1346 = vunpack.c.h.b16 %v1292
        %v1347 = vunpack.c.l.b16 %v1293
        %v1348 = vunpack.c.h.b16 %v1293
        %v1349 = vunpack.c.l.b16 %v1294
        %v1350 = vunpack.c.h.b16 %v1294
        %v1351 = vunpack.c.l.b16 %v1295
        %v1352 = vunpack.c.h.b16 %v1295
        %v1353 = vunpack.c.l.b16 %v1296
        %v1354 = vunpack.c.h.b16 %v1296
        %v1355 = vunpack.c.l.b16 %v1297
        %v1356 = vunpack.c.h.b16 %v1297
        %v1357 = vunpack.c.l.b16 %v1298
        %v1358 = vunpack.c.h.b16 %v1298
        %v1359 = vunpack.c.l.b16 %v1299
        %v1360 = vunpack.c.h.b16 %v1299
        %v1361 = vunpack.c.l.b16 %v1300
        %v1362 = vunpack.c.h.b16 %v1300
        %v1363 = vunpack.c.l.b16 %v1301
        %v1364 = vunpack.c.h.b16 %v1301
        %v1365 = vpack.c.b16 %v1331, %v1329
        %v1366 = vpack.c.b16 %v1332, %v1330
        %v1367 = vpack.c.b16 %v1335, %v1333
        %v1368 = vpack.c.b16 %v1336, %v1334
        %v1369 = vpack.c.b16 %v1339, %v1337
        %v1370 = vpack.c.b16 %v1340, %v1338
        %v1371 = vpack.c.b16 %v1343, %v1341
        %v1372 = vpack.c.b16 %v1344, %v1342
        %v1373 = vpack.c.b16 %v1347, %v1345
        %v1374 = vpack.c.b16 %v1348, %v1346
        %v1375 = vpack.c.b16 %v1351, %v1349
        %v1376 = vpack.c.b16 %v1352, %v1350
        %v1377 = vpack.c.b16 %v1355, %v1353
        %v1378 = vpack.c.b16 %v1356, %v1354
        %v1379 = vpack.c.b16 %v1359, %v1357
        %v1380 = vpack.c.b16 %v1360, %v1358
        %v1381 = vpack.c.b16 %v1363, %v1361
        %v1382 = vpack.c.b16 %v1364, %v1362
        %v1400 = vsel %vm830, %v1309, 0
        %v1403 = vsel %vm834, %v1381, 0
        %v1406 = vsel %vm834, %v1382, 0
        %1408 = vmatpush.bf16.msra.mxu0 %v1379
        %1409 = vmatpush.bf16.msra.mxu0 %v1377
        %1410 = vmatpush.bf16.msra.mxu0 %v1375
        %1411 = vmatpush.bf16.msra.mxu0 %v1373
        %1412 = vmatpush.bf16.msra.mxu0 %v1371
        %1413 = vmatpush.bf16.msra.mxu0 %v1369
        %1414 = vmatpush.bf16.msra.mxu0 %v1367
        %1415 = vmatpush.bf16.msra.mxu0 %v1365
        %1416 = vmatmul.bf16.gmra.mxu0 %v1308
        %v1417 = vpop.f32.mrf.mxu0
        %v1418 = vadd.f32 0.0, %v1417
        %v1419 = vpop.f32.mrf.mxu0
        %v1420 = vadd.f32 0.0, %v1419
        %1421 = vdwg.mxu0
        %1422 = vmatpush.bf16.msra.mxu0 0
        %1423 = vmatpush.bf16.msra.mxu0 0
        %1424 = vmatpush.bf16.msra.mxu0 0
        %1425 = vmatpush.bf16.msra.mxu0 0
        %1426 = vmatpush.bf16.msra.mxu0 0
        %1427 = vmatpush.bf16.msra.mxu0 0
        %1428 = vmatpush.bf16.msra.mxu0 0
        %1429 = vmatpush.bf16.msra.mxu0 %v1403
        %1430 = vmatmul.bf16.gmra.mxu0 %v1400
        %v1431 = vpop.f32.mrf.mxu0
        %v1432 = vadd.f32 %v1418, %v1431
        %v1433 = vpop.f32.mrf.mxu0
        %v1434 = vadd.f32 %v1420, %v1433
        %1435 = vdwg.mxu0
        %1436 = vmatpush.bf16.msra.mxu0 %v1380
        %1437 = vmatpush.bf16.msra.mxu0 %v1378
        %1438 = vmatpush.bf16.msra.mxu0 %v1376
        %1439 = vmatpush.bf16.msra.mxu0 %v1374
        %1440 = vmatpush.bf16.msra.mxu0 %v1372
        %1441 = vmatpush.bf16.msra.mxu0 %v1370
        %1442 = vmatpush.bf16.msra.mxu0 %v1368
        %1443 = vmatpush.bf16.msra.mxu0 %v1366
        %1444 = vmatmul.bf16.gmra.mxu0 %v1308
        %v1445 = vpop.f32.mrf.mxu0
        %v1446 = vadd.f32 0.0, %v1445
        %v1447 = vpop.f32.mrf.mxu0
        %v1448 = vadd.f32 0.0, %v1447
        %1449 = vdwg.mxu0
        %1450 = vmatpush.bf16.msra.mxu0 0
        %1451 = vmatpush.bf16.msra.mxu0 0
        %1452 = vmatpush.bf16.msra.mxu0 0
        %1453 = vmatpush.bf16.msra.mxu0 0
        %1454 = vmatpush.bf16.msra.mxu0 0
        %1455 = vmatpush.bf16.msra.mxu0 0
        %1456 = vmatpush.bf16.msra.mxu0 0
        %1457 = vmatpush.bf16.msra.mxu0 %v1406
        %1458 = vmatmul.bf16.gmra.mxu0 %v1400
        %v1459 = vpop.f32.mrf.mxu0
        %v1460 = vadd.f32 %v1446, %v1459
        %v1461 = vpop.f32.mrf.mxu0
        %v1462 = vadd.f32 %v1448, %v1461
        %1463 = vdwg.mxu0
        %v1464 = vmax.f32 %v1432, %v1460
        %v1465 = vmax.f32 %v1434, %v1462
        %s1466 = scalar_lea.vmem %s648, 80 [#allocation4]
        %v1467 = vld [vmem:[%s1466] sm:$0xff]
        %v1468 = vld [vmem:[%s1466 + $0x8] sm:$0xff]
        %v1471 = vunpack.c.l.b16 %v1467
        %v1472 = vunpack.c.h.b16 %v1467
        %v1473 = vunpack.c.l.b16 %v1468
        %v1474 = vunpack.c.h.b16 %v1468
        %v1475 = vpack.c.b16 %v1473, %v1471
        %v1476 = vpack.c.b16 %v1474, %v1472
        %v1479 = vsel %vm830, %v1476, 0
        %1481 = vmatpush.bf16.msra.mxu0 %v1379
        %1482 = vmatpush.bf16.msra.mxu0 %v1377
        %1483 = vmatpush.bf16.msra.mxu0 %v1375
        %1484 = vmatpush.bf16.msra.mxu0 %v1373
        %1485 = vmatpush.bf16.msra.mxu0 %v1371
        %1486 = vmatpush.bf16.msra.mxu0 %v1369
        %1487 = vmatpush.bf16.msra.mxu0 %v1367
        %1488 = vmatpush.bf16.msra.mxu0 %v1365
        %1489 = vmatmul.bf16.gmra.mxu0 %v1475
        %v1490 = vpop.f32.mrf.mxu0
        %v1491 = vadd.f32 0.0, %v1490
        %v1492 = vpop.f32.mrf.mxu0
        %v1493 = vadd.f32 0.0, %v1492
        %1494 = vdwg.mxu0
        %1495 = vmatpush.bf16.msra.mxu0 0
        %1496 = vmatpush.bf16.msra.mxu0 0
        %1497 = vmatpush.bf16.msra.mxu0 0
        %1498 = vmatpush.bf16.msra.mxu0 0
        %1499 = vmatpush.bf16.msra.mxu0 0
        %1500 = vmatpush.bf16.msra.mxu0 0
        %1501 = vmatpush.bf16.msra.mxu0 0
        %1502 = vmatpush.bf16.msra.mxu0 %v1403
        %1503 = vmatmul.bf16.gmra.mxu0 %v1479
        %v1504 = vpop.f32.mrf.mxu0
        %v1505 = vadd.f32 %v1491, %v1504
        %v1506 = vpop.f32.mrf.mxu0
        %v1507 = vadd.f32 %v1493, %v1506
        %1508 = vdwg.mxu0
        %1509 = vmatpush.bf16.msra.mxu0 %v1380
        %1510 = vmatpush.bf16.msra.mxu0 %v1378
        %1511 = vmatpush.bf16.msra.mxu0 %v1376
        %1512 = vmatpush.bf16.msra.mxu0 %v1374
        %1513 = vmatpush.bf16.msra.mxu0 %v1372
        %1514 = vmatpush.bf16.msra.mxu0 %v1370
        %1515 = vmatpush.bf16.msra.mxu0 %v1368
        %1516 = vmatpush.bf16.msra.mxu0 %v1366
        %1517 = vmatmul.bf16.gmra.mxu0 %v1475
        %v1518 = vpop.f32.mrf.mxu0
        %v1519 = vadd.f32 0.0, %v1518
        %v1520 = vpop.f32.mrf.mxu0
        %v1521 = vadd.f32 0.0, %v1520
        %1522 = vdwg.mxu0
        %1523 = vmatpush.bf16.msra.mxu0 0
        %1524 = vmatpush.bf16.msra.mxu0 0
        %1525 = vmatpush.bf16.msra.mxu0 0
        %1526 = vmatpush.bf16.msra.mxu0 0
        %1527 = vmatpush.bf16.msra.mxu0 0
        %1528 = vmatpush.bf16.msra.mxu0 0
        %1529 = vmatpush.bf16.msra.mxu0 0
        %1530 = vmatpush.bf16.msra.mxu0 %v1406
        %1531 = vmatmul.bf16.gmra.mxu0 %v1479
        %v1532 = vpop.f32.mrf.mxu0
        %v1533 = vadd.f32 %v1519, %v1532
        %v1534 = vpop.f32.mrf.mxu0
        %v1535 = vadd.f32 %v1521, %v1534
        %1536 = vdwg.mxu0
        %v1537 = vmax.f32 %v1505, %v1533
        %v1538 = vmax.f32 %v1507, %v1535
        %v1539 = vmax.f32 %v1464, %v1537
        %v1540 = vmax.f32 %v1465, %v1538
        %v1541 = vadd.f32 %v1539, %v975
        %v1542 = vadd.f32 %v1540, %v975
        %vm1543 = vcmp.gt.f32.partialorder %v1541, 0.0
        %vm1544 = vcmp.gt.f32.partialorder %v1542, 0.0
        %v1545 = vmin.f32 %v1541, 0.0
        %v1546 = vmin.f32 %v1542, 0.0
        %v1547 = vmul.f32 %v1545, 1.442695
        %v1548 = vpow.pop %v1547
        %v1549 = vmul.f32 %v1546, 1.442695
        %v1550 = vpow.pop %v1549
        %v1551 = vsub.f32 %v1548, 1.0
        %v1552 = vsub.f32 %v1550, 1.0
        %v1553 = vmul.f32 %v1551, 1.6732632
        %v1554 = vmul.f32 %v1552, 1.6732632
        %v1555 = vsel %vm1543, %v1541, %v1553
        %v1556 = vsel %vm1544, %v1542, %v1554
        %v1557 = vmul.f32 %v1555, 1.050701
        %v1558 = vmul.f32 %v1556, 1.050701
        %v1559 = vpack.c.bf16 %v1557, %v1557
        %v1560 = vpack.c.bf16 %v1558, %v1558
        %1561 = vst [vmem:[#allocation2 + $0x8] sm:$0xf] %v1559
        %1562 = vst [vmem:[#allocation2 + $0x38] sm:$0xf] %v1560
        %s1563 = scalar_lea.vmem %s648, 96 [#allocation4]
        %v1564 = vld [vmem:[%s1563] sm:$0xff]
        %v1565 = vld [vmem:[%s1563 + $0x8] sm:$0xff]
        %v1566 = vld [vmem:[%s1] sm:$0xff]
        %v1567 = vld [vmem:[%s1 + $0x8] sm:$0xff]
        %v1568 = vld [vmem:[%s1 + $0x10] sm:$0xff]
        %v1569 = vld [vmem:[%s1 + $0x18] sm:$0xff]
        %v1570 = vld [vmem:[%s1 + $0x20] sm:$0xff]
        %v1571 = vld [vmem:[%s1 + $0x28] sm:$0xff]
        %v1572 = vld [vmem:[%s1 + $0x30] sm:$0xff]
        %v1573 = vld [vmem:[%s1 + $0x38] sm:$0xff]
        %v1574 = vld [vmem:[%s1 + $0x40] sm:$0xff]
        %v1575 = vld [vmem:[%s1 + $0x48] sm:$0xff]
        %v1576 = vld [vmem:[%s1 + $0x50] sm:$0xff]
        %v1577 = vld [vmem:[%s1 + $0x58] sm:$0xff]
        %v1578 = vld [vmem:[%s1 + $0x60] sm:$0xff]
        %v1579 = vld [vmem:[%s1 + $0x68] sm:$0xff]
        %v1580 = vld [vmem:[%s1 + $0x70] sm:$0xff]
        %v1581 = vld [vmem:[%s1 + $0x78] sm:$0xff]
        %v1582 = vld [vmem:[%s1 + $0x80] sm:$0xff]
        %v1583 = vld [vmem:[%s1 + $0x88] sm:$0x33]
        %v1586 = vunpack.c.l.b16 %v1564
        %v1587 = vunpack.c.h.b16 %v1564
        %v1588 = vunpack.c.l.b16 %v1565
        %v1589 = vunpack.c.h.b16 %v1565
        %v1590 = vpack.c.b16 %v1588, %v1586
        %v1591 = vpack.c.b16 %v1589, %v1587
        %v1611 = vunpack.c.l.b16 %v1566
        %v1612 = vunpack.c.h.b16 %v1566
        %v1613 = vunpack.c.l.b16 %v1567
        %v1614 = vunpack.c.h.b16 %v1567
        %v1615 = vunpack.c.l.b16 %v1568
        %v1616 = vunpack.c.h.b16 %v1568
        %v1617 = vunpack.c.l.b16 %v1569
        %v1618 = vunpack.c.h.b16 %v1569
        %v1619 = vunpack.c.l.b16 %v1570
        %v1620 = vunpack.c.h.b16 %v1570
        %v1621 = vunpack.c.l.b16 %v1571
        %v1622 = vunpack.c.h.b16 %v1571
        %v1623 = vunpack.c.l.b16 %v1572
        %v1624 = vunpack.c.h.b16 %v1572
        %v1625 = vunpack.c.l.b16 %v1573
        %v1626 = vunpack.c.h.b16 %v1573
        %v1627 = vunpack.c.l.b16 %v1574
        %v1628 = vunpack.c.h.b16 %v1574
        %v1629 = vunpack.c.l.b16 %v1575
        %v1630 = vunpack.c.h.b16 %v1575
        %v1631 = vunpack.c.l.b16 %v1576
        %v1632 = vunpack.c.h.b16 %v1576
        %v1633 = vunpack.c.l.b16 %v1577
        %v1634 = vunpack.c.h.b16 %v1577
        %v1635 = vunpack.c.l.b16 %v1578
        %v1636 = vunpack.c.h.b16 %v1578
        %v1637 = vunpack.c.l.b16 %v1579
        %v1638 = vunpack.c.h.b16 %v1579
        %v1639 = vunpack.c.l.b16 %v1580
        %v1640 = vunpack.c.h.b16 %v1580
        %v1641 = vunpack.c.l.b16 %v1581
        %v1642 = vunpack.c.h.b16 %v1581
        %v1643 = vunpack.c.l.b16 %v1582
        %v1644 = vunpack.c.h.b16 %v1582
        %v1645 = vunpack.c.l.b16 %v1583
        %v1646 = vunpack.c.h.b16 %v1583
        %v1647 = vpack.c.b16 %v1613, %v1611
        %v1648 = vpack.c.b16 %v1614, %v1612
        %v1649 = vpack.c.b16 %v1617, %v1615
        %v1650 = vpack.c.b16 %v1618, %v1616
        %v1651 = vpack.c.b16 %v1621, %v1619
        %v1652 = vpack.c.b16 %v1622, %v1620
        %v1653 = vpack.c.b16 %v1625, %v1623
        %v1654 = vpack.c.b16 %v1626, %v1624
        %v1655 = vpack.c.b16 %v1629, %v1627
        %v1656 = vpack.c.b16 %v1630, %v1628
        %v1657 = vpack.c.b16 %v1633, %v1631
        %v1658 = vpack.c.b16 %v1634, %v1632
        %v1659 = vpack.c.b16 %v1637, %v1635
        %v1660 = vpack.c.b16 %v1638, %v1636
        %v1661 = vpack.c.b16 %v1641, %v1639
        %v1662 = vpack.c.b16 %v1642, %v1640
        %v1663 = vpack.c.b16 %v1645, %v1643
        %v1664 = vpack.c.b16 %v1646, %v1644
        %v1682 = vsel %vm830, %v1591, 0
        %v1685 = vsel %vm834, %v1663, 0
        %v1688 = vsel %vm834, %v1664, 0
        %1690 = vmatpush.bf16.msra.mxu0 %v1661
        %1691 = vmatpush.bf16.msra.mxu0 %v1659
        %1692 = vmatpush.bf16.msra.mxu0 %v1657
        %1693 = vmatpush.bf16.msra.mxu0 %v1655
        %1694 = vmatpush.bf16.msra.mxu0 %v1653
        %1695 = vmatpush.bf16.msra.mxu0 %v1651
        %1696 = vmatpush.bf16.msra.mxu0 %v1649
        %1697 = vmatpush.bf16.msra.mxu0 %v1647
        %1698 = vmatmul.bf16.gmra.mxu0 %v1590
        %v1699 = vpop.f32.mrf.mxu0
        %v1700 = vadd.f32 0.0, %v1699
        %v1701 = vpop.f32.mrf.mxu0
        %v1702 = vadd.f32 0.0, %v1701
        %1703 = vdwg.mxu0
        %1704 = vmatpush.bf16.msra.mxu0 0
        %1705 = vmatpush.bf16.msra.mxu0 0
        %1706 = vmatpush.bf16.msra.mxu0 0
        %1707 = vmatpush.bf16.msra.mxu0 0
        %1708 = vmatpush.bf16.msra.mxu0 0
        %1709 = vmatpush.bf16.msra.mxu0 0
        %1710 = vmatpush.bf16.msra.mxu0 0
        %1711 = vmatpush.bf16.msra.mxu0 %v1685
        %1712 = vmatmul.bf16.gmra.mxu0 %v1682
        %v1713 = vpop.f32.mrf.mxu0
        %v1714 = vadd.f32 %v1700, %v1713
        %v1715 = vpop.f32.mrf.mxu0
        %v1716 = vadd.f32 %v1702, %v1715
        %1717 = vdwg.mxu0
        %1718 = vmatpush.bf16.msra.mxu0 %v1662
        %1719 = vmatpush.bf16.msra.mxu0 %v1660
        %1720 = vmatpush.bf16.msra.mxu0 %v1658
        %1721 = vmatpush.bf16.msra.mxu0 %v1656
        %1722 = vmatpush.bf16.msra.mxu0 %v1654
        %1723 = vmatpush.bf16.msra.mxu0 %v1652
        %1724 = vmatpush.bf16.msra.mxu0 %v1650
        %1725 = vmatpush.bf16.msra.mxu0 %v1648
        %1726 = vmatmul.bf16.gmra.mxu0 %v1590
        %v1727 = vpop.f32.mrf.mxu0
        %v1728 = vadd.f32 0.0, %v1727
        %v1729 = vpop.f32.mrf.mxu0
        %v1730 = vadd.f32 0.0, %v1729
        %1731 = vdwg.mxu0
        %1732 = vmatpush.bf16.msra.mxu0 0
        %1733 = vmatpush.bf16.msra.mxu0 0
        %1734 = vmatpush.bf16.msra.mxu0 0
        %1735 = vmatpush.bf16.msra.mxu0 0
        %1736 = vmatpush.bf16.msra.mxu0 0
        %1737 = vmatpush.bf16.msra.mxu0 0
        %1738 = vmatpush.bf16.msra.mxu0 0
        %1739 = vmatpush.bf16.msra.mxu0 %v1688
        %1740 = vmatmul.bf16.gmra.mxu0 %v1682
        %v1741 = vpop.f32.mrf.mxu0
        %v1742 = vadd.f32 %v1728, %v1741
        %v1743 = vpop.f32.mrf.mxu0
        %v1744 = vadd.f32 %v1730, %v1743
        %1745 = vdwg.mxu0
        %v1746 = vmax.f32 %v1714, %v1742
        %v1747 = vmax.f32 %v1716, %v1744
        %s1748 = scalar_lea.vmem %s648, 112 [#allocation4]
        %v1749 = vld [vmem:[%s1748] sm:$0xff]
        %v1750 = vld [vmem:[%s1748 + $0x8] sm:$0xff]
        %v1753 = vunpack.c.l.b16 %v1749
        %v1754 = vunpack.c.h.b16 %v1749
        %v1755 = vunpack.c.l.b16 %v1750
        %v1756 = vunpack.c.h.b16 %v1750
        %v1757 = vpack.c.b16 %v1755, %v1753
        %v1758 = vpack.c.b16 %v1756, %v1754
        %v1761 = vsel %vm830, %v1758, 0
        %1763 = vmatpush.bf16.msra.mxu0 %v1661
        %1764 = vmatpush.bf16.msra.mxu0 %v1659
        %1765 = vmatpush.bf16.msra.mxu0 %v1657
        %1766 = vmatpush.bf16.msra.mxu0 %v1655
        %1767 = vmatpush.bf16.msra.mxu0 %v1653
        %1768 = vmatpush.bf16.msra.mxu0 %v1651
        %1769 = vmatpush.bf16.msra.mxu0 %v1649
        %1770 = vmatpush.bf16.msra.mxu0 %v1647
        %1771 = vmatmul.bf16.gmra.mxu0 %v1757
        %v1772 = vpop.f32.mrf.mxu0
        %v1773 = vadd.f32 0.0, %v1772
        %v1774 = vpop.f32.mrf.mxu0
        %v1775 = vadd.f32 0.0, %v1774
        %1776 = vdwg.mxu0
        %1777 = vmatpush.bf16.msra.mxu0 0
        %1778 = vmatpush.bf16.msra.mxu0 0
        %1779 = vmatpush.bf16.msra.mxu0 0
        %1780 = vmatpush.bf16.msra.mxu0 0
        %1781 = vmatpush.bf16.msra.mxu0 0
        %1782 = vmatpush.bf16.msra.mxu0 0
        %1783 = vmatpush.bf16.msra.mxu0 0
        %1784 = vmatpush.bf16.msra.mxu0 %v1685
        %1785 = vmatmul.bf16.gmra.mxu0 %v1761
        %v1786 = vpop.f32.mrf.mxu0
        %v1787 = vadd.f32 %v1773, %v1786
        %v1788 = vpop.f32.mrf.mxu0
        %v1789 = vadd.f32 %v1775, %v1788
        %1790 = vdwg.mxu0
        %1791 = vmatpush.bf16.msra.mxu0 %v1662
        %1792 = vmatpush.bf16.msra.mxu0 %v1660
        %1793 = vmatpush.bf16.msra.mxu0 %v1658
        %1794 = vmatpush.bf16.msra.mxu0 %v1656
        %1795 = vmatpush.bf16.msra.mxu0 %v1654
        %1796 = vmatpush.bf16.msra.mxu0 %v1652
        %1797 = vmatpush.bf16.msra.mxu0 %v1650
        %1798 = vmatpush.bf16.msra.mxu0 %v1648
        %1799 = vmatmul.bf16.gmra.mxu0 %v1757
        %v1800 = vpop.f32.mrf.mxu0
        %v1801 = vadd.f32 0.0, %v1800
        %v1802 = vpop.f32.mrf.mxu0
        %v1803 = vadd.f32 0.0, %v1802
        %1804 = vdwg.mxu0
        %1805 = vmatpush.bf16.msra.mxu0 0
        %1806 = vmatpush.bf16.msra.mxu0 0
        %1807 = vmatpush.bf16.msra.mxu0 0
        %1808 = vmatpush.bf16.msra.mxu0 0
        %1809 = vmatpush.bf16.msra.mxu0 0
        %1810 = vmatpush.bf16.msra.mxu0 0
        %1811 = vmatpush.bf16.msra.mxu0 0
        %1812 = vmatpush.bf16.msra.mxu0 %v1688
        %1813 = vmatmul.bf16.gmra.mxu0 %v1761
        %v1814 = vpop.f32.mrf.mxu0
        %v1815 = vadd.f32 %v1801, %v1814
        %v1816 = vpop.f32.mrf.mxu0
        %v1817 = vadd.f32 %v1803, %v1816
        %1818 = vdwg.mxu0
        %v1819 = vmax.f32 %v1787, %v1815
        %v1820 = vmax.f32 %v1789, %v1817
        %v1821 = vmax.f32 %v1746, %v1819
        %v1822 = vmax.f32 %v1747, %v1820
        %v1823 = vadd.f32 %v1821, %v975
        %v1824 = vadd.f32 %v1822, %v975
        %vm1825 = vcmp.gt.f32.partialorder %v1823, 0.0
        %vm1826 = vcmp.gt.f32.partialorder %v1824, 0.0
        %v1827 = vmin.f32 %v1823, 0.0
        %v1828 = vmin.f32 %v1824, 0.0
        %v1829 = vmul.f32 %v1827, 1.442695
        %v1830 = vpow.pop %v1829
        %v1831 = vmul.f32 %v1828, 1.442695
        %v1832 = vpow.pop %v1831
        %v1833 = vsub.f32 %v1830, 1.0
        %v1834 = vsub.f32 %v1832, 1.0
        %v1835 = vmul.f32 %v1833, 1.6732632
        %v1836 = vmul.f32 %v1834, 1.6732632
        %v1837 = vsel %vm1825, %v1823, %v1835
        %v1838 = vsel %vm1826, %v1824, %v1836
        %v1839 = vmul.f32 %v1837, 1.050701
        %v1840 = vmul.f32 %v1838, 1.050701
        %v1841 = vpack.c.bf16 %v1839, %v1839
        %v1842 = vpack.c.bf16 %v1840, %v1840
        %1843 = vst [vmem:[#allocation2 + $0xc] sm:$0xf] %v1841
        %1844 = vst [vmem:[#allocation2 + $0x3c] sm:$0xf] %v1842
        %s1845 = scalar_lea.vmem %s648, 128 [#allocation4]
        %v1846 = vld [vmem:[%s1845] sm:$0xff]
        %v1847 = vld [vmem:[%s1845 + $0x8] sm:$0xff]
        %v1848 = vld [vmem:[%s1] sm:$0xff]
        %v1849 = vld [vmem:[%s1 + $0x8] sm:$0xff]
        %v1850 = vld [vmem:[%s1 + $0x10] sm:$0xff]
        %v1851 = vld [vmem:[%s1 + $0x18] sm:$0xff]
        %v1852 = vld [vmem:[%s1 + $0x20] sm:$0xff]
        %v1853 = vld [vmem:[%s1 + $0x28] sm:$0xff]
        %v1854 = vld [vmem:[%s1 + $0x30] sm:$0xff]
        %v1855 = vld [vmem:[%s1 + $0x38] sm:$0xff]
        %v1856 = vld [vmem:[%s1 + $0x40] sm:$0xff]
        %v1857 = vld [vmem:[%s1 + $0x48] sm:$0xff]
        %v1858 = vld [vmem:[%s1 + $0x50] sm:$0xff]
        %v1859 = vld [vmem:[%s1 + $0x58] sm:$0xff]
        %v1860 = vld [vmem:[%s1 + $0x60] sm:$0xff]
        %v1861 = vld [vmem:[%s1 + $0x68] sm:$0xff]
        %v1862 = vld [vmem:[%s1 + $0x70] sm:$0xff]
        %v1863 = vld [vmem:[%s1 + $0x78] sm:$0xff]
        %v1864 = vld [vmem:[%s1 + $0x80] sm:$0xff]
        %v1865 = vld [vmem:[%s1 + $0x88] sm:$0x33]
        %v1868 = vunpack.c.l.b16 %v1846
        %v1869 = vunpack.c.h.b16 %v1846
        %v1870 = vunpack.c.l.b16 %v1847
        %v1871 = vunpack.c.h.b16 %v1847
        %v1872 = vpack.c.b16 %v1870, %v1868
        %v1873 = vpack.c.b16 %v1871, %v1869
        %v1893 = vunpack.c.l.b16 %v1848
        %v1894 = vunpack.c.h.b16 %v1848
        %v1895 = vunpack.c.l.b16 %v1849
        %v1896 = vunpack.c.h.b16 %v1849
        %v1897 = vunpack.c.l.b16 %v1850
        %v1898 = vunpack.c.h.b16 %v1850
        %v1899 = vunpack.c.l.b16 %v1851
        %v1900 = vunpack.c.h.b16 %v1851
        %v1901 = vunpack.c.l.b16 %v1852
        %v1902 = vunpack.c.h.b16 %v1852
        %v1903 = vunpack.c.l.b16 %v1853
        %v1904 = vunpack.c.h.b16 %v1853
        %v1905 = vunpack.c.l.b16 %v1854
        %v1906 = vunpack.c.h.b16 %v1854
        %v1907 = vunpack.c.l.b16 %v1855
        %v1908 = vunpack.c.h.b16 %v1855
        %v1909 = vunpack.c.l.b16 %v1856
        %v1910 = vunpack.c.h.b16 %v1856
        %v1911 = vunpack.c.l.b16 %v1857
        %v1912 = vunpack.c.h.b16 %v1857
        %v1913 = vunpack.c.l.b16 %v1858
        %v1914 = vunpack.c.h.b16 %v1858
        %v1915 = vunpack.c.l.b16 %v1859
        %v1916 = vunpack.c.h.b16 %v1859
        %v1917 = vunpack.c.l.b16 %v1860
        %v1918 = vunpack.c.h.b16 %v1860
        %v1919 = vunpack.c.l.b16 %v1861
        %v1920 = vunpack.c.h.b16 %v1861
        %v1921 = vunpack.c.l.b16 %v1862
        %v1922 = vunpack.c.h.b16 %v1862
        %v1923 = vunpack.c.l.b16 %v1863
        %v1924 = vunpack.c.h.b16 %v1863
        %v1925 = vunpack.c.l.b16 %v1864
        %v1926 = vunpack.c.h.b16 %v1864
        %v1927 = vunpack.c.l.b16 %v1865
        %v1928 = vunpack.c.h.b16 %v1865
        %v1929 = vpack.c.b16 %v1895, %v1893
        %v1930 = vpack.c.b16 %v1896, %v1894
        %v1931 = vpack.c.b16 %v1899, %v1897
        %v1932 = vpack.c.b16 %v1900, %v1898
        %v1933 = vpack.c.b16 %v1903, %v1901
        %v1934 = vpack.c.b16 %v1904, %v1902
        %v1935 = vpack.c.b16 %v1907, %v1905
        %v1936 = vpack.c.b16 %v1908, %v1906
        %v1937 = vpack.c.b16 %v1911, %v1909
        %v1938 = vpack.c.b16 %v1912, %v1910
        %v1939 = vpack.c.b16 %v1915, %v1913
        %v1940 = vpack.c.b16 %v1916, %v1914
        %v1941 = vpack.c.b16 %v1919, %v1917
        %v1942 = vpack.c.b16 %v1920, %v1918
        %v1943 = vpack.c.b16 %v1923, %v1921
        %v1944 = vpack.c.b16 %v1924, %v1922
        %v1945 = vpack.c.b16 %v1927, %v1925
        %v1946 = vpack.c.b16 %v1928, %v1926
        %v1964 = vsel %vm830, %v1873, 0
        %v1967 = vsel %vm834, %v1945, 0
        %v1970 = vsel %vm834, %v1946, 0
        %1972 = vmatpush.bf16.msra.mxu0 %v1943
        %1973 = vmatpush.bf16.msra.mxu0 %v1941
        %1974 = vmatpush.bf16.msra.mxu0 %v1939
        %1975 = vmatpush.bf16.msra.mxu0 %v1937
        %1976 = vmatpush.bf16.msra.mxu0 %v1935
        %1977 = vmatpush.bf16.msra.mxu0 %v1933
        %1978 = vmatpush.bf16.msra.mxu0 %v1931
        %1979 = vmatpush.bf16.msra.mxu0 %v1929
        %1980 = vmatmul.bf16.gmra.mxu0 %v1872
        %v1981 = vpop.f32.mrf.mxu0
        %v1982 = vadd.f32 0.0, %v1981
        %v1983 = vpop.f32.mrf.mxu0
        %v1984 = vadd.f32 0.0, %v1983
        %1985 = vdwg.mxu0
        %1986 = vmatpush.bf16.msra.mxu0 0
        %1987 = vmatpush.bf16.msra.mxu0 0
        %1988 = vmatpush.bf16.msra.mxu0 0
        %1989 = vmatpush.bf16.msra.mxu0 0
        %1990 = vmatpush.bf16.msra.mxu0 0
        %1991 = vmatpush.bf16.msra.mxu0 0
        %1992 = vmatpush.bf16.msra.mxu0 0
        %1993 = vmatpush.bf16.msra.mxu0 %v1967
        %1994 = vmatmul.bf16.gmra.mxu0 %v1964
        %v1995 = vpop.f32.mrf.mxu0
        %v1996 = vadd.f32 %v1982, %v1995
        %v1997 = vpop.f32.mrf.mxu0
        %v1998 = vadd.f32 %v1984, %v1997
        %1999 = vdwg.mxu0
        %2000 = vmatpush.bf16.msra.mxu0 %v1944
        %2001 = vmatpush.bf16.msra.mxu0 %v1942
        %2002 = vmatpush.bf16.msra.mxu0 %v1940
        %2003 = vmatpush.bf16.msra.mxu0 %v1938
        %2004 = vmatpush.bf16.msra.mxu0 %v1936
        %2005 = vmatpush.bf16.msra.mxu0 %v1934
        %2006 = vmatpush.bf16.msra.mxu0 %v1932
        %2007 = vmatpush.bf16.msra.mxu0 %v1930
        %2008 = vmatmul.bf16.gmra.mxu0 %v1872
        %v2009 = vpop.f32.mrf.mxu0
        %v2010 = vadd.f32 0.0, %v2009
        %v2011 = vpop.f32.mrf.mxu0
        %v2012 = vadd.f32 0.0, %v2011
        %2013 = vdwg.mxu0
        %2014 = vmatpush.bf16.msra.mxu0 0
        %2015 = vmatpush.bf16.msra.mxu0 0
        %2016 = vmatpush.bf16.msra.mxu0 0
        %2017 = vmatpush.bf16.msra.mxu0 0
        %2018 = vmatpush.bf16.msra.mxu0 0
        %2019 = vmatpush.bf16.msra.mxu0 0
        %2020 = vmatpush.bf16.msra.mxu0 0
        %2021 = vmatpush.bf16.msra.mxu0 %v1970
        %2022 = vmatmul.bf16.gmra.mxu0 %v1964
        %v2023 = vpop.f32.mrf.mxu0
        %v2024 = vadd.f32 %v2010, %v2023
        %v2025 = vpop.f32.mrf.mxu0
        %v2026 = vadd.f32 %v2012, %v2025
        %2027 = vdwg.mxu0
        %v2028 = vmax.f32 %v1996, %v2024
        %v2029 = vmax.f32 %v1998, %v2026
        %s2030 = scalar_lea.vmem %s648, 144 [#allocation4]
        %v2031 = vld [vmem:[%s2030] sm:$0xff]
        %v2032 = vld [vmem:[%s2030 + $0x8] sm:$0xff]
        %v2035 = vunpack.c.l.b16 %v2031
        %v2036 = vunpack.c.h.b16 %v2031
        %v2037 = vunpack.c.l.b16 %v2032
        %v2038 = vunpack.c.h.b16 %v2032
        %v2039 = vpack.c.b16 %v2037, %v2035
        %v2040 = vpack.c.b16 %v2038, %v2036
        %v2043 = vsel %vm830, %v2040, 0
        %2045 = vmatpush.bf16.msra.mxu0 %v1943
        %2046 = vmatpush.bf16.msra.mxu0 %v1941
        %2047 = vmatpush.bf16.msra.mxu0 %v1939
        %2048 = vmatpush.bf16.msra.mxu0 %v1937
        %2049 = vmatpush.bf16.msra.mxu0 %v1935
        %2050 = vmatpush.bf16.msra.mxu0 %v1933
        %2051 = vmatpush.bf16.msra.mxu0 %v1931
        %2052 = vmatpush.bf16.msra.mxu0 %v1929
        %2053 = vmatmul.bf16.gmra.mxu0 %v2039
        %v2054 = vpop.f32.mrf.mxu0
        %v2055 = vadd.f32 0.0, %v2054
        %v2056 = vpop.f32.mrf.mxu0
        %v2057 = vadd.f32 0.0, %v2056
        %2058 = vdwg.mxu0
        %2059 = vmatpush.bf16.msra.mxu0 0
        %2060 = vmatpush.bf16.msra.mxu0 0
        %2061 = vmatpush.bf16.msra.mxu0 0
        %2062 = vmatpush.bf16.msra.mxu0 0
        %2063 = vmatpush.bf16.msra.mxu0 0
        %2064 = vmatpush.bf16.msra.mxu0 0
        %2065 = vmatpush.bf16.msra.mxu0 0
        %2066 = vmatpush.bf16.msra.mxu0 %v1967
        %2067 = vmatmul.bf16.gmra.mxu0 %v2043
        %v2068 = vpop.f32.mrf.mxu0
        %v2069 = vadd.f32 %v2055, %v2068
        %v2070 = vpop.f32.mrf.mxu0
        %v2071 = vadd.f32 %v2057, %v2070
        %2072 = vdwg.mxu0
        %2073 = vmatpush.bf16.msra.mxu0 %v1944
        %2074 = vmatpush.bf16.msra.mxu0 %v1942
        %2075 = vmatpush.bf16.msra.mxu0 %v1940
        %2076 = vmatpush.bf16.msra.mxu0 %v1938
        %2077 = vmatpush.bf16.msra.mxu0 %v1936
        %2078 = vmatpush.bf16.msra.mxu0 %v1934
        %2079 = vmatpush.bf16.msra.mxu0 %v1932
        %2080 = vmatpush.bf16.msra.mxu0 %v1930
        %2081 = vmatmul.bf16.gmra.mxu0 %v2039
        %v2082 = vpop.f32.mrf.mxu0
        %v2083 = vadd.f32 0.0, %v2082
        %v2084 = vpop.f32.mrf.mxu0
        %v2085 = vadd.f32 0.0, %v2084
        %2086 = vdwg.mxu0
        %2087 = vmatpush.bf16.msra.mxu0 0
        %2088 = vmatpush.bf16.msra.mxu0 0
        %2089 = vmatpush.bf16.msra.mxu0 0
        %2090 = vmatpush.bf16.msra.mxu0 0
        %2091 = vmatpush.bf16.msra.mxu0 0
        %2092 = vmatpush.bf16.msra.mxu0 0
        %2093 = vmatpush.bf16.msra.mxu0 0
        %2094 = vmatpush.bf16.msra.mxu0 %v1970
        %2095 = vmatmul.bf16.gmra.mxu0 %v2043
        %v2096 = vpop.f32.mrf.mxu0
        %v2097 = vadd.f32 %v2083, %v2096
        %v2098 = vpop.f32.mrf.mxu0
        %v2099 = vadd.f32 %v2085, %v2098
        %2100 = vdwg.mxu0
        %v2101 = vmax.f32 %v2069, %v2097
        %v2102 = vmax.f32 %v2071, %v2099
        %v2103 = vmax.f32 %v2028, %v2101
        %v2104 = vmax.f32 %v2029, %v2102
        %v2105 = vadd.f32 %v2103, %v975
        %v2106 = vadd.f32 %v2104, %v975
        %vm2107 = vcmp.gt.f32.partialorder %v2105, 0.0
        %vm2108 = vcmp.gt.f32.partialorder %v2106, 0.0
        %v2109 = vmin.f32 %v2105, 0.0
        %v2110 = vmin.f32 %v2106, 0.0
        %v2111 = vmul.f32 %v2109, 1.442695
        %v2112 = vpow.pop %v2111
        %v2113 = vmul.f32 %v2110, 1.442695
        %v2114 = vpow.pop %v2113
        %v2115 = vsub.f32 %v2112, 1.0
        %v2116 = vsub.f32 %v2114, 1.0
        %v2117 = vmul.f32 %v2115, 1.6732632
        %v2118 = vmul.f32 %v2116, 1.6732632
        %v2119 = vsel %vm2107, %v2105, %v2117
        %v2120 = vsel %vm2108, %v2106, %v2118
        %v2121 = vmul.f32 %v2119, 1.050701
        %v2122 = vmul.f32 %v2120, 1.050701
        %v2123 = vpack.c.bf16 %v2121, %v2121
        %v2124 = vpack.c.bf16 %v2122, %v2122
        %2125 = vst [vmem:[#allocation2 + $0x10] sm:$0xf] %v2123
        %2126 = vst [vmem:[#allocation2 + $0x40] sm:$0xf] %v2124
        %s2127 = scalar_lea.vmem %s648, 160 [#allocation4]
        %v2128 = vld [vmem:[%s2127] sm:$0xff]
        %v2129 = vld [vmem:[%s2127 + $0x8] sm:$0xff]
        %v2130 = vld [vmem:[%s1] sm:$0xff]
        %v2131 = vld [vmem:[%s1 + $0x8] sm:$0xff]
        %v2132 = vld [vmem:[%s1 + $0x10] sm:$0xff]
        %v2133 = vld [vmem:[%s1 + $0x18] sm:$0xff]
        %v2134 = vld [vmem:[%s1 + $0x20] sm:$0xff]
        %v2135 = vld [vmem:[%s1 + $0x28] sm:$0xff]
        %v2136 = vld [vmem:[%s1 + $0x30] sm:$0xff]
        %v2137 = vld [vmem:[%s1 + $0x38] sm:$0xff]
        %v2138 = vld [vmem:[%s1 + $0x40] sm:$0xff]
        %v2139 = vld [vmem:[%s1 + $0x48] sm:$0xff]
        %v2140 = vld [vmem:[%s1 + $0x50] sm:$0xff]
        %v2141 = vld [vmem:[%s1 + $0x58] sm:$0xff]
        %v2142 = vld [vmem:[%s1 + $0x60] sm:$0xff]
        %v2143 = vld [vmem:[%s1 + $0x68] sm:$0xff]
        %v2144 = vld [vmem:[%s1 + $0x70] sm:$0xff]
        %v2145 = vld [vmem:[%s1 + $0x78] sm:$0xff]
        %v2146 = vld [vmem:[%s1 + $0x80] sm:$0xff]
        %v2147 = vld [vmem:[%s1 + $0x88] sm:$0x33]
        %v2150 = vunpack.c.l.b16 %v2128
        %v2151 = vunpack.c.h.b16 %v2128
        %v2152 = vunpack.c.l.b16 %v2129
        %v2153 = vunpack.c.h.b16 %v2129
        %v2154 = vpack.c.b16 %v2152, %v2150
        %v2155 = vpack.c.b16 %v2153, %v2151
        %v2175 = vunpack.c.l.b16 %v2130
        %v2176 = vunpack.c.h.b16 %v2130
        %v2177 = vunpack.c.l.b16 %v2131
        %v2178 = vunpack.c.h.b16 %v2131
        %v2179 = vunpack.c.l.b16 %v2132
        %v2180 = vunpack.c.h.b16 %v2132
        %v2181 = vunpack.c.l.b16 %v2133
        %v2182 = vunpack.c.h.b16 %v2133
        %v2183 = vunpack.c.l.b16 %v2134
        %v2184 = vunpack.c.h.b16 %v2134
        %v2185 = vunpack.c.l.b16 %v2135
        %v2186 = vunpack.c.h.b16 %v2135
        %v2187 = vunpack.c.l.b16 %v2136
        %v2188 = vunpack.c.h.b16 %v2136
        %v2189 = vunpack.c.l.b16 %v2137
        %v2190 = vunpack.c.h.b16 %v2137
        %v2191 = vunpack.c.l.b16 %v2138
        %v2192 = vunpack.c.h.b16 %v2138
        %v2193 = vunpack.c.l.b16 %v2139
        %v2194 = vunpack.c.h.b16 %v2139
        %v2195 = vunpack.c.l.b16 %v2140
        %v2196 = vunpack.c.h.b16 %v2140
        %v2197 = vunpack.c.l.b16 %v2141
        %v2198 = vunpack.c.h.b16 %v2141
        %v2199 = vunpack.c.l.b16 %v2142
        %v2200 = vunpack.c.h.b16 %v2142
        %v2201 = vunpack.c.l.b16 %v2143
        %v2202 = vunpack.c.h.b16 %v2143
        %v2203 = vunpack.c.l.b16 %v2144
        %v2204 = vunpack.c.h.b16 %v2144
        %v2205 = vunpack.c.l.b16 %v2145
        %v2206 = vunpack.c.h.b16 %v2145
        %v2207 = vunpack.c.l.b16 %v2146
        %v2208 = vunpack.c.h.b16 %v2146
        %v2209 = vunpack.c.l.b16 %v2147
        %v2210 = vunpack.c.h.b16 %v2147
        %v2211 = vpack.c.b16 %v2177, %v2175
        %v2212 = vpack.c.b16 %v2178, %v2176
        %v2213 = vpack.c.b16 %v2181, %v2179
        %v2214 = vpack.c.b16 %v2182, %v2180
        %v2215 = vpack.c.b16 %v2185, %v2183
        %v2216 = vpack.c.b16 %v2186, %v2184
        %v2217 = vpack.c.b16 %v2189, %v2187
        %v2218 = vpack.c.b16 %v2190, %v2188
        %v2219 = vpack.c.b16 %v2193, %v2191
        %v2220 = vpack.c.b16 %v2194, %v2192
        %v2221 = vpack.c.b16 %v2197, %v2195
        %v2222 = vpack.c.b16 %v2198, %v2196
        %v2223 = vpack.c.b16 %v2201, %v2199
        %v2224 = vpack.c.b16 %v2202, %v2200
        %v2225 = vpack.c.b16 %v2205, %v2203
        %v2226 = vpack.c.b16 %v2206, %v2204
        %v2227 = vpack.c.b16 %v2209, %v2207
        %v2228 = vpack.c.b16 %v2210, %v2208
        %v2246 = vsel %vm830, %v2155, 0
        %v2249 = vsel %vm834, %v2227, 0
        %v2252 = vsel %vm834, %v2228, 0
        %2254 = vmatpush.bf16.msra.mxu0 %v2225
        %2255 = vmatpush.bf16.msra.mxu0 %v2223
        %2256 = vmatpush.bf16.msra.mxu0 %v2221
        %2257 = vmatpush.bf16.msra.mxu0 %v2219
        %2258 = vmatpush.bf16.msra.mxu0 %v2217
        %2259 = vmatpush.bf16.msra.mxu0 %v2215
        %2260 = vmatpush.bf16.msra.mxu0 %v2213
        %2261 = vmatpush.bf16.msra.mxu0 %v2211
        %2262 = vmatmul.bf16.gmra.mxu0 %v2154
        %v2263 = vpop.f32.mrf.mxu0
        %v2264 = vadd.f32 0.0, %v2263
        %v2265 = vpop.f32.mrf.mxu0
        %v2266 = vadd.f32 0.0, %v2265
        %2267 = vdwg.mxu0
        %2268 = vmatpush.bf16.msra.mxu0 0
        %2269 = vmatpush.bf16.msra.mxu0 0
        %2270 = vmatpush.bf16.msra.mxu0 0
        %2271 = vmatpush.bf16.msra.mxu0 0
        %2272 = vmatpush.bf16.msra.mxu0 0
        %2273 = vmatpush.bf16.msra.mxu0 0
        %2274 = vmatpush.bf16.msra.mxu0 0
        %2275 = vmatpush.bf16.msra.mxu0 %v2249
        %2276 = vmatmul.bf16.gmra.mxu0 %v2246
        %v2277 = vpop.f32.mrf.mxu0
        %v2278 = vadd.f32 %v2264, %v2277
        %v2279 = vpop.f32.mrf.mxu0
        %v2280 = vadd.f32 %v2266, %v2279
        %2281 = vdwg.mxu0
        %2282 = vmatpush.bf16.msra.mxu0 %v2226
        %2283 = vmatpush.bf16.msra.mxu0 %v2224
        %2284 = vmatpush.bf16.msra.mxu0 %v2222
        %2285 = vmatpush.bf16.msra.mxu0 %v2220
        %2286 = vmatpush.bf16.msra.mxu0 %v2218
        %2287 = vmatpush.bf16.msra.mxu0 %v2216
        %2288 = vmatpush.bf16.msra.mxu0 %v2214
        %2289 = vmatpush.bf16.msra.mxu0 %v2212
        %2290 = vmatmul.bf16.gmra.mxu0 %v2154
        %v2291 = vpop.f32.mrf.mxu0
        %v2292 = vadd.f32 0.0, %v2291
        %v2293 = vpop.f32.mrf.mxu0
        %v2294 = vadd.f32 0.0, %v2293
        %2295 = vdwg.mxu0
        %2296 = vmatpush.bf16.msra.mxu0 0
        %2297 = vmatpush.bf16.msra.mxu0 0
        %2298 = vmatpush.bf16.msra.mxu0 0
        %2299 = vmatpush.bf16.msra.mxu0 0
        %2300 = vmatpush.bf16.msra.mxu0 0
        %2301 = vmatpush.bf16.msra.mxu0 0
        %2302 = vmatpush.bf16.msra.mxu0 0
        %2303 = vmatpush.bf16.msra.mxu0 %v2252
        %2304 = vmatmul.bf16.gmra.mxu0 %v2246
        %v2305 = vpop.f32.mrf.mxu0
        %v2306 = vadd.f32 %v2292, %v2305
        %v2307 = vpop.f32.mrf.mxu0
        %v2308 = vadd.f32 %v2294, %v2307
        %2309 = vdwg.mxu0
        %v2310 = vmax.f32 %v2278, %v2306
        %v2311 = vmax.f32 %v2280, %v2308
        %s2312 = scalar_lea.vmem %s648, 176 [#allocation4]
        %v2313 = vld [vmem:[%s2312] sm:$0xff]
        %v2314 = vld [vmem:[%s2312 + $0x8] sm:$0xff]
        %v2317 = vunpack.c.l.b16 %v2313
        %v2318 = vunpack.c.h.b16 %v2313
        %v2319 = vunpack.c.l.b16 %v2314
        %v2320 = vunpack.c.h.b16 %v2314
        %v2321 = vpack.c.b16 %v2319, %v2317
        %v2322 = vpack.c.b16 %v2320, %v2318
        %v2325 = vsel %vm830, %v2322, 0
        %2327 = vmatpush.bf16.msra.mxu0 %v2225
        %2328 = vmatpush.bf16.msra.mxu0 %v2223
        %2329 = vmatpush.bf16.msra.mxu0 %v2221
        %2330 = vmatpush.bf16.msra.mxu0 %v2219
        %2331 = vmatpush.bf16.msra.mxu0 %v2217
        %2332 = vmatpush.bf16.msra.mxu0 %v2215
        %2333 = vmatpush.bf16.msra.mxu0 %v2213
        %2334 = vmatpush.bf16.msra.mxu0 %v2211
        %2335 = vmatmul.bf16.gmra.mxu0 %v2321
        %v2336 = vpop.f32.mrf.mxu0
        %v2337 = vadd.f32 0.0, %v2336
        %v2338 = vpop.f32.mrf.mxu0
        %v2339 = vadd.f32 0.0, %v2338
        %2340 = vdwg.mxu0
        %2341 = vmatpush.bf16.msra.mxu0 0
        %2342 = vmatpush.bf16.msra.mxu0 0
        %2343 = vmatpush.bf16.msra.mxu0 0
        %2344 = vmatpush.bf16.msra.mxu0 0
        %2345 = vmatpush.bf16.msra.mxu0 0
        %2346 = vmatpush.bf16.msra.mxu0 0
        %2347 = vmatpush.bf16.msra.mxu0 0
        %2348 = vmatpush.bf16.msra.mxu0 %v2249
        %2349 = vmatmul.bf16.gmra.mxu0 %v2325
        %v2350 = vpop.f32.mrf.mxu0
        %v2351 = vadd.f32 %v2337, %v2350
        %v2352 = vpop.f32.mrf.mxu0
        %v2353 = vadd.f32 %v2339, %v2352
        %2354 = vdwg.mxu0
        %2355 = vmatpush.bf16.msra.mxu0 %v2226
        %2356 = vmatpush.bf16.msra.mxu0 %v2224
        %2357 = vmatpush.bf16.msra.mxu0 %v2222
        %2358 = vmatpush.bf16.msra.mxu0 %v2220
        %2359 = vmatpush.bf16.msra.mxu0 %v2218
        %2360 = vmatpush.bf16.msra.mxu0 %v2216
        %2361 = vmatpush.bf16.msra.mxu0 %v2214
        %2362 = vmatpush.bf16.msra.mxu0 %v2212
        %2363 = vmatmul.bf16.gmra.mxu0 %v2321
        %v2364 = vpop.f32.mrf.mxu0
        %v2365 = vadd.f32 0.0, %v2364
        %v2366 = vpop.f32.mrf.mxu0
        %v2367 = vadd.f32 0.0, %v2366
        %2368 = vdwg.mxu0
        %2369 = vmatpush.bf16.msra.mxu0 0
        %2370 = vmatpush.bf16.msra.mxu0 0
        %2371 = vmatpush.bf16.msra.mxu0 0
        %2372 = vmatpush.bf16.msra.mxu0 0
        %2373 = vmatpush.bf16.msra.mxu0 0
        %2374 = vmatpush.bf16.msra.mxu0 0
        %2375 = vmatpush.bf16.msra.mxu0 0
        %2376 = vmatpush.bf16.msra.mxu0 %v2252
        %2377 = vmatmul.bf16.gmra.mxu0 %v2325
        %v2378 = vpop.f32.mrf.mxu0
        %v2379 = vadd.f32 %v2365, %v2378
        %v2380 = vpop.f32.mrf.mxu0
        %v2381 = vadd.f32 %v2367, %v2380
        %2382 = vdwg.mxu0
        %v2383 = vmax.f32 %v2351, %v2379
        %v2384 = vmax.f32 %v2353, %v2381
        %v2385 = vmax.f32 %v2310, %v2383
        %v2386 = vmax.f32 %v2311, %v2384
        %v2387 = vadd.f32 %v2385, %v975
        %v2388 = vadd.f32 %v2386, %v975
        %vm2389 = vcmp.gt.f32.partialorder %v2387, 0.0
        %vm2390 = vcmp.gt.f32.partialorder %v2388, 0.0
        %v2391 = vmin.f32 %v2387, 0.0
        %v2392 = vmin.f32 %v2388, 0.0
        %v2393 = vmul.f32 %v2391, 1.442695
        %v2394 = vpow.pop %v2393
        %v2395 = vmul.f32 %v2392, 1.442695
        %v2396 = vpow.pop %v2395
        %v2397 = vsub.f32 %v2394, 1.0
        %v2398 = vsub.f32 %v2396, 1.0
        %v2399 = vmul.f32 %v2397, 1.6732632
        %v2400 = vmul.f32 %v2398, 1.6732632
        %v2401 = vsel %vm2389, %v2387, %v2399
        %v2402 = vsel %vm2390, %v2388, %v2400
        %v2403 = vmul.f32 %v2401, 1.050701
        %v2404 = vmul.f32 %v2402, 1.050701
        %v2405 = vpack.c.bf16 %v2403, %v2403
        %v2406 = vpack.c.bf16 %v2404, %v2404
        %2407 = vst [vmem:[#allocation2 + $0x14] sm:$0xf] %v2405
        %2408 = vst [vmem:[#allocation2 + $0x44] sm:$0xf] %v2406
        %s2409 = scalar_lea.vmem %s648, 192 [#allocation4]
        %v2410 = vld [vmem:[%s2409] sm:$0xff]
        %v2411 = vld [vmem:[%s2409 + $0x8] sm:$0xff]
        %v2412 = vld [vmem:[%s1] sm:$0xff]
        %v2413 = vld [vmem:[%s1 + $0x8] sm:$0xff]
        %v2414 = vld [vmem:[%s1 + $0x10] sm:$0xff]
        %v2415 = vld [vmem:[%s1 + $0x18] sm:$0xff]
        %v2416 = vld [vmem:[%s1 + $0x20] sm:$0xff]
        %v2417 = vld [vmem:[%s1 + $0x28] sm:$0xff]
        %v2418 = vld [vmem:[%s1 + $0x30] sm:$0xff]
        %v2419 = vld [vmem:[%s1 + $0x38] sm:$0xff]
        %v2420 = vld [vmem:[%s1 + $0x40] sm:$0xff]
        %v2421 = vld [vmem:[%s1 + $0x48] sm:$0xff]
        %v2422 = vld [vmem:[%s1 + $0x50] sm:$0xff]
        %v2423 = vld [vmem:[%s1 + $0x58] sm:$0xff]
        %v2424 = vld [vmem:[%s1 + $0x60] sm:$0xff]
        %v2425 = vld [vmem:[%s1 + $0x68] sm:$0xff]
        %v2426 = vld [vmem:[%s1 + $0x70] sm:$0xff]
        %v2427 = vld [vmem:[%s1 + $0x78] sm:$0xff]
        %v2428 = vld [vmem:[%s1 + $0x80] sm:$0xff]
        %v2429 = vld [vmem:[%s1 + $0x88] sm:$0x33]
        %v2432 = vunpack.c.l.b16 %v2410
        %v2433 = vunpack.c.h.b16 %v2410
        %v2434 = vunpack.c.l.b16 %v2411
        %v2435 = vunpack.c.h.b16 %v2411
        %v2436 = vpack.c.b16 %v2434, %v2432
        %v2437 = vpack.c.b16 %v2435, %v2433
        %v2457 = vunpack.c.l.b16 %v2412
        %v2458 = vunpack.c.h.b16 %v2412
        %v2459 = vunpack.c.l.b16 %v2413
        %v2460 = vunpack.c.h.b16 %v2413
        %v2461 = vunpack.c.l.b16 %v2414
        %v2462 = vunpack.c.h.b16 %v2414
        %v2463 = vunpack.c.l.b16 %v2415
        %v2464 = vunpack.c.h.b16 %v2415
        %v2465 = vunpack.c.l.b16 %v2416
        %v2466 = vunpack.c.h.b16 %v2416
        %v2467 = vunpack.c.l.b16 %v2417
        %v2468 = vunpack.c.h.b16 %v2417
        %v2469 = vunpack.c.l.b16 %v2418
        %v2470 = vunpack.c.h.b16 %v2418
        %v2471 = vunpack.c.l.b16 %v2419
        %v2472 = vunpack.c.h.b16 %v2419
        %v2473 = vunpack.c.l.b16 %v2420
        %v2474 = vunpack.c.h.b16 %v2420
        %v2475 = vunpack.c.l.b16 %v2421
        %v2476 = vunpack.c.h.b16 %v2421
        %v2477 = vunpack.c.l.b16 %v2422
        %v2478 = vunpack.c.h.b16 %v2422
        %v2479 = vunpack.c.l.b16 %v2423
        %v2480 = vunpack.c.h.b16 %v2423
        %v2481 = vunpack.c.l.b16 %v2424
        %v2482 = vunpack.c.h.b16 %v2424
        %v2483 = vunpack.c.l.b16 %v2425
        %v2484 = vunpack.c.h.b16 %v2425
        %v2485 = vunpack.c.l.b16 %v2426
        %v2486 = vunpack.c.h.b16 %v2426
        %v2487 = vunpack.c.l.b16 %v2427
        %v2488 = vunpack.c.h.b16 %v2427
        %v2489 = vunpack.c.l.b16 %v2428
        %v2490 = vunpack.c.h.b16 %v2428
        %v2491 = vunpack.c.l.b16 %v2429
        %v2492 = vunpack.c.h.b16 %v2429
        %v2493 = vpack.c.b16 %v2459, %v2457
        %v2494 = vpack.c.b16 %v2460, %v2458
        %v2495 = vpack.c.b16 %v2463, %v2461
        %v2496 = vpack.c.b16 %v2464, %v2462
        %v2497 = vpack.c.b16 %v2467, %v2465
        %v2498 = vpack.c.b16 %v2468, %v2466
        %v2499 = vpack.c.b16 %v2471, %v2469
        %v2500 = vpack.c.b16 %v2472, %v2470
        %v2501 = vpack.c.b16 %v2475, %v2473
        %v2502 = vpack.c.b16 %v2476, %v2474
        %v2503 = vpack.c.b16 %v2479, %v2477
        %v2504 = vpack.c.b16 %v2480, %v2478
        %v2505 = vpack.c.b16 %v2483, %v2481
        %v2506 = vpack.c.b16 %v2484, %v2482
        %v2507 = vpack.c.b16 %v2487, %v2485
        %v2508 = vpack.c.b16 %v2488, %v2486
        %v2509 = vpack.c.b16 %v2491, %v2489
        %v2510 = vpack.c.b16 %v2492, %v2490
        %v2528 = vsel %vm830, %v2437, 0
        %v2531 = vsel %vm834, %v2509, 0
        %v2534 = vsel %vm834, %v2510, 0
        %2536 = vmatpush.bf16.msra.mxu0 %v2507
        %2537 = vmatpush.bf16.msra.mxu0 %v2505
        %2538 = vmatpush.bf16.msra.mxu0 %v2503
        %2539 = vmatpush.bf16.msra.mxu0 %v2501
        %2540 = vmatpush.bf16.msra.mxu0 %v2499
        %2541 = vmatpush.bf16.msra.mxu0 %v2497
        %2542 = vmatpush.bf16.msra.mxu0 %v2495
        %2543 = vmatpush.bf16.msra.mxu0 %v2493
        %2544 = vmatmul.bf16.gmra.mxu0 %v2436
        %v2545 = vpop.f32.mrf.mxu0
        %v2546 = vadd.f32 0.0, %v2545
        %v2547 = vpop.f32.mrf.mxu0
        %v2548 = vadd.f32 0.0, %v2547
        %2549 = vdwg.mxu0
        %2550 = vmatpush.bf16.msra.mxu0 0
        %2551 = vmatpush.bf16.msra.mxu0 0
        %2552 = vmatpush.bf16.msra.mxu0 0
        %2553 = vmatpush.bf16.msra.mxu0 0
        %2554 = vmatpush.bf16.msra.mxu0 0
        %2555 = vmatpush.bf16.msra.mxu0 0
        %2556 = vmatpush.bf16.msra.mxu0 0
        %2557 = vmatpush.bf16.msra.mxu0 %v2531
        %2558 = vmatmul.bf16.gmra.mxu0 %v2528
        %v2559 = vpop.f32.mrf.mxu0
        %v2560 = vadd.f32 %v2546, %v2559
        %v2561 = vpop.f32.mrf.mxu0
        %v2562 = vadd.f32 %v2548, %v2561
        %2563 = vdwg.mxu0
        %2564 = vmatpush.bf16.msra.mxu0 %v2508
        %2565 = vmatpush.bf16.msra.mxu0 %v2506
        %2566 = vmatpush.bf16.msra.mxu0 %v2504
        %2567 = vmatpush.bf16.msra.mxu0 %v2502
        %2568 = vmatpush.bf16.msra.mxu0 %v2500
        %2569 = vmatpush.bf16.msra.mxu0 %v2498
        %2570 = vmatpush.bf16.msra.mxu0 %v2496
        %2571 = vmatpush.bf16.msra.mxu0 %v2494
        %2572 = vmatmul.bf16.gmra.mxu0 %v2436
        %v2573 = vpop.f32.mrf.mxu0
        %v2574 = vadd.f32 0.0, %v2573
        %v2575 = vpop.f32.mrf.mxu0
        %v2576 = vadd.f32 0.0, %v2575
        %2577 = vdwg.mxu0
        %2578 = vmatpush.bf16.msra.mxu0 0
        %2579 = vmatpush.bf16.msra.mxu0 0
        %2580 = vmatpush.bf16.msra.mxu0 0
        %2581 = vmatpush.bf16.msra.mxu0 0
        %2582 = vmatpush.bf16.msra.mxu0 0
        %2583 = vmatpush.bf16.msra.mxu0 0
        %2584 = vmatpush.bf16.msra.mxu0 0
        %2585 = vmatpush.bf16.msra.mxu0 %v2534
        %2586 = vmatmul.bf16.gmra.mxu0 %v2528
        %v2587 = vpop.f32.mrf.mxu0
        %v2588 = vadd.f32 %v2574, %v2587
        %v2589 = vpop.f32.mrf.mxu0
        %v2590 = vadd.f32 %v2576, %v2589
        %2591 = vdwg.mxu0
        %v2592 = vmax.f32 %v2560, %v2588
        %v2593 = vmax.f32 %v2562, %v2590
        %s2594 = scalar_lea.vmem %s648, 208 [#allocation4]
        %v2595 = vld [vmem:[%s2594] sm:$0xff]
        %v2596 = vld [vmem:[%s2594 + $0x8] sm:$0xff]
        %v2599 = vunpack.c.l.b16 %v2595
        %v2600 = vunpack.c.h.b16 %v2595
        %v2601 = vunpack.c.l.b16 %v2596
        %v2602 = vunpack.c.h.b16 %v2596
        %v2603 = vpack.c.b16 %v2601, %v2599
        %v2604 = vpack.c.b16 %v2602, %v2600
        %v2607 = vsel %vm830, %v2604, 0
        %2609 = vmatpush.bf16.msra.mxu0 %v2507
        %2610 = vmatpush.bf16.msra.mxu0 %v2505
        %2611 = vmatpush.bf16.msra.mxu0 %v2503
        %2612 = vmatpush.bf16.msra.mxu0 %v2501
        %2613 = vmatpush.bf16.msra.mxu0 %v2499
        %2614 = vmatpush.bf16.msra.mxu0 %v2497
        %2615 = vmatpush.bf16.msra.mxu0 %v2495
        %2616 = vmatpush.bf16.msra.mxu0 %v2493
        %2617 = vmatmul.bf16.gmra.mxu0 %v2603
        %v2618 = vpop.f32.mrf.mxu0
        %v2619 = vadd.f32 0.0, %v2618
        %v2620 = vpop.f32.mrf.mxu0
        %v2621 = vadd.f32 0.0, %v2620
        %2622 = vdwg.mxu0
        %2623 = vmatpush.bf16.msra.mxu0 0
        %2624 = vmatpush.bf16.msra.mxu0 0
        %2625 = vmatpush.bf16.msra.mxu0 0
        %2626 = vmatpush.bf16.msra.mxu0 0
        %2627 = vmatpush.bf16.msra.mxu0 0
        %2628 = vmatpush.bf16.msra.mxu0 0
        %2629 = vmatpush.bf16.msra.mxu0 0
        %2630 = vmatpush.bf16.msra.mxu0 %v2531
        %2631 = vmatmul.bf16.gmra.mxu0 %v2607
        %v2632 = vpop.f32.mrf.mxu0
        %v2633 = vadd.f32 %v2619, %v2632
        %v2634 = vpop.f32.mrf.mxu0
        %v2635 = vadd.f32 %v2621, %v2634
        %2636 = vdwg.mxu0
        %2637 = vmatpush.bf16.msra.mxu0 %v2508
        %2638 = vmatpush.bf16.msra.mxu0 %v2506
        %2639 = vmatpush.bf16.msra.mxu0 %v2504
        %2640 = vmatpush.bf16.msra.mxu0 %v2502
        %2641 = vmatpush.bf16.msra.mxu0 %v2500
        %2642 = vmatpush.bf16.msra.mxu0 %v2498
        %2643 = vmatpush.bf16.msra.mxu0 %v2496
        %2644 = vmatpush.bf16.msra.mxu0 %v2494
        %2645 = vmatmul.bf16.gmra.mxu0 %v2603
        %v2646 = vpop.f32.mrf.mxu0
        %v2647 = vadd.f32 0.0, %v2646
        %v2648 = vpop.f32.mrf.mxu0
        %v2649 = vadd.f32 0.0, %v2648
        %2650 = vdwg.mxu0
        %2651 = vmatpush.bf16.msra.mxu0 0
        %2652 = vmatpush.bf16.msra.mxu0 0
        %2653 = vmatpush.bf16.msra.mxu0 0
        %2654 = vmatpush.bf16.msra.mxu0 0
        %2655 = vmatpush.bf16.msra.mxu0 0
        %2656 = vmatpush.bf16.msra.mxu0 0
        %2657 = vmatpush.bf16.msra.mxu0 0
        %2658 = vmatpush.bf16.msra.mxu0 %v2534
        %2659 = vmatmul.bf16.gmra.mxu0 %v2607
        %v2660 = vpop.f32.mrf.mxu0
        %v2661 = vadd.f32 %v2647, %v2660
        %v2662 = vpop.f32.mrf.mxu0
        %v2663 = vadd.f32 %v2649, %v2662
        %2664 = vdwg.mxu0
        %v2665 = vmax.f32 %v2633, %v2661
        %v2666 = vmax.f32 %v2635, %v2663
        %v2667 = vmax.f32 %v2592, %v2665
        %v2668 = vmax.f32 %v2593, %v2666
        %v2669 = vadd.f32 %v2667, %v975
        %v2670 = vadd.f32 %v2668, %v975
        %vm2671 = vcmp.gt.f32.partialorder %v2669, 0.0
        %vm2672 = vcmp.gt.f32.partialorder %v2670, 0.0
        %v2673 = vmin.f32 %v2669, 0.0
        %v2674 = vmin.f32 %v2670, 0.0
        %v2675 = vmul.f32 %v2673, 1.442695
        %v2676 = vpow.pop %v2675
        %v2677 = vmul.f32 %v2674, 1.442695
        %v2678 = vpow.pop %v2677
        %v2679 = vsub.f32 %v2676, 1.0
        %v2680 = vsub.f32 %v2678, 1.0
        %v2681 = vmul.f32 %v2679, 1.6732632
        %v2682 = vmul.f32 %v2680, 1.6732632
        %v2683 = vsel %vm2671, %v2669, %v2681
        %v2684 = vsel %vm2672, %v2670, %v2682
        %v2685 = vmul.f32 %v2683, 1.050701
        %v2686 = vmul.f32 %v2684, 1.050701
        %v2687 = vpack.c.bf16 %v2685, %v2685
        %v2688 = vpack.c.bf16 %v2686, %v2686
        %2689 = vst [vmem:[#allocation2 + $0x18] sm:$0xf] %v2687
        %2690 = vst [vmem:[#allocation2 + $0x48] sm:$0xf] %v2688
        %s2691 = scalar_lea.vmem %s648, 224 [#allocation4]
        %v2692 = vld [vmem:[%s2691] sm:$0xff]
        %v2693 = vld [vmem:[%s2691 + $0x8] sm:$0xff]
        %v2694 = vld [vmem:[%s1] sm:$0xff]
        %v2695 = vld [vmem:[%s1 + $0x8] sm:$0xff]
        %v2696 = vld [vmem:[%s1 + $0x10] sm:$0xff]
        %v2697 = vld [vmem:[%s1 + $0x18] sm:$0xff]
        %v2698 = vld [vmem:[%s1 + $0x20] sm:$0xff]
        %v2699 = vld [vmem:[%s1 + $0x28] sm:$0xff]
        %v2700 = vld [vmem:[%s1 + $0x30] sm:$0xff]
        %v2701 = vld [vmem:[%s1 + $0x38] sm:$0xff]
        %v2702 = vld [vmem:[%s1 + $0x40] sm:$0xff]
        %v2703 = vld [vmem:[%s1 + $0x48] sm:$0xff]
        %v2704 = vld [vmem:[%s1 + $0x50] sm:$0xff]
        %v2705 = vld [vmem:[%s1 + $0x58] sm:$0xff]
        %v2706 = vld [vmem:[%s1 + $0x60] sm:$0xff]
        %v2707 = vld [vmem:[%s1 + $0x68] sm:$0xff]
        %v2708 = vld [vmem:[%s1 + $0x70] sm:$0xff]
        %v2709 = vld [vmem:[%s1 + $0x78] sm:$0xff]
        %v2710 = vld [vmem:[%s1 + $0x80] sm:$0xff]
        %v2711 = vld [vmem:[%s1 + $0x88] sm:$0x33]
        %v2714 = vunpack.c.l.b16 %v2692
        %v2715 = vunpack.c.h.b16 %v2692
        %v2716 = vunpack.c.l.b16 %v2693
        %v2717 = vunpack.c.h.b16 %v2693
        %v2718 = vpack.c.b16 %v2716, %v2714
        %v2719 = vpack.c.b16 %v2717, %v2715
        %v2739 = vunpack.c.l.b16 %v2694
        %v2740 = vunpack.c.h.b16 %v2694
        %v2741 = vunpack.c.l.b16 %v2695
        %v2742 = vunpack.c.h.b16 %v2695
        %v2743 = vunpack.c.l.b16 %v2696
        %v2744 = vunpack.c.h.b16 %v2696
        %v2745 = vunpack.c.l.b16 %v2697
        %v2746 = vunpack.c.h.b16 %v2697
        %v2747 = vunpack.c.l.b16 %v2698
        %v2748 = vunpack.c.h.b16 %v2698
        %v2749 = vunpack.c.l.b16 %v2699
        %v2750 = vunpack.c.h.b16 %v2699
        %v2751 = vunpack.c.l.b16 %v2700
        %v2752 = vunpack.c.h.b16 %v2700
        %v2753 = vunpack.c.l.b16 %v2701
        %v2754 = vunpack.c.h.b16 %v2701
        %v2755 = vunpack.c.l.b16 %v2702
        %v2756 = vunpack.c.h.b16 %v2702
        %v2757 = vunpack.c.l.b16 %v2703
        %v2758 = vunpack.c.h.b16 %v2703
        %v2759 = vunpack.c.l.b16 %v2704
        %v2760 = vunpack.c.h.b16 %v2704
        %v2761 = vunpack.c.l.b16 %v2705
        %v2762 = vunpack.c.h.b16 %v2705
        %v2763 = vunpack.c.l.b16 %v2706
        %v2764 = vunpack.c.h.b16 %v2706
        %v2765 = vunpack.c.l.b16 %v2707
        %v2766 = vunpack.c.h.b16 %v2707
        %v2767 = vunpack.c.l.b16 %v2708
        %v2768 = vunpack.c.h.b16 %v2708
        %v2769 = vunpack.c.l.b16 %v2709
        %v2770 = vunpack.c.h.b16 %v2709
        %v2771 = vunpack.c.l.b16 %v2710
        %v2772 = vunpack.c.h.b16 %v2710
        %v2773 = vunpack.c.l.b16 %v2711
        %v2774 = vunpack.c.h.b16 %v2711
        %v2775 = vpack.c.b16 %v2741, %v2739
        %v2776 = vpack.c.b16 %v2742, %v2740
        %v2777 = vpack.c.b16 %v2745, %v2743
        %v2778 = vpack.c.b16 %v2746, %v2744
        %v2779 = vpack.c.b16 %v2749, %v2747
        %v2780 = vpack.c.b16 %v2750, %v2748
        %v2781 = vpack.c.b16 %v2753, %v2751
        %v2782 = vpack.c.b16 %v2754, %v2752
        %v2783 = vpack.c.b16 %v2757, %v2755
        %v2784 = vpack.c.b16 %v2758, %v2756
        %v2785 = vpack.c.b16 %v2761, %v2759
        %v2786 = vpack.c.b16 %v2762, %v2760
        %v2787 = vpack.c.b16 %v2765, %v2763
        %v2788 = vpack.c.b16 %v2766, %v2764
        %v2789 = vpack.c.b16 %v2769, %v2767
        %v2790 = vpack.c.b16 %v2770, %v2768
        %v2791 = vpack.c.b16 %v2773, %v2771
        %v2792 = vpack.c.b16 %v2774, %v2772
        %v2810 = vsel %vm830, %v2719, 0
        %v2813 = vsel %vm834, %v2791, 0
        %v2816 = vsel %vm834, %v2792, 0
        %2818 = vmatpush.bf16.msra.mxu0 %v2789
        %2819 = vmatpush.bf16.msra.mxu0 %v2787
        %2820 = vmatpush.bf16.msra.mxu0 %v2785
        %2821 = vmatpush.bf16.msra.mxu0 %v2783
        %2822 = vmatpush.bf16.msra.mxu0 %v2781
        %2823 = vmatpush.bf16.msra.mxu0 %v2779
        %2824 = vmatpush.bf16.msra.mxu0 %v2777
        %2825 = vmatpush.bf16.msra.mxu0 %v2775
        %2826 = vmatmul.bf16.gmra.mxu0 %v2718
        %v2827 = vpop.f32.mrf.mxu0
        %v2828 = vadd.f32 0.0, %v2827
        %v2829 = vpop.f32.mrf.mxu0
        %v2830 = vadd.f32 0.0, %v2829
        %2831 = vdwg.mxu0
        %2832 = vmatpush.bf16.msra.mxu0 0
        %2833 = vmatpush.bf16.msra.mxu0 0
        %2834 = vmatpush.bf16.msra.mxu0 0
        %2835 = vmatpush.bf16.msra.mxu0 0
        %2836 = vmatpush.bf16.msra.mxu0 0
        %2837 = vmatpush.bf16.msra.mxu0 0
        %2838 = vmatpush.bf16.msra.mxu0 0
        %2839 = vmatpush.bf16.msra.mxu0 %v2813
        %2840 = vmatmul.bf16.gmra.mxu0 %v2810
        %v2841 = vpop.f32.mrf.mxu0
        %v2842 = vadd.f32 %v2828, %v2841
        %v2843 = vpop.f32.mrf.mxu0
        %v2844 = vadd.f32 %v2830, %v2843
        %2845 = vdwg.mxu0
        %2846 = vmatpush.bf16.msra.mxu0 %v2790
        %2847 = vmatpush.bf16.msra.mxu0 %v2788
        %2848 = vmatpush.bf16.msra.mxu0 %v2786
        %2849 = vmatpush.bf16.msra.mxu0 %v2784
        %2850 = vmatpush.bf16.msra.mxu0 %v2782
        %2851 = vmatpush.bf16.msra.mxu0 %v2780
        %2852 = vmatpush.bf16.msra.mxu0 %v2778
        %2853 = vmatpush.bf16.msra.mxu0 %v2776
        %2854 = vmatmul.bf16.gmra.mxu0 %v2718
        %v2855 = vpop.f32.mrf.mxu0
        %v2856 = vadd.f32 0.0, %v2855
        %v2857 = vpop.f32.mrf.mxu0
        %v2858 = vadd.f32 0.0, %v2857
        %2859 = vdwg.mxu0
        %2860 = vmatpush.bf16.msra.mxu0 0
        %2861 = vmatpush.bf16.msra.mxu0 0
        %2862 = vmatpush.bf16.msra.mxu0 0
        %2863 = vmatpush.bf16.msra.mxu0 0
        %2864 = vmatpush.bf16.msra.mxu0 0
        %2865 = vmatpush.bf16.msra.mxu0 0
        %2866 = vmatpush.bf16.msra.mxu0 0
        %2867 = vmatpush.bf16.msra.mxu0 %v2816
        %2868 = vmatmul.bf16.gmra.mxu0 %v2810
        %v2869 = vpop.f32.mrf.mxu0
        %v2870 = vadd.f32 %v2856, %v2869
        %v2871 = vpop.f32.mrf.mxu0
        %v2872 = vadd.f32 %v2858, %v2871
        %2873 = vdwg.mxu0
        %v2874 = vmax.f32 %v2842, %v2870
        %v2875 = vmax.f32 %v2844, %v2872
        %s2876 = scalar_lea.vmem %s648, 240 [#allocation4]
        %v2877 = vld [vmem:[%s2876] sm:$0xff]
        %v2878 = vld [vmem:[%s2876 + $0x8] sm:$0xff]
        %v2881 = vunpack.c.l.b16 %v2877
        %v2882 = vunpack.c.h.b16 %v2877
        %v2883 = vunpack.c.l.b16 %v2878
        %v2884 = vunpack.c.h.b16 %v2878
        %v2885 = vpack.c.b16 %v2883, %v2881
        %v2886 = vpack.c.b16 %v2884, %v2882
        %v2889 = vsel %vm830, %v2886, 0
        %2891 = vmatpush.bf16.msra.mxu0 %v2789
        %2892 = vmatpush.bf16.msra.mxu0 %v2787
        %2893 = vmatpush.bf16.msra.mxu0 %v2785
        %2894 = vmatpush.bf16.msra.mxu0 %v2783
        %2895 = vmatpush.bf16.msra.mxu0 %v2781
        %2896 = vmatpush.bf16.msra.mxu0 %v2779
        %2897 = vmatpush.bf16.msra.mxu0 %v2777
        %2898 = vmatpush.bf16.msra.mxu0 %v2775
        %2899 = vmatmul.bf16.gmra.mxu0 %v2885
        %v2900 = vpop.f32.mrf.mxu0
        %v2901 = vadd.f32 0.0, %v2900
        %v2902 = vpop.f32.mrf.mxu0
        %v2903 = vadd.f32 0.0, %v2902
        %2904 = vdwg.mxu0
        %2905 = vmatpush.bf16.msra.mxu0 0
        %2906 = vmatpush.bf16.msra.mxu0 0
        %2907 = vmatpush.bf16.msra.mxu0 0
        %2908 = vmatpush.bf16.msra.mxu0 0
        %2909 = vmatpush.bf16.msra.mxu0 0
        %2910 = vmatpush.bf16.msra.mxu0 0
        %2911 = vmatpush.bf16.msra.mxu0 0
        %2912 = vmatpush.bf16.msra.mxu0 %v2813
        %2913 = vmatmul.bf16.gmra.mxu0 %v2889
        %v2914 = vpop.f32.mrf.mxu0
        %v2915 = vadd.f32 %v2901, %v2914
        %v2916 = vpop.f32.mrf.mxu0
        %v2917 = vadd.f32 %v2903, %v2916
        %2918 = vdwg.mxu0
        %2919 = vmatpush.bf16.msra.mxu0 %v2790
        %2920 = vmatpush.bf16.msra.mxu0 %v2788
        %2921 = vmatpush.bf16.msra.mxu0 %v2786
        %2922 = vmatpush.bf16.msra.mxu0 %v2784
        %2923 = vmatpush.bf16.msra.mxu0 %v2782
        %2924 = vmatpush.bf16.msra.mxu0 %v2780
        %2925 = vmatpush.bf16.msra.mxu0 %v2778
        %2926 = vmatpush.bf16.msra.mxu0 %v2776
        %2927 = vmatmul.bf16.gmra.mxu0 %v2885
        %v2928 = vpop.f32.mrf.mxu0
        %v2929 = vadd.f32 0.0, %v2928
        %v2930 = vpop.f32.mrf.mxu0
        %v2931 = vadd.f32 0.0, %v2930
        %2932 = vdwg.mxu0
        %2933 = vmatpush.bf16.msra.mxu0 0
        %2934 = vmatpush.bf16.msra.mxu0 0
        %2935 = vmatpush.bf16.msra.mxu0 0
        %2936 = vmatpush.bf16.msra.mxu0 0
        %2937 = vmatpush.bf16.msra.mxu0 0
        %2938 = vmatpush.bf16.msra.mxu0 0
        %2939 = vmatpush.bf16.msra.mxu0 0
        %2940 = vmatpush.bf16.msra.mxu0 %v2816
        %2941 = vmatmul.bf16.gmra.mxu0 %v2889
        %v2942 = vpop.f32.mrf.mxu0
        %v2943 = vadd.f32 %v2929, %v2942
        %v2944 = vpop.f32.mrf.mxu0
        %v2945 = vadd.f32 %v2931, %v2944
        %2946 = vdwg.mxu0
        %v2947 = vmax.f32 %v2915, %v2943
        %v2948 = vmax.f32 %v2917, %v2945
        %v2949 = vmax.f32 %v2874, %v2947
        %v2950 = vmax.f32 %v2875, %v2948
        %v2951 = vadd.f32 %v2949, %v975
        %v2952 = vadd.f32 %v2950, %v975
        %vm2953 = vcmp.gt.f32.partialorder %v2951, 0.0
        %vm2954 = vcmp.gt.f32.partialorder %v2952, 0.0
        %v2955 = vmin.f32 %v2951, 0.0
        %v2956 = vmin.f32 %v2952, 0.0
        %v2957 = vmul.f32 %v2955, 1.442695
        %v2958 = vpow.pop %v2957
        %v2959 = vmul.f32 %v2956, 1.442695
        %v2960 = vpow.pop %v2959
        %v2961 = vsub.f32 %v2958, 1.0
        %v2962 = vsub.f32 %v2960, 1.0
        %v2963 = vmul.f32 %v2961, 1.6732632
        %v2964 = vmul.f32 %v2962, 1.6732632
        %v2965 = vsel %vm2953, %v2951, %v2963
        %v2966 = vsel %vm2954, %v2952, %v2964
        %v2967 = vmul.f32 %v2965, 1.050701
        %v2968 = vmul.f32 %v2966, 1.050701
        %v2969 = vpack.c.bf16 %v2967, %v2967
        %v2970 = vpack.c.bf16 %v2968, %v2968
        %2971 = vst [vmem:[#allocation2 + $0x1c] sm:$0xf] %v2969
        %2972 = vst [vmem:[#allocation2 + $0x4c] sm:$0xf] %v2970
        %s2973 = scalar_lea.vmem %s648, 256 [#allocation4]
        %v2974 = vld [vmem:[%s2973] sm:$0xff]
        %v2975 = vld [vmem:[%s2973 + $0x8] sm:$0xff]
        %v2976 = vld [vmem:[%s1] sm:$0xff]
        %v2977 = vld [vmem:[%s1 + $0x8] sm:$0xff]
        %v2978 = vld [vmem:[%s1 + $0x10] sm:$0xff]
        %v2979 = vld [vmem:[%s1 + $0x18] sm:$0xff]
        %v2980 = vld [vmem:[%s1 + $0x20] sm:$0xff]
        %v2981 = vld [vmem:[%s1 + $0x28] sm:$0xff]
        %v2982 = vld [vmem:[%s1 + $0x30] sm:$0xff]
        %v2983 = vld [vmem:[%s1 + $0x38] sm:$0xff]
        %v2984 = vld [vmem:[%s1 + $0x40] sm:$0xff]
        %v2985 = vld [vmem:[%s1 + $0x48] sm:$0xff]
        %v2986 = vld [vmem:[%s1 + $0x50] sm:$0xff]
        %v2987 = vld [vmem:[%s1 + $0x58] sm:$0xff]
        %v2988 = vld [vmem:[%s1 + $0x60] sm:$0xff]
        %v2989 = vld [vmem:[%s1 + $0x68] sm:$0xff]
        %v2990 = vld [vmem:[%s1 + $0x70] sm:$0xff]
        %v2991 = vld [vmem:[%s1 + $0x78] sm:$0xff]
        %v2992 = vld [vmem:[%s1 + $0x80] sm:$0xff]
        %v2993 = vld [vmem:[%s1 + $0x88] sm:$0x33]
        %v2996 = vunpack.c.l.b16 %v2974
        %v2997 = vunpack.c.h.b16 %v2974
        %v2998 = vunpack.c.l.b16 %v2975
        %v2999 = vunpack.c.h.b16 %v2975
        %v3000 = vpack.c.b16 %v2998, %v2996
        %v3001 = vpack.c.b16 %v2999, %v2997
        %v3021 = vunpack.c.l.b16 %v2976
        %v3022 = vunpack.c.h.b16 %v2976
        %v3023 = vunpack.c.l.b16 %v2977
        %v3024 = vunpack.c.h.b16 %v2977
        %v3025 = vunpack.c.l.b16 %v2978
        %v3026 = vunpack.c.h.b16 %v2978
        %v3027 = vunpack.c.l.b16 %v2979
        %v3028 = vunpack.c.h.b16 %v2979
        %v3029 = vunpack.c.l.b16 %v2980
        %v3030 = vunpack.c.h.b16 %v2980
        %v3031 = vunpack.c.l.b16 %v2981
        %v3032 = vunpack.c.h.b16 %v2981
        %v3033 = vunpack.c.l.b16 %v2982
        %v3034 = vunpack.c.h.b16 %v2982
        %v3035 = vunpack.c.l.b16 %v2983
        %v3036 = vunpack.c.h.b16 %v2983
        %v3037 = vunpack.c.l.b16 %v2984
        %v3038 = vunpack.c.h.b16 %v2984
        %v3039 = vunpack.c.l.b16 %v2985
        %v3040 = vunpack.c.h.b16 %v2985
        %v3041 = vunpack.c.l.b16 %v2986
        %v3042 = vunpack.c.h.b16 %v2986
        %v3043 = vunpack.c.l.b16 %v2987
        %v3044 = vunpack.c.h.b16 %v2987
        %v3045 = vunpack.c.l.b16 %v2988
        %v3046 = vunpack.c.h.b16 %v2988
        %v3047 = vunpack.c.l.b16 %v2989
        %v3048 = vunpack.c.h.b16 %v2989
        %v3049 = vunpack.c.l.b16 %v2990
        %v3050 = vunpack.c.h.b16 %v2990
        %v3051 = vunpack.c.l.b16 %v2991
        %v3052 = vunpack.c.h.b16 %v2991
        %v3053 = vunpack.c.l.b16 %v2992
        %v3054 = vunpack.c.h.b16 %v2992
        %v3055 = vunpack.c.l.b16 %v2993
        %v3056 = vunpack.c.h.b16 %v2993
        %v3057 = vpack.c.b16 %v3023, %v3021
        %v3058 = vpack.c.b16 %v3024, %v3022
        %v3059 = vpack.c.b16 %v3027, %v3025
        %v3060 = vpack.c.b16 %v3028, %v3026
        %v3061 = vpack.c.b16 %v3031, %v3029
        %v3062 = vpack.c.b16 %v3032, %v3030
        %v3063 = vpack.c.b16 %v3035, %v3033
        %v3064 = vpack.c.b16 %v3036, %v3034
        %v3065 = vpack.c.b16 %v3039, %v3037
        %v3066 = vpack.c.b16 %v3040, %v3038
        %v3067 = vpack.c.b16 %v3043, %v3041
        %v3068 = vpack.c.b16 %v3044, %v3042
        %v3069 = vpack.c.b16 %v3047, %v3045
        %v3070 = vpack.c.b16 %v3048, %v3046
        %v3071 = vpack.c.b16 %v3051, %v3049
        %v3072 = vpack.c.b16 %v3052, %v3050
        %v3073 = vpack.c.b16 %v3055, %v3053
        %v3074 = vpack.c.b16 %v3056, %v3054
        %v3092 = vsel %vm830, %v3001, 0
        %v3095 = vsel %vm834, %v3073, 0
        %v3098 = vsel %vm834, %v3074, 0
        %3100 = vmatpush.bf16.msra.mxu0 %v3071
        %3101 = vmatpush.bf16.msra.mxu0 %v3069
        %3102 = vmatpush.bf16.msra.mxu0 %v3067
        %3103 = vmatpush.bf16.msra.mxu0 %v3065
        %3104 = vmatpush.bf16.msra.mxu0 %v3063
        %3105 = vmatpush.bf16.msra.mxu0 %v3061
        %3106 = vmatpush.bf16.msra.mxu0 %v3059
        %3107 = vmatpush.bf16.msra.mxu0 %v3057
        %3108 = vmatmul.bf16.gmra.mxu0 %v3000
        %v3109 = vpop.f32.mrf.mxu0
        %v3110 = vadd.f32 0.0, %v3109
        %v3111 = vpop.f32.mrf.mxu0
        %v3112 = vadd.f32 0.0, %v3111
        %3113 = vdwg.mxu0
        %3114 = vmatpush.bf16.msra.mxu0 0
        %3115 = vmatpush.bf16.msra.mxu0 0
        %3116 = vmatpush.bf16.msra.mxu0 0
        %3117 = vmatpush.bf16.msra.mxu0 0
        %3118 = vmatpush.bf16.msra.mxu0 0
        %3119 = vmatpush.bf16.msra.mxu0 0
        %3120 = vmatpush.bf16.msra.mxu0 0
        %3121 = vmatpush.bf16.msra.mxu0 %v3095
        %3122 = vmatmul.bf16.gmra.mxu0 %v3092
        %v3123 = vpop.f32.mrf.mxu0
        %v3124 = vadd.f32 %v3110, %v3123
        %v3125 = vpop.f32.mrf.mxu0
        %v3126 = vadd.f32 %v3112, %v3125
        %3127 = vdwg.mxu0
        %3128 = vmatpush.bf16.msra.mxu0 %v3072
        %3129 = vmatpush.bf16.msra.mxu0 %v3070
        %3130 = vmatpush.bf16.msra.mxu0 %v3068
        %3131 = vmatpush.bf16.msra.mxu0 %v3066
        %3132 = vmatpush.bf16.msra.mxu0 %v3064
        %3133 = vmatpush.bf16.msra.mxu0 %v3062
        %3134 = vmatpush.bf16.msra.mxu0 %v3060
        %3135 = vmatpush.bf16.msra.mxu0 %v3058
        %3136 = vmatmul.bf16.gmra.mxu0 %v3000
        %v3137 = vpop.f32.mrf.mxu0
        %v3138 = vadd.f32 0.0, %v3137
        %v3139 = vpop.f32.mrf.mxu0
        %v3140 = vadd.f32 0.0, %v3139
        %3141 = vdwg.mxu0
        %3142 = vmatpush.bf16.msra.mxu0 0
        %3143 = vmatpush.bf16.msra.mxu0 0
        %3144 = vmatpush.bf16.msra.mxu0 0
        %3145 = vmatpush.bf16.msra.mxu0 0
        %3146 = vmatpush.bf16.msra.mxu0 0
        %3147 = vmatpush.bf16.msra.mxu0 0
        %3148 = vmatpush.bf16.msra.mxu0 0
        %3149 = vmatpush.bf16.msra.mxu0 %v3098
        %3150 = vmatmul.bf16.gmra.mxu0 %v3092
        %v3151 = vpop.f32.mrf.mxu0
        %v3152 = vadd.f32 %v3138, %v3151
        %v3153 = vpop.f32.mrf.mxu0
        %v3154 = vadd.f32 %v3140, %v3153
        %3155 = vdwg.mxu0
        %v3156 = vmax.f32 %v3124, %v3152
        %v3157 = vmax.f32 %v3126, %v3154
        %s3158 = scalar_lea.vmem %s648, 272 [#allocation4]
        %v3159 = vld [vmem:[%s3158] sm:$0xff]
        %v3160 = vld [vmem:[%s3158 + $0x8] sm:$0xff]
        %v3163 = vunpack.c.l.b16 %v3159
        %v3164 = vunpack.c.h.b16 %v3159
        %v3165 = vunpack.c.l.b16 %v3160
        %v3166 = vunpack.c.h.b16 %v3160
        %v3167 = vpack.c.b16 %v3165, %v3163
        %v3168 = vpack.c.b16 %v3166, %v3164
        %v3171 = vsel %vm830, %v3168, 0
        %3173 = vmatpush.bf16.msra.mxu0 %v3071
        %3174 = vmatpush.bf16.msra.mxu0 %v3069
        %3175 = vmatpush.bf16.msra.mxu0 %v3067
        %3176 = vmatpush.bf16.msra.mxu0 %v3065
        %3177 = vmatpush.bf16.msra.mxu0 %v3063
        %3178 = vmatpush.bf16.msra.mxu0 %v3061
        %3179 = vmatpush.bf16.msra.mxu0 %v3059
        %3180 = vmatpush.bf16.msra.mxu0 %v3057
        %3181 = vmatmul.bf16.gmra.mxu0 %v3167
        %v3182 = vpop.f32.mrf.mxu0
        %v3183 = vadd.f32 0.0, %v3182
        %v3184 = vpop.f32.mrf.mxu0
        %v3185 = vadd.f32 0.0, %v3184
        %3186 = vdwg.mxu0
        %3187 = vmatpush.bf16.msra.mxu0 0
        %3188 = vmatpush.bf16.msra.mxu0 0
        %3189 = vmatpush.bf16.msra.mxu0 0
        %3190 = vmatpush.bf16.msra.mxu0 0
        %3191 = vmatpush.bf16.msra.mxu0 0
        %3192 = vmatpush.bf16.msra.mxu0 0
        %3193 = vmatpush.bf16.msra.mxu0 0
        %3194 = vmatpush.bf16.msra.mxu0 %v3095
        %3195 = vmatmul.bf16.gmra.mxu0 %v3171
        %v3196 = vpop.f32.mrf.mxu0
        %v3197 = vadd.f32 %v3183, %v3196
        %v3198 = vpop.f32.mrf.mxu0
        %v3199 = vadd.f32 %v3185, %v3198
        %3200 = vdwg.mxu0
        %3201 = vmatpush.bf16.msra.mxu0 %v3072
        %3202 = vmatpush.bf16.msra.mxu0 %v3070
        %3203 = vmatpush.bf16.msra.mxu0 %v3068
        %3204 = vmatpush.bf16.msra.mxu0 %v3066
        %3205 = vmatpush.bf16.msra.mxu0 %v3064
        %3206 = vmatpush.bf16.msra.mxu0 %v3062
        %3207 = vmatpush.bf16.msra.mxu0 %v3060
        %3208 = vmatpush.bf16.msra.mxu0 %v3058
        %3209 = vmatmul.bf16.gmra.mxu0 %v3167
        %v3210 = vpop.f32.mrf.mxu0
        %v3211 = vadd.f32 0.0, %v3210
        %v3212 = vpop.f32.mrf.mxu0
        %v3213 = vadd.f32 0.0, %v3212
        %3214 = vdwg.mxu0
        %3215 = vmatpush.bf16.msra.mxu0 0
        %3216 = vmatpush.bf16.msra.mxu0 0
        %3217 = vmatpush.bf16.msra.mxu0 0
        %3218 = vmatpush.bf16.msra.mxu0 0
        %3219 = vmatpush.bf16.msra.mxu0 0
        %3220 = vmatpush.bf16.msra.mxu0 0
        %3221 = vmatpush.bf16.msra.mxu0 0
        %3222 = vmatpush.bf16.msra.mxu0 %v3098
        %3223 = vmatmul.bf16.gmra.mxu0 %v3171
        %v3224 = vpop.f32.mrf.mxu0
        %v3225 = vadd.f32 %v3211, %v3224
        %v3226 = vpop.f32.mrf.mxu0
        %v3227 = vadd.f32 %v3213, %v3226
        %3228 = vdwg.mxu0
        %v3229 = vmax.f32 %v3197, %v3225
        %v3230 = vmax.f32 %v3199, %v3227
        %v3231 = vmax.f32 %v3156, %v3229
        %v3232 = vmax.f32 %v3157, %v3230
        %v3233 = vadd.f32 %v3231, %v975
        %v3234 = vadd.f32 %v3232, %v975
        %vm3235 = vcmp.gt.f32.partialorder %v3233, 0.0
        %vm3236 = vcmp.gt.f32.partialorder %v3234, 0.0
        %v3237 = vmin.f32 %v3233, 0.0
        %v3238 = vmin.f32 %v3234, 0.0
        %v3239 = vmul.f32 %v3237, 1.442695
        %v3240 = vpow.pop %v3239
        %v3241 = vmul.f32 %v3238, 1.442695
        %v3242 = vpow.pop %v3241
        %v3243 = vsub.f32 %v3240, 1.0
        %v3244 = vsub.f32 %v3242, 1.0
        %v3245 = vmul.f32 %v3243, 1.6732632
        %v3246 = vmul.f32 %v3244, 1.6732632
        %v3247 = vsel %vm3235, %v3233, %v3245
        %v3248 = vsel %vm3236, %v3234, %v3246
        %v3249 = vmul.f32 %v3247, 1.050701
        %v3250 = vmul.f32 %v3248, 1.050701
        %v3251 = vpack.c.bf16 %v3249, %v3249
        %v3252 = vpack.c.bf16 %v3250, %v3250
        %3253 = vst [vmem:[#allocation2 + $0x20] sm:$0xf] %v3251
        %3254 = vst [vmem:[#allocation2 + $0x50] sm:$0xf] %v3252
        %s3255 = scalar_lea.vmem %s648, 288 [#allocation4]
        %v3256 = vld [vmem:[%s3255] sm:$0xff]
        %v3257 = vld [vmem:[%s3255 + $0x8] sm:$0xff]
        %v3258 = vld [vmem:[%s1] sm:$0xff]
        %v3259 = vld [vmem:[%s1 + $0x8] sm:$0xff]
        %v3260 = vld [vmem:[%s1 + $0x10] sm:$0xff]
        %v3261 = vld [vmem:[%s1 + $0x18] sm:$0xff]
        %v3262 = vld [vmem:[%s1 + $0x20] sm:$0xff]
        %v3263 = vld [vmem:[%s1 + $0x28] sm:$0xff]
        %v3264 = vld [vmem:[%s1 + $0x30] sm:$0xff]
        %v3265 = vld [vmem:[%s1 + $0x38] sm:$0xff]
        %v3266 = vld [vmem:[%s1 + $0x40] sm:$0xff]
        %v3267 = vld [vmem:[%s1 + $0x48] sm:$0xff]
        %v3268 = vld [vmem:[%s1 + $0x50] sm:$0xff]
        %v3269 = vld [vmem:[%s1 + $0x58] sm:$0xff]
        %v3270 = vld [vmem:[%s1 + $0x60] sm:$0xff]
        %v3271 = vld [vmem:[%s1 + $0x68] sm:$0xff]
        %v3272 = vld [vmem:[%s1 + $0x70] sm:$0xff]
        %v3273 = vld [vmem:[%s1 + $0x78] sm:$0xff]
        %v3274 = vld [vmem:[%s1 + $0x80] sm:$0xff]
        %v3275 = vld [vmem:[%s1 + $0x88] sm:$0x33]
        %v3278 = vunpack.c.l.b16 %v3256
        %v3279 = vunpack.c.h.b16 %v3256
        %v3280 = vunpack.c.l.b16 %v3257
        %v3281 = vunpack.c.h.b16 %v3257
        %v3282 = vpack.c.b16 %v3280, %v3278
        %v3283 = vpack.c.b16 %v3281, %v3279
        %v3303 = vunpack.c.l.b16 %v3258
        %v3304 = vunpack.c.h.b16 %v3258
        %v3305 = vunpack.c.l.b16 %v3259
        %v3306 = vunpack.c.h.b16 %v3259
        %v3307 = vunpack.c.l.b16 %v3260
        %v3308 = vunpack.c.h.b16 %v3260
        %v3309 = vunpack.c.l.b16 %v3261
        %v3310 = vunpack.c.h.b16 %v3261
        %v3311 = vunpack.c.l.b16 %v3262
        %v3312 = vunpack.c.h.b16 %v3262
        %v3313 = vunpack.c.l.b16 %v3263
        %v3314 = vunpack.c.h.b16 %v3263
        %v3315 = vunpack.c.l.b16 %v3264
        %v3316 = vunpack.c.h.b16 %v3264
        %v3317 = vunpack.c.l.b16 %v3265
        %v3318 = vunpack.c.h.b16 %v3265
        %v3319 = vunpack.c.l.b16 %v3266
        %v3320 = vunpack.c.h.b16 %v3266
        %v3321 = vunpack.c.l.b16 %v3267
        %v3322 = vunpack.c.h.b16 %v3267
        %v3323 = vunpack.c.l.b16 %v3268
        %v3324 = vunpack.c.h.b16 %v3268
        %v3325 = vunpack.c.l.b16 %v3269
        %v3326 = vunpack.c.h.b16 %v3269
        %v3327 = vunpack.c.l.b16 %v3270
        %v3328 = vunpack.c.h.b16 %v3270
        %v3329 = vunpack.c.l.b16 %v3271
        %v3330 = vunpack.c.h.b16 %v3271
        %v3331 = vunpack.c.l.b16 %v3272
        %v3332 = vunpack.c.h.b16 %v3272
        %v3333 = vunpack.c.l.b16 %v3273
        %v3334 = vunpack.c.h.b16 %v3273
        %v3335 = vunpack.c.l.b16 %v3274
        %v3336 = vunpack.c.h.b16 %v3274
        %v3337 = vunpack.c.l.b16 %v3275
        %v3338 = vunpack.c.h.b16 %v3275
        %v3339 = vpack.c.b16 %v3305, %v3303
        %v3340 = vpack.c.b16 %v3306, %v3304
        %v3341 = vpack.c.b16 %v3309, %v3307
        %v3342 = vpack.c.b16 %v3310, %v3308
        %v3343 = vpack.c.b16 %v3313, %v3311
        %v3344 = vpack.c.b16 %v3314, %v3312
        %v3345 = vpack.c.b16 %v3317, %v3315
        %v3346 = vpack.c.b16 %v3318, %v3316
        %v3347 = vpack.c.b16 %v3321, %v3319
        %v3348 = vpack.c.b16 %v3322, %v3320
        %v3349 = vpack.c.b16 %v3325, %v3323
        %v3350 = vpack.c.b16 %v3326, %v3324
        %v3351 = vpack.c.b16 %v3329, %v3327
        %v3352 = vpack.c.b16 %v3330, %v3328
        %v3353 = vpack.c.b16 %v3333, %v3331
        %v3354 = vpack.c.b16 %v3334, %v3332
        %v3355 = vpack.c.b16 %v3337, %v3335
        %v3356 = vpack.c.b16 %v3338, %v3336
        %v3374 = vsel %vm830, %v3283, 0
        %v3377 = vsel %vm834, %v3355, 0
        %v3380 = vsel %vm834, %v3356, 0
        %3382 = vmatpush.bf16.msra.mxu0 %v3353
        %3383 = vmatpush.bf16.msra.mxu0 %v3351
        %3384 = vmatpush.bf16.msra.mxu0 %v3349
        %3385 = vmatpush.bf16.msra.mxu0 %v3347
        %3386 = vmatpush.bf16.msra.mxu0 %v3345
        %3387 = vmatpush.bf16.msra.mxu0 %v3343
        %3388 = vmatpush.bf16.msra.mxu0 %v3341
        %3389 = vmatpush.bf16.msra.mxu0 %v3339
        %3390 = vmatmul.bf16.gmra.mxu0 %v3282
        %v3391 = vpop.f32.mrf.mxu0
        %v3392 = vadd.f32 0.0, %v3391
        %v3393 = vpop.f32.mrf.mxu0
        %v3394 = vadd.f32 0.0, %v3393
        %3395 = vdwg.mxu0
        %3396 = vmatpush.bf16.msra.mxu0 0
        %3397 = vmatpush.bf16.msra.mxu0 0
        %3398 = vmatpush.bf16.msra.mxu0 0
        %3399 = vmatpush.bf16.msra.mxu0 0
        %3400 = vmatpush.bf16.msra.mxu0 0
        %3401 = vmatpush.bf16.msra.mxu0 0
        %3402 = vmatpush.bf16.msra.mxu0 0
        %3403 = vmatpush.bf16.msra.mxu0 %v3377
        %3404 = vmatmul.bf16.gmra.mxu0 %v3374
        %v3405 = vpop.f32.mrf.mxu0
        %v3406 = vadd.f32 %v3392, %v3405
        %v3407 = vpop.f32.mrf.mxu0
        %v3408 = vadd.f32 %v3394, %v3407
        %3409 = vdwg.mxu0
        %3410 = vmatpush.bf16.msra.mxu0 %v3354
        %3411 = vmatpush.bf16.msra.mxu0 %v3352
        %3412 = vmatpush.bf16.msra.mxu0 %v3350
        %3413 = vmatpush.bf16.msra.mxu0 %v3348
        %3414 = vmatpush.bf16.msra.mxu0 %v3346
        %3415 = vmatpush.bf16.msra.mxu0 %v3344
        %3416 = vmatpush.bf16.msra.mxu0 %v3342
        %3417 = vmatpush.bf16.msra.mxu0 %v3340
        %3418 = vmatmul.bf16.gmra.mxu0 %v3282
        %v3419 = vpop.f32.mrf.mxu0
        %v3420 = vadd.f32 0.0, %v3419
        %v3421 = vpop.f32.mrf.mxu0
        %v3422 = vadd.f32 0.0, %v3421
        %3423 = vdwg.mxu0
        %3424 = vmatpush.bf16.msra.mxu0 0
        %3425 = vmatpush.bf16.msra.mxu0 0
        %3426 = vmatpush.bf16.msra.mxu0 0
        %3427 = vmatpush.bf16.msra.mxu0 0
        %3428 = vmatpush.bf16.msra.mxu0 0
        %3429 = vmatpush.bf16.msra.mxu0 0
        %3430 = vmatpush.bf16.msra.mxu0 0
        %3431 = vmatpush.bf16.msra.mxu0 %v3380
        %3432 = vmatmul.bf16.gmra.mxu0 %v3374
        %v3433 = vpop.f32.mrf.mxu0
        %v3434 = vadd.f32 %v3420, %v3433
        %v3435 = vpop.f32.mrf.mxu0
        %v3436 = vadd.f32 %v3422, %v3435
        %3437 = vdwg.mxu0
        %v3438 = vmax.f32 %v3406, %v3434
        %v3439 = vmax.f32 %v3408, %v3436
        %s3440 = scalar_lea.vmem %s648, 304 [#allocation4]
        %v3441 = vld [vmem:[%s3440] sm:$0xff]
        %v3442 = vld [vmem:[%s3440 + $0x8] sm:$0xff]
        %v3445 = vunpack.c.l.b16 %v3441
        %v3446 = vunpack.c.h.b16 %v3441
        %v3447 = vunpack.c.l.b16 %v3442
        %v3448 = vunpack.c.h.b16 %v3442
        %v3449 = vpack.c.b16 %v3447, %v3445
        %v3450 = vpack.c.b16 %v3448, %v3446
        %v3453 = vsel %vm830, %v3450, 0
        %3455 = vmatpush.bf16.msra.mxu0 %v3353
        %3456 = vmatpush.bf16.msra.mxu0 %v3351
        %3457 = vmatpush.bf16.msra.mxu0 %v3349
        %3458 = vmatpush.bf16.msra.mxu0 %v3347
        %3459 = vmatpush.bf16.msra.mxu0 %v3345
        %3460 = vmatpush.bf16.msra.mxu0 %v3343
        %3461 = vmatpush.bf16.msra.mxu0 %v3341
        %3462 = vmatpush.bf16.msra.mxu0 %v3339
        %3463 = vmatmul.bf16.gmra.mxu0 %v3449
        %v3464 = vpop.f32.mrf.mxu0
        %v3465 = vadd.f32 0.0, %v3464
        %v3466 = vpop.f32.mrf.mxu0
        %v3467 = vadd.f32 0.0, %v3466
        %3468 = vdwg.mxu0
        %3469 = vmatpush.bf16.msra.mxu0 0
        %3470 = vmatpush.bf16.msra.mxu0 0
        %3471 = vmatpush.bf16.msra.mxu0 0
        %3472 = vmatpush.bf16.msra.mxu0 0
        %3473 = vmatpush.bf16.msra.mxu0 0
        %3474 = vmatpush.bf16.msra.mxu0 0
        %3475 = vmatpush.bf16.msra.mxu0 0
        %3476 = vmatpush.bf16.msra.mxu0 %v3377
        %3477 = vmatmul.bf16.gmra.mxu0 %v3453
        %v3478 = vpop.f32.mrf.mxu0
        %v3479 = vadd.f32 %v3465, %v3478
        %v3480 = vpop.f32.mrf.mxu0
        %v3481 = vadd.f32 %v3467, %v3480
        %3482 = vdwg.mxu0
        %3483 = vmatpush.bf16.msra.mxu0 %v3354
        %3484 = vmatpush.bf16.msra.mxu0 %v3352
        %3485 = vmatpush.bf16.msra.mxu0 %v3350
        %3486 = vmatpush.bf16.msra.mxu0 %v3348
        %3487 = vmatpush.bf16.msra.mxu0 %v3346
        %3488 = vmatpush.bf16.msra.mxu0 %v3344
        %3489 = vmatpush.bf16.msra.mxu0 %v3342
        %3490 = vmatpush.bf16.msra.mxu0 %v3340
        %3491 = vmatmul.bf16.gmra.mxu0 %v3449
        %v3492 = vpop.f32.mrf.mxu0
        %v3493 = vadd.f32 0.0, %v3492
        %v3494 = vpop.f32.mrf.mxu0
        %v3495 = vadd.f32 0.0, %v3494
        %3496 = vdwg.mxu0
        %3497 = vmatpush.bf16.msra.mxu0 0
        %3498 = vmatpush.bf16.msra.mxu0 0
        %3499 = vmatpush.bf16.msra.mxu0 0
        %3500 = vmatpush.bf16.msra.mxu0 0
        %3501 = vmatpush.bf16.msra.mxu0 0
        %3502 = vmatpush.bf16.msra.mxu0 0
        %3503 = vmatpush.bf16.msra.mxu0 0
        %3504 = vmatpush.bf16.msra.mxu0 %v3380
        %3505 = vmatmul.bf16.gmra.mxu0 %v3453
        %v3506 = vpop.f32.mrf.mxu0
        %v3507 = vadd.f32 %v3493, %v3506
        %v3508 = vpop.f32.mrf.mxu0
        %v3509 = vadd.f32 %v3495, %v3508
        %3510 = vdwg.mxu0
        %v3511 = vmax.f32 %v3479, %v3507
        %v3512 = vmax.f32 %v3481, %v3509
        %v3513 = vmax.f32 %v3438, %v3511
        %v3514 = vmax.f32 %v3439, %v3512
        %v3515 = vadd.f32 %v3513, %v975
        %v3516 = vadd.f32 %v3514, %v975
        %vm3517 = vcmp.gt.f32.partialorder %v3515, 0.0
        %vm3518 = vcmp.gt.f32.partialorder %v3516, 0.0
        %v3519 = vmin.f32 %v3515, 0.0
        %v3520 = vmin.f32 %v3516, 0.0
        %v3521 = vmul.f32 %v3519, 1.442695
        %v3522 = vpow.pop %v3521
        %v3523 = vmul.f32 %v3520, 1.442695
        %v3524 = vpow.pop %v3523
        %v3525 = vsub.f32 %v3522, 1.0
        %v3526 = vsub.f32 %v3524, 1.0
        %v3527 = vmul.f32 %v3525, 1.6732632
        %v3528 = vmul.f32 %v3526, 1.6732632
        %v3529 = vsel %vm3517, %v3515, %v3527
        %v3530 = vsel %vm3518, %v3516, %v3528
        %v3531 = vmul.f32 %v3529, 1.050701
        %v3532 = vmul.f32 %v3530, 1.050701
        %v3533 = vpack.c.bf16 %v3531, %v3531
        %v3534 = vpack.c.bf16 %v3532, %v3532
        %3535 = vst [vmem:[#allocation2 + $0x24] sm:$0xf] %v3533
        %3536 = vst [vmem:[#allocation2 + $0x54] sm:$0xf] %v3534
        %s3537 = scalar_lea.vmem %s648, 320 [#allocation4]
        %v3538 = vld [vmem:[%s3537] sm:$0xff]
        %v3539 = vld [vmem:[%s3537 + $0x8] sm:$0xff]
        %v3540 = vld [vmem:[%s1] sm:$0xff]
        %v3541 = vld [vmem:[%s1 + $0x8] sm:$0xff]
        %v3542 = vld [vmem:[%s1 + $0x10] sm:$0xff]
        %v3543 = vld [vmem:[%s1 + $0x18] sm:$0xff]
        %v3544 = vld [vmem:[%s1 + $0x20] sm:$0xff]
        %v3545 = vld [vmem:[%s1 + $0x28] sm:$0xff]
        %v3546 = vld [vmem:[%s1 + $0x30] sm:$0xff]
        %v3547 = vld [vmem:[%s1 + $0x38] sm:$0xff]
        %v3548 = vld [vmem:[%s1 + $0x40] sm:$0xff]
        %v3549 = vld [vmem:[%s1 + $0x48] sm:$0xff]
        %v3550 = vld [vmem:[%s1 + $0x50] sm:$0xff]
        %v3551 = vld [vmem:[%s1 + $0x58] sm:$0xff]
        %v3552 = vld [vmem:[%s1 + $0x60] sm:$0xff]
        %v3553 = vld [vmem:[%s1 + $0x68] sm:$0xff]
        %v3554 = vld [vmem:[%s1 + $0x70] sm:$0xff]
        %v3555 = vld [vmem:[%s1 + $0x78] sm:$0xff]
        %v3556 = vld [vmem:[%s1 + $0x80] sm:$0xff]
        %v3557 = vld [vmem:[%s1 + $0x88] sm:$0x33]
        %v3560 = vunpack.c.l.b16 %v3538
        %v3561 = vunpack.c.h.b16 %v3538
        %v3562 = vunpack.c.l.b16 %v3539
        %v3563 = vunpack.c.h.b16 %v3539
        %v3564 = vpack.c.b16 %v3562, %v3560
        %v3565 = vpack.c.b16 %v3563, %v3561
        %v3585 = vunpack.c.l.b16 %v3540
        %v3586 = vunpack.c.h.b16 %v3540
        %v3587 = vunpack.c.l.b16 %v3541
        %v3588 = vunpack.c.h.b16 %v3541
        %v3589 = vunpack.c.l.b16 %v3542
        %v3590 = vunpack.c.h.b16 %v3542
        %v3591 = vunpack.c.l.b16 %v3543
        %v3592 = vunpack.c.h.b16 %v3543
        %v3593 = vunpack.c.l.b16 %v3544
        %v3594 = vunpack.c.h.b16 %v3544
        %v3595 = vunpack.c.l.b16 %v3545
        %v3596 = vunpack.c.h.b16 %v3545
        %v3597 = vunpack.c.l.b16 %v3546
        %v3598 = vunpack.c.h.b16 %v3546
        %v3599 = vunpack.c.l.b16 %v3547
        %v3600 = vunpack.c.h.b16 %v3547
        %v3601 = vunpack.c.l.b16 %v3548
        %v3602 = vunpack.c.h.b16 %v3548
        %v3603 = vunpack.c.l.b16 %v3549
        %v3604 = vunpack.c.h.b16 %v3549
        %v3605 = vunpack.c.l.b16 %v3550
        %v3606 = vunpack.c.h.b16 %v3550
        %v3607 = vunpack.c.l.b16 %v3551
        %v3608 = vunpack.c.h.b16 %v3551
        %v3609 = vunpack.c.l.b16 %v3552
        %v3610 = vunpack.c.h.b16 %v3552
        %v3611 = vunpack.c.l.b16 %v3553
        %v3612 = vunpack.c.h.b16 %v3553
        %v3613 = vunpack.c.l.b16 %v3554
        %v3614 = vunpack.c.h.b16 %v3554
        %v3615 = vunpack.c.l.b16 %v3555
        %v3616 = vunpack.c.h.b16 %v3555
        %v3617 = vunpack.c.l.b16 %v3556
        %v3618 = vunpack.c.h.b16 %v3556
        %v3619 = vunpack.c.l.b16 %v3557
        %v3620 = vunpack.c.h.b16 %v3557
        %v3621 = vpack.c.b16 %v3587, %v3585
        %v3622 = vpack.c.b16 %v3588, %v3586
        %v3623 = vpack.c.b16 %v3591, %v3589
        %v3624 = vpack.c.b16 %v3592, %v3590
        %v3625 = vpack.c.b16 %v3595, %v3593
        %v3626 = vpack.c.b16 %v3596, %v3594
        %v3627 = vpack.c.b16 %v3599, %v3597
        %v3628 = vpack.c.b16 %v3600, %v3598
        %v3629 = vpack.c.b16 %v3603, %v3601
        %v3630 = vpack.c.b16 %v3604, %v3602
        %v3631 = vpack.c.b16 %v3607, %v3605
        %v3632 = vpack.c.b16 %v3608, %v3606
        %v3633 = vpack.c.b16 %v3611, %v3609
        %v3634 = vpack.c.b16 %v3612, %v3610
        %v3635 = vpack.c.b16 %v3615, %v3613
        %v3636 = vpack.c.b16 %v3616, %v3614
        %v3637 = vpack.c.b16 %v3619, %v3617
        %v3638 = vpack.c.b16 %v3620, %v3618
        %v3656 = vsel %vm830, %v3565, 0
        %v3659 = vsel %vm834, %v3637, 0
        %v3662 = vsel %vm834, %v3638, 0
        %3664 = vmatpush.bf16.msra.mxu0 %v3635
        %3665 = vmatpush.bf16.msra.mxu0 %v3633
        %3666 = vmatpush.bf16.msra.mxu0 %v3631
        %3667 = vmatpush.bf16.msra.mxu0 %v3629
        %3668 = vmatpush.bf16.msra.mxu0 %v3627
        %3669 = vmatpush.bf16.msra.mxu0 %v3625
        %3670 = vmatpush.bf16.msra.mxu0 %v3623
        %3671 = vmatpush.bf16.msra.mxu0 %v3621
        %3672 = vmatmul.bf16.gmra.mxu0 %v3564
        %v3673 = vpop.f32.mrf.mxu0
        %v3674 = vadd.f32 0.0, %v3673
        %v3675 = vpop.f32.mrf.mxu0
        %v3676 = vadd.f32 0.0, %v3675
        %3677 = vdwg.mxu0
        %3678 = vmatpush.bf16.msra.mxu0 0
        %3679 = vmatpush.bf16.msra.mxu0 0
        %3680 = vmatpush.bf16.msra.mxu0 0
        %3681 = vmatpush.bf16.msra.mxu0 0
        %3682 = vmatpush.bf16.msra.mxu0 0
        %3683 = vmatpush.bf16.msra.mxu0 0
        %3684 = vmatpush.bf16.msra.mxu0 0
        %3685 = vmatpush.bf16.msra.mxu0 %v3659
        %3686 = vmatmul.bf16.gmra.mxu0 %v3656
        %v3687 = vpop.f32.mrf.mxu0
        %v3688 = vadd.f32 %v3674, %v3687
        %v3689 = vpop.f32.mrf.mxu0
        %v3690 = vadd.f32 %v3676, %v3689
        %3691 = vdwg.mxu0
        %3692 = vmatpush.bf16.msra.mxu0 %v3636
        %3693 = vmatpush.bf16.msra.mxu0 %v3634
        %3694 = vmatpush.bf16.msra.mxu0 %v3632
        %3695 = vmatpush.bf16.msra.mxu0 %v3630
        %3696 = vmatpush.bf16.msra.mxu0 %v3628
        %3697 = vmatpush.bf16.msra.mxu0 %v3626
        %3698 = vmatpush.bf16.msra.mxu0 %v3624
        %3699 = vmatpush.bf16.msra.mxu0 %v3622
        %3700 = vmatmul.bf16.gmra.mxu0 %v3564
        %v3701 = vpop.f32.mrf.mxu0
        %v3702 = vadd.f32 0.0, %v3701
        %v3703 = vpop.f32.mrf.mxu0
        %v3704 = vadd.f32 0.0, %v3703
        %3705 = vdwg.mxu0
        %3706 = vmatpush.bf16.msra.mxu0 0
        %3707 = vmatpush.bf16.msra.mxu0 0
        %3708 = vmatpush.bf16.msra.mxu0 0
        %3709 = vmatpush.bf16.msra.mxu0 0
        %3710 = vmatpush.bf16.msra.mxu0 0
        %3711 = vmatpush.bf16.msra.mxu0 0
        %3712 = vmatpush.bf16.msra.mxu0 0
        %3713 = vmatpush.bf16.msra.mxu0 %v3662
        %3714 = vmatmul.bf16.gmra.mxu0 %v3656
        %v3715 = vpop.f32.mrf.mxu0
        %v3716 = vadd.f32 %v3702, %v3715
        %v3717 = vpop.f32.mrf.mxu0
        %v3718 = vadd.f32 %v3704, %v3717
        %3719 = vdwg.mxu0
        %v3720 = vmax.f32 %v3688, %v3716
        %v3721 = vmax.f32 %v3690, %v3718
        %s3722 = scalar_lea.vmem %s648, 336 [#allocation4]
        %v3723 = vld [vmem:[%s3722] sm:$0xff]
        %v3724 = vld [vmem:[%s3722 + $0x8] sm:$0xff]
        %v3727 = vunpack.c.l.b16 %v3723
        %v3728 = vunpack.c.h.b16 %v3723
        %v3729 = vunpack.c.l.b16 %v3724
        %v3730 = vunpack.c.h.b16 %v3724
        %v3731 = vpack.c.b16 %v3729, %v3727
        %v3732 = vpack.c.b16 %v3730, %v3728
        %v3735 = vsel %vm830, %v3732, 0
        %3737 = vmatpush.bf16.msra.mxu0 %v3635
        %3738 = vmatpush.bf16.msra.mxu0 %v3633
        %3739 = vmatpush.bf16.msra.mxu0 %v3631
        %3740 = vmatpush.bf16.msra.mxu0 %v3629
        %3741 = vmatpush.bf16.msra.mxu0 %v3627
        %3742 = vmatpush.bf16.msra.mxu0 %v3625
        %3743 = vmatpush.bf16.msra.mxu0 %v3623
        %3744 = vmatpush.bf16.msra.mxu0 %v3621
        %3745 = vmatmul.bf16.gmra.mxu0 %v3731
        %v3746 = vpop.f32.mrf.mxu0
        %v3747 = vadd.f32 0.0, %v3746
        %v3748 = vpop.f32.mrf.mxu0
        %v3749 = vadd.f32 0.0, %v3748
        %3750 = vdwg.mxu0
        %3751 = vmatpush.bf16.msra.mxu0 0
        %3752 = vmatpush.bf16.msra.mxu0 0
        %3753 = vmatpush.bf16.msra.mxu0 0
        %3754 = vmatpush.bf16.msra.mxu0 0
        %3755 = vmatpush.bf16.msra.mxu0 0
        %3756 = vmatpush.bf16.msra.mxu0 0
        %3757 = vmatpush.bf16.msra.mxu0 0
        %3758 = vmatpush.bf16.msra.mxu0 %v3659
        %3759 = vmatmul.bf16.gmra.mxu0 %v3735
        %v3760 = vpop.f32.mrf.mxu0
        %v3761 = vadd.f32 %v3747, %v3760
        %v3762 = vpop.f32.mrf.mxu0
        %v3763 = vadd.f32 %v3749, %v3762
        %3764 = vdwg.mxu0
        %3765 = vmatpush.bf16.msra.mxu0 %v3636
        %3766 = vmatpush.bf16.msra.mxu0 %v3634
        %3767 = vmatpush.bf16.msra.mxu0 %v3632
        %3768 = vmatpush.bf16.msra.mxu0 %v3630
        %3769 = vmatpush.bf16.msra.mxu0 %v3628
        %3770 = vmatpush.bf16.msra.mxu0 %v3626
        %3771 = vmatpush.bf16.msra.mxu0 %v3624
        %3772 = vmatpush.bf16.msra.mxu0 %v3622
        %3773 = vmatmul.bf16.gmra.mxu0 %v3731
        %v3774 = vpop.f32.mrf.mxu0
        %v3775 = vadd.f32 0.0, %v3774
        %v3776 = vpop.f32.mrf.mxu0
        %v3777 = vadd.f32 0.0, %v3776
        %3778 = vdwg.mxu0
        %3779 = vmatpush.bf16.msra.mxu0 0
        %3780 = vmatpush.bf16.msra.mxu0 0
        %3781 = vmatpush.bf16.msra.mxu0 0
        %3782 = vmatpush.bf16.msra.mxu0 0
        %3783 = vmatpush.bf16.msra.mxu0 0
        %3784 = vmatpush.bf16.msra.mxu0 0
        %3785 = vmatpush.bf16.msra.mxu0 0
        %3786 = vmatpush.bf16.msra.mxu0 %v3662
        %3787 = vmatmul.bf16.gmra.mxu0 %v3735
        %v3788 = vpop.f32.mrf.mxu0
        %v3789 = vadd.f32 %v3775, %v3788
        %v3790 = vpop.f32.mrf.mxu0
        %v3791 = vadd.f32 %v3777, %v3790
        %3792 = vdwg.mxu0
        %v3793 = vmax.f32 %v3761, %v3789
        %v3794 = vmax.f32 %v3763, %v3791
        %v3795 = vmax.f32 %v3720, %v3793
        %v3796 = vmax.f32 %v3721, %v3794
        %v3797 = vadd.f32 %v3795, %v975
        %v3798 = vadd.f32 %v3796, %v975
        %vm3799 = vcmp.gt.f32.partialorder %v3797, 0.0
        %vm3800 = vcmp.gt.f32.partialorder %v3798, 0.0
        %v3801 = vmin.f32 %v3797, 0.0
        %v3802 = vmin.f32 %v3798, 0.0
        %v3803 = vmul.f32 %v3801, 1.442695
        %v3804 = vpow.pop %v3803
        %v3805 = vmul.f32 %v3802, 1.442695
        %v3806 = vpow.pop %v3805
        %v3807 = vsub.f32 %v3804, 1.0
        %v3808 = vsub.f32 %v3806, 1.0
        %v3809 = vmul.f32 %v3807, 1.6732632
        %v3810 = vmul.f32 %v3808, 1.6732632
        %v3811 = vsel %vm3799, %v3797, %v3809
        %v3812 = vsel %vm3800, %v3798, %v3810
        %v3813 = vmul.f32 %v3811, 1.050701
        %v3814 = vmul.f32 %v3812, 1.050701
        %v3815 = vpack.c.bf16 %v3813, %v3813
        %v3816 = vpack.c.bf16 %v3814, %v3814
        %3817 = vst [vmem:[#allocation2 + $0x28] sm:$0xf] %v3815
        %3818 = vst [vmem:[#allocation2 + $0x58] sm:$0xf] %v3816
        %s3819 = scalar_lea.vmem %s648, 352 [#allocation4]
        %v3820 = vld [vmem:[%s3819] sm:$0xff]
        %v3821 = vld [vmem:[%s3819 + $0x8] sm:$0xff]
        %v3822 = vld [vmem:[%s1] sm:$0xff]
        %v3823 = vld [vmem:[%s1 + $0x8] sm:$0xff]
        %v3824 = vld [vmem:[%s1 + $0x10] sm:$0xff]
        %v3825 = vld [vmem:[%s1 + $0x18] sm:$0xff]
        %v3826 = vld [vmem:[%s1 + $0x20] sm:$0xff]
        %v3827 = vld [vmem:[%s1 + $0x28] sm:$0xff]
        %v3828 = vld [vmem:[%s1 + $0x30] sm:$0xff]
        %v3829 = vld [vmem:[%s1 + $0x38] sm:$0xff]
        %v3830 = vld [vmem:[%s1 + $0x40] sm:$0xff]
        %v3831 = vld [vmem:[%s1 + $0x48] sm:$0xff]
        %v3832 = vld [vmem:[%s1 + $0x50] sm:$0xff]
        %v3833 = vld [vmem:[%s1 + $0x58] sm:$0xff]
        %v3834 = vld [vmem:[%s1 + $0x60] sm:$0xff]
        %v3835 = vld [vmem:[%s1 + $0x68] sm:$0xff]
        %v3836 = vld [vmem:[%s1 + $0x70] sm:$0xff]
        %v3837 = vld [vmem:[%s1 + $0x78] sm:$0xff]
        %v3838 = vld [vmem:[%s1 + $0x80] sm:$0xff]
        %v3839 = vld [vmem:[%s1 + $0x88] sm:$0x33]
        %v3842 = vunpack.c.l.b16 %v3820
        %v3843 = vunpack.c.h.b16 %v3820
        %v3844 = vunpack.c.l.b16 %v3821
        %v3845 = vunpack.c.h.b16 %v3821
        %v3846 = vpack.c.b16 %v3844, %v3842
        %v3847 = vpack.c.b16 %v3845, %v3843
        %v3867 = vunpack.c.l.b16 %v3822
        %v3868 = vunpack.c.h.b16 %v3822
        %v3869 = vunpack.c.l.b16 %v3823
        %v3870 = vunpack.c.h.b16 %v3823
        %v3871 = vunpack.c.l.b16 %v3824
        %v3872 = vunpack.c.h.b16 %v3824
        %v3873 = vunpack.c.l.b16 %v3825
        %v3874 = vunpack.c.h.b16 %v3825
        %v3875 = vunpack.c.l.b16 %v3826
        %v3876 = vunpack.c.h.b16 %v3826
        %v3877 = vunpack.c.l.b16 %v3827
        %v3878 = vunpack.c.h.b16 %v3827
        %v3879 = vunpack.c.l.b16 %v3828
        %v3880 = vunpack.c.h.b16 %v3828
        %v3881 = vunpack.c.l.b16 %v3829
        %v3882 = vunpack.c.h.b16 %v3829
        %v3883 = vunpack.c.l.b16 %v3830
        %v3884 = vunpack.c.h.b16 %v3830
        %v3885 = vunpack.c.l.b16 %v3831
        %v3886 = vunpack.c.h.b16 %v3831
        %v3887 = vunpack.c.l.b16 %v3832
        %v3888 = vunpack.c.h.b16 %v3832
        %v3889 = vunpack.c.l.b16 %v3833
        %v3890 = vunpack.c.h.b16 %v3833
        %v3891 = vunpack.c.l.b16 %v3834
        %v3892 = vunpack.c.h.b16 %v3834
        %v3893 = vunpack.c.l.b16 %v3835
        %v3894 = vunpack.c.h.b16 %v3835
        %v3895 = vunpack.c.l.b16 %v3836
        %v3896 = vunpack.c.h.b16 %v3836
        %v3897 = vunpack.c.l.b16 %v3837
        %v3898 = vunpack.c.h.b16 %v3837
        %v3899 = vunpack.c.l.b16 %v3838
        %v3900 = vunpack.c.h.b16 %v3838
        %v3901 = vunpack.c.l.b16 %v3839
        %v3902 = vunpack.c.h.b16 %v3839
        %v3903 = vpack.c.b16 %v3869, %v3867
        %v3904 = vpack.c.b16 %v3870, %v3868
        %v3905 = vpack.c.b16 %v3873, %v3871
        %v3906 = vpack.c.b16 %v3874, %v3872
        %v3907 = vpack.c.b16 %v3877, %v3875
        %v3908 = vpack.c.b16 %v3878, %v3876
        %v3909 = vpack.c.b16 %v3881, %v3879
        %v3910 = vpack.c.b16 %v3882, %v3880
        %v3911 = vpack.c.b16 %v3885, %v3883
        %v3912 = vpack.c.b16 %v3886, %v3884
        %v3913 = vpack.c.b16 %v3889, %v3887
        %v3914 = vpack.c.b16 %v3890, %v3888
        %v3915 = vpack.c.b16 %v3893, %v3891
        %v3916 = vpack.c.b16 %v3894, %v3892
        %v3917 = vpack.c.b16 %v3897, %v3895
        %v3918 = vpack.c.b16 %v3898, %v3896
        %v3919 = vpack.c.b16 %v3901, %v3899
        %v3920 = vpack.c.b16 %v3902, %v3900
        %v3938 = vsel %vm830, %v3847, 0
        %v3941 = vsel %vm834, %v3919, 0
        %v3944 = vsel %vm834, %v3920, 0
        %3946 = vmatpush.bf16.msra.mxu0 %v3917
        %3947 = vmatpush.bf16.msra.mxu0 %v3915
        %3948 = vmatpush.bf16.msra.mxu0 %v3913
        %3949 = vmatpush.bf16.msra.mxu0 %v3911
        %3950 = vmatpush.bf16.msra.mxu0 %v3909
        %3951 = vmatpush.bf16.msra.mxu0 %v3907
        %3952 = vmatpush.bf16.msra.mxu0 %v3905
        %3953 = vmatpush.bf16.msra.mxu0 %v3903
        %3954 = vmatmul.bf16.gmra.mxu0 %v3846
        %v3955 = vpop.f32.mrf.mxu0
        %v3956 = vadd.f32 0.0, %v3955
        %v3957 = vpop.f32.mrf.mxu0
        %v3958 = vadd.f32 0.0, %v3957
        %3959 = vdwg.mxu0
        %3960 = vmatpush.bf16.msra.mxu0 0
        %3961 = vmatpush.bf16.msra.mxu0 0
        %3962 = vmatpush.bf16.msra.mxu0 0
        %3963 = vmatpush.bf16.msra.mxu0 0
        %3964 = vmatpush.bf16.msra.mxu0 0
        %3965 = vmatpush.bf16.msra.mxu0 0
        %3966 = vmatpush.bf16.msra.mxu0 0
        %3967 = vmatpush.bf16.msra.mxu0 %v3941
        %3968 = vmatmul.bf16.gmra.mxu0 %v3938
        %v3969 = vpop.f32.mrf.mxu0
        %v3970 = vadd.f32 %v3956, %v3969
        %v3971 = vpop.f32.mrf.mxu0
        %v3972 = vadd.f32 %v3958, %v3971
        %3973 = vdwg.mxu0
        %3974 = vmatpush.bf16.msra.mxu0 %v3918
        %3975 = vmatpush.bf16.msra.mxu0 %v3916
        %3976 = vmatpush.bf16.msra.mxu0 %v3914
        %3977 = vmatpush.bf16.msra.mxu0 %v3912
        %3978 = vmatpush.bf16.msra.mxu0 %v3910
        %3979 = vmatpush.bf16.msra.mxu0 %v3908
        %3980 = vmatpush.bf16.msra.mxu0 %v3906
        %3981 = vmatpush.bf16.msra.mxu0 %v3904
        %3982 = vmatmul.bf16.gmra.mxu0 %v3846
        %v3983 = vpop.f32.mrf.mxu0
        %v3984 = vadd.f32 0.0, %v3983
        %v3985 = vpop.f32.mrf.mxu0
        %v3986 = vadd.f32 0.0, %v3985
        %3987 = vdwg.mxu0
        %3988 = vmatpush.bf16.msra.mxu0 0
        %3989 = vmatpush.bf16.msra.mxu0 0
        %3990 = vmatpush.bf16.msra.mxu0 0
        %3991 = vmatpush.bf16.msra.mxu0 0
        %3992 = vmatpush.bf16.msra.mxu0 0
        %3993 = vmatpush.bf16.msra.mxu0 0
        %3994 = vmatpush.bf16.msra.mxu0 0
        %3995 = vmatpush.bf16.msra.mxu0 %v3944
        %3996 = vmatmul.bf16.gmra.mxu0 %v3938
        %v3997 = vpop.f32.mrf.mxu0
        %v3998 = vadd.f32 %v3984, %v3997
        %v3999 = vpop.f32.mrf.mxu0
        %v4000 = vadd.f32 %v3986, %v3999
        %4001 = vdwg.mxu0
        %v4002 = vmax.f32 %v3970, %v3998
        %v4003 = vmax.f32 %v3972, %v4000
        %s4004 = scalar_lea.vmem %s648, 368 [#allocation4]
        %v4005 = vld [vmem:[%s4004] sm:$0xff]
        %v4006 = vld [vmem:[%s4004 + $0x8] sm:$0xff]
        %v4009 = vunpack.c.l.b16 %v4005
        %v4010 = vunpack.c.h.b16 %v4005
        %v4011 = vunpack.c.l.b16 %v4006
        %v4012 = vunpack.c.h.b16 %v4006
        %v4013 = vpack.c.b16 %v4011, %v4009
        %v4014 = vpack.c.b16 %v4012, %v4010
        %v4017 = vsel %vm830, %v4014, 0
        %4019 = vmatpush.bf16.msra.mxu0 %v3917
        %4020 = vmatpush.bf16.msra.mxu0 %v3915
        %4021 = vmatpush.bf16.msra.mxu0 %v3913
        %4022 = vmatpush.bf16.msra.mxu0 %v3911
        %4023 = vmatpush.bf16.msra.mxu0 %v3909
        %4024 = vmatpush.bf16.msra.mxu0 %v3907
        %4025 = vmatpush.bf16.msra.mxu0 %v3905
        %4026 = vmatpush.bf16.msra.mxu0 %v3903
        %4027 = vmatmul.bf16.gmra.mxu0 %v4013
        %v4028 = vpop.f32.mrf.mxu0
        %v4029 = vadd.f32 0.0, %v4028
        %v4030 = vpop.f32.mrf.mxu0
        %v4031 = vadd.f32 0.0, %v4030
        %4032 = vdwg.mxu0
        %4033 = vmatpush.bf16.msra.mxu0 0
        %4034 = vmatpush.bf16.msra.mxu0 0
        %4035 = vmatpush.bf16.msra.mxu0 0
        %4036 = vmatpush.bf16.msra.mxu0 0
        %4037 = vmatpush.bf16.msra.mxu0 0
        %4038 = vmatpush.bf16.msra.mxu0 0
        %4039 = vmatpush.bf16.msra.mxu0 0
        %4040 = vmatpush.bf16.msra.mxu0 %v3941
        %4041 = vmatmul.bf16.gmra.mxu0 %v4017
        %v4042 = vpop.f32.mrf.mxu0
        %v4043 = vadd.f32 %v4029, %v4042
        %v4044 = vpop.f32.mrf.mxu0
        %v4045 = vadd.f32 %v4031, %v4044
        %4046 = vdwg.mxu0
        %4047 = vmatpush.bf16.msra.mxu0 %v3918
        %4048 = vmatpush.bf16.msra.mxu0 %v3916
        %4049 = vmatpush.bf16.msra.mxu0 %v3914
        %4050 = vmatpush.bf16.msra.mxu0 %v3912
        %4051 = vmatpush.bf16.msra.mxu0 %v3910
        %4052 = vmatpush.bf16.msra.mxu0 %v3908
        %4053 = vmatpush.bf16.msra.mxu0 %v3906
        %4054 = vmatpush.bf16.msra.mxu0 %v3904
        %4055 = vmatmul.bf16.gmra.mxu0 %v4013
        %v4056 = vpop.f32.mrf.mxu0
        %v4057 = vadd.f32 0.0, %v4056
        %v4058 = vpop.f32.mrf.mxu0
        %v4059 = vadd.f32 0.0, %v4058
        %4060 = vdwg.mxu0
        %4061 = vmatpush.bf16.msra.mxu0 0
        %4062 = vmatpush.bf16.msra.mxu0 0
        %4063 = vmatpush.bf16.msra.mxu0 0
        %4064 = vmatpush.bf16.msra.mxu0 0
        %4065 = vmatpush.bf16.msra.mxu0 0
        %4066 = vmatpush.bf16.msra.mxu0 0
        %4067 = vmatpush.bf16.msra.mxu0 0
        %4068 = vmatpush.bf16.msra.mxu0 %v3944
        %4069 = vmatmul.bf16.gmra.mxu0 %v4017
        %v4070 = vpop.f32.mrf.mxu0
        %v4071 = vadd.f32 %v4057, %v4070
        %v4072 = vpop.f32.mrf.mxu0
        %v4073 = vadd.f32 %v4059, %v4072
        %4074 = vdwg.mxu0
        %v4075 = vmax.f32 %v4043, %v4071
        %v4076 = vmax.f32 %v4045, %v4073
        %v4077 = vmax.f32 %v4002, %v4075
        %v4078 = vmax.f32 %v4003, %v4076
        %v4079 = vadd.f32 %v4077, %v975
        %v4080 = vadd.f32 %v4078, %v975
        %vm4081 = vcmp.gt.f32.partialorder %v4079, 0.0
        %vm4082 = vcmp.gt.f32.partialorder %v4080, 0.0
        %v4083 = vmin.f32 %v4079, 0.0
        %v4084 = vmin.f32 %v4080, 0.0
        %v4085 = vmul.f32 %v4083, 1.442695
        %v4086 = vpow.pop %v4085
        %v4087 = vmul.f32 %v4084, 1.442695
        %v4088 = vpow.pop %v4087
        %v4089 = vsub.f32 %v4086, 1.0
        %v4090 = vsub.f32 %v4088, 1.0
        %v4091 = vmul.f32 %v4089, 1.6732632
        %v4092 = vmul.f32 %v4090, 1.6732632
        %v4093 = vsel %vm4081, %v4079, %v4091
        %v4094 = vsel %vm4082, %v4080, %v4092
        %v4095 = vmul.f32 %v4093, 1.050701
        %v4096 = vmul.f32 %v4094, 1.050701
        %v4097 = vpack.c.bf16 %v4095, %v4095
        %v4098 = vpack.c.bf16 %v4096, %v4096
        %4099 = vst [vmem:[#allocation2 + $0x2c] sm:$0xf] %v4097
        %4100 = vst [vmem:[#allocation2 + $0x5c] sm:$0xf] %v4098
        %v4101 = vld [vmem:[%s8] sm:$0x1]
        %4102 = vst [vmem:[#allocation3] sm:$0xff] 0.0
        %4103 = vst [vmem:[#allocation3 + $0x8] sm:$0xff] 0.0
        %v4104 = vld [vmem:[#allocation2] sm:$0xff]
        %v4105 = vld [vmem:[#allocation2 + $0x8] sm:$0xff]
        %v4106 = vld [vmem:[#allocation2 + $0x10] sm:$0xf]
        %v4107 = vld [vmem:[#allocation2 + $0x30] sm:$0xff]
        %v4108 = vld [vmem:[#allocation2 + $0x38] sm:$0xff]
        %v4109 = vld [vmem:[#allocation2 + $0x40] sm:$0xf]
        %v4110 = vld [vmem:[%s2] sm:$0xff]
        %v4111 = vld [vmem:[%s2 + $0x8] sm:$0xff]
        %v4112 = vld [vmem:[%s2 + $0x10] sm:$0xff]
        %v4113 = vld [vmem:[%s2 + $0x18] sm:$0xff]
        %v4114 = vld [vmem:[%s2 + $0x20] sm:$0xff]
        %v4115 = vld [vmem:[%s2 + $0x28] sm:$0xff]
        %v4116 = vld [vmem:[%s2 + $0x30] sm:$0xff]
        %v4117 = vld [vmem:[%s2 + $0x38] sm:$0xff]
        %v4118 = vld [vmem:[%s2 + $0x40] sm:$0xff]
        %v4119 = vld [vmem:[%s2 + $0x48] sm:$0xff]
        %v4120 = vld [vmem:[%s2 + $0x50] sm:$0xff]
        %v4121 = vld [vmem:[%s2 + $0x58] sm:$0xff]
        %v4122 = vld [vmem:[%s2 + $0x60] sm:$0xff]
        %v4123 = vld [vmem:[%s2 + $0x68] sm:$0xff]
        %v4124 = vld [vmem:[%s2 + $0x70] sm:$0xff]
        %v4125 = vld [vmem:[%s2 + $0x78] sm:$0xff]
        %v4126 = vld [vmem:[%s2 + $0x80] sm:$0xff]
        %v4127 = vld [vmem:[%s2 + $0x88] sm:$0xff]
        %v4128 = vld [vmem:[%s2 + $0x90] sm:$0xff]
        %v4129 = vld [vmem:[%s2 + $0x98] sm:$0xff]
        %v4130 = vld [vmem:[%s2 + $0xa0] sm:$0xff]
        %v4131 = vld [vmem:[%s2 + $0xa8] sm:$0xff]
        %v4132 = vld [vmem:[%s2 + $0xb0] sm:$0xff]
        %v4133 = vld [vmem:[%s2 + $0xb8] sm:$0xff]
        %v4134 = vld [vmem:[%s2 + $0xc0] sm:$0xff]
        %v4135 = vld [vmem:[%s2 + $0xc8] sm:$0xff]
        %v4136 = vld [vmem:[%s2 + $0xd0] sm:$0xff]
        %v4137 = vld [vmem:[%s2 + $0xd8] sm:$0xff]
        %v4138 = vld [vmem:[%s2 + $0xe0] sm:$0xff]
        %v4139 = vld [vmem:[%s2 + $0xe8] sm:$0xff]
        %v4140 = vld [vmem:[%s2 + $0xf0] sm:$0xff]
        %v4141 = vld [vmem:[%s2 + $0xf8] sm:$0xff]
        %v4142 = vld [vmem:[%s2 + $0x100] sm:$0xff]
        %v4143 = vld [vmem:[%s2 + $0x108] sm:$0xff]
        %v4144 = vld [vmem:[%s2 + $0x110] sm:$0xff]
        %v4145 = vld [vmem:[%s2 + $0x118] sm:$0xff]
        %v4146 = vld [vmem:[%s2 + $0x120] sm:$0xff]
        %v4147 = vld [vmem:[%s2 + $0x128] sm:$0xff]
        %v4148 = vld [vmem:[%s2 + $0x130] sm:$0xff]
        %v4149 = vld [vmem:[%s2 + $0x138] sm:$0xff]
        %v4150 = vld [vmem:[%s2 + $0x140] sm:$0xff]
        %v4151 = vld [vmem:[%s2 + $0x148] sm:$0xff]
        %v4152 = vld [vmem:[%s2 + $0x150] sm:$0xff]
        %v4153 = vld [vmem:[%s2 + $0x158] sm:$0xff]
        %v4154 = vld [vmem:[%s2 + $0x160] sm:$0xff]
        %v4155 = vld [vmem:[%s2 + $0x168] sm:$0xff]
        %v4156 = vld [vmem:[%s2 + $0x170] sm:$0xff]
        %v4157 = vld [vmem:[%s2 + $0x178] sm:$0xff]
        %v4158 = vld [vmem:[%s2 + $0x180] sm:$0xff]
        %v4159 = vld [vmem:[%s2 + $0x188] sm:$0xff]
        %v4160 = vld [vmem:[%s2 + $0x190] sm:$0xff]
        %v4161 = vld [vmem:[%s2 + $0x198] sm:$0xff]
        %v4162 = vld [vmem:[%s2 + $0x1a0] sm:$0xff]
        %v4163 = vld [vmem:[%s2 + $0x1a8] sm:$0xff]
        %v4164 = vld [vmem:[%s2 + $0x1b0] sm:$0xff]
        %v4165 = vld [vmem:[%s2 + $0x1b8] sm:$0xff]
        %v4166 = vld [vmem:[%s2 + $0x1c0] sm:$0xff]
        %v4167 = vld [vmem:[%s2 + $0x1c8] sm:$0xff]
        %v4168 = vld [vmem:[%s2 + $0x1d0] sm:$0xff]
        %v4169 = vld [vmem:[%s2 + $0x1d8] sm:$0xff]
        %v4170 = vld [vmem:[%s2 + $0x1e0] sm:$0xff]
        %v4171 = vld [vmem:[%s2 + $0x1e8] sm:$0xff]
        %v4172 = vld [vmem:[%s2 + $0x1f0] sm:$0xff]
        %v4173 = vld [vmem:[%s2 + $0x1f8] sm:$0xff]
        %v4174 = vld [vmem:[%s2 + $0x200] sm:$0xff]
        %v4175 = vld [vmem:[%s2 + $0x208] sm:$0xff]
        %v4176 = vld [vmem:[%s2 + $0x210] sm:$0xff]
        %v4177 = vld [vmem:[%s2 + $0x218] sm:$0xff]
        %v4178 = vld [vmem:[%s2 + $0x220] sm:$0xff]
        %v4179 = vld [vmem:[%s2 + $0x228] sm:$0xff]
        %v4180 = vld [vmem:[%s2 + $0x230] sm:$0xff]
        %v4181 = vld [vmem:[%s2 + $0x238] sm:$0xff]
        %v4182 = vld [vmem:[%s2 + $0x240] sm:$0xff]
        %v4183 = vld [vmem:[%s2 + $0x248] sm:$0xff]
        %v4184 = vld [vmem:[%s2 + $0x250] sm:$0xff]
        %v4185 = vld [vmem:[%s2 + $0x258] sm:$0xff]
        %v4186 = vld [vmem:[%s2 + $0x260] sm:$0xff]
        %v4187 = vld [vmem:[%s2 + $0x268] sm:$0xff]
        %v4188 = vld [vmem:[%s2 + $0x270] sm:$0xff]
        %v4189 = vld [vmem:[%s2 + $0x278] sm:$0xff]
        %v4196 = vunpack.c.l.b16 %v4104
        %v4197 = vunpack.c.h.b16 %v4104
        %v4198 = vunpack.c.l.b16 %v4105
        %v4199 = vunpack.c.h.b16 %v4105
        %v4200 = vunpack.c.l.b16 %v4106
        %v4201 = vunpack.c.l.b16 %v4107
        %v4202 = vunpack.c.h.b16 %v4107
        %v4203 = vunpack.c.l.b16 %v4108
        %v4204 = vunpack.c.h.b16 %v4108
        %v4205 = vunpack.c.l.b16 %v4109
        %v4206 = vpack.c.b16 %v4201, %v4196
        %v4207 = vpack.c.b16 %v4202, %v4197
        %v4208 = vpack.c.b16 %v4203, %v4198
        %v4209 = vpack.c.b16 %v4204, %v4199
        %v4210 = vpack.c.b16 %v4205, %v4200
        %v4296 = vunpack.c.l.b16 %v4110
        %v4297 = vunpack.c.h.b16 %v4110
        %v4298 = vunpack.c.l.b16 %v4111
        %v4299 = vunpack.c.h.b16 %v4111
        %v4300 = vunpack.c.l.b16 %v4112
        %v4301 = vunpack.c.h.b16 %v4112
        %v4302 = vunpack.c.l.b16 %v4113
        %v4303 = vunpack.c.h.b16 %v4113
        %v4304 = vunpack.c.l.b16 %v4114
        %v4305 = vunpack.c.h.b16 %v4114
        %v4306 = vunpack.c.l.b16 %v4115
        %v4307 = vunpack.c.h.b16 %v4115
        %v4308 = vunpack.c.l.b16 %v4116
        %v4309 = vunpack.c.h.b16 %v4116
        %v4310 = vunpack.c.l.b16 %v4117
        %v4311 = vunpack.c.h.b16 %v4117
        %v4312 = vunpack.c.l.b16 %v4118
        %v4313 = vunpack.c.h.b16 %v4118
        %v4314 = vunpack.c.l.b16 %v4119
        %v4315 = vunpack.c.h.b16 %v4119
        %v4316 = vunpack.c.l.b16 %v4120
        %v4317 = vunpack.c.h.b16 %v4120
        %v4318 = vunpack.c.l.b16 %v4121
        %v4319 = vunpack.c.h.b16 %v4121
        %v4320 = vunpack.c.l.b16 %v4122
        %v4321 = vunpack.c.h.b16 %v4122
        %v4322 = vunpack.c.l.b16 %v4123
        %v4323 = vunpack.c.h.b16 %v4123
        %v4324 = vunpack.c.l.b16 %v4124
        %v4325 = vunpack.c.h.b16 %v4124
        %v4326 = vunpack.c.l.b16 %v4125
        %v4327 = vunpack.c.h.b16 %v4125
        %v4328 = vunpack.c.l.b16 %v4126
        %v4329 = vunpack.c.h.b16 %v4126
        %v4330 = vunpack.c.l.b16 %v4127
        %v4331 = vunpack.c.h.b16 %v4127
        %v4332 = vunpack.c.l.b16 %v4128
        %v4333 = vunpack.c.h.b16 %v4128
        %v4334 = vunpack.c.l.b16 %v4129
        %v4335 = vunpack.c.h.b16 %v4129
        %v4336 = vunpack.c.l.b16 %v4130
        %v4337 = vunpack.c.h.b16 %v4130
        %v4338 = vunpack.c.l.b16 %v4131
        %v4339 = vunpack.c.h.b16 %v4131
        %v4340 = vunpack.c.l.b16 %v4132
        %v4341 = vunpack.c.h.b16 %v4132
        %v4342 = vunpack.c.l.b16 %v4133
        %v4343 = vunpack.c.h.b16 %v4133
        %v4344 = vunpack.c.l.b16 %v4134
        %v4345 = vunpack.c.h.b16 %v4134
        %v4346 = vunpack.c.l.b16 %v4135
        %v4347 = vunpack.c.h.b16 %v4135
        %v4348 = vunpack.c.l.b16 %v4136
        %v4349 = vunpack.c.h.b16 %v4136
        %v4350 = vunpack.c.l.b16 %v4137
        %v4351 = vunpack.c.h.b16 %v4137
        %v4352 = vunpack.c.l.b16 %v4138
        %v4353 = vunpack.c.h.b16 %v4138
        %v4354 = vunpack.c.l.b16 %v4139
        %v4355 = vunpack.c.h.b16 %v4139
        %v4356 = vunpack.c.l.b16 %v4140
        %v4357 = vunpack.c.h.b16 %v4140
        %v4358 = vunpack.c.l.b16 %v4141
        %v4359 = vunpack.c.h.b16 %v4141
        %v4360 = vunpack.c.l.b16 %v4142
        %v4361 = vunpack.c.h.b16 %v4142
        %v4362 = vunpack.c.l.b16 %v4143
        %v4363 = vunpack.c.h.b16 %v4143
        %v4364 = vunpack.c.l.b16 %v4144
        %v4365 = vunpack.c.h.b16 %v4144
        %v4366 = vunpack.c.l.b16 %v4145
        %v4367 = vunpack.c.h.b16 %v4145
        %v4368 = vunpack.c.l.b16 %v4146
        %v4369 = vunpack.c.h.b16 %v4146
        %v4370 = vunpack.c.l.b16 %v4147
        %v4371 = vunpack.c.h.b16 %v4147
        %v4372 = vunpack.c.l.b16 %v4148
        %v4373 = vunpack.c.h.b16 %v4148
        %v4374 = vunpack.c.l.b16 %v4149
        %v4375 = vunpack.c.h.b16 %v4149
        %v4376 = vunpack.c.l.b16 %v4150
        %v4377 = vunpack.c.h.b16 %v4150
        %v4378 = vunpack.c.l.b16 %v4151
        %v4379 = vunpack.c.h.b16 %v4151
        %v4380 = vunpack.c.l.b16 %v4152
        %v4381 = vunpack.c.h.b16 %v4152
        %v4382 = vunpack.c.l.b16 %v4153
        %v4383 = vunpack.c.h.b16 %v4153
        %v4384 = vunpack.c.l.b16 %v4154
        %v4385 = vunpack.c.h.b16 %v4154
        %v4386 = vunpack.c.l.b16 %v4155
        %v4387 = vunpack.c.h.b16 %v4155
        %v4388 = vunpack.c.l.b16 %v4156
        %v4389 = vunpack.c.h.b16 %v4156
        %v4390 = vunpack.c.l.b16 %v4157
        %v4391 = vunpack.c.h.b16 %v4157
        %v4392 = vunpack.c.l.b16 %v4158
        %v4393 = vunpack.c.h.b16 %v4158
        %v4394 = vunpack.c.l.b16 %v4159
        %v4395 = vunpack.c.h.b16 %v4159
        %v4396 = vunpack.c.l.b16 %v4160
        %v4397 = vunpack.c.h.b16 %v4160
        %v4398 = vunpack.c.l.b16 %v4161
        %v4399 = vunpack.c.h.b16 %v4161
        %v4400 = vunpack.c.l.b16 %v4162
        %v4401 = vunpack.c.h.b16 %v4162
        %v4402 = vunpack.c.l.b16 %v4163
        %v4403 = vunpack.c.h.b16 %v4163
        %v4404 = vunpack.c.l.b16 %v4164
        %v4405 = vunpack.c.h.b16 %v4164
        %v4406 = vunpack.c.l.b16 %v4165
        %v4407 = vunpack.c.h.b16 %v4165
        %v4408 = vunpack.c.l.b16 %v4166
        %v4409 = vunpack.c.h.b16 %v4166
        %v4410 = vunpack.c.l.b16 %v4167
        %v4411 = vunpack.c.h.b16 %v4167
        %v4412 = vunpack.c.l.b16 %v4168
        %v4413 = vunpack.c.h.b16 %v4168
        %v4414 = vunpack.c.l.b16 %v4169
        %v4415 = vunpack.c.h.b16 %v4169
        %v4416 = vunpack.c.l.b16 %v4170
        %v4417 = vunpack.c.h.b16 %v4170
        %v4418 = vunpack.c.l.b16 %v4171
        %v4419 = vunpack.c.h.b16 %v4171
        %v4420 = vunpack.c.l.b16 %v4172
        %v4421 = vunpack.c.h.b16 %v4172
        %v4422 = vunpack.c.l.b16 %v4173
        %v4423 = vunpack.c.h.b16 %v4173
        %v4424 = vunpack.c.l.b16 %v4174
        %v4425 = vunpack.c.h.b16 %v4174
        %v4426 = vunpack.c.l.b16 %v4175
        %v4427 = vunpack.c.h.b16 %v4175
        %v4428 = vunpack.c.l.b16 %v4176
        %v4429 = vunpack.c.h.b16 %v4176
        %v4430 = vunpack.c.l.b16 %v4177
        %v4431 = vunpack.c.h.b16 %v4177
        %v4432 = vunpack.c.l.b16 %v4178
        %v4433 = vunpack.c.h.b16 %v4178
        %v4434 = vunpack.c.l.b16 %v4179
        %v4435 = vunpack.c.h.b16 %v4179
        %v4436 = vunpack.c.l.b16 %v4180
        %v4437 = vunpack.c.h.b16 %v4180
        %v4438 = vunpack.c.l.b16 %v4181
        %v4439 = vunpack.c.h.b16 %v4181
        %v4440 = vunpack.c.l.b16 %v4182
        %v4441 = vunpack.c.h.b16 %v4182
        %v4442 = vunpack.c.l.b16 %v4183
        %v4443 = vunpack.c.h.b16 %v4183
        %v4444 = vunpack.c.l.b16 %v4184
        %v4445 = vunpack.c.h.b16 %v4184
        %v4446 = vunpack.c.l.b16 %v4185
        %v4447 = vunpack.c.h.b16 %v4185
        %v4448 = vunpack.c.l.b16 %v4186
        %v4449 = vunpack.c.h.b16 %v4186
        %v4450 = vunpack.c.l.b16 %v4187
        %v4451 = vunpack.c.h.b16 %v4187
        %v4452 = vunpack.c.l.b16 %v4188
        %v4453 = vunpack.c.h.b16 %v4188
        %v4454 = vunpack.c.l.b16 %v4189
        %v4455 = vunpack.c.h.b16 %v4189
        %v4456 = vpack.c.b16 %v4298, %v4296
        %v4457 = vpack.c.b16 %v4299, %v4297
        %v4458 = vpack.c.b16 %v4302, %v4300
        %v4459 = vpack.c.b16 %v4303, %v4301
        %v4460 = vpack.c.b16 %v4306, %v4304
        %v4461 = vpack.c.b16 %v4307, %v4305
        %v4462 = vpack.c.b16 %v4310, %v4308
        %v4463 = vpack.c.b16 %v4311, %v4309
        %v4464 = vpack.c.b16 %v4314, %v4312
        %v4465 = vpack.c.b16 %v4315, %v4313
        %v4466 = vpack.c.b16 %v4318, %v4316
        %v4467 = vpack.c.b16 %v4319, %v4317
        %v4468 = vpack.c.b16 %v4322, %v4320
        %v4469 = vpack.c.b16 %v4323, %v4321
        %v4470 = vpack.c.b16 %v4326, %v4324
        %v4471 = vpack.c.b16 %v4327, %v4325
        %v4472 = vpack.c.b16 %v4330, %v4328
        %v4473 = vpack.c.b16 %v4331, %v4329
        %v4474 = vpack.c.b16 %v4334, %v4332
        %v4475 = vpack.c.b16 %v4335, %v4333
        %v4476 = vpack.c.b16 %v4338, %v4336
        %v4477 = vpack.c.b16 %v4339, %v4337
        %v4478 = vpack.c.b16 %v4342, %v4340
        %v4479 = vpack.c.b16 %v4343, %v4341
        %v4480 = vpack.c.b16 %v4346, %v4344
        %v4481 = vpack.c.b16 %v4347, %v4345
        %v4482 = vpack.c.b16 %v4350, %v4348
        %v4483 = vpack.c.b16 %v4351, %v4349
        %v4484 = vpack.c.b16 %v4354, %v4352
        %v4485 = vpack.c.b16 %v4355, %v4353
        %v4486 = vpack.c.b16 %v4358, %v4356
        %v4487 = vpack.c.b16 %v4359, %v4357
        %v4488 = vpack.c.b16 %v4362, %v4360
        %v4489 = vpack.c.b16 %v4363, %v4361
        %v4490 = vpack.c.b16 %v4366, %v4364
        %v4491 = vpack.c.b16 %v4367, %v4365
        %v4492 = vpack.c.b16 %v4370, %v4368
        %v4493 = vpack.c.b16 %v4371, %v4369
        %v4494 = vpack.c.b16 %v4374, %v4372
        %v4495 = vpack.c.b16 %v4375, %v4373
        %v4496 = vpack.c.b16 %v4378, %v4376
        %v4497 = vpack.c.b16 %v4379, %v4377
        %v4498 = vpack.c.b16 %v4382, %v4380
        %v4499 = vpack.c.b16 %v4383, %v4381
        %v4500 = vpack.c.b16 %v4386, %v4384
        %v4501 = vpack.c.b16 %v4387, %v4385
        %v4502 = vpack.c.b16 %v4390, %v4388
        %v4503 = vpack.c.b16 %v4391, %v4389
        %v4504 = vpack.c.b16 %v4394, %v4392
        %v4505 = vpack.c.b16 %v4395, %v4393
        %v4506 = vpack.c.b16 %v4398, %v4396
        %v4507 = vpack.c.b16 %v4399, %v4397
        %v4508 = vpack.c.b16 %v4402, %v4400
        %v4509 = vpack.c.b16 %v4403, %v4401
        %v4510 = vpack.c.b16 %v4406, %v4404
        %v4511 = vpack.c.b16 %v4407, %v4405
        %v4512 = vpack.c.b16 %v4410, %v4408
        %v4513 = vpack.c.b16 %v4411, %v4409
        %v4514 = vpack.c.b16 %v4414, %v4412
        %v4515 = vpack.c.b16 %v4415, %v4413
        %v4516 = vpack.c.b16 %v4418, %v4416
        %v4517 = vpack.c.b16 %v4419, %v4417
        %v4518 = vpack.c.b16 %v4422, %v4420
        %v4519 = vpack.c.b16 %v4423, %v4421
        %v4520 = vpack.c.b16 %v4426, %v4424
        %v4521 = vpack.c.b16 %v4427, %v4425
        %v4522 = vpack.c.b16 %v4430, %v4428
        %v4523 = vpack.c.b16 %v4431, %v4429
        %v4524 = vpack.c.b16 %v4434, %v4432
        %v4525 = vpack.c.b16 %v4435, %v4433
        %v4526 = vpack.c.b16 %v4438, %v4436
        %v4527 = vpack.c.b16 %v4439, %v4437
        %v4528 = vpack.c.b16 %v4442, %v4440
        %v4529 = vpack.c.b16 %v4443, %v4441
        %v4530 = vpack.c.b16 %v4446, %v4444
        %v4531 = vpack.c.b16 %v4447, %v4445
        %v4532 = vpack.c.b16 %v4450, %v4448
        %v4533 = vpack.c.b16 %v4451, %v4449
        %v4534 = vpack.c.b16 %v4454, %v4452
        %v4535 = vpack.c.b16 %v4455, %v4453
        %4616 = vmatpush.bf16.msra.mxu0 %v4470
        %4617 = vmatpush.bf16.msra.mxu0 %v4468
        %4618 = vmatpush.bf16.msra.mxu0 %v4466
        %4619 = vmatpush.bf16.msra.mxu0 %v4464
        %4620 = vmatpush.bf16.msra.mxu0 %v4462
        %4621 = vmatpush.bf16.msra.mxu0 %v4460
        %4622 = vmatpush.bf16.msra.mxu0 %v4458
        %4623 = vmatpush.bf16.msra.mxu0 %v4456
        %4624 = vmatmul.bf16.gmra.mxu0 %v4206
        %v4625 = vpop.f32.mrf.mxu0
        %v4626 = vadd.f32 0.0, %v4625
        %v4627 = vpop.f32.mrf.mxu0
        %v4628 = vadd.f32 0.0, %v4627
        %4629 = vdwg.mxu0
        %4630 = vmatpush.bf16.msra.mxu0 %v4486
        %4631 = vmatpush.bf16.msra.mxu0 %v4484
        %4632 = vmatpush.bf16.msra.mxu0 %v4482
        %4633 = vmatpush.bf16.msra.mxu0 %v4480
        %4634 = vmatpush.bf16.msra.mxu0 %v4478
        %4635 = vmatpush.bf16.msra.mxu0 %v4476
        %4636 = vmatpush.bf16.msra.mxu0 %v4474
        %4637 = vmatpush.bf16.msra.mxu0 %v4472
        %4638 = vmatmul.bf16.gmra.mxu0 %v4207
        %v4639 = vpop.f32.mrf.mxu0
        %v4640 = vadd.f32 %v4626, %v4639
        %v4641 = vpop.f32.mrf.mxu0
        %v4642 = vadd.f32 %v4628, %v4641
        %4643 = vdwg.mxu0
        %4644 = vmatpush.bf16.msra.mxu0 %v4502
        %4645 = vmatpush.bf16.msra.mxu0 %v4500
        %4646 = vmatpush.bf16.msra.mxu0 %v4498
        %4647 = vmatpush.bf16.msra.mxu0 %v4496
        %4648 = vmatpush.bf16.msra.mxu0 %v4494
        %4649 = vmatpush.bf16.msra.mxu0 %v4492
        %4650 = vmatpush.bf16.msra.mxu0 %v4490
        %4651 = vmatpush.bf16.msra.mxu0 %v4488
        %4652 = vmatmul.bf16.gmra.mxu0 %v4208
        %v4653 = vpop.f32.mrf.mxu0
        %v4654 = vadd.f32 %v4640, %v4653
        %v4655 = vpop.f32.mrf.mxu0
        %v4656 = vadd.f32 %v4642, %v4655
        %4657 = vdwg.mxu0
        %4658 = vmatpush.bf16.msra.mxu0 %v4518
        %4659 = vmatpush.bf16.msra.mxu0 %v4516
        %4660 = vmatpush.bf16.msra.mxu0 %v4514
        %4661 = vmatpush.bf16.msra.mxu0 %v4512
        %4662 = vmatpush.bf16.msra.mxu0 %v4510
        %4663 = vmatpush.bf16.msra.mxu0 %v4508
        %4664 = vmatpush.bf16.msra.mxu0 %v4506
        %4665 = vmatpush.bf16.msra.mxu0 %v4504
        %4666 = vmatmul.bf16.gmra.mxu0 %v4209
        %v4667 = vpop.f32.mrf.mxu0
        %v4668 = vadd.f32 %v4654, %v4667
        %v4669 = vpop.f32.mrf.mxu0
        %v4670 = vadd.f32 %v4656, %v4669
        %4671 = vdwg.mxu0
        %4672 = vmatpush.bf16.msra.mxu0 %v4534
        %4673 = vmatpush.bf16.msra.mxu0 %v4532
        %4674 = vmatpush.bf16.msra.mxu0 %v4530
        %4675 = vmatpush.bf16.msra.mxu0 %v4528
        %4676 = vmatpush.bf16.msra.mxu0 %v4526
        %4677 = vmatpush.bf16.msra.mxu0 %v4524
        %4678 = vmatpush.bf16.msra.mxu0 %v4522
        %4679 = vmatpush.bf16.msra.mxu0 %v4520
        %4680 = vmatmul.bf16.gmra.mxu0 %v4210
        %v4681 = vpop.f32.mrf.mxu0
        %v4682 = vadd.f32 %v4668, %v4681
        %v4683 = vpop.f32.mrf.mxu0
        %v4684 = vadd.f32 %v4670, %v4683
        %4685 = vdwg.mxu0
        %4686 = vmatpush.bf16.msra.mxu0 %v4471
        %4687 = vmatpush.bf16.msra.mxu0 %v4469
        %4688 = vmatpush.bf16.msra.mxu0 %v4467
        %4689 = vmatpush.bf16.msra.mxu0 %v4465
        %4690 = vmatpush.bf16.msra.mxu0 %v4463
        %4691 = vmatpush.bf16.msra.mxu0 %v4461
        %4692 = vmatpush.bf16.msra.mxu0 %v4459
        %4693 = vmatpush.bf16.msra.mxu0 %v4457
        %4694 = vmatmul.bf16.gmra.mxu0 %v4206
        %v4695 = vpop.f32.mrf.mxu0
        %v4696 = vadd.f32 0.0, %v4695
        %v4697 = vpop.f32.mrf.mxu0
        %v4698 = vadd.f32 0.0, %v4697
        %4699 = vdwg.mxu0
        %4700 = vmatpush.bf16.msra.mxu0 %v4487
        %4701 = vmatpush.bf16.msra.mxu0 %v4485
        %4702 = vmatpush.bf16.msra.mxu0 %v4483
        %4703 = vmatpush.bf16.msra.mxu0 %v4481
        %4704 = vmatpush.bf16.msra.mxu0 %v4479
        %4705 = vmatpush.bf16.msra.mxu0 %v4477
        %4706 = vmatpush.bf16.msra.mxu0 %v4475
        %4707 = vmatpush.bf16.msra.mxu0 %v4473
        %4708 = vmatmul.bf16.gmra.mxu0 %v4207
        %v4709 = vpop.f32.mrf.mxu0
        %v4710 = vadd.f32 %v4696, %v4709
        %v4711 = vpop.f32.mrf.mxu0
        %v4712 = vadd.f32 %v4698, %v4711
        %4713 = vdwg.mxu0
        %4714 = vmatpush.bf16.msra.mxu0 %v4503
        %4715 = vmatpush.bf16.msra.mxu0 %v4501
        %4716 = vmatpush.bf16.msra.mxu0 %v4499
        %4717 = vmatpush.bf16.msra.mxu0 %v4497
        %4718 = vmatpush.bf16.msra.mxu0 %v4495
        %4719 = vmatpush.bf16.msra.mxu0 %v4493
        %4720 = vmatpush.bf16.msra.mxu0 %v4491
        %4721 = vmatpush.bf16.msra.mxu0 %v4489
        %4722 = vmatmul.bf16.gmra.mxu0 %v4208
        %v4723 = vpop.f32.mrf.mxu0
        %v4724 = vadd.f32 %v4710, %v4723
        %v4725 = vpop.f32.mrf.mxu0
        %v4726 = vadd.f32 %v4712, %v4725
        %4727 = vdwg.mxu0
        %4728 = vmatpush.bf16.msra.mxu0 %v4519
        %4729 = vmatpush.bf16.msra.mxu0 %v4517
        %4730 = vmatpush.bf16.msra.mxu0 %v4515
        %4731 = vmatpush.bf16.msra.mxu0 %v4513
        %4732 = vmatpush.bf16.msra.mxu0 %v4511
        %4733 = vmatpush.bf16.msra.mxu0 %v4509
        %4734 = vmatpush.bf16.msra.mxu0 %v4507
        %4735 = vmatpush.bf16.msra.mxu0 %v4505
        %4736 = vmatmul.bf16.gmra.mxu0 %v4209
        %v4737 = vpop.f32.mrf.mxu0
        %v4738 = vadd.f32 %v4724, %v4737
        %v4739 = vpop.f32.mrf.mxu0
        %v4740 = vadd.f32 %v4726, %v4739
        %4741 = vdwg.mxu0
        %4742 = vmatpush.bf16.msra.mxu0 %v4535
        %4743 = vmatpush.bf16.msra.mxu0 %v4533
        %4744 = vmatpush.bf16.msra.mxu0 %v4531
        %4745 = vmatpush.bf16.msra.mxu0 %v4529
        %4746 = vmatpush.bf16.msra.mxu0 %v4527
        %4747 = vmatpush.bf16.msra.mxu0 %v4525
        %4748 = vmatpush.bf16.msra.mxu0 %v4523
        %4749 = vmatpush.bf16.msra.mxu0 %v4521
        %4750 = vmatmul.bf16.gmra.mxu0 %v4210
        %v4751 = vpop.f32.mrf.mxu0
        %v4752 = vadd.f32 %v4738, %v4751
        %v4753 = vpop.f32.mrf.mxu0
        %v4754 = vadd.f32 %v4740, %v4753
        %4755 = vdwg.mxu0
        %v4756 = vmax.f32 %v4682, %v4752
        %v4757 = vmax.f32 %v4684, %v4754
        %v4758 = vld [vmem:[#allocation2 + $0x4] sm:$0xff]
        %v4759 = vld [vmem:[#allocation2 + $0xc] sm:$0xff]
        %v4760 = vld [vmem:[#allocation2 + $0x14] sm:$0xf]
        %v4761 = vld [vmem:[#allocation2 + $0x34] sm:$0xff]
        %v4762 = vld [vmem:[#allocation2 + $0x3c] sm:$0xff]
        %v4763 = vld [vmem:[#allocation2 + $0x44] sm:$0xf]
        %v4770 = vunpack.c.l.b16 %v4758
        %v4771 = vunpack.c.h.b16 %v4758
        %v4772 = vunpack.c.l.b16 %v4759
        %v4773 = vunpack.c.h.b16 %v4759
        %v4774 = vunpack.c.l.b16 %v4760
        %v4775 = vunpack.c.l.b16 %v4761
        %v4776 = vunpack.c.h.b16 %v4761
        %v4777 = vunpack.c.l.b16 %v4762
        %v4778 = vunpack.c.h.b16 %v4762
        %v4779 = vunpack.c.l.b16 %v4763
        %v4780 = vpack.c.b16 %v4775, %v4770
        %v4781 = vpack.c.b16 %v4776, %v4771
        %v4782 = vpack.c.b16 %v4777, %v4772
        %v4783 = vpack.c.b16 %v4778, %v4773
        %v4784 = vpack.c.b16 %v4779, %v4774
        %4790 = vmatpush.bf16.msra.mxu0 %v4470
        %4791 = vmatpush.bf16.msra.mxu0 %v4468
        %4792 = vmatpush.bf16.msra.mxu0 %v4466
        %4793 = vmatpush.bf16.msra.mxu0 %v4464
        %4794 = vmatpush.bf16.msra.mxu0 %v4462
        %4795 = vmatpush.bf16.msra.mxu0 %v4460
        %4796 = vmatpush.bf16.msra.mxu0 %v4458
        %4797 = vmatpush.bf16.msra.mxu0 %v4456
        %4798 = vmatmul.bf16.gmra.mxu0 %v4780
        %v4799 = vpop.f32.mrf.mxu0
        %v4800 = vadd.f32 0.0, %v4799
        %v4801 = vpop.f32.mrf.mxu0
        %v4802 = vadd.f32 0.0, %v4801
        %4803 = vdwg.mxu0
        %4804 = vmatpush.bf16.msra.mxu0 %v4486
        %4805 = vmatpush.bf16.msra.mxu0 %v4484
        %4806 = vmatpush.bf16.msra.mxu0 %v4482
        %4807 = vmatpush.bf16.msra.mxu0 %v4480
        %4808 = vmatpush.bf16.msra.mxu0 %v4478
        %4809 = vmatpush.bf16.msra.mxu0 %v4476
        %4810 = vmatpush.bf16.msra.mxu0 %v4474
        %4811 = vmatpush.bf16.msra.mxu0 %v4472
        %4812 = vmatmul.bf16.gmra.mxu0 %v4781
        %v4813 = vpop.f32.mrf.mxu0
        %v4814 = vadd.f32 %v4800, %v4813
        %v4815 = vpop.f32.mrf.mxu0
        %v4816 = vadd.f32 %v4802, %v4815
        %4817 = vdwg.mxu0
        %4818 = vmatpush.bf16.msra.mxu0 %v4502
        %4819 = vmatpush.bf16.msra.mxu0 %v4500
        %4820 = vmatpush.bf16.msra.mxu0 %v4498
        %4821 = vmatpush.bf16.msra.mxu0 %v4496
        %4822 = vmatpush.bf16.msra.mxu0 %v4494
        %4823 = vmatpush.bf16.msra.mxu0 %v4492
        %4824 = vmatpush.bf16.msra.mxu0 %v4490
        %4825 = vmatpush.bf16.msra.mxu0 %v4488
        %4826 = vmatmul.bf16.gmra.mxu0 %v4782
        %v4827 = vpop.f32.mrf.mxu0
        %v4828 = vadd.f32 %v4814, %v4827
        %v4829 = vpop.f32.mrf.mxu0
        %v4830 = vadd.f32 %v4816, %v4829
        %4831 = vdwg.mxu0
        %4832 = vmatpush.bf16.msra.mxu0 %v4518
        %4833 = vmatpush.bf16.msra.mxu0 %v4516
        %4834 = vmatpush.bf16.msra.mxu0 %v4514
        %4835 = vmatpush.bf16.msra.mxu0 %v4512
        %4836 = vmatpush.bf16.msra.mxu0 %v4510
        %4837 = vmatpush.bf16.msra.mxu0 %v4508
        %4838 = vmatpush.bf16.msra.mxu0 %v4506
        %4839 = vmatpush.bf16.msra.mxu0 %v4504
        %4840 = vmatmul.bf16.gmra.mxu0 %v4783
        %v4841 = vpop.f32.mrf.mxu0
        %v4842 = vadd.f32 %v4828, %v4841
        %v4843 = vpop.f32.mrf.mxu0
        %v4844 = vadd.f32 %v4830, %v4843
        %4845 = vdwg.mxu0
        %4846 = vmatpush.bf16.msra.mxu0 %v4534
        %4847 = vmatpush.bf16.msra.mxu0 %v4532
        %4848 = vmatpush.bf16.msra.mxu0 %v4530
        %4849 = vmatpush.bf16.msra.mxu0 %v4528
        %4850 = vmatpush.bf16.msra.mxu0 %v4526
        %4851 = vmatpush.bf16.msra.mxu0 %v4524
        %4852 = vmatpush.bf16.msra.mxu0 %v4522
        %4853 = vmatpush.bf16.msra.mxu0 %v4520
        %4854 = vmatmul.bf16.gmra.mxu0 %v4784
        %v4855 = vpop.f32.mrf.mxu0
        %v4856 = vadd.f32 %v4842, %v4855
        %v4857 = vpop.f32.mrf.mxu0
        %v4858 = vadd.f32 %v4844, %v4857
        %4859 = vdwg.mxu0
        %4860 = vmatpush.bf16.msra.mxu0 %v4471
        %4861 = vmatpush.bf16.msra.mxu0 %v4469
        %4862 = vmatpush.bf16.msra.mxu0 %v4467
        %4863 = vmatpush.bf16.msra.mxu0 %v4465
        %4864 = vmatpush.bf16.msra.mxu0 %v4463
        %4865 = vmatpush.bf16.msra.mxu0 %v4461
        %4866 = vmatpush.bf16.msra.mxu0 %v4459
        %4867 = vmatpush.bf16.msra.mxu0 %v4457
        %4868 = vmatmul.bf16.gmra.mxu0 %v4780
        %v4869 = vpop.f32.mrf.mxu0
        %v4870 = vadd.f32 0.0, %v4869
        %v4871 = vpop.f32.mrf.mxu0
        %v4872 = vadd.f32 0.0, %v4871
        %4873 = vdwg.mxu0
        %4874 = vmatpush.bf16.msra.mxu0 %v4487
        %4875 = vmatpush.bf16.msra.mxu0 %v4485
        %4876 = vmatpush.bf16.msra.mxu0 %v4483
        %4877 = vmatpush.bf16.msra.mxu0 %v4481
        %4878 = vmatpush.bf16.msra.mxu0 %v4479
        %4879 = vmatpush.bf16.msra.mxu0 %v4477
        %4880 = vmatpush.bf16.msra.mxu0 %v4475
        %4881 = vmatpush.bf16.msra.mxu0 %v4473
        %4882 = vmatmul.bf16.gmra.mxu0 %v4781
        %v4883 = vpop.f32.mrf.mxu0
        %v4884 = vadd.f32 %v4870, %v4883
        %v4885 = vpop.f32.mrf.mxu0
        %v4886 = vadd.f32 %v4872, %v4885
        %4887 = vdwg.mxu0
        %4888 = vmatpush.bf16.msra.mxu0 %v4503
        %4889 = vmatpush.bf16.msra.mxu0 %v4501
        %4890 = vmatpush.bf16.msra.mxu0 %v4499
        %4891 = vmatpush.bf16.msra.mxu0 %v4497
        %4892 = vmatpush.bf16.msra.mxu0 %v4495
        %4893 = vmatpush.bf16.msra.mxu0 %v4493
        %4894 = vmatpush.bf16.msra.mxu0 %v4491
        %4895 = vmatpush.bf16.msra.mxu0 %v4489
        %4896 = vmatmul.bf16.gmra.mxu0 %v4782
        %v4897 = vpop.f32.mrf.mxu0
        %v4898 = vadd.f32 %v4884, %v4897
        %v4899 = vpop.f32.mrf.mxu0
        %v4900 = vadd.f32 %v4886, %v4899
        %4901 = vdwg.mxu0
        %4902 = vmatpush.bf16.msra.mxu0 %v4519
        %4903 = vmatpush.bf16.msra.mxu0 %v4517
        %4904 = vmatpush.bf16.msra.mxu0 %v4515
        %4905 = vmatpush.bf16.msra.mxu0 %v4513
        %4906 = vmatpush.bf16.msra.mxu0 %v4511
        %4907 = vmatpush.bf16.msra.mxu0 %v4509
        %4908 = vmatpush.bf16.msra.mxu0 %v4507
        %4909 = vmatpush.bf16.msra.mxu0 %v4505
        %4910 = vmatmul.bf16.gmra.mxu0 %v4783
        %v4911 = vpop.f32.mrf.mxu0
        %v4912 = vadd.f32 %v4898, %v4911
        %v4913 = vpop.f32.mrf.mxu0
        %v4914 = vadd.f32 %v4900, %v4913
        %4915 = vdwg.mxu0
        %4916 = vmatpush.bf16.msra.mxu0 %v4535
        %4917 = vmatpush.bf16.msra.mxu0 %v4533
        %4918 = vmatpush.bf16.msra.mxu0 %v4531
        %4919 = vmatpush.bf16.msra.mxu0 %v4529
        %4920 = vmatpush.bf16.msra.mxu0 %v4527
        %4921 = vmatpush.bf16.msra.mxu0 %v4525
        %4922 = vmatpush.bf16.msra.mxu0 %v4523
        %4923 = vmatpush.bf16.msra.mxu0 %v4521
        %4924 = vmatmul.bf16.gmra.mxu0 %v4784
        %v4925 = vpop.f32.mrf.mxu0
        %v4926 = vadd.f32 %v4912, %v4925
        %v4927 = vpop.f32.mrf.mxu0
        %v4928 = vadd.f32 %v4914, %v4927
        %4929 = vdwg.mxu0
        %v4930 = vmax.f32 %v4856, %v4926
        %v4931 = vmax.f32 %v4858, %v4928
        %v4932 = vmax.f32 %v4756, %v4930
        %v4933 = vmax.f32 %v4757, %v4931
        %v4935 = vperm.slane %v4101, 0
        %v4937 = vadd.f32 %v4932, %v4935
        %v4938 = vadd.f32 %v4933, %v4935
        %vm4939 = vcmp.gt.f32.partialorder %v4937, 0.0
        %vm4940 = vcmp.gt.f32.partialorder %v4938, 0.0
        %v4941 = vmin.f32 %v4937, 0.0
        %v4942 = vmin.f32 %v4938, 0.0
        %v4943 = vmul.f32 %v4941, 1.442695
        %v4944 = vpow.pop %v4943
        %v4945 = vmul.f32 %v4942, 1.442695
        %v4946 = vpow.pop %v4945
        %v4947 = vsub.f32 %v4944, 1.0
        %v4948 = vsub.f32 %v4946, 1.0
        %v4949 = vmul.f32 %v4947, 1.6732632
        %v4950 = vmul.f32 %v4948, 1.6732632
        %v4951 = vsel %vm4939, %v4937, %v4949
        %v4952 = vsel %vm4940, %v4938, %v4950
        %v4953 = vmul.f32 %v4951, 1.050701
        %v4954 = vmul.f32 %v4952, 1.050701
        %v4955 = vpack.c.bf16 %v4954, %v4953
        %v4956 = vld [vmem:[#allocation3] sm:$0xff]
        %v4957 = vld [vmem:[#allocation3 + $0x8] sm:$0xff]
        %v4958 = vld [vmem:[%s3] sm:$0xf]
        %v4959 = vld [vmem:[%s3 + $0x4] sm:$0xf]
        %v4960 = vld [vmem:[%s3 + $0x8] sm:$0xf]
        %v4961 = vld [vmem:[%s3 + $0xc] sm:$0xf]
        %v4962 = vld [vmem:[%s3 + $0x10] sm:$0xf]
        %v4963 = vld [vmem:[%s3 + $0x14] sm:$0xf]
        %v4964 = vld [vmem:[%s3 + $0x18] sm:$0xf]
        %v4965 = vld [vmem:[%s3 + $0x1c] sm:$0xf]
        %v4966 = vld [vmem:[%s3 + $0x20] sm:$0xf]
        %v4967 = vld [vmem:[%s3 + $0x24] sm:$0xf]
        %v4968 = vld [vmem:[%s3 + $0x28] sm:$0xf]
        %v4969 = vld [vmem:[%s3 + $0x2c] sm:$0xf]
        %v4970 = vld [vmem:[%s3 + $0x30] sm:$0xf]
        %v4971 = vld [vmem:[%s3 + $0x34] sm:$0xf]
        %v4972 = vld [vmem:[%s3 + $0x38] sm:$0xf]
        %v4973 = vld [vmem:[%s3 + $0x3c] sm:$0xf]
        %v4990 = vunpack.c.l.b16 %v4958
        %v4991 = vunpack.c.l.b16 %v4959
        %v4992 = vunpack.c.l.b16 %v4960
        %v4993 = vunpack.c.l.b16 %v4961
        %v4994 = vunpack.c.l.b16 %v4962
        %v4995 = vunpack.c.l.b16 %v4963
        %v4996 = vunpack.c.l.b16 %v4964
        %v4997 = vunpack.c.l.b16 %v4965
        %v4998 = vunpack.c.l.b16 %v4966
        %v4999 = vunpack.c.l.b16 %v4967
        %v5000 = vunpack.c.l.b16 %v4968
        %v5001 = vunpack.c.l.b16 %v4969
        %v5002 = vunpack.c.l.b16 %v4970
        %v5003 = vunpack.c.l.b16 %v4971
        %v5004 = vunpack.c.l.b16 %v4972
        %v5005 = vunpack.c.l.b16 %v4973
        %v5006 = vpack.c.b16 %v4991, %v4990
        %v5007 = vpack.c.b16 %v4993, %v4992
        %v5008 = vpack.c.b16 %v4995, %v4994
        %v5009 = vpack.c.b16 %v4997, %v4996
        %v5010 = vpack.c.b16 %v4999, %v4998
        %v5011 = vpack.c.b16 %v5001, %v5000
        %v5012 = vpack.c.b16 %v5003, %v5002
        %v5013 = vpack.c.b16 %v5005, %v5004
        %5022 = vmatpush.bf16.msra.mxu0 %v5013
        %5023 = vmatpush.bf16.msra.mxu0 %v5012
        %5024 = vmatpush.bf16.msra.mxu0 %v5011
        %5025 = vmatpush.bf16.msra.mxu0 %v5010
        %5026 = vmatpush.bf16.msra.mxu0 %v5009
        %5027 = vmatpush.bf16.msra.mxu0 %v5008
        %5028 = vmatpush.bf16.msra.mxu0 %v5007
        %5029 = vmatpush.bf16.msra.mxu0 %v5006
        %5030 = vmatmul.bf16.gmra.mxu0 %v4955
        %v5031 = vpop.f32.mrf.mxu0
        %v5032 = vadd.f32 0.0, %v5031
        %v5033 = vpop.f32.mrf.mxu0
        %v5034 = vadd.f32 0.0, %v5033
        %5035 = vdwg.mxu0
        %v5036 = vadd.f32 %v4956, %v5032
        %v5037 = vadd.f32 %v4957, %v5034
        %5038 = vst [vmem:[#allocation3] sm:$0xff] %v5036
        %5039 = vst [vmem:[#allocation3 + $0x8] sm:$0xff] %v5037
        %v5040 = vld [vmem:[#allocation2 + $0x8] sm:$0xff]
        %v5041 = vld [vmem:[#allocation2 + $0x10] sm:$0xff]
        %v5042 = vld [vmem:[#allocation2 + $0x18] sm:$0xf]
        %v5043 = vld [vmem:[#allocation2 + $0x38] sm:$0xff]
        %v5044 = vld [vmem:[#allocation2 + $0x40] sm:$0xff]
        %v5045 = vld [vmem:[#allocation2 + $0x48] sm:$0xf]
        %v5046 = vld [vmem:[%s2] sm:$0xff]
        %v5047 = vld [vmem:[%s2 + $0x8] sm:$0xff]
        %v5048 = vld [vmem:[%s2 + $0x10] sm:$0xff]
        %v5049 = vld [vmem:[%s2 + $0x18] sm:$0xff]
        %v5050 = vld [vmem:[%s2 + $0x20] sm:$0xff]
        %v5051 = vld [vmem:[%s2 + $0x28] sm:$0xff]
        %v5052 = vld [vmem:[%s2 + $0x30] sm:$0xff]
        %v5053 = vld [vmem:[%s2 + $0x38] sm:$0xff]
        %v5054 = vld [vmem:[%s2 + $0x40] sm:$0xff]
        %v5055 = vld [vmem:[%s2 + $0x48] sm:$0xff]
        %v5056 = vld [vmem:[%s2 + $0x50] sm:$0xff]
        %v5057 = vld [vmem:[%s2 + $0x58] sm:$0xff]
        %v5058 = vld [vmem:[%s2 + $0x60] sm:$0xff]
        %v5059 = vld [vmem:[%s2 + $0x68] sm:$0xff]
        %v5060 = vld [vmem:[%s2 + $0x70] sm:$0xff]
        %v5061 = vld [vmem:[%s2 + $0x78] sm:$0xff]
        %v5062 = vld [vmem:[%s2 + $0x80] sm:$0xff]
        %v5063 = vld [vmem:[%s2 + $0x88] sm:$0xff]
        %v5064 = vld [vmem:[%s2 + $0x90] sm:$0xff]
        %v5065 = vld [vmem:[%s2 + $0x98] sm:$0xff]
        %v5066 = vld [vmem:[%s2 + $0xa0] sm:$0xff]
        %v5067 = vld [vmem:[%s2 + $0xa8] sm:$0xff]
        %v5068 = vld [vmem:[%s2 + $0xb0] sm:$0xff]
        %v5069 = vld [vmem:[%s2 + $0xb8] sm:$0xff]
        %v5070 = vld [vmem:[%s2 + $0xc0] sm:$0xff]
        %v5071 = vld [vmem:[%s2 + $0xc8] sm:$0xff]
        %v5072 = vld [vmem:[%s2 + $0xd0] sm:$0xff]
        %v5073 = vld [vmem:[%s2 + $0xd8] sm:$0xff]
        %v5074 = vld [vmem:[%s2 + $0xe0] sm:$0xff]
        %v5075 = vld [vmem:[%s2 + $0xe8] sm:$0xff]
        %v5076 = vld [vmem:[%s2 + $0xf0] sm:$0xff]
        %v5077 = vld [vmem:[%s2 + $0xf8] sm:$0xff]
        %v5078 = vld [vmem:[%s2 + $0x100] sm:$0xff]
        %v5079 = vld [vmem:[%s2 + $0x108] sm:$0xff]
        %v5080 = vld [vmem:[%s2 + $0x110] sm:$0xff]
        %v5081 = vld [vmem:[%s2 + $0x118] sm:$0xff]
        %v5082 = vld [vmem:[%s2 + $0x120] sm:$0xff]
        %v5083 = vld [vmem:[%s2 + $0x128] sm:$0xff]
        %v5084 = vld [vmem:[%s2 + $0x130] sm:$0xff]
        %v5085 = vld [vmem:[%s2 + $0x138] sm:$0xff]
        %v5086 = vld [vmem:[%s2 + $0x140] sm:$0xff]
        %v5087 = vld [vmem:[%s2 + $0x148] sm:$0xff]
        %v5088 = vld [vmem:[%s2 + $0x150] sm:$0xff]
        %v5089 = vld [vmem:[%s2 + $0x158] sm:$0xff]
        %v5090 = vld [vmem:[%s2 + $0x160] sm:$0xff]
        %v5091 = vld [vmem:[%s2 + $0x168] sm:$0xff]
        %v5092 = vld [vmem:[%s2 + $0x170] sm:$0xff]
        %v5093 = vld [vmem:[%s2 + $0x178] sm:$0xff]
        %v5094 = vld [vmem:[%s2 + $0x180] sm:$0xff]
        %v5095 = vld [vmem:[%s2 + $0x188] sm:$0xff]
        %v5096 = vld [vmem:[%s2 + $0x190] sm:$0xff]
        %v5097 = vld [vmem:[%s2 + $0x198] sm:$0xff]
        %v5098 = vld [vmem:[%s2 + $0x1a0] sm:$0xff]
        %v5099 = vld [vmem:[%s2 + $0x1a8] sm:$0xff]
        %v5100 = vld [vmem:[%s2 + $0x1b0] sm:$0xff]
        %v5101 = vld [vmem:[%s2 + $0x1b8] sm:$0xff]
        %v5102 = vld [vmem:[%s2 + $0x1c0] sm:$0xff]
        %v5103 = vld [vmem:[%s2 + $0x1c8] sm:$0xff]
        %v5104 = vld [vmem:[%s2 + $0x1d0] sm:$0xff]
        %v5105 = vld [vmem:[%s2 + $0x1d8] sm:$0xff]
        %v5106 = vld [vmem:[%s2 + $0x1e0] sm:$0xff]
        %v5107 = vld [vmem:[%s2 + $0x1e8] sm:$0xff]
        %v5108 = vld [vmem:[%s2 + $0x1f0] sm:$0xff]
        %v5109 = vld [vmem:[%s2 + $0x1f8] sm:$0xff]
        %v5110 = vld [vmem:[%s2 + $0x200] sm:$0xff]
        %v5111 = vld [vmem:[%s2 + $0x208] sm:$0xff]
        %v5112 = vld [vmem:[%s2 + $0x210] sm:$0xff]
        %v5113 = vld [vmem:[%s2 + $0x218] sm:$0xff]
        %v5114 = vld [vmem:[%s2 + $0x220] sm:$0xff]
        %v5115 = vld [vmem:[%s2 + $0x228] sm:$0xff]
        %v5116 = vld [vmem:[%s2 + $0x230] sm:$0xff]
        %v5117 = vld [vmem:[%s2 + $0x238] sm:$0xff]
        %v5118 = vld [vmem:[%s2 + $0x240] sm:$0xff]
        %v5119 = vld [vmem:[%s2 + $0x248] sm:$0xff]
        %v5120 = vld [vmem:[%s2 + $0x250] sm:$0xff]
        %v5121 = vld [vmem:[%s2 + $0x258] sm:$0xff]
        %v5122 = vld [vmem:[%s2 + $0x260] sm:$0xff]
        %v5123 = vld [vmem:[%s2 + $0x268] sm:$0xff]
        %v5124 = vld [vmem:[%s2 + $0x270] sm:$0xff]
        %v5125 = vld [vmem:[%s2 + $0x278] sm:$0xff]
        %v5132 = vunpack.c.l.b16 %v5040
        %v5133 = vunpack.c.h.b16 %v5040
        %v5134 = vunpack.c.l.b16 %v5041
        %v5135 = vunpack.c.h.b16 %v5041
        %v5136 = vunpack.c.l.b16 %v5042
        %v5137 = vunpack.c.l.b16 %v5043
        %v5138 = vunpack.c.h.b16 %v5043
        %v5139 = vunpack.c.l.b16 %v5044
        %v5140 = vunpack.c.h.b16 %v5044
        %v5141 = vunpack.c.l.b16 %v5045
        %v5142 = vpack.c.b16 %v5137, %v5132
        %v5143 = vpack.c.b16 %v5138, %v5133
        %v5144 = vpack.c.b16 %v5139, %v5134
        %v5145 = vpack.c.b16 %v5140, %v5135
        %v5146 = vpack.c.b16 %v5141, %v5136
        %v5232 = vunpack.c.l.b16 %v5046
        %v5233 = vunpack.c.h.b16 %v5046
        %v5234 = vunpack.c.l.b16 %v5047
        %v5235 = vunpack.c.h.b16 %v5047
        %v5236 = vunpack.c.l.b16 %v5048
        %v5237 = vunpack.c.h.b16 %v5048
        %v5238 = vunpack.c.l.b16 %v5049
        %v5239 = vunpack.c.h.b16 %v5049
        %v5240 = vunpack.c.l.b16 %v5050
        %v5241 = vunpack.c.h.b16 %v5050
        %v5242 = vunpack.c.l.b16 %v5051
        %v5243 = vunpack.c.h.b16 %v5051
        %v5244 = vunpack.c.l.b16 %v5052
        %v5245 = vunpack.c.h.b16 %v5052
        %v5246 = vunpack.c.l.b16 %v5053
        %v5247 = vunpack.c.h.b16 %v5053
        %v5248 = vunpack.c.l.b16 %v5054
        %v5249 = vunpack.c.h.b16 %v5054
        %v5250 = vunpack.c.l.b16 %v5055
        %v5251 = vunpack.c.h.b16 %v5055
        %v5252 = vunpack.c.l.b16 %v5056
        %v5253 = vunpack.c.h.b16 %v5056
        %v5254 = vunpack.c.l.b16 %v5057
        %v5255 = vunpack.c.h.b16 %v5057
        %v5256 = vunpack.c.l.b16 %v5058
        %v5257 = vunpack.c.h.b16 %v5058
        %v5258 = vunpack.c.l.b16 %v5059
        %v5259 = vunpack.c.h.b16 %v5059
        %v5260 = vunpack.c.l.b16 %v5060
        %v5261 = vunpack.c.h.b16 %v5060
        %v5262 = vunpack.c.l.b16 %v5061
        %v5263 = vunpack.c.h.b16 %v5061
        %v5264 = vunpack.c.l.b16 %v5062
        %v5265 = vunpack.c.h.b16 %v5062
        %v5266 = vunpack.c.l.b16 %v5063
        %v5267 = vunpack.c.h.b16 %v5063
        %v5268 = vunpack.c.l.b16 %v5064
        %v5269 = vunpack.c.h.b16 %v5064
        %v5270 = vunpack.c.l.b16 %v5065
        %v5271 = vunpack.c.h.b16 %v5065
        %v5272 = vunpack.c.l.b16 %v5066
        %v5273 = vunpack.c.h.b16 %v5066
        %v5274 = vunpack.c.l.b16 %v5067
        %v5275 = vunpack.c.h.b16 %v5067
        %v5276 = vunpack.c.l.b16 %v5068
        %v5277 = vunpack.c.h.b16 %v5068
        %v5278 = vunpack.c.l.b16 %v5069
        %v5279 = vunpack.c.h.b16 %v5069
        %v5280 = vunpack.c.l.b16 %v5070
        %v5281 = vunpack.c.h.b16 %v5070
        %v5282 = vunpack.c.l.b16 %v5071
        %v5283 = vunpack.c.h.b16 %v5071
        %v5284 = vunpack.c.l.b16 %v5072
        %v5285 = vunpack.c.h.b16 %v5072
        %v5286 = vunpack.c.l.b16 %v5073
        %v5287 = vunpack.c.h.b16 %v5073
        %v5288 = vunpack.c.l.b16 %v5074
        %v5289 = vunpack.c.h.b16 %v5074
        %v5290 = vunpack.c.l.b16 %v5075
        %v5291 = vunpack.c.h.b16 %v5075
        %v5292 = vunpack.c.l.b16 %v5076
        %v5293 = vunpack.c.h.b16 %v5076
        %v5294 = vunpack.c.l.b16 %v5077
        %v5295 = vunpack.c.h.b16 %v5077
        %v5296 = vunpack.c.l.b16 %v5078
        %v5297 = vunpack.c.h.b16 %v5078
        %v5298 = vunpack.c.l.b16 %v5079
        %v5299 = vunpack.c.h.b16 %v5079
        %v5300 = vunpack.c.l.b16 %v5080
        %v5301 = vunpack.c.h.b16 %v5080
        %v5302 = vunpack.c.l.b16 %v5081
        %v5303 = vunpack.c.h.b16 %v5081
        %v5304 = vunpack.c.l.b16 %v5082
        %v5305 = vunpack.c.h.b16 %v5082
        %v5306 = vunpack.c.l.b16 %v5083
        %v5307 = vunpack.c.h.b16 %v5083
        %v5308 = vunpack.c.l.b16 %v5084
        %v5309 = vunpack.c.h.b16 %v5084
        %v5310 = vunpack.c.l.b16 %v5085
        %v5311 = vunpack.c.h.b16 %v5085
        %v5312 = vunpack.c.l.b16 %v5086
        %v5313 = vunpack.c.h.b16 %v5086
        %v5314 = vunpack.c.l.b16 %v5087
        %v5315 = vunpack.c.h.b16 %v5087
        %v5316 = vunpack.c.l.b16 %v5088
        %v5317 = vunpack.c.h.b16 %v5088
        %v5318 = vunpack.c.l.b16 %v5089
        %v5319 = vunpack.c.h.b16 %v5089
        %v5320 = vunpack.c.l.b16 %v5090
        %v5321 = vunpack.c.h.b16 %v5090
        %v5322 = vunpack.c.l.b16 %v5091
        %v5323 = vunpack.c.h.b16 %v5091
        %v5324 = vunpack.c.l.b16 %v5092
        %v5325 = vunpack.c.h.b16 %v5092
        %v5326 = vunpack.c.l.b16 %v5093
        %v5327 = vunpack.c.h.b16 %v5093
        %v5328 = vunpack.c.l.b16 %v5094
        %v5329 = vunpack.c.h.b16 %v5094
        %v5330 = vunpack.c.l.b16 %v5095
        %v5331 = vunpack.c.h.b16 %v5095
        %v5332 = vunpack.c.l.b16 %v5096
        %v5333 = vunpack.c.h.b16 %v5096
        %v5334 = vunpack.c.l.b16 %v5097
        %v5335 = vunpack.c.h.b16 %v5097
        %v5336 = vunpack.c.l.b16 %v5098
        %v5337 = vunpack.c.h.b16 %v5098
        %v5338 = vunpack.c.l.b16 %v5099
        %v5339 = vunpack.c.h.b16 %v5099
        %v5340 = vunpack.c.l.b16 %v5100
        %v5341 = vunpack.c.h.b16 %v5100
        %v5342 = vunpack.c.l.b16 %v5101
        %v5343 = vunpack.c.h.b16 %v5101
        %v5344 = vunpack.c.l.b16 %v5102
        %v5345 = vunpack.c.h.b16 %v5102
        %v5346 = vunpack.c.l.b16 %v5103
        %v5347 = vunpack.c.h.b16 %v5103
        %v5348 = vunpack.c.l.b16 %v5104
        %v5349 = vunpack.c.h.b16 %v5104
        %v5350 = vunpack.c.l.b16 %v5105
        %v5351 = vunpack.c.h.b16 %v5105
        %v5352 = vunpack.c.l.b16 %v5106
        %v5353 = vunpack.c.h.b16 %v5106
        %v5354 = vunpack.c.l.b16 %v5107
        %v5355 = vunpack.c.h.b16 %v5107
        %v5356 = vunpack.c.l.b16 %v5108
        %v5357 = vunpack.c.h.b16 %v5108
        %v5358 = vunpack.c.l.b16 %v5109
        %v5359 = vunpack.c.h.b16 %v5109
        %v5360 = vunpack.c.l.b16 %v5110
        %v5361 = vunpack.c.h.b16 %v5110
        %v5362 = vunpack.c.l.b16 %v5111
        %v5363 = vunpack.c.h.b16 %v5111
        %v5364 = vunpack.c.l.b16 %v5112
        %v5365 = vunpack.c.h.b16 %v5112
        %v5366 = vunpack.c.l.b16 %v5113
        %v5367 = vunpack.c.h.b16 %v5113
        %v5368 = vunpack.c.l.b16 %v5114
        %v5369 = vunpack.c.h.b16 %v5114
        %v5370 = vunpack.c.l.b16 %v5115
        %v5371 = vunpack.c.h.b16 %v5115
        %v5372 = vunpack.c.l.b16 %v5116
        %v5373 = vunpack.c.h.b16 %v5116
        %v5374 = vunpack.c.l.b16 %v5117
        %v5375 = vunpack.c.h.b16 %v5117
        %v5376 = vunpack.c.l.b16 %v5118
        %v5377 = vunpack.c.h.b16 %v5118
        %v5378 = vunpack.c.l.b16 %v5119
        %v5379 = vunpack.c.h.b16 %v5119
        %v5380 = vunpack.c.l.b16 %v5120
        %v5381 = vunpack.c.h.b16 %v5120
        %v5382 = vunpack.c.l.b16 %v5121
        %v5383 = vunpack.c.h.b16 %v5121
        %v5384 = vunpack.c.l.b16 %v5122
        %v5385 = vunpack.c.h.b16 %v5122
        %v5386 = vunpack.c.l.b16 %v5123
        %v5387 = vunpack.c.h.b16 %v5123
        %v5388 = vunpack.c.l.b16 %v5124
        %v5389 = vunpack.c.h.b16 %v5124
        %v5390 = vunpack.c.l.b16 %v5125
        %v5391 = vunpack.c.h.b16 %v5125
        %v5392 = vpack.c.b16 %v5234, %v5232
        %v5393 = vpack.c.b16 %v5235, %v5233
        %v5394 = vpack.c.b16 %v5238, %v5236
        %v5395 = vpack.c.b16 %v5239, %v5237
        %v5396 = vpack.c.b16 %v5242, %v5240
        %v5397 = vpack.c.b16 %v5243, %v5241
        %v5398 = vpack.c.b16 %v5246, %v5244
        %v5399 = vpack.c.b16 %v5247, %v5245
        %v5400 = vpack.c.b16 %v5250, %v5248
        %v5401 = vpack.c.b16 %v5251, %v5249
        %v5402 = vpack.c.b16 %v5254, %v5252
        %v5403 = vpack.c.b16 %v5255, %v5253
        %v5404 = vpack.c.b16 %v5258, %v5256
        %v5405 = vpack.c.b16 %v5259, %v5257
        %v5406 = vpack.c.b16 %v5262, %v5260
        %v5407 = vpack.c.b16 %v5263, %v5261
        %v5408 = vpack.c.b16 %v5266, %v5264
        %v5409 = vpack.c.b16 %v5267, %v5265
        %v5410 = vpack.c.b16 %v5270, %v5268
        %v5411 = vpack.c.b16 %v5271, %v5269
        %v5412 = vpack.c.b16 %v5274, %v5272
        %v5413 = vpack.c.b16 %v5275, %v5273
        %v5414 = vpack.c.b16 %v5278, %v5276
        %v5415 = vpack.c.b16 %v5279, %v5277
        %v5416 = vpack.c.b16 %v5282, %v5280
        %v5417 = vpack.c.b16 %v5283, %v5281
        %v5418 = vpack.c.b16 %v5286, %v5284
        %v5419 = vpack.c.b16 %v5287, %v5285
        %v5420 = vpack.c.b16 %v5290, %v5288
        %v5421 = vpack.c.b16 %v5291, %v5289
        %v5422 = vpack.c.b16 %v5294, %v5292
        %v5423 = vpack.c.b16 %v5295, %v5293
        %v5424 = vpack.c.b16 %v5298, %v5296
        %v5425 = vpack.c.b16 %v5299, %v5297
        %v5426 = vpack.c.b16 %v5302, %v5300
        %v5427 = vpack.c.b16 %v5303, %v5301
        %v5428 = vpack.c.b16 %v5306, %v5304
        %v5429 = vpack.c.b16 %v5307, %v5305
        %v5430 = vpack.c.b16 %v5310, %v5308
        %v5431 = vpack.c.b16 %v5311, %v5309
        %v5432 = vpack.c.b16 %v5314, %v5312
        %v5433 = vpack.c.b16 %v5315, %v5313
        %v5434 = vpack.c.b16 %v5318, %v5316
        %v5435 = vpack.c.b16 %v5319, %v5317
        %v5436 = vpack.c.b16 %v5322, %v5320
        %v5437 = vpack.c.b16 %v5323, %v5321
        %v5438 = vpack.c.b16 %v5326, %v5324
        %v5439 = vpack.c.b16 %v5327, %v5325
        %v5440 = vpack.c.b16 %v5330, %v5328
        %v5441 = vpack.c.b16 %v5331, %v5329
        %v5442 = vpack.c.b16 %v5334, %v5332
        %v5443 = vpack.c.b16 %v5335, %v5333
        %v5444 = vpack.c.b16 %v5338, %v5336
        %v5445 = vpack.c.b16 %v5339, %v5337
        %v5446 = vpack.c.b16 %v5342, %v5340
        %v5447 = vpack.c.b16 %v5343, %v5341
        %v5448 = vpack.c.b16 %v5346, %v5344
        %v5449 = vpack.c.b16 %v5347, %v5345
        %v5450 = vpack.c.b16 %v5350, %v5348
        %v5451 = vpack.c.b16 %v5351, %v5349
        %v5452 = vpack.c.b16 %v5354, %v5352
        %v5453 = vpack.c.b16 %v5355, %v5353
        %v5454 = vpack.c.b16 %v5358, %v5356
        %v5455 = vpack.c.b16 %v5359, %v5357
        %v5456 = vpack.c.b16 %v5362, %v5360
        %v5457 = vpack.c.b16 %v5363, %v5361
        %v5458 = vpack.c.b16 %v5366, %v5364
        %v5459 = vpack.c.b16 %v5367, %v5365
        %v5460 = vpack.c.b16 %v5370, %v5368
        %v5461 = vpack.c.b16 %v5371, %v5369
        %v5462 = vpack.c.b16 %v5374, %v5372
        %v5463 = vpack.c.b16 %v5375, %v5373
        %v5464 = vpack.c.b16 %v5378, %v5376
        %v5465 = vpack.c.b16 %v5379, %v5377
        %v5466 = vpack.c.b16 %v5382, %v5380
        %v5467 = vpack.c.b16 %v5383, %v5381
        %v5468 = vpack.c.b16 %v5386, %v5384
        %v5469 = vpack.c.b16 %v5387, %v5385
        %v5470 = vpack.c.b16 %v5390, %v5388
        %v5471 = vpack.c.b16 %v5391, %v5389
        %5552 = vmatpush.bf16.msra.mxu0 %v5406
        %5553 = vmatpush.bf16.msra.mxu0 %v5404
        %5554 = vmatpush.bf16.msra.mxu0 %v5402
        %5555 = vmatpush.bf16.msra.mxu0 %v5400
        %5556 = vmatpush.bf16.msra.mxu0 %v5398
        %5557 = vmatpush.bf16.msra.mxu0 %v5396
        %5558 = vmatpush.bf16.msra.mxu0 %v5394
        %5559 = vmatpush.bf16.msra.mxu0 %v5392
        %5560 = vmatmul.bf16.gmra.mxu0 %v5142
        %v5561 = vpop.f32.mrf.mxu0
        %v5562 = vadd.f32 0.0, %v5561
        %v5563 = vpop.f32.mrf.mxu0
        %v5564 = vadd.f32 0.0, %v5563
        %5565 = vdwg.mxu0
        %5566 = vmatpush.bf16.msra.mxu0 %v5422
        %5567 = vmatpush.bf16.msra.mxu0 %v5420
        %5568 = vmatpush.bf16.msra.mxu0 %v5418
        %5569 = vmatpush.bf16.msra.mxu0 %v5416
        %5570 = vmatpush.bf16.msra.mxu0 %v5414
        %5571 = vmatpush.bf16.msra.mxu0 %v5412
        %5572 = vmatpush.bf16.msra.mxu0 %v5410
        %5573 = vmatpush.bf16.msra.mxu0 %v5408
        %5574 = vmatmul.bf16.gmra.mxu0 %v5143
        %v5575 = vpop.f32.mrf.mxu0
        %v5576 = vadd.f32 %v5562, %v5575
        %v5577 = vpop.f32.mrf.mxu0
        %v5578 = vadd.f32 %v5564, %v5577
        %5579 = vdwg.mxu0
        %5580 = vmatpush.bf16.msra.mxu0 %v5438
        %5581 = vmatpush.bf16.msra.mxu0 %v5436
        %5582 = vmatpush.bf16.msra.mxu0 %v5434
        %5583 = vmatpush.bf16.msra.mxu0 %v5432
        %5584 = vmatpush.bf16.msra.mxu0 %v5430
        %5585 = vmatpush.bf16.msra.mxu0 %v5428
        %5586 = vmatpush.bf16.msra.mxu0 %v5426
        %5587 = vmatpush.bf16.msra.mxu0 %v5424
        %5588 = vmatmul.bf16.gmra.mxu0 %v5144
        %v5589 = vpop.f32.mrf.mxu0
        %v5590 = vadd.f32 %v5576, %v5589
        %v5591 = vpop.f32.mrf.mxu0
        %v5592 = vadd.f32 %v5578, %v5591
        %5593 = vdwg.mxu0
        %5594 = vmatpush.bf16.msra.mxu0 %v5454
        %5595 = vmatpush.bf16.msra.mxu0 %v5452
        %5596 = vmatpush.bf16.msra.mxu0 %v5450
        %5597 = vmatpush.bf16.msra.mxu0 %v5448
        %5598 = vmatpush.bf16.msra.mxu0 %v5446
        %5599 = vmatpush.bf16.msra.mxu0 %v5444
        %5600 = vmatpush.bf16.msra.mxu0 %v5442
        %5601 = vmatpush.bf16.msra.mxu0 %v5440
        %5602 = vmatmul.bf16.gmra.mxu0 %v5145
        %v5603 = vpop.f32.mrf.mxu0
        %v5604 = vadd.f32 %v5590, %v5603
        %v5605 = vpop.f32.mrf.mxu0
        %v5606 = vadd.f32 %v5592, %v5605
        %5607 = vdwg.mxu0
        %5608 = vmatpush.bf16.msra.mxu0 %v5470
        %5609 = vmatpush.bf16.msra.mxu0 %v5468
        %5610 = vmatpush.bf16.msra.mxu0 %v5466
        %5611 = vmatpush.bf16.msra.mxu0 %v5464
        %5612 = vmatpush.bf16.msra.mxu0 %v5462
        %5613 = vmatpush.bf16.msra.mxu0 %v5460
        %5614 = vmatpush.bf16.msra.mxu0 %v5458
        %5615 = vmatpush.bf16.msra.mxu0 %v5456
        %5616 = vmatmul.bf16.gmra.mxu0 %v5146
        %v5617 = vpop.f32.mrf.mxu0
        %v5618 = vadd.f32 %v5604, %v5617
        %v5619 = vpop.f32.mrf.mxu0
        %v5620 = vadd.f32 %v5606, %v5619
        %5621 = vdwg.mxu0
        %5622 = vmatpush.bf16.msra.mxu0 %v5407
        %5623 = vmatpush.bf16.msra.mxu0 %v5405
        %5624 = vmatpush.bf16.msra.mxu0 %v5403
        %5625 = vmatpush.bf16.msra.mxu0 %v5401
        %5626 = vmatpush.bf16.msra.mxu0 %v5399
        %5627 = vmatpush.bf16.msra.mxu0 %v5397
        %5628 = vmatpush.bf16.msra.mxu0 %v5395
        %5629 = vmatpush.bf16.msra.mxu0 %v5393
        %5630 = vmatmul.bf16.gmra.mxu0 %v5142
        %v5631 = vpop.f32.mrf.mxu0
        %v5632 = vadd.f32 0.0, %v5631
        %v5633 = vpop.f32.mrf.mxu0
        %v5634 = vadd.f32 0.0, %v5633
        %5635 = vdwg.mxu0
        %5636 = vmatpush.bf16.msra.mxu0 %v5423
        %5637 = vmatpush.bf16.msra.mxu0 %v5421
        %5638 = vmatpush.bf16.msra.mxu0 %v5419
        %5639 = vmatpush.bf16.msra.mxu0 %v5417
        %5640 = vmatpush.bf16.msra.mxu0 %v5415
        %5641 = vmatpush.bf16.msra.mxu0 %v5413
        %5642 = vmatpush.bf16.msra.mxu0 %v5411
        %5643 = vmatpush.bf16.msra.mxu0 %v5409
        %5644 = vmatmul.bf16.gmra.mxu0 %v5143
        %v5645 = vpop.f32.mrf.mxu0
        %v5646 = vadd.f32 %v5632, %v5645
        %v5647 = vpop.f32.mrf.mxu0
        %v5648 = vadd.f32 %v5634, %v5647
        %5649 = vdwg.mxu0
        %5650 = vmatpush.bf16.msra.mxu0 %v5439
        %5651 = vmatpush.bf16.msra.mxu0 %v5437
        %5652 = vmatpush.bf16.msra.mxu0 %v5435
        %5653 = vmatpush.bf16.msra.mxu0 %v5433
        %5654 = vmatpush.bf16.msra.mxu0 %v5431
        %5655 = vmatpush.bf16.msra.mxu0 %v5429
        %5656 = vmatpush.bf16.msra.mxu0 %v5427
        %5657 = vmatpush.bf16.msra.mxu0 %v5425
        %5658 = vmatmul.bf16.gmra.mxu0 %v5144
        %v5659 = vpop.f32.mrf.mxu0
        %v5660 = vadd.f32 %v5646, %v5659
        %v5661 = vpop.f32.mrf.mxu0
        %v5662 = vadd.f32 %v5648, %v5661
        %5663 = vdwg.mxu0
        %5664 = vmatpush.bf16.msra.mxu0 %v5455
        %5665 = vmatpush.bf16.msra.mxu0 %v5453
        %5666 = vmatpush.bf16.msra.mxu0 %v5451
        %5667 = vmatpush.bf16.msra.mxu0 %v5449
        %5668 = vmatpush.bf16.msra.mxu0 %v5447
        %5669 = vmatpush.bf16.msra.mxu0 %v5445
        %5670 = vmatpush.bf16.msra.mxu0 %v5443
        %5671 = vmatpush.bf16.msra.mxu0 %v5441
        %5672 = vmatmul.bf16.gmra.mxu0 %v5145
        %v5673 = vpop.f32.mrf.mxu0
        %v5674 = vadd.f32 %v5660, %v5673
        %v5675 = vpop.f32.mrf.mxu0
        %v5676 = vadd.f32 %v5662, %v5675
        %5677 = vdwg.mxu0
        %5678 = vmatpush.bf16.msra.mxu0 %v5471
        %5679 = vmatpush.bf16.msra.mxu0 %v5469
        %5680 = vmatpush.bf16.msra.mxu0 %v5467
        %5681 = vmatpush.bf16.msra.mxu0 %v5465
        %5682 = vmatpush.bf16.msra.mxu0 %v5463
        %5683 = vmatpush.bf16.msra.mxu0 %v5461
        %5684 = vmatpush.bf16.msra.mxu0 %v5459
        %5685 = vmatpush.bf16.msra.mxu0 %v5457
        %5686 = vmatmul.bf16.gmra.mxu0 %v5146
        %v5687 = vpop.f32.mrf.mxu0
        %v5688 = vadd.f32 %v5674, %v5687
        %v5689 = vpop.f32.mrf.mxu0
        %v5690 = vadd.f32 %v5676, %v5689
        %5691 = vdwg.mxu0
        %v5692 = vmax.f32 %v5618, %v5688
        %v5693 = vmax.f32 %v5620, %v5690
        %v5694 = vld [vmem:[#allocation2 + $0xc] sm:$0xff]
        %v5695 = vld [vmem:[#allocation2 + $0x14] sm:$0xff]
        %v5696 = vld [vmem:[#allocation2 + $0x1c] sm:$0xf]
        %v5697 = vld [vmem:[#allocation2 + $0x3c] sm:$0xff]
        %v5698 = vld [vmem:[#allocation2 + $0x44] sm:$0xff]
        %v5699 = vld [vmem:[#allocation2 + $0x4c] sm:$0xf]
        %v5706 = vunpack.c.l.b16 %v5694
        %v5707 = vunpack.c.h.b16 %v5694
        %v5708 = vunpack.c.l.b16 %v5695
        %v5709 = vunpack.c.h.b16 %v5695
        %v5710 = vunpack.c.l.b16 %v5696
        %v5711 = vunpack.c.l.b16 %v5697
        %v5712 = vunpack.c.h.b16 %v5697
        %v5713 = vunpack.c.l.b16 %v5698
        %v5714 = vunpack.c.h.b16 %v5698
        %v5715 = vunpack.c.l.b16 %v5699
        %v5716 = vpack.c.b16 %v5711, %v5706
        %v5717 = vpack.c.b16 %v5712, %v5707
        %v5718 = vpack.c.b16 %v5713, %v5708
        %v5719 = vpack.c.b16 %v5714, %v5709
        %v5720 = vpack.c.b16 %v5715, %v5710
        %5726 = vmatpush.bf16.msra.mxu0 %v5406
        %5727 = vmatpush.bf16.msra.mxu0 %v5404
        %5728 = vmatpush.bf16.msra.mxu0 %v5402
        %5729 = vmatpush.bf16.msra.mxu0 %v5400
        %5730 = vmatpush.bf16.msra.mxu0 %v5398
        %5731 = vmatpush.bf16.msra.mxu0 %v5396
        %5732 = vmatpush.bf16.msra.mxu0 %v5394
        %5733 = vmatpush.bf16.msra.mxu0 %v5392
        %5734 = vmatmul.bf16.gmra.mxu0 %v5716
        %v5735 = vpop.f32.mrf.mxu0
        %v5736 = vadd.f32 0.0, %v5735
        %v5737 = vpop.f32.mrf.mxu0
        %v5738 = vadd.f32 0.0, %v5737
        %5739 = vdwg.mxu0
        %5740 = vmatpush.bf16.msra.mxu0 %v5422
        %5741 = vmatpush.bf16.msra.mxu0 %v5420
        %5742 = vmatpush.bf16.msra.mxu0 %v5418
        %5743 = vmatpush.bf16.msra.mxu0 %v5416
        %5744 = vmatpush.bf16.msra.mxu0 %v5414
        %5745 = vmatpush.bf16.msra.mxu0 %v5412
        %5746 = vmatpush.bf16.msra.mxu0 %v5410
        %5747 = vmatpush.bf16.msra.mxu0 %v5408
        %5748 = vmatmul.bf16.gmra.mxu0 %v5717
        %v5749 = vpop.f32.mrf.mxu0
        %v5750 = vadd.f32 %v5736, %v5749
        %v5751 = vpop.f32.mrf.mxu0
        %v5752 = vadd.f32 %v5738, %v5751
        %5753 = vdwg.mxu0
        %5754 = vmatpush.bf16.msra.mxu0 %v5438
        %5755 = vmatpush.bf16.msra.mxu0 %v5436
        %5756 = vmatpush.bf16.msra.mxu0 %v5434
        %5757 = vmatpush.bf16.msra.mxu0 %v5432
        %5758 = vmatpush.bf16.msra.mxu0 %v5430
        %5759 = vmatpush.bf16.msra.mxu0 %v5428
        %5760 = vmatpush.bf16.msra.mxu0 %v5426
        %5761 = vmatpush.bf16.msra.mxu0 %v5424
        %5762 = vmatmul.bf16.gmra.mxu0 %v5718
        %v5763 = vpop.f32.mrf.mxu0
        %v5764 = vadd.f32 %v5750, %v5763
        %v5765 = vpop.f32.mrf.mxu0
        %v5766 = vadd.f32 %v5752, %v5765
        %5767 = vdwg.mxu0
        %5768 = vmatpush.bf16.msra.mxu0 %v5454
        %5769 = vmatpush.bf16.msra.mxu0 %v5452
        %5770 = vmatpush.bf16.msra.mxu0 %v5450
        %5771 = vmatpush.bf16.msra.mxu0 %v5448
        %5772 = vmatpush.bf16.msra.mxu0 %v5446
        %5773 = vmatpush.bf16.msra.mxu0 %v5444
        %5774 = vmatpush.bf16.msra.mxu0 %v5442
        %5775 = vmatpush.bf16.msra.mxu0 %v5440
        %5776 = vmatmul.bf16.gmra.mxu0 %v5719
        %v5777 = vpop.f32.mrf.mxu0
        %v5778 = vadd.f32 %v5764, %v5777
        %v5779 = vpop.f32.mrf.mxu0
        %v5780 = vadd.f32 %v5766, %v5779
        %5781 = vdwg.mxu0
        %5782 = vmatpush.bf16.msra.mxu0 %v5470
        %5783 = vmatpush.bf16.msra.mxu0 %v5468
        %5784 = vmatpush.bf16.msra.mxu0 %v5466
        %5785 = vmatpush.bf16.msra.mxu0 %v5464
        %5786 = vmatpush.bf16.msra.mxu0 %v5462
        %5787 = vmatpush.bf16.msra.mxu0 %v5460
        %5788 = vmatpush.bf16.msra.mxu0 %v5458
        %5789 = vmatpush.bf16.msra.mxu0 %v5456
        %5790 = vmatmul.bf16.gmra.mxu0 %v5720
        %v5791 = vpop.f32.mrf.mxu0
        %v5792 = vadd.f32 %v5778, %v5791
        %v5793 = vpop.f32.mrf.mxu0
        %v5794 = vadd.f32 %v5780, %v5793
        %5795 = vdwg.mxu0
        %5796 = vmatpush.bf16.msra.mxu0 %v5407
        %5797 = vmatpush.bf16.msra.mxu0 %v5405
        %5798 = vmatpush.bf16.msra.mxu0 %v5403
        %5799 = vmatpush.bf16.msra.mxu0 %v5401
        %5800 = vmatpush.bf16.msra.mxu0 %v5399
        %5801 = vmatpush.bf16.msra.mxu0 %v5397
        %5802 = vmatpush.bf16.msra.mxu0 %v5395
        %5803 = vmatpush.bf16.msra.mxu0 %v5393
        %5804 = vmatmul.bf16.gmra.mxu0 %v5716
        %v5805 = vpop.f32.mrf.mxu0
        %v5806 = vadd.f32 0.0, %v5805
        %v5807 = vpop.f32.mrf.mxu0
        %v5808 = vadd.f32 0.0, %v5807
        %5809 = vdwg.mxu0
        %5810 = vmatpush.bf16.msra.mxu0 %v5423
        %5811 = vmatpush.bf16.msra.mxu0 %v5421
        %5812 = vmatpush.bf16.msra.mxu0 %v5419
        %5813 = vmatpush.bf16.msra.mxu0 %v5417
        %5814 = vmatpush.bf16.msra.mxu0 %v5415
        %5815 = vmatpush.bf16.msra.mxu0 %v5413
        %5816 = vmatpush.bf16.msra.mxu0 %v5411
        %5817 = vmatpush.bf16.msra.mxu0 %v5409
        %5818 = vmatmul.bf16.gmra.mxu0 %v5717
        %v5819 = vpop.f32.mrf.mxu0
        %v5820 = vadd.f32 %v5806, %v5819
        %v5821 = vpop.f32.mrf.mxu0
        %v5822 = vadd.f32 %v5808, %v5821
        %5823 = vdwg.mxu0
        %5824 = vmatpush.bf16.msra.mxu0 %v5439
        %5825 = vmatpush.bf16.msra.mxu0 %v5437
        %5826 = vmatpush.bf16.msra.mxu0 %v5435
        %5827 = vmatpush.bf16.msra.mxu0 %v5433
        %5828 = vmatpush.bf16.msra.mxu0 %v5431
        %5829 = vmatpush.bf16.msra.mxu0 %v5429
        %5830 = vmatpush.bf16.msra.mxu0 %v5427
        %5831 = vmatpush.bf16.msra.mxu0 %v5425
        %5832 = vmatmul.bf16.gmra.mxu0 %v5718
        %v5833 = vpop.f32.mrf.mxu0
        %v5834 = vadd.f32 %v5820, %v5833
        %v5835 = vpop.f32.mrf.mxu0
        %v5836 = vadd.f32 %v5822, %v5835
        %5837 = vdwg.mxu0
        %5838 = vmatpush.bf16.msra.mxu0 %v5455
        %5839 = vmatpush.bf16.msra.mxu0 %v5453
        %5840 = vmatpush.bf16.msra.mxu0 %v5451
        %5841 = vmatpush.bf16.msra.mxu0 %v5449
        %5842 = vmatpush.bf16.msra.mxu0 %v5447
        %5843 = vmatpush.bf16.msra.mxu0 %v5445
        %5844 = vmatpush.bf16.msra.mxu0 %v5443
        %5845 = vmatpush.bf16.msra.mxu0 %v5441
        %5846 = vmatmul.bf16.gmra.mxu0 %v5719
        %v5847 = vpop.f32.mrf.mxu0
        %v5848 = vadd.f32 %v5834, %v5847
        %v5849 = vpop.f32.mrf.mxu0
        %v5850 = vadd.f32 %v5836, %v5849
        %5851 = vdwg.mxu0
        %5852 = vmatpush.bf16.msra.mxu0 %v5471
        %5853 = vmatpush.bf16.msra.mxu0 %v5469
        %5854 = vmatpush.bf16.msra.mxu0 %v5467
        %5855 = vmatpush.bf16.msra.mxu0 %v5465
        %5856 = vmatpush.bf16.msra.mxu0 %v5463
        %5857 = vmatpush.bf16.msra.mxu0 %v5461
        %5858 = vmatpush.bf16.msra.mxu0 %v5459
        %5859 = vmatpush.bf16.msra.mxu0 %v5457
        %5860 = vmatmul.bf16.gmra.mxu0 %v5720
        %v5861 = vpop.f32.mrf.mxu0
        %v5862 = vadd.f32 %v5848, %v5861
        %v5863 = vpop.f32.mrf.mxu0
        %v5864 = vadd.f32 %v5850, %v5863
        %5865 = vdwg.mxu0
        %v5866 = vmax.f32 %v5792, %v5862
        %v5867 = vmax.f32 %v5794, %v5864
        %v5868 = vmax.f32 %v5692, %v5866
        %v5869 = vmax.f32 %v5693, %v5867
        %v5870 = vadd.f32 %v5868, %v4935
        %v5871 = vadd.f32 %v5869, %v4935
        %vm5872 = vcmp.gt.f32.partialorder %v5870, 0.0
        %vm5873 = vcmp.gt.f32.partialorder %v5871, 0.0
        %v5874 = vmin.f32 %v5870, 0.0
        %v5875 = vmin.f32 %v5871, 0.0
        %v5876 = vmul.f32 %v5874, 1.442695
        %v5877 = vpow.pop %v5876
        %v5878 = vmul.f32 %v5875, 1.442695
        %v5879 = vpow.pop %v5878
        %v5880 = vsub.f32 %v5877, 1.0
        %v5881 = vsub.f32 %v5879, 1.0
        %v5882 = vmul.f32 %v5880, 1.6732632
        %v5883 = vmul.f32 %v5881, 1.6732632
        %v5884 = vsel %vm5872, %v5870, %v5882
        %v5885 = vsel %vm5873, %v5871, %v5883
        %v5886 = vmul.f32 %v5884, 1.050701
        %v5887 = vmul.f32 %v5885, 1.050701
        %v5888 = vpack.c.bf16 %v5887, %v5886
        %v5889 = vld [vmem:[#allocation3] sm:$0xff]
        %v5890 = vld [vmem:[#allocation3 + $0x8] sm:$0xff]
        %s5891 = scalar_lea.vmem %s3, 64
        %v5892 = vld [vmem:[%s5891] sm:$0xf]
        %v5893 = vld [vmem:[%s5891 + $0x4] sm:$0xf]
        %v5894 = vld [vmem:[%s5891 + $0x8] sm:$0xf]
        %v5895 = vld [vmem:[%s5891 + $0xc] sm:$0xf]
        %v5896 = vld [vmem:[%s5891 + $0x10] sm:$0xf]
        %v5897 = vld [vmem:[%s5891 + $0x14] sm:$0xf]
        %v5898 = vld [vmem:[%s5891 + $0x18] sm:$0xf]
        %v5899 = vld [vmem:[%s5891 + $0x1c] sm:$0xf]
        %v5900 = vld [vmem:[%s5891 + $0x20] sm:$0xf]
        %v5901 = vld [vmem:[%s5891 + $0x24] sm:$0xf]
        %v5902 = vld [vmem:[%s5891 + $0x28] sm:$0xf]
        %v5903 = vld [vmem:[%s5891 + $0x2c] sm:$0xf]
        %v5904 = vld [vmem:[%s5891 + $0x30] sm:$0xf]
        %v5905 = vld [vmem:[%s5891 + $0x34] sm:$0xf]
        %v5906 = vld [vmem:[%s5891 + $0x38] sm:$0xf]
        %v5907 = vld [vmem:[%s5891 + $0x3c] sm:$0xf]
        %v5924 = vunpack.c.l.b16 %v5892
        %v5925 = vunpack.c.l.b16 %v5893
        %v5926 = vunpack.c.l.b16 %v5894
        %v5927 = vunpack.c.l.b16 %v5895
        %v5928 = vunpack.c.l.b16 %v5896
        %v5929 = vunpack.c.l.b16 %v5897
        %v5930 = vunpack.c.l.b16 %v5898
        %v5931 = vunpack.c.l.b16 %v5899
        %v5932 = vunpack.c.l.b16 %v5900
        %v5933 = vunpack.c.l.b16 %v5901
        %v5934 = vunpack.c.l.b16 %v5902
        %v5935 = vunpack.c.l.b16 %v5903
        %v5936 = vunpack.c.l.b16 %v5904
        %v5937 = vunpack.c.l.b16 %v5905
        %v5938 = vunpack.c.l.b16 %v5906
        %v5939 = vunpack.c.l.b16 %v5907
        %v5940 = vpack.c.b16 %v5925, %v5924
        %v5941 = vpack.c.b16 %v5927, %v5926
        %v5942 = vpack.c.b16 %v5929, %v5928
        %v5943 = vpack.c.b16 %v5931, %v5930
        %v5944 = vpack.c.b16 %v5933, %v5932
        %v5945 = vpack.c.b16 %v5935, %v5934
        %v5946 = vpack.c.b16 %v5937, %v5936
        %v5947 = vpack.c.b16 %v5939, %v5938
        %5956 = vmatpush.bf16.msra.mxu0 %v5947
        %5957 = vmatpush.bf16.msra.mxu0 %v5946
        %5958 = vmatpush.bf16.msra.mxu0 %v5945
        %5959 = vmatpush.bf16.msra.mxu0 %v5944
        %5960 = vmatpush.bf16.msra.mxu0 %v5943
        %5961 = vmatpush.bf16.msra.mxu0 %v5942
        %5962 = vmatpush.bf16.msra.mxu0 %v5941
        %5963 = vmatpush.bf16.msra.mxu0 %v5940
        %5964 = vmatmul.bf16.gmra.mxu0 %v5888
        %v5965 = vpop.f32.mrf.mxu0
        %v5966 = vadd.f32 0.0, %v5965
        %v5967 = vpop.f32.mrf.mxu0
        %v5968 = vadd.f32 0.0, %v5967
        %5969 = vdwg.mxu0
        %v5970 = vadd.f32 %v5889, %v5966
        %v5971 = vadd.f32 %v5890, %v5968
        %5972 = vst [vmem:[#allocation3] sm:$0xff] %v5970
        %5973 = vst [vmem:[#allocation3 + $0x8] sm:$0xff] %v5971
        %v5974 = vld [vmem:[#allocation2 + $0x10] sm:$0xff]
        %v5975 = vld [vmem:[#allocation2 + $0x18] sm:$0xff]
        %v5976 = vld [vmem:[#allocation2 + $0x20] sm:$0xf]
        %v5977 = vld [vmem:[#allocation2 + $0x40] sm:$0xff]
        %v5978 = vld [vmem:[#allocation2 + $0x48] sm:$0xff]
        %v5979 = vld [vmem:[#allocation2 + $0x50] sm:$0xf]
        %v5980 = vld [vmem:[%s2] sm:$0xff]
        %v5981 = vld [vmem:[%s2 + $0x8] sm:$0xff]
        %v5982 = vld [vmem:[%s2 + $0x10] sm:$0xff]
        %v5983 = vld [vmem:[%s2 + $0x18] sm:$0xff]
        %v5984 = vld [vmem:[%s2 + $0x20] sm:$0xff]
        %v5985 = vld [vmem:[%s2 + $0x28] sm:$0xff]
        %v5986 = vld [vmem:[%s2 + $0x30] sm:$0xff]
        %v5987 = vld [vmem:[%s2 + $0x38] sm:$0xff]
        %v5988 = vld [vmem:[%s2 + $0x40] sm:$0xff]
        %v5989 = vld [vmem:[%s2 + $0x48] sm:$0xff]
        %v5990 = vld [vmem:[%s2 + $0x50] sm:$0xff]
        %v5991 = vld [vmem:[%s2 + $0x58] sm:$0xff]
        %v5992 = vld [vmem:[%s2 + $0x60] sm:$0xff]
        %v5993 = vld [vmem:[%s2 + $0x68] sm:$0xff]
        %v5994 = vld [vmem:[%s2 + $0x70] sm:$0xff]
        %v5995 = vld [vmem:[%s2 + $0x78] sm:$0xff]
        %v5996 = vld [vmem:[%s2 + $0x80] sm:$0xff]
        %v5997 = vld [vmem:[%s2 + $0x88] sm:$0xff]
        %v5998 = vld [vmem:[%s2 + $0x90] sm:$0xff]
        %v5999 = vld [vmem:[%s2 + $0x98] sm:$0xff]
        %v6000 = vld [vmem:[%s2 + $0xa0] sm:$0xff]
        %v6001 = vld [vmem:[%s2 + $0xa8] sm:$0xff]
        %v6002 = vld [vmem:[%s2 + $0xb0] sm:$0xff]
        %v6003 = vld [vmem:[%s2 + $0xb8] sm:$0xff]
        %v6004 = vld [vmem:[%s2 + $0xc0] sm:$0xff]
        %v6005 = vld [vmem:[%s2 + $0xc8] sm:$0xff]
        %v6006 = vld [vmem:[%s2 + $0xd0] sm:$0xff]
        %v6007 = vld [vmem:[%s2 + $0xd8] sm:$0xff]
        %v6008 = vld [vmem:[%s2 + $0xe0] sm:$0xff]
        %v6009 = vld [vmem:[%s2 + $0xe8] sm:$0xff]
        %v6010 = vld [vmem:[%s2 + $0xf0] sm:$0xff]
        %v6011 = vld [vmem:[%s2 + $0xf8] sm:$0xff]
        %v6012 = vld [vmem:[%s2 + $0x100] sm:$0xff]
        %v6013 = vld [vmem:[%s2 + $0x108] sm:$0xff]
        %v6014 = vld [vmem:[%s2 + $0x110] sm:$0xff]
        %v6015 = vld [vmem:[%s2 + $0x118] sm:$0xff]
        %v6016 = vld [vmem:[%s2 + $0x120] sm:$0xff]
        %v6017 = vld [vmem:[%s2 + $0x128] sm:$0xff]
        %v6018 = vld [vmem:[%s2 + $0x130] sm:$0xff]
        %v6019 = vld [vmem:[%s2 + $0x138] sm:$0xff]
        %v6020 = vld [vmem:[%s2 + $0x140] sm:$0xff]
        %v6021 = vld [vmem:[%s2 + $0x148] sm:$0xff]
        %v6022 = vld [vmem:[%s2 + $0x150] sm:$0xff]
        %v6023 = vld [vmem:[%s2 + $0x158] sm:$0xff]
        %v6024 = vld [vmem:[%s2 + $0x160] sm:$0xff]
        %v6025 = vld [vmem:[%s2 + $0x168] sm:$0xff]
        %v6026 = vld [vmem:[%s2 + $0x170] sm:$0xff]
        %v6027 = vld [vmem:[%s2 + $0x178] sm:$0xff]
        %v6028 = vld [vmem:[%s2 + $0x180] sm:$0xff]
        %v6029 = vld [vmem:[%s2 + $0x188] sm:$0xff]
        %v6030 = vld [vmem:[%s2 + $0x190] sm:$0xff]
        %v6031 = vld [vmem:[%s2 + $0x198] sm:$0xff]
        %v6032 = vld [vmem:[%s2 + $0x1a0] sm:$0xff]
        %v6033 = vld [vmem:[%s2 + $0x1a8] sm:$0xff]
        %v6034 = vld [vmem:[%s2 + $0x1b0] sm:$0xff]
        %v6035 = vld [vmem:[%s2 + $0x1b8] sm:$0xff]
        %v6036 = vld [vmem:[%s2 + $0x1c0] sm:$0xff]
        %v6037 = vld [vmem:[%s2 + $0x1c8] sm:$0xff]
        %v6038 = vld [vmem:[%s2 + $0x1d0] sm:$0xff]
        %v6039 = vld [vmem:[%s2 + $0x1d8] sm:$0xff]
        %v6040 = vld [vmem:[%s2 + $0x1e0] sm:$0xff]
        %v6041 = vld [vmem:[%s2 + $0x1e8] sm:$0xff]
        %v6042 = vld [vmem:[%s2 + $0x1f0] sm:$0xff]
        %v6043 = vld [vmem:[%s2 + $0x1f8] sm:$0xff]
        %v6044 = vld [vmem:[%s2 + $0x200] sm:$0xff]
        %v6045 = vld [vmem:[%s2 + $0x208] sm:$0xff]
        %v6046 = vld [vmem:[%s2 + $0x210] sm:$0xff]
        %v6047 = vld [vmem:[%s2 + $0x218] sm:$0xff]
        %v6048 = vld [vmem:[%s2 + $0x220] sm:$0xff]
        %v6049 = vld [vmem:[%s2 + $0x228] sm:$0xff]
        %v6050 = vld [vmem:[%s2 + $0x230] sm:$0xff]
        %v6051 = vld [vmem:[%s2 + $0x238] sm:$0xff]
        %v6052 = vld [vmem:[%s2 + $0x240] sm:$0xff]
        %v6053 = vld [vmem:[%s2 + $0x248] sm:$0xff]
        %v6054 = vld [vmem:[%s2 + $0x250] sm:$0xff]
        %v6055 = vld [vmem:[%s2 + $0x258] sm:$0xff]
        %v6056 = vld [vmem:[%s2 + $0x260] sm:$0xff]
        %v6057 = vld [vmem:[%s2 + $0x268] sm:$0xff]
        %v6058 = vld [vmem:[%s2 + $0x270] sm:$0xff]
        %v6059 = vld [vmem:[%s2 + $0x278] sm:$0xff]
        %v6066 = vunpack.c.l.b16 %v5974
        %v6067 = vunpack.c.h.b16 %v5974
        %v6068 = vunpack.c.l.b16 %v5975
        %v6069 = vunpack.c.h.b16 %v5975
        %v6070 = vunpack.c.l.b16 %v5976
        %v6071 = vunpack.c.l.b16 %v5977
        %v6072 = vunpack.c.h.b16 %v5977
        %v6073 = vunpack.c.l.b16 %v5978
        %v6074 = vunpack.c.h.b16 %v5978
        %v6075 = vunpack.c.l.b16 %v5979
        %v6076 = vpack.c.b16 %v6071, %v6066
        %v6077 = vpack.c.b16 %v6072, %v6067
        %v6078 = vpack.c.b16 %v6073, %v6068
        %v6079 = vpack.c.b16 %v6074, %v6069
        %v6080 = vpack.c.b16 %v6075, %v6070
        %v6166 = vunpack.c.l.b16 %v5980
        %v6167 = vunpack.c.h.b16 %v5980
        %v6168 = vunpack.c.l.b16 %v5981
        %v6169 = vunpack.c.h.b16 %v5981
        %v6170 = vunpack.c.l.b16 %v5982
        %v6171 = vunpack.c.h.b16 %v5982
        %v6172 = vunpack.c.l.b16 %v5983
        %v6173 = vunpack.c.h.b16 %v5983
        %v6174 = vunpack.c.l.b16 %v5984
        %v6175 = vunpack.c.h.b16 %v5984
        %v6176 = vunpack.c.l.b16 %v5985
        %v6177 = vunpack.c.h.b16 %v5985
        %v6178 = vunpack.c.l.b16 %v5986
        %v6179 = vunpack.c.h.b16 %v5986
        %v6180 = vunpack.c.l.b16 %v5987
        %v6181 = vunpack.c.h.b16 %v5987
        %v6182 = vunpack.c.l.b16 %v5988
        %v6183 = vunpack.c.h.b16 %v5988
        %v6184 = vunpack.c.l.b16 %v5989
        %v6185 = vunpack.c.h.b16 %v5989
        %v6186 = vunpack.c.l.b16 %v5990
        %v6187 = vunpack.c.h.b16 %v5990
        %v6188 = vunpack.c.l.b16 %v5991
        %v6189 = vunpack.c.h.b16 %v5991
        %v6190 = vunpack.c.l.b16 %v5992
        %v6191 = vunpack.c.h.b16 %v5992
        %v6192 = vunpack.c.l.b16 %v5993
        %v6193 = vunpack.c.h.b16 %v5993
        %v6194 = vunpack.c.l.b16 %v5994
        %v6195 = vunpack.c.h.b16 %v5994
        %v6196 = vunpack.c.l.b16 %v5995
        %v6197 = vunpack.c.h.b16 %v5995
        %v6198 = vunpack.c.l.b16 %v5996
        %v6199 = vunpack.c.h.b16 %v5996
        %v6200 = vunpack.c.l.b16 %v5997
        %v6201 = vunpack.c.h.b16 %v5997
        %v6202 = vunpack.c.l.b16 %v5998
        %v6203 = vunpack.c.h.b16 %v5998
        %v6204 = vunpack.c.l.b16 %v5999
        %v6205 = vunpack.c.h.b16 %v5999
        %v6206 = vunpack.c.l.b16 %v6000
        %v6207 = vunpack.c.h.b16 %v6000
        %v6208 = vunpack.c.l.b16 %v6001
        %v6209 = vunpack.c.h.b16 %v6001
        %v6210 = vunpack.c.l.b16 %v6002
        %v6211 = vunpack.c.h.b16 %v6002
        %v6212 = vunpack.c.l.b16 %v6003
        %v6213 = vunpack.c.h.b16 %v6003
        %v6214 = vunpack.c.l.b16 %v6004
        %v6215 = vunpack.c.h.b16 %v6004
        %v6216 = vunpack.c.l.b16 %v6005
        %v6217 = vunpack.c.h.b16 %v6005
        %v6218 = vunpack.c.l.b16 %v6006
        %v6219 = vunpack.c.h.b16 %v6006
        %v6220 = vunpack.c.l.b16 %v6007
        %v6221 = vunpack.c.h.b16 %v6007
        %v6222 = vunpack.c.l.b16 %v6008
        %v6223 = vunpack.c.h.b16 %v6008
        %v6224 = vunpack.c.l.b16 %v6009
        %v6225 = vunpack.c.h.b16 %v6009
        %v6226 = vunpack.c.l.b16 %v6010
        %v6227 = vunpack.c.h.b16 %v6010
        %v6228 = vunpack.c.l.b16 %v6011
        %v6229 = vunpack.c.h.b16 %v6011
        %v6230 = vunpack.c.l.b16 %v6012
        %v6231 = vunpack.c.h.b16 %v6012
        %v6232 = vunpack.c.l.b16 %v6013
        %v6233 = vunpack.c.h.b16 %v6013
        %v6234 = vunpack.c.l.b16 %v6014
        %v6235 = vunpack.c.h.b16 %v6014
        %v6236 = vunpack.c.l.b16 %v6015
        %v6237 = vunpack.c.h.b16 %v6015
        %v6238 = vunpack.c.l.b16 %v6016
        %v6239 = vunpack.c.h.b16 %v6016
        %v6240 = vunpack.c.l.b16 %v6017
        %v6241 = vunpack.c.h.b16 %v6017
        %v6242 = vunpack.c.l.b16 %v6018
        %v6243 = vunpack.c.h.b16 %v6018
        %v6244 = vunpack.c.l.b16 %v6019
        %v6245 = vunpack.c.h.b16 %v6019
        %v6246 = vunpack.c.l.b16 %v6020
        %v6247 = vunpack.c.h.b16 %v6020
        %v6248 = vunpack.c.l.b16 %v6021
        %v6249 = vunpack.c.h.b16 %v6021
        %v6250 = vunpack.c.l.b16 %v6022
        %v6251 = vunpack.c.h.b16 %v6022
        %v6252 = vunpack.c.l.b16 %v6023
        %v6253 = vunpack.c.h.b16 %v6023
        %v6254 = vunpack.c.l.b16 %v6024
        %v6255 = vunpack.c.h.b16 %v6024
        %v6256 = vunpack.c.l.b16 %v6025
        %v6257 = vunpack.c.h.b16 %v6025
        %v6258 = vunpack.c.l.b16 %v6026
        %v6259 = vunpack.c.h.b16 %v6026
        %v6260 = vunpack.c.l.b16 %v6027
        %v6261 = vunpack.c.h.b16 %v6027
        %v6262 = vunpack.c.l.b16 %v6028
        %v6263 = vunpack.c.h.b16 %v6028
        %v6264 = vunpack.c.l.b16 %v6029
        %v6265 = vunpack.c.h.b16 %v6029
        %v6266 = vunpack.c.l.b16 %v6030
        %v6267 = vunpack.c.h.b16 %v6030
        %v6268 = vunpack.c.l.b16 %v6031
        %v6269 = vunpack.c.h.b16 %v6031
        %v6270 = vunpack.c.l.b16 %v6032
        %v6271 = vunpack.c.h.b16 %v6032
        %v6272 = vunpack.c.l.b16 %v6033
        %v6273 = vunpack.c.h.b16 %v6033
        %v6274 = vunpack.c.l.b16 %v6034
        %v6275 = vunpack.c.h.b16 %v6034
        %v6276 = vunpack.c.l.b16 %v6035
        %v6277 = vunpack.c.h.b16 %v6035
        %v6278 = vunpack.c.l.b16 %v6036
        %v6279 = vunpack.c.h.b16 %v6036
        %v6280 = vunpack.c.l.b16 %v6037
        %v6281 = vunpack.c.h.b16 %v6037
        %v6282 = vunpack.c.l.b16 %v6038
        %v6283 = vunpack.c.h.b16 %v6038
        %v6284 = vunpack.c.l.b16 %v6039
        %v6285 = vunpack.c.h.b16 %v6039
        %v6286 = vunpack.c.l.b16 %v6040
        %v6287 = vunpack.c.h.b16 %v6040
        %v6288 = vunpack.c.l.b16 %v6041
        %v6289 = vunpack.c.h.b16 %v6041
        %v6290 = vunpack.c.l.b16 %v6042
        %v6291 = vunpack.c.h.b16 %v6042
        %v6292 = vunpack.c.l.b16 %v6043
        %v6293 = vunpack.c.h.b16 %v6043
        %v6294 = vunpack.c.l.b16 %v6044
        %v6295 = vunpack.c.h.b16 %v6044
        %v6296 = vunpack.c.l.b16 %v6045
        %v6297 = vunpack.c.h.b16 %v6045
        %v6298 = vunpack.c.l.b16 %v6046
        %v6299 = vunpack.c.h.b16 %v6046
        %v6300 = vunpack.c.l.b16 %v6047
        %v6301 = vunpack.c.h.b16 %v6047
        %v6302 = vunpack.c.l.b16 %v6048
        %v6303 = vunpack.c.h.b16 %v6048
        %v6304 = vunpack.c.l.b16 %v6049
        %v6305 = vunpack.c.h.b16 %v6049
        %v6306 = vunpack.c.l.b16 %v6050
        %v6307 = vunpack.c.h.b16 %v6050
        %v6308 = vunpack.c.l.b16 %v6051
        %v6309 = vunpack.c.h.b16 %v6051
        %v6310 = vunpack.c.l.b16 %v6052
        %v6311 = vunpack.c.h.b16 %v6052
        %v6312 = vunpack.c.l.b16 %v6053
        %v6313 = vunpack.c.h.b16 %v6053
        %v6314 = vunpack.c.l.b16 %v6054
        %v6315 = vunpack.c.h.b16 %v6054
        %v6316 = vunpack.c.l.b16 %v6055
        %v6317 = vunpack.c.h.b16 %v6055
        %v6318 = vunpack.c.l.b16 %v6056
        %v6319 = vunpack.c.h.b16 %v6056
        %v6320 = vunpack.c.l.b16 %v6057
        %v6321 = vunpack.c.h.b16 %v6057
        %v6322 = vunpack.c.l.b16 %v6058
        %v6323 = vunpack.c.h.b16 %v6058
        %v6324 = vunpack.c.l.b16 %v6059
        %v6325 = vunpack.c.h.b16 %v6059
        %v6326 = vpack.c.b16 %v6168, %v6166
        %v6327 = vpack.c.b16 %v6169, %v6167
        %v6328 = vpack.c.b16 %v6172, %v6170
        %v6329 = vpack.c.b16 %v6173, %v6171
        %v6330 = vpack.c.b16 %v6176, %v6174
        %v6331 = vpack.c.b16 %v6177, %v6175
        %v6332 = vpack.c.b16 %v6180, %v6178
        %v6333 = vpack.c.b16 %v6181, %v6179
        %v6334 = vpack.c.b16 %v6184, %v6182
        %v6335 = vpack.c.b16 %v6185, %v6183
        %v6336 = vpack.c.b16 %v6188, %v6186
        %v6337 = vpack.c.b16 %v6189, %v6187
        %v6338 = vpack.c.b16 %v6192, %v6190
        %v6339 = vpack.c.b16 %v6193, %v6191
        %v6340 = vpack.c.b16 %v6196, %v6194
        %v6341 = vpack.c.b16 %v6197, %v6195
        %v6342 = vpack.c.b16 %v6200, %v6198
        %v6343 = vpack.c.b16 %v6201, %v6199
        %v6344 = vpack.c.b16 %v6204, %v6202
        %v6345 = vpack.c.b16 %v6205, %v6203
        %v6346 = vpack.c.b16 %v6208, %v6206
        %v6347 = vpack.c.b16 %v6209, %v6207
        %v6348 = vpack.c.b16 %v6212, %v6210
        %v6349 = vpack.c.b16 %v6213, %v6211
        %v6350 = vpack.c.b16 %v6216, %v6214
        %v6351 = vpack.c.b16 %v6217, %v6215
        %v6352 = vpack.c.b16 %v6220, %v6218
        %v6353 = vpack.c.b16 %v6221, %v6219
        %v6354 = vpack.c.b16 %v6224, %v6222
        %v6355 = vpack.c.b16 %v6225, %v6223
        %v6356 = vpack.c.b16 %v6228, %v6226
        %v6357 = vpack.c.b16 %v6229, %v6227
        %v6358 = vpack.c.b16 %v6232, %v6230
        %v6359 = vpack.c.b16 %v6233, %v6231
        %v6360 = vpack.c.b16 %v6236, %v6234
        %v6361 = vpack.c.b16 %v6237, %v6235
        %v6362 = vpack.c.b16 %v6240, %v6238
        %v6363 = vpack.c.b16 %v6241, %v6239
        %v6364 = vpack.c.b16 %v6244, %v6242
        %v6365 = vpack.c.b16 %v6245, %v6243
        %v6366 = vpack.c.b16 %v6248, %v6246
        %v6367 = vpack.c.b16 %v6249, %v6247
        %v6368 = vpack.c.b16 %v6252, %v6250
        %v6369 = vpack.c.b16 %v6253, %v6251
        %v6370 = vpack.c.b16 %v6256, %v6254
        %v6371 = vpack.c.b16 %v6257, %v6255
        %v6372 = vpack.c.b16 %v6260, %v6258
        %v6373 = vpack.c.b16 %v6261, %v6259
        %v6374 = vpack.c.b16 %v6264, %v6262
        %v6375 = vpack.c.b16 %v6265, %v6263
        %v6376 = vpack.c.b16 %v6268, %v6266
        %v6377 = vpack.c.b16 %v6269, %v6267
        %v6378 = vpack.c.b16 %v6272, %v6270
        %v6379 = vpack.c.b16 %v6273, %v6271
        %v6380 = vpack.c.b16 %v6276, %v6274
        %v6381 = vpack.c.b16 %v6277, %v6275
        %v6382 = vpack.c.b16 %v6280, %v6278
        %v6383 = vpack.c.b16 %v6281, %v6279
        %v6384 = vpack.c.b16 %v6284, %v6282
        %v6385 = vpack.c.b16 %v6285, %v6283
        %v6386 = vpack.c.b16 %v6288, %v6286
        %v6387 = vpack.c.b16 %v6289, %v6287
        %v6388 = vpack.c.b16 %v6292, %v6290
        %v6389 = vpack.c.b16 %v6293, %v6291
        %v6390 = vpack.c.b16 %v6296, %v6294
        %v6391 = vpack.c.b16 %v6297, %v6295
        %v6392 = vpack.c.b16 %v6300, %v6298
        %v6393 = vpack.c.b16 %v6301, %v6299
        %v6394 = vpack.c.b16 %v6304, %v6302
        %v6395 = vpack.c.b16 %v6305, %v6303
        %v6396 = vpack.c.b16 %v6308, %v6306
        %v6397 = vpack.c.b16 %v6309, %v6307
        %v6398 = vpack.c.b16 %v6312, %v6310
        %v6399 = vpack.c.b16 %v6313, %v6311
        %v6400 = vpack.c.b16 %v6316, %v6314
        %v6401 = vpack.c.b16 %v6317, %v6315
        %v6402 = vpack.c.b16 %v6320, %v6318
        %v6403 = vpack.c.b16 %v6321, %v6319
        %v6404 = vpack.c.b16 %v6324, %v6322
        %v6405 = vpack.c.b16 %v6325, %v6323
        %6486 = vmatpush.bf16.msra.mxu0 %v6340
        %6487 = vmatpush.bf16.msra.mxu0 %v6338
        %6488 = vmatpush.bf16.msra.mxu0 %v6336
        %6489 = vmatpush.bf16.msra.mxu0 %v6334
        %6490 = vmatpush.bf16.msra.mxu0 %v6332
        %6491 = vmatpush.bf16.msra.mxu0 %v6330
        %6492 = vmatpush.bf16.msra.mxu0 %v6328
        %6493 = vmatpush.bf16.msra.mxu0 %v6326
        %6494 = vmatmul.bf16.gmra.mxu0 %v6076
        %v6495 = vpop.f32.mrf.mxu0
        %v6496 = vadd.f32 0.0, %v6495
        %v6497 = vpop.f32.mrf.mxu0
        %v6498 = vadd.f32 0.0, %v6497
        %6499 = vdwg.mxu0
        %6500 = vmatpush.bf16.msra.mxu0 %v6356
        %6501 = vmatpush.bf16.msra.mxu0 %v6354
        %6502 = vmatpush.bf16.msra.mxu0 %v6352
        %6503 = vmatpush.bf16.msra.mxu0 %v6350
        %6504 = vmatpush.bf16.msra.mxu0 %v6348
        %6505 = vmatpush.bf16.msra.mxu0 %v6346
        %6506 = vmatpush.bf16.msra.mxu0 %v6344
        %6507 = vmatpush.bf16.msra.mxu0 %v6342
        %6508 = vmatmul.bf16.gmra.mxu0 %v6077
        %v6509 = vpop.f32.mrf.mxu0
        %v6510 = vadd.f32 %v6496, %v6509
        %v6511 = vpop.f32.mrf.mxu0
        %v6512 = vadd.f32 %v6498, %v6511
        %6513 = vdwg.mxu0
        %6514 = vmatpush.bf16.msra.mxu0 %v6372
        %6515 = vmatpush.bf16.msra.mxu0 %v6370
        %6516 = vmatpush.bf16.msra.mxu0 %v6368
        %6517 = vmatpush.bf16.msra.mxu0 %v6366
        %6518 = vmatpush.bf16.msra.mxu0 %v6364
        %6519 = vmatpush.bf16.msra.mxu0 %v6362
        %6520 = vmatpush.bf16.msra.mxu0 %v6360
        %6521 = vmatpush.bf16.msra.mxu0 %v6358
        %6522 = vmatmul.bf16.gmra.mxu0 %v6078
        %v6523 = vpop.f32.mrf.mxu0
        %v6524 = vadd.f32 %v6510, %v6523
        %v6525 = vpop.f32.mrf.mxu0
        %v6526 = vadd.f32 %v6512, %v6525
        %6527 = vdwg.mxu0
        %6528 = vmatpush.bf16.msra.mxu0 %v6388
        %6529 = vmatpush.bf16.msra.mxu0 %v6386
        %6530 = vmatpush.bf16.msra.mxu0 %v6384
        %6531 = vmatpush.bf16.msra.mxu0 %v6382
        %6532 = vmatpush.bf16.msra.mxu0 %v6380
        %6533 = vmatpush.bf16.msra.mxu0 %v6378
        %6534 = vmatpush.bf16.msra.mxu0 %v6376
        %6535 = vmatpush.bf16.msra.mxu0 %v6374
        %6536 = vmatmul.bf16.gmra.mxu0 %v6079
        %v6537 = vpop.f32.mrf.mxu0
        %v6538 = vadd.f32 %v6524, %v6537
        %v6539 = vpop.f32.mrf.mxu0
        %v6540 = vadd.f32 %v6526, %v6539
        %6541 = vdwg.mxu0
        %6542 = vmatpush.bf16.msra.mxu0 %v6404
        %6543 = vmatpush.bf16.msra.mxu0 %v6402
        %6544 = vmatpush.bf16.msra.mxu0 %v6400
        %6545 = vmatpush.bf16.msra.mxu0 %v6398
        %6546 = vmatpush.bf16.msra.mxu0 %v6396
        %6547 = vmatpush.bf16.msra.mxu0 %v6394
        %6548 = vmatpush.bf16.msra.mxu0 %v6392
        %6549 = vmatpush.bf16.msra.mxu0 %v6390
        %6550 = vmatmul.bf16.gmra.mxu0 %v6080
        %v6551 = vpop.f32.mrf.mxu0
        %v6552 = vadd.f32 %v6538, %v6551
        %v6553 = vpop.f32.mrf.mxu0
        %v6554 = vadd.f32 %v6540, %v6553
        %6555 = vdwg.mxu0
        %6556 = vmatpush.bf16.msra.mxu0 %v6341
        %6557 = vmatpush.bf16.msra.mxu0 %v6339
        %6558 = vmatpush.bf16.msra.mxu0 %v6337
        %6559 = vmatpush.bf16.msra.mxu0 %v6335
        %6560 = vmatpush.bf16.msra.mxu0 %v6333
        %6561 = vmatpush.bf16.msra.mxu0 %v6331
        %6562 = vmatpush.bf16.msra.mxu0 %v6329
        %6563 = vmatpush.bf16.msra.mxu0 %v6327
        %6564 = vmatmul.bf16.gmra.mxu0 %v6076
        %v6565 = vpop.f32.mrf.mxu0
        %v6566 = vadd.f32 0.0, %v6565
        %v6567 = vpop.f32.mrf.mxu0
        %v6568 = vadd.f32 0.0, %v6567
        %6569 = vdwg.mxu0
        %6570 = vmatpush.bf16.msra.mxu0 %v6357
        %6571 = vmatpush.bf16.msra.mxu0 %v6355
        %6572 = vmatpush.bf16.msra.mxu0 %v6353
        %6573 = vmatpush.bf16.msra.mxu0 %v6351
        %6574 = vmatpush.bf16.msra.mxu0 %v6349
        %6575 = vmatpush.bf16.msra.mxu0 %v6347
        %6576 = vmatpush.bf16.msra.mxu0 %v6345
        %6577 = vmatpush.bf16.msra.mxu0 %v6343
        %6578 = vmatmul.bf16.gmra.mxu0 %v6077
        %v6579 = vpop.f32.mrf.mxu0
        %v6580 = vadd.f32 %v6566, %v6579
        %v6581 = vpop.f32.mrf.mxu0
        %v6582 = vadd.f32 %v6568, %v6581
        %6583 = vdwg.mxu0
        %6584 = vmatpush.bf16.msra.mxu0 %v6373
        %6585 = vmatpush.bf16.msra.mxu0 %v6371
        %6586 = vmatpush.bf16.msra.mxu0 %v6369
        %6587 = vmatpush.bf16.msra.mxu0 %v6367
        %6588 = vmatpush.bf16.msra.mxu0 %v6365
        %6589 = vmatpush.bf16.msra.mxu0 %v6363
        %6590 = vmatpush.bf16.msra.mxu0 %v6361
        %6591 = vmatpush.bf16.msra.mxu0 %v6359
        %6592 = vmatmul.bf16.gmra.mxu0 %v6078
        %v6593 = vpop.f32.mrf.mxu0
        %v6594 = vadd.f32 %v6580, %v6593
        %v6595 = vpop.f32.mrf.mxu0
        %v6596 = vadd.f32 %v6582, %v6595
        %6597 = vdwg.mxu0
        %6598 = vmatpush.bf16.msra.mxu0 %v6389
        %6599 = vmatpush.bf16.msra.mxu0 %v6387
        %6600 = vmatpush.bf16.msra.mxu0 %v6385
        %6601 = vmatpush.bf16.msra.mxu0 %v6383
        %6602 = vmatpush.bf16.msra.mxu0 %v6381
        %6603 = vmatpush.bf16.msra.mxu0 %v6379
        %6604 = vmatpush.bf16.msra.mxu0 %v6377
        %6605 = vmatpush.bf16.msra.mxu0 %v6375
        %6606 = vmatmul.bf16.gmra.mxu0 %v6079
        %v6607 = vpop.f32.mrf.mxu0
        %v6608 = vadd.f32 %v6594, %v6607
        %v6609 = vpop.f32.mrf.mxu0
        %v6610 = vadd.f32 %v6596, %v6609
        %6611 = vdwg.mxu0
        %6612 = vmatpush.bf16.msra.mxu0 %v6405
        %6613 = vmatpush.bf16.msra.mxu0 %v6403
        %6614 = vmatpush.bf16.msra.mxu0 %v6401
        %6615 = vmatpush.bf16.msra.mxu0 %v6399
        %6616 = vmatpush.bf16.msra.mxu0 %v6397
        %6617 = vmatpush.bf16.msra.mxu0 %v6395
        %6618 = vmatpush.bf16.msra.mxu0 %v6393
        %6619 = vmatpush.bf16.msra.mxu0 %v6391
        %6620 = vmatmul.bf16.gmra.mxu0 %v6080
        %v6621 = vpop.f32.mrf.mxu0
        %v6622 = vadd.f32 %v6608, %v6621
        %v6623 = vpop.f32.mrf.mxu0
        %v6624 = vadd.f32 %v6610, %v6623
        %6625 = vdwg.mxu0
        %v6626 = vmax.f32 %v6552, %v6622
        %v6627 = vmax.f32 %v6554, %v6624
        %v6628 = vld [vmem:[#allocation2 + $0x14] sm:$0xff]
        %v6629 = vld [vmem:[#allocation2 + $0x1c] sm:$0xff]
        %v6630 = vld [vmem:[#allocation2 + $0x24] sm:$0xf]
        %v6631 = vld [vmem:[#allocation2 + $0x44] sm:$0xff]
        %v6632 = vld [vmem:[#allocation2 + $0x4c] sm:$0xff]
        %v6633 = vld [vmem:[#allocation2 + $0x54] sm:$0xf]
        %v6640 = vunpack.c.l.b16 %v6628
        %v6641 = vunpack.c.h.b16 %v6628
        %v6642 = vunpack.c.l.b16 %v6629
        %v6643 = vunpack.c.h.b16 %v6629
        %v6644 = vunpack.c.l.b16 %v6630
        %v6645 = vunpack.c.l.b16 %v6631
        %v6646 = vunpack.c.h.b16 %v6631
        %v6647 = vunpack.c.l.b16 %v6632
        %v6648 = vunpack.c.h.b16 %v6632
        %v6649 = vunpack.c.l.b16 %v6633
        %v6650 = vpack.c.b16 %v6645, %v6640
        %v6651 = vpack.c.b16 %v6646, %v6641
        %v6652 = vpack.c.b16 %v6647, %v6642
        %v6653 = vpack.c.b16 %v6648, %v6643
        %v6654 = vpack.c.b16 %v6649, %v6644
        %6660 = vmatpush.bf16.msra.mxu0 %v6340
        %6661 = vmatpush.bf16.msra.mxu0 %v6338
        %6662 = vmatpush.bf16.msra.mxu0 %v6336
        %6663 = vmatpush.bf16.msra.mxu0 %v6334
        %6664 = vmatpush.bf16.msra.mxu0 %v6332
        %6665 = vmatpush.bf16.msra.mxu0 %v6330
        %6666 = vmatpush.bf16.msra.mxu0 %v6328
        %6667 = vmatpush.bf16.msra.mxu0 %v6326
        %6668 = vmatmul.bf16.gmra.mxu0 %v6650
        %v6669 = vpop.f32.mrf.mxu0
        %v6670 = vadd.f32 0.0, %v6669
        %v6671 = vpop.f32.mrf.mxu0
        %v6672 = vadd.f32 0.0, %v6671
        %6673 = vdwg.mxu0
        %6674 = vmatpush.bf16.msra.mxu0 %v6356
        %6675 = vmatpush.bf16.msra.mxu0 %v6354
        %6676 = vmatpush.bf16.msra.mxu0 %v6352
        %6677 = vmatpush.bf16.msra.mxu0 %v6350
        %6678 = vmatpush.bf16.msra.mxu0 %v6348
        %6679 = vmatpush.bf16.msra.mxu0 %v6346
        %6680 = vmatpush.bf16.msra.mxu0 %v6344
        %6681 = vmatpush.bf16.msra.mxu0 %v6342
        %6682 = vmatmul.bf16.gmra.mxu0 %v6651
        %v6683 = vpop.f32.mrf.mxu0
        %v6684 = vadd.f32 %v6670, %v6683
        %v6685 = vpop.f32.mrf.mxu0
        %v6686 = vadd.f32 %v6672, %v6685
        %6687 = vdwg.mxu0
        %6688 = vmatpush.bf16.msra.mxu0 %v6372
        %6689 = vmatpush.bf16.msra.mxu0 %v6370
        %6690 = vmatpush.bf16.msra.mxu0 %v6368
        %6691 = vmatpush.bf16.msra.mxu0 %v6366
        %6692 = vmatpush.bf16.msra.mxu0 %v6364
        %6693 = vmatpush.bf16.msra.mxu0 %v6362
        %6694 = vmatpush.bf16.msra.mxu0 %v6360
        %6695 = vmatpush.bf16.msra.mxu0 %v6358
        %6696 = vmatmul.bf16.gmra.mxu0 %v6652
        %v6697 = vpop.f32.mrf.mxu0
        %v6698 = vadd.f32 %v6684, %v6697
        %v6699 = vpop.f32.mrf.mxu0
        %v6700 = vadd.f32 %v6686, %v6699
        %6701 = vdwg.mxu0
        %6702 = vmatpush.bf16.msra.mxu0 %v6388
        %6703 = vmatpush.bf16.msra.mxu0 %v6386
        %6704 = vmatpush.bf16.msra.mxu0 %v6384
        %6705 = vmatpush.bf16.msra.mxu0 %v6382
        %6706 = vmatpush.bf16.msra.mxu0 %v6380
        %6707 = vmatpush.bf16.msra.mxu0 %v6378
        %6708 = vmatpush.bf16.msra.mxu0 %v6376
        %6709 = vmatpush.bf16.msra.mxu0 %v6374
        %6710 = vmatmul.bf16.gmra.mxu0 %v6653
        %v6711 = vpop.f32.mrf.mxu0
        %v6712 = vadd.f32 %v6698, %v6711
        %v6713 = vpop.f32.mrf.mxu0
        %v6714 = vadd.f32 %v6700, %v6713
        %6715 = vdwg.mxu0
        %6716 = vmatpush.bf16.msra.mxu0 %v6404
        %6717 = vmatpush.bf16.msra.mxu0 %v6402
        %6718 = vmatpush.bf16.msra.mxu0 %v6400
        %6719 = vmatpush.bf16.msra.mxu0 %v6398
        %6720 = vmatpush.bf16.msra.mxu0 %v6396
        %6721 = vmatpush.bf16.msra.mxu0 %v6394
        %6722 = vmatpush.bf16.msra.mxu0 %v6392
        %6723 = vmatpush.bf16.msra.mxu0 %v6390
        %6724 = vmatmul.bf16.gmra.mxu0 %v6654
        %v6725 = vpop.f32.mrf.mxu0
        %v6726 = vadd.f32 %v6712, %v6725
        %v6727 = vpop.f32.mrf.mxu0
        %v6728 = vadd.f32 %v6714, %v6727
        %6729 = vdwg.mxu0
        %6730 = vmatpush.bf16.msra.mxu0 %v6341
        %6731 = vmatpush.bf16.msra.mxu0 %v6339
        %6732 = vmatpush.bf16.msra.mxu0 %v6337
        %6733 = vmatpush.bf16.msra.mxu0 %v6335
        %6734 = vmatpush.bf16.msra.mxu0 %v6333
        %6735 = vmatpush.bf16.msra.mxu0 %v6331
        %6736 = vmatpush.bf16.msra.mxu0 %v6329
        %6737 = vmatpush.bf16.msra.mxu0 %v6327
        %6738 = vmatmul.bf16.gmra.mxu0 %v6650
        %v6739 = vpop.f32.mrf.mxu0
        %v6740 = vadd.f32 0.0, %v6739
        %v6741 = vpop.f32.mrf.mxu0
        %v6742 = vadd.f32 0.0, %v6741
        %6743 = vdwg.mxu0
        %6744 = vmatpush.bf16.msra.mxu0 %v6357
        %6745 = vmatpush.bf16.msra.mxu0 %v6355
        %6746 = vmatpush.bf16.msra.mxu0 %v6353
        %6747 = vmatpush.bf16.msra.mxu0 %v6351
        %6748 = vmatpush.bf16.msra.mxu0 %v6349
        %6749 = vmatpush.bf16.msra.mxu0 %v6347
        %6750 = vmatpush.bf16.msra.mxu0 %v6345
        %6751 = vmatpush.bf16.msra.mxu0 %v6343
        %6752 = vmatmul.bf16.gmra.mxu0 %v6651
        %v6753 = vpop.f32.mrf.mxu0
        %v6754 = vadd.f32 %v6740, %v6753
        %v6755 = vpop.f32.mrf.mxu0
        %v6756 = vadd.f32 %v6742, %v6755
        %6757 = vdwg.mxu0
        %6758 = vmatpush.bf16.msra.mxu0 %v6373
        %6759 = vmatpush.bf16.msra.mxu0 %v6371
        %6760 = vmatpush.bf16.msra.mxu0 %v6369
        %6761 = vmatpush.bf16.msra.mxu0 %v6367
        %6762 = vmatpush.bf16.msra.mxu0 %v6365
        %6763 = vmatpush.bf16.msra.mxu0 %v6363
        %6764 = vmatpush.bf16.msra.mxu0 %v6361
        %6765 = vmatpush.bf16.msra.mxu0 %v6359
        %6766 = vmatmul.bf16.gmra.mxu0 %v6652
        %v6767 = vpop.f32.mrf.mxu0
        %v6768 = vadd.f32 %v6754, %v6767
        %v6769 = vpop.f32.mrf.mxu0
        %v6770 = vadd.f32 %v6756, %v6769
        %6771 = vdwg.mxu0
        %6772 = vmatpush.bf16.msra.mxu0 %v6389
        %6773 = vmatpush.bf16.msra.mxu0 %v6387
        %6774 = vmatpush.bf16.msra.mxu0 %v6385
        %6775 = vmatpush.bf16.msra.mxu0 %v6383
        %6776 = vmatpush.bf16.msra.mxu0 %v6381
        %6777 = vmatpush.bf16.msra.mxu0 %v6379
        %6778 = vmatpush.bf16.msra.mxu0 %v6377
        %6779 = vmatpush.bf16.msra.mxu0 %v6375
        %6780 = vmatmul.bf16.gmra.mxu0 %v6653
        %v6781 = vpop.f32.mrf.mxu0
        %v6782 = vadd.f32 %v6768, %v6781
        %v6783 = vpop.f32.mrf.mxu0
        %v6784 = vadd.f32 %v6770, %v6783
        %6785 = vdwg.mxu0
        %6786 = vmatpush.bf16.msra.mxu0 %v6405
        %6787 = vmatpush.bf16.msra.mxu0 %v6403
        %6788 = vmatpush.bf16.msra.mxu0 %v6401
        %6789 = vmatpush.bf16.msra.mxu0 %v6399
        %6790 = vmatpush.bf16.msra.mxu0 %v6397
        %6791 = vmatpush.bf16.msra.mxu0 %v6395
        %6792 = vmatpush.bf16.msra.mxu0 %v6393
        %6793 = vmatpush.bf16.msra.mxu0 %v6391
        %6794 = vmatmul.bf16.gmra.mxu0 %v6654
        %v6795 = vpop.f32.mrf.mxu0
        %v6796 = vadd.f32 %v6782, %v6795
        %v6797 = vpop.f32.mrf.mxu0
        %v6798 = vadd.f32 %v6784, %v6797
        %6799 = vdwg.mxu0
        %v6800 = vmax.f32 %v6726, %v6796
        %v6801 = vmax.f32 %v6728, %v6798
        %v6802 = vmax.f32 %v6626, %v6800
        %v6803 = vmax.f32 %v6627, %v6801
        %v6804 = vadd.f32 %v6802, %v4935
        %v6805 = vadd.f32 %v6803, %v4935
        %vm6806 = vcmp.gt.f32.partialorder %v6804, 0.0
        %vm6807 = vcmp.gt.f32.partialorder %v6805, 0.0
        %v6808 = vmin.f32 %v6804, 0.0
        %v6809 = vmin.f32 %v6805, 0.0
        %v6810 = vmul.f32 %v6808, 1.442695
        %v6811 = vpow.pop %v6810
        %v6812 = vmul.f32 %v6809, 1.442695
        %v6813 = vpow.pop %v6812
        %v6814 = vsub.f32 %v6811, 1.0
        %v6815 = vsub.f32 %v6813, 1.0
        %v6816 = vmul.f32 %v6814, 1.6732632
        %v6817 = vmul.f32 %v6815, 1.6732632
        %v6818 = vsel %vm6806, %v6804, %v6816
        %v6819 = vsel %vm6807, %v6805, %v6817
        %v6820 = vmul.f32 %v6818, 1.050701
        %v6821 = vmul.f32 %v6819, 1.050701
        %v6822 = vpack.c.bf16 %v6821, %v6820
        %v6823 = vld [vmem:[#allocation3] sm:$0xff]
        %v6824 = vld [vmem:[#allocation3 + $0x8] sm:$0xff]
        %s6825 = scalar_lea.vmem %s3, 128
        %v6826 = vld [vmem:[%s6825] sm:$0xf]
        %v6827 = vld [vmem:[%s6825 + $0x4] sm:$0xf]
        %v6828 = vld [vmem:[%s6825 + $0x8] sm:$0xf]
        %v6829 = vld [vmem:[%s6825 + $0xc] sm:$0xf]
        %v6830 = vld [vmem:[%s6825 + $0x10] sm:$0xf]
        %v6831 = vld [vmem:[%s6825 + $0x14] sm:$0xf]
        %v6832 = vld [vmem:[%s6825 + $0x18] sm:$0xf]
        %v6833 = vld [vmem:[%s6825 + $0x1c] sm:$0xf]
        %v6834 = vld [vmem:[%s6825 + $0x20] sm:$0xf]
        %v6835 = vld [vmem:[%s6825 + $0x24] sm:$0xf]
        %v6836 = vld [vmem:[%s6825 + $0x28] sm:$0xf]
        %v6837 = vld [vmem:[%s6825 + $0x2c] sm:$0xf]
        %v6838 = vld [vmem:[%s6825 + $0x30] sm:$0xf]
        %v6839 = vld [vmem:[%s6825 + $0x34] sm:$0xf]
        %v6840 = vld [vmem:[%s6825 + $0x38] sm:$0xf]
        %v6841 = vld [vmem:[%s6825 + $0x3c] sm:$0xf]
        %v6858 = vunpack.c.l.b16 %v6826
        %v6859 = vunpack.c.l.b16 %v6827
        %v6860 = vunpack.c.l.b16 %v6828
        %v6861 = vunpack.c.l.b16 %v6829
        %v6862 = vunpack.c.l.b16 %v6830
        %v6863 = vunpack.c.l.b16 %v6831
        %v6864 = vunpack.c.l.b16 %v6832
        %v6865 = vunpack.c.l.b16 %v6833
        %v6866 = vunpack.c.l.b16 %v6834
        %v6867 = vunpack.c.l.b16 %v6835
        %v6868 = vunpack.c.l.b16 %v6836
        %v6869 = vunpack.c.l.b16 %v6837
        %v6870 = vunpack.c.l.b16 %v6838
        %v6871 = vunpack.c.l.b16 %v6839
        %v6872 = vunpack.c.l.b16 %v6840
        %v6873 = vunpack.c.l.b16 %v6841
        %v6874 = vpack.c.b16 %v6859, %v6858
        %v6875 = vpack.c.b16 %v6861, %v6860
        %v6876 = vpack.c.b16 %v6863, %v6862
        %v6877 = vpack.c.b16 %v6865, %v6864
        %v6878 = vpack.c.b16 %v6867, %v6866
        %v6879 = vpack.c.b16 %v6869, %v6868
        %v6880 = vpack.c.b16 %v6871, %v6870
        %v6881 = vpack.c.b16 %v6873, %v6872
        %6890 = vmatpush.bf16.msra.mxu0 %v6881
        %6891 = vmatpush.bf16.msra.mxu0 %v6880
        %6892 = vmatpush.bf16.msra.mxu0 %v6879
        %6893 = vmatpush.bf16.msra.mxu0 %v6878
        %6894 = vmatpush.bf16.msra.mxu0 %v6877
        %6895 = vmatpush.bf16.msra.mxu0 %v6876
        %6896 = vmatpush.bf16.msra.mxu0 %v6875
        %6897 = vmatpush.bf16.msra.mxu0 %v6874
        %6898 = vmatmul.bf16.gmra.mxu0 %v6822
        %v6899 = vpop.f32.mrf.mxu0
        %v6900 = vadd.f32 0.0, %v6899
        %v6901 = vpop.f32.mrf.mxu0
        %v6902 = vadd.f32 0.0, %v6901
        %6903 = vdwg.mxu0
        %v6904 = vadd.f32 %v6823, %v6900
        %v6905 = vadd.f32 %v6824, %v6902
        %6906 = vst [vmem:[#allocation3] sm:$0xff] %v6904
        %6907 = vst [vmem:[#allocation3 + $0x8] sm:$0xff] %v6905
        %v6908 = vld [vmem:[#allocation2 + $0x18] sm:$0xff]
        %v6909 = vld [vmem:[#allocation2 + $0x20] sm:$0xff]
        %v6910 = vld [vmem:[#allocation2 + $0x28] sm:$0xf]
        %v6911 = vld [vmem:[#allocation2 + $0x48] sm:$0xff]
        %v6912 = vld [vmem:[#allocation2 + $0x50] sm:$0xff]
        %v6913 = vld [vmem:[#allocation2 + $0x58] sm:$0xf]
        %v6914 = vld [vmem:[%s2] sm:$0xff]
        %v6915 = vld [vmem:[%s2 + $0x8] sm:$0xff]
        %v6916 = vld [vmem:[%s2 + $0x10] sm:$0xff]
        %v6917 = vld [vmem:[%s2 + $0x18] sm:$0xff]
        %v6918 = vld [vmem:[%s2 + $0x20] sm:$0xff]
        %v6919 = vld [vmem:[%s2 + $0x28] sm:$0xff]
        %v6920 = vld [vmem:[%s2 + $0x30] sm:$0xff]
        %v6921 = vld [vmem:[%s2 + $0x38] sm:$0xff]
        %v6922 = vld [vmem:[%s2 + $0x40] sm:$0xff]
        %v6923 = vld [vmem:[%s2 + $0x48] sm:$0xff]
        %v6924 = vld [vmem:[%s2 + $0x50] sm:$0xff]
        %v6925 = vld [vmem:[%s2 + $0x58] sm:$0xff]
        %v6926 = vld [vmem:[%s2 + $0x60] sm:$0xff]
        %v6927 = vld [vmem:[%s2 + $0x68] sm:$0xff]
        %v6928 = vld [vmem:[%s2 + $0x70] sm:$0xff]
        %v6929 = vld [vmem:[%s2 + $0x78] sm:$0xff]
        %v6930 = vld [vmem:[%s2 + $0x80] sm:$0xff]
        %v6931 = vld [vmem:[%s2 + $0x88] sm:$0xff]
        %v6932 = vld [vmem:[%s2 + $0x90] sm:$0xff]
        %v6933 = vld [vmem:[%s2 + $0x98] sm:$0xff]
        %v6934 = vld [vmem:[%s2 + $0xa0] sm:$0xff]
        %v6935 = vld [vmem:[%s2 + $0xa8] sm:$0xff]
        %v6936 = vld [vmem:[%s2 + $0xb0] sm:$0xff]
        %v6937 = vld [vmem:[%s2 + $0xb8] sm:$0xff]
        %v6938 = vld [vmem:[%s2 + $0xc0] sm:$0xff]
        %v6939 = vld [vmem:[%s2 + $0xc8] sm:$0xff]
        %v6940 = vld [vmem:[%s2 + $0xd0] sm:$0xff]
        %v6941 = vld [vmem:[%s2 + $0xd8] sm:$0xff]
        %v6942 = vld [vmem:[%s2 + $0xe0] sm:$0xff]
        %v6943 = vld [vmem:[%s2 + $0xe8] sm:$0xff]
        %v6944 = vld [vmem:[%s2 + $0xf0] sm:$0xff]
        %v6945 = vld [vmem:[%s2 + $0xf8] sm:$0xff]
        %v6946 = vld [vmem:[%s2 + $0x100] sm:$0xff]
        %v6947 = vld [vmem:[%s2 + $0x108] sm:$0xff]
        %v6948 = vld [vmem:[%s2 + $0x110] sm:$0xff]
        %v6949 = vld [vmem:[%s2 + $0x118] sm:$0xff]
        %v6950 = vld [vmem:[%s2 + $0x120] sm:$0xff]
        %v6951 = vld [vmem:[%s2 + $0x128] sm:$0xff]
        %v6952 = vld [vmem:[%s2 + $0x130] sm:$0xff]
        %v6953 = vld [vmem:[%s2 + $0x138] sm:$0xff]
        %v6954 = vld [vmem:[%s2 + $0x140] sm:$0xff]
        %v6955 = vld [vmem:[%s2 + $0x148] sm:$0xff]
        %v6956 = vld [vmem:[%s2 + $0x150] sm:$0xff]
        %v6957 = vld [vmem:[%s2 + $0x158] sm:$0xff]
        %v6958 = vld [vmem:[%s2 + $0x160] sm:$0xff]
        %v6959 = vld [vmem:[%s2 + $0x168] sm:$0xff]
        %v6960 = vld [vmem:[%s2 + $0x170] sm:$0xff]
        %v6961 = vld [vmem:[%s2 + $0x178] sm:$0xff]
        %v6962 = vld [vmem:[%s2 + $0x180] sm:$0xff]
        %v6963 = vld [vmem:[%s2 + $0x188] sm:$0xff]
        %v6964 = vld [vmem:[%s2 + $0x190] sm:$0xff]
        %v6965 = vld [vmem:[%s2 + $0x198] sm:$0xff]
        %v6966 = vld [vmem:[%s2 + $0x1a0] sm:$0xff]
        %v6967 = vld [vmem:[%s2 + $0x1a8] sm:$0xff]
        %v6968 = vld [vmem:[%s2 + $0x1b0] sm:$0xff]
        %v6969 = vld [vmem:[%s2 + $0x1b8] sm:$0xff]
        %v6970 = vld [vmem:[%s2 + $0x1c0] sm:$0xff]
        %v6971 = vld [vmem:[%s2 + $0x1c8] sm:$0xff]
        %v6972 = vld [vmem:[%s2 + $0x1d0] sm:$0xff]
        %v6973 = vld [vmem:[%s2 + $0x1d8] sm:$0xff]
        %v6974 = vld [vmem:[%s2 + $0x1e0] sm:$0xff]
        %v6975 = vld [vmem:[%s2 + $0x1e8] sm:$0xff]
        %v6976 = vld [vmem:[%s2 + $0x1f0] sm:$0xff]
        %v6977 = vld [vmem:[%s2 + $0x1f8] sm:$0xff]
        %v6978 = vld [vmem:[%s2 + $0x200] sm:$0xff]
        %v6979 = vld [vmem:[%s2 + $0x208] sm:$0xff]
        %v6980 = vld [vmem:[%s2 + $0x210] sm:$0xff]
        %v6981 = vld [vmem:[%s2 + $0x218] sm:$0xff]
        %v6982 = vld [vmem:[%s2 + $0x220] sm:$0xff]
        %v6983 = vld [vmem:[%s2 + $0x228] sm:$0xff]
        %v6984 = vld [vmem:[%s2 + $0x230] sm:$0xff]
        %v6985 = vld [vmem:[%s2 + $0x238] sm:$0xff]
        %v6986 = vld [vmem:[%s2 + $0x240] sm:$0xff]
        %v6987 = vld [vmem:[%s2 + $0x248] sm:$0xff]
        %v6988 = vld [vmem:[%s2 + $0x250] sm:$0xff]
        %v6989 = vld [vmem:[%s2 + $0x258] sm:$0xff]
        %v6990 = vld [vmem:[%s2 + $0x260] sm:$0xff]
        %v6991 = vld [vmem:[%s2 + $0x268] sm:$0xff]
        %v6992 = vld [vmem:[%s2 + $0x270] sm:$0xff]
        %v6993 = vld [vmem:[%s2 + $0x278] sm:$0xff]
        %v7000 = vunpack.c.l.b16 %v6908
        %v7001 = vunpack.c.h.b16 %v6908
        %v7002 = vunpack.c.l.b16 %v6909
        %v7003 = vunpack.c.h.b16 %v6909
        %v7004 = vunpack.c.l.b16 %v6910
        %v7005 = vunpack.c.l.b16 %v6911
        %v7006 = vunpack.c.h.b16 %v6911
        %v7007 = vunpack.c.l.b16 %v6912
        %v7008 = vunpack.c.h.b16 %v6912
        %v7009 = vunpack.c.l.b16 %v6913
        %v7010 = vpack.c.b16 %v7005, %v7000
        %v7011 = vpack.c.b16 %v7006, %v7001
        %v7012 = vpack.c.b16 %v7007, %v7002
        %v7013 = vpack.c.b16 %v7008, %v7003
        %v7014 = vpack.c.b16 %v7009, %v7004
        %v7100 = vunpack.c.l.b16 %v6914
        %v7101 = vunpack.c.h.b16 %v6914
        %v7102 = vunpack.c.l.b16 %v6915
        %v7103 = vunpack.c.h.b16 %v6915
        %v7104 = vunpack.c.l.b16 %v6916
        %v7105 = vunpack.c.h.b16 %v6916
        %v7106 = vunpack.c.l.b16 %v6917
        %v7107 = vunpack.c.h.b16 %v6917
        %v7108 = vunpack.c.l.b16 %v6918
        %v7109 = vunpack.c.h.b16 %v6918
        %v7110 = vunpack.c.l.b16 %v6919
        %v7111 = vunpack.c.h.b16 %v6919
        %v7112 = vunpack.c.l.b16 %v6920
        %v7113 = vunpack.c.h.b16 %v6920
        %v7114 = vunpack.c.l.b16 %v6921
        %v7115 = vunpack.c.h.b16 %v6921
        %v7116 = vunpack.c.l.b16 %v6922
        %v7117 = vunpack.c.h.b16 %v6922
        %v7118 = vunpack.c.l.b16 %v6923
        %v7119 = vunpack.c.h.b16 %v6923
        %v7120 = vunpack.c.l.b16 %v6924
        %v7121 = vunpack.c.h.b16 %v6924
        %v7122 = vunpack.c.l.b16 %v6925
        %v7123 = vunpack.c.h.b16 %v6925
        %v7124 = vunpack.c.l.b16 %v6926
        %v7125 = vunpack.c.h.b16 %v6926
        %v7126 = vunpack.c.l.b16 %v6927
        %v7127 = vunpack.c.h.b16 %v6927
        %v7128 = vunpack.c.l.b16 %v6928
        %v7129 = vunpack.c.h.b16 %v6928
        %v7130 = vunpack.c.l.b16 %v6929
        %v7131 = vunpack.c.h.b16 %v6929
        %v7132 = vunpack.c.l.b16 %v6930
        %v7133 = vunpack.c.h.b16 %v6930
        %v7134 = vunpack.c.l.b16 %v6931
        %v7135 = vunpack.c.h.b16 %v6931
        %v7136 = vunpack.c.l.b16 %v6932
        %v7137 = vunpack.c.h.b16 %v6932
        %v7138 = vunpack.c.l.b16 %v6933
        %v7139 = vunpack.c.h.b16 %v6933
        %v7140 = vunpack.c.l.b16 %v6934
        %v7141 = vunpack.c.h.b16 %v6934
        %v7142 = vunpack.c.l.b16 %v6935
        %v7143 = vunpack.c.h.b16 %v6935
        %v7144 = vunpack.c.l.b16 %v6936
        %v7145 = vunpack.c.h.b16 %v6936
        %v7146 = vunpack.c.l.b16 %v6937
        %v7147 = vunpack.c.h.b16 %v6937
        %v7148 = vunpack.c.l.b16 %v6938
        %v7149 = vunpack.c.h.b16 %v6938
        %v7150 = vunpack.c.l.b16 %v6939
        %v7151 = vunpack.c.h.b16 %v6939
        %v7152 = vunpack.c.l.b16 %v6940
        %v7153 = vunpack.c.h.b16 %v6940
        %v7154 = vunpack.c.l.b16 %v6941
        %v7155 = vunpack.c.h.b16 %v6941
        %v7156 = vunpack.c.l.b16 %v6942
        %v7157 = vunpack.c.h.b16 %v6942
        %v7158 = vunpack.c.l.b16 %v6943
        %v7159 = vunpack.c.h.b16 %v6943
        %v7160 = vunpack.c.l.b16 %v6944
        %v7161 = vunpack.c.h.b16 %v6944
        %v7162 = vunpack.c.l.b16 %v6945
        %v7163 = vunpack.c.h.b16 %v6945
        %v7164 = vunpack.c.l.b16 %v6946
        %v7165 = vunpack.c.h.b16 %v6946
        %v7166 = vunpack.c.l.b16 %v6947
        %v7167 = vunpack.c.h.b16 %v6947
        %v7168 = vunpack.c.l.b16 %v6948
        %v7169 = vunpack.c.h.b16 %v6948
        %v7170 = vunpack.c.l.b16 %v6949
        %v7171 = vunpack.c.h.b16 %v6949
        %v7172 = vunpack.c.l.b16 %v6950
        %v7173 = vunpack.c.h.b16 %v6950
        %v7174 = vunpack.c.l.b16 %v6951
        %v7175 = vunpack.c.h.b16 %v6951
        %v7176 = vunpack.c.l.b16 %v6952
        %v7177 = vunpack.c.h.b16 %v6952
        %v7178 = vunpack.c.l.b16 %v6953
        %v7179 = vunpack.c.h.b16 %v6953
        %v7180 = vunpack.c.l.b16 %v6954
        %v7181 = vunpack.c.h.b16 %v6954
        %v7182 = vunpack.c.l.b16 %v6955
        %v7183 = vunpack.c.h.b16 %v6955
        %v7184 = vunpack.c.l.b16 %v6956
        %v7185 = vunpack.c.h.b16 %v6956
        %v7186 = vunpack.c.l.b16 %v6957
        %v7187 = vunpack.c.h.b16 %v6957
        %v7188 = vunpack.c.l.b16 %v6958
        %v7189 = vunpack.c.h.b16 %v6958
        %v7190 = vunpack.c.l.b16 %v6959
        %v7191 = vunpack.c.h.b16 %v6959
        %v7192 = vunpack.c.l.b16 %v6960
        %v7193 = vunpack.c.h.b16 %v6960
        %v7194 = vunpack.c.l.b16 %v6961
        %v7195 = vunpack.c.h.b16 %v6961
        %v7196 = vunpack.c.l.b16 %v6962
        %v7197 = vunpack.c.h.b16 %v6962
        %v7198 = vunpack.c.l.b16 %v6963
        %v7199 = vunpack.c.h.b16 %v6963
        %v7200 = vunpack.c.l.b16 %v6964
        %v7201 = vunpack.c.h.b16 %v6964
        %v7202 = vunpack.c.l.b16 %v6965
        %v7203 = vunpack.c.h.b16 %v6965
        %v7204 = vunpack.c.l.b16 %v6966
        %v7205 = vunpack.c.h.b16 %v6966
        %v7206 = vunpack.c.l.b16 %v6967
        %v7207 = vunpack.c.h.b16 %v6967
        %v7208 = vunpack.c.l.b16 %v6968
        %v7209 = vunpack.c.h.b16 %v6968
        %v7210 = vunpack.c.l.b16 %v6969
        %v7211 = vunpack.c.h.b16 %v6969
        %v7212 = vunpack.c.l.b16 %v6970
        %v7213 = vunpack.c.h.b16 %v6970
        %v7214 = vunpack.c.l.b16 %v6971
        %v7215 = vunpack.c.h.b16 %v6971
        %v7216 = vunpack.c.l.b16 %v6972
        %v7217 = vunpack.c.h.b16 %v6972
        %v7218 = vunpack.c.l.b16 %v6973
        %v7219 = vunpack.c.h.b16 %v6973
        %v7220 = vunpack.c.l.b16 %v6974
        %v7221 = vunpack.c.h.b16 %v6974
        %v7222 = vunpack.c.l.b16 %v6975
        %v7223 = vunpack.c.h.b16 %v6975
        %v7224 = vunpack.c.l.b16 %v6976
        %v7225 = vunpack.c.h.b16 %v6976
        %v7226 = vunpack.c.l.b16 %v6977
        %v7227 = vunpack.c.h.b16 %v6977
        %v7228 = vunpack.c.l.b16 %v6978
        %v7229 = vunpack.c.h.b16 %v6978
        %v7230 = vunpack.c.l.b16 %v6979
        %v7231 = vunpack.c.h.b16 %v6979
        %v7232 = vunpack.c.l.b16 %v6980
        %v7233 = vunpack.c.h.b16 %v6980
        %v7234 = vunpack.c.l.b16 %v6981
        %v7235 = vunpack.c.h.b16 %v6981
        %v7236 = vunpack.c.l.b16 %v6982
        %v7237 = vunpack.c.h.b16 %v6982
        %v7238 = vunpack.c.l.b16 %v6983
        %v7239 = vunpack.c.h.b16 %v6983
        %v7240 = vunpack.c.l.b16 %v6984
        %v7241 = vunpack.c.h.b16 %v6984
        %v7242 = vunpack.c.l.b16 %v6985
        %v7243 = vunpack.c.h.b16 %v6985
        %v7244 = vunpack.c.l.b16 %v6986
        %v7245 = vunpack.c.h.b16 %v6986
        %v7246 = vunpack.c.l.b16 %v6987
        %v7247 = vunpack.c.h.b16 %v6987
        %v7248 = vunpack.c.l.b16 %v6988
        %v7249 = vunpack.c.h.b16 %v6988
        %v7250 = vunpack.c.l.b16 %v6989
        %v7251 = vunpack.c.h.b16 %v6989
        %v7252 = vunpack.c.l.b16 %v6990
        %v7253 = vunpack.c.h.b16 %v6990
        %v7254 = vunpack.c.l.b16 %v6991
        %v7255 = vunpack.c.h.b16 %v6991
        %v7256 = vunpack.c.l.b16 %v6992
        %v7257 = vunpack.c.h.b16 %v6992
        %v7258 = vunpack.c.l.b16 %v6993
        %v7259 = vunpack.c.h.b16 %v6993
        %v7260 = vpack.c.b16 %v7102, %v7100
        %v7261 = vpack.c.b16 %v7103, %v7101
        %v7262 = vpack.c.b16 %v7106, %v7104
        %v7263 = vpack.c.b16 %v7107, %v7105
        %v7264 = vpack.c.b16 %v7110, %v7108
        %v7265 = vpack.c.b16 %v7111, %v7109
        %v7266 = vpack.c.b16 %v7114, %v7112
        %v7267 = vpack.c.b16 %v7115, %v7113
        %v7268 = vpack.c.b16 %v7118, %v7116
        %v7269 = vpack.c.b16 %v7119, %v7117
        %v7270 = vpack.c.b16 %v7122, %v7120
        %v7271 = vpack.c.b16 %v7123, %v7121
        %v7272 = vpack.c.b16 %v7126, %v7124
        %v7273 = vpack.c.b16 %v7127, %v7125
        %v7274 = vpack.c.b16 %v7130, %v7128
        %v7275 = vpack.c.b16 %v7131, %v7129
        %v7276 = vpack.c.b16 %v7134, %v7132
        %v7277 = vpack.c.b16 %v7135, %v7133
        %v7278 = vpack.c.b16 %v7138, %v7136
        %v7279 = vpack.c.b16 %v7139, %v7137
        %v7280 = vpack.c.b16 %v7142, %v7140
        %v7281 = vpack.c.b16 %v7143, %v7141
        %v7282 = vpack.c.b16 %v7146, %v7144
        %v7283 = vpack.c.b16 %v7147, %v7145
        %v7284 = vpack.c.b16 %v7150, %v7148
        %v7285 = vpack.c.b16 %v7151, %v7149
        %v7286 = vpack.c.b16 %v7154, %v7152
        %v7287 = vpack.c.b16 %v7155, %v7153
        %v7288 = vpack.c.b16 %v7158, %v7156
        %v7289 = vpack.c.b16 %v7159, %v7157
        %v7290 = vpack.c.b16 %v7162, %v7160
        %v7291 = vpack.c.b16 %v7163, %v7161
        %v7292 = vpack.c.b16 %v7166, %v7164
        %v7293 = vpack.c.b16 %v7167, %v7165
        %v7294 = vpack.c.b16 %v7170, %v7168
        %v7295 = vpack.c.b16 %v7171, %v7169
        %v7296 = vpack.c.b16 %v7174, %v7172
        %v7297 = vpack.c.b16 %v7175, %v7173
        %v7298 = vpack.c.b16 %v7178, %v7176
        %v7299 = vpack.c.b16 %v7179, %v7177
        %v7300 = vpack.c.b16 %v7182, %v7180
        %v7301 = vpack.c.b16 %v7183, %v7181
        %v7302 = vpack.c.b16 %v7186, %v7184
        %v7303 = vpack.c.b16 %v7187, %v7185
        %v7304 = vpack.c.b16 %v7190, %v7188
        %v7305 = vpack.c.b16 %v7191, %v7189
        %v7306 = vpack.c.b16 %v7194, %v7192
        %v7307 = vpack.c.b16 %v7195, %v7193
        %v7308 = vpack.c.b16 %v7198, %v7196
        %v7309 = vpack.c.b16 %v7199, %v7197
        %v7310 = vpack.c.b16 %v7202, %v7200
        %v7311 = vpack.c.b16 %v7203, %v7201
        %v7312 = vpack.c.b16 %v7206, %v7204
        %v7313 = vpack.c.b16 %v7207, %v7205
        %v7314 = vpack.c.b16 %v7210, %v7208
        %v7315 = vpack.c.b16 %v7211, %v7209
        %v7316 = vpack.c.b16 %v7214, %v7212
        %v7317 = vpack.c.b16 %v7215, %v7213
        %v7318 = vpack.c.b16 %v7218, %v7216
        %v7319 = vpack.c.b16 %v7219, %v7217
        %v7320 = vpack.c.b16 %v7222, %v7220
        %v7321 = vpack.c.b16 %v7223, %v7221
        %v7322 = vpack.c.b16 %v7226, %v7224
        %v7323 = vpack.c.b16 %v7227, %v7225
        %v7324 = vpack.c.b16 %v7230, %v7228
        %v7325 = vpack.c.b16 %v7231, %v7229
        %v7326 = vpack.c.b16 %v7234, %v7232
        %v7327 = vpack.c.b16 %v7235, %v7233
        %v7328 = vpack.c.b16 %v7238, %v7236
        %v7329 = vpack.c.b16 %v7239, %v7237
        %v7330 = vpack.c.b16 %v7242, %v7240
        %v7331 = vpack.c.b16 %v7243, %v7241
        %v7332 = vpack.c.b16 %v7246, %v7244
        %v7333 = vpack.c.b16 %v7247, %v7245
        %v7334 = vpack.c.b16 %v7250, %v7248
        %v7335 = vpack.c.b16 %v7251, %v7249
        %v7336 = vpack.c.b16 %v7254, %v7252
        %v7337 = vpack.c.b16 %v7255, %v7253
        %v7338 = vpack.c.b16 %v7258, %v7256
        %v7339 = vpack.c.b16 %v7259, %v7257
        %7420 = vmatpush.bf16.msra.mxu0 %v7274
        %7421 = vmatpush.bf16.msra.mxu0 %v7272
        %7422 = vmatpush.bf16.msra.mxu0 %v7270
        %7423 = vmatpush.bf16.msra.mxu0 %v7268
        %7424 = vmatpush.bf16.msra.mxu0 %v7266
        %7425 = vmatpush.bf16.msra.mxu0 %v7264
        %7426 = vmatpush.bf16.msra.mxu0 %v7262
        %7427 = vmatpush.bf16.msra.mxu0 %v7260
        %7428 = vmatmul.bf16.gmra.mxu0 %v7010
        %v7429 = vpop.f32.mrf.mxu0
        %v7430 = vadd.f32 0.0, %v7429
        %v7431 = vpop.f32.mrf.mxu0
        %v7432 = vadd.f32 0.0, %v7431
        %7433 = vdwg.mxu0
        %7434 = vmatpush.bf16.msra.mxu0 %v7290
        %7435 = vmatpush.bf16.msra.mxu0 %v7288
        %7436 = vmatpush.bf16.msra.mxu0 %v7286
        %7437 = vmatpush.bf16.msra.mxu0 %v7284
        %7438 = vmatpush.bf16.msra.mxu0 %v7282
        %7439 = vmatpush.bf16.msra.mxu0 %v7280
        %7440 = vmatpush.bf16.msra.mxu0 %v7278
        %7441 = vmatpush.bf16.msra.mxu0 %v7276
        %7442 = vmatmul.bf16.gmra.mxu0 %v7011
        %v7443 = vpop.f32.mrf.mxu0
        %v7444 = vadd.f32 %v7430, %v7443
        %v7445 = vpop.f32.mrf.mxu0
        %v7446 = vadd.f32 %v7432, %v7445
        %7447 = vdwg.mxu0
        %7448 = vmatpush.bf16.msra.mxu0 %v7306
        %7449 = vmatpush.bf16.msra.mxu0 %v7304
        %7450 = vmatpush.bf16.msra.mxu0 %v7302
        %7451 = vmatpush.bf16.msra.mxu0 %v7300
        %7452 = vmatpush.bf16.msra.mxu0 %v7298
        %7453 = vmatpush.bf16.msra.mxu0 %v7296
        %7454 = vmatpush.bf16.msra.mxu0 %v7294
        %7455 = vmatpush.bf16.msra.mxu0 %v7292
        %7456 = vmatmul.bf16.gmra.mxu0 %v7012
        %v7457 = vpop.f32.mrf.mxu0
        %v7458 = vadd.f32 %v7444, %v7457
        %v7459 = vpop.f32.mrf.mxu0
        %v7460 = vadd.f32 %v7446, %v7459
        %7461 = vdwg.mxu0
        %7462 = vmatpush.bf16.msra.mxu0 %v7322
        %7463 = vmatpush.bf16.msra.mxu0 %v7320
        %7464 = vmatpush.bf16.msra.mxu0 %v7318
        %7465 = vmatpush.bf16.msra.mxu0 %v7316
        %7466 = vmatpush.bf16.msra.mxu0 %v7314
        %7467 = vmatpush.bf16.msra.mxu0 %v7312
        %7468 = vmatpush.bf16.msra.mxu0 %v7310
        %7469 = vmatpush.bf16.msra.mxu0 %v7308
        %7470 = vmatmul.bf16.gmra.mxu0 %v7013
        %v7471 = vpop.f32.mrf.mxu0
        %v7472 = vadd.f32 %v7458, %v7471
        %v7473 = vpop.f32.mrf.mxu0
        %v7474 = vadd.f32 %v7460, %v7473
        %7475 = vdwg.mxu0
        %7476 = vmatpush.bf16.msra.mxu0 %v7338
        %7477 = vmatpush.bf16.msra.mxu0 %v7336
        %7478 = vmatpush.bf16.msra.mxu0 %v7334
        %7479 = vmatpush.bf16.msra.mxu0 %v7332
        %7480 = vmatpush.bf16.msra.mxu0 %v7330
        %7481 = vmatpush.bf16.msra.mxu0 %v7328
        %7482 = vmatpush.bf16.msra.mxu0 %v7326
        %7483 = vmatpush.bf16.msra.mxu0 %v7324
        %7484 = vmatmul.bf16.gmra.mxu0 %v7014
        %v7485 = vpop.f32.mrf.mxu0
        %v7486 = vadd.f32 %v7472, %v7485
        %v7487 = vpop.f32.mrf.mxu0
        %v7488 = vadd.f32 %v7474, %v7487
        %7489 = vdwg.mxu0
        %7490 = vmatpush.bf16.msra.mxu0 %v7275
        %7491 = vmatpush.bf16.msra.mxu0 %v7273
        %7492 = vmatpush.bf16.msra.mxu0 %v7271
        %7493 = vmatpush.bf16.msra.mxu0 %v7269
        %7494 = vmatpush.bf16.msra.mxu0 %v7267
        %7495 = vmatpush.bf16.msra.mxu0 %v7265
        %7496 = vmatpush.bf16.msra.mxu0 %v7263
        %7497 = vmatpush.bf16.msra.mxu0 %v7261
        %7498 = vmatmul.bf16.gmra.mxu0 %v7010
        %v7499 = vpop.f32.mrf.mxu0
        %v7500 = vadd.f32 0.0, %v7499
        %v7501 = vpop.f32.mrf.mxu0
        %v7502 = vadd.f32 0.0, %v7501
        %7503 = vdwg.mxu0
        %7504 = vmatpush.bf16.msra.mxu0 %v7291
        %7505 = vmatpush.bf16.msra.mxu0 %v7289
        %7506 = vmatpush.bf16.msra.mxu0 %v7287
        %7507 = vmatpush.bf16.msra.mxu0 %v7285
        %7508 = vmatpush.bf16.msra.mxu0 %v7283
        %7509 = vmatpush.bf16.msra.mxu0 %v7281
        %7510 = vmatpush.bf16.msra.mxu0 %v7279
        %7511 = vmatpush.bf16.msra.mxu0 %v7277
        %7512 = vmatmul.bf16.gmra.mxu0 %v7011
        %v7513 = vpop.f32.mrf.mxu0
        %v7514 = vadd.f32 %v7500, %v7513
        %v7515 = vpop.f32.mrf.mxu0
        %v7516 = vadd.f32 %v7502, %v7515
        %7517 = vdwg.mxu0
        %7518 = vmatpush.bf16.msra.mxu0 %v7307
        %7519 = vmatpush.bf16.msra.mxu0 %v7305
        %7520 = vmatpush.bf16.msra.mxu0 %v7303
        %7521 = vmatpush.bf16.msra.mxu0 %v7301
        %7522 = vmatpush.bf16.msra.mxu0 %v7299
        %7523 = vmatpush.bf16.msra.mxu0 %v7297
        %7524 = vmatpush.bf16.msra.mxu0 %v7295
        %7525 = vmatpush.bf16.msra.mxu0 %v7293
        %7526 = vmatmul.bf16.gmra.mxu0 %v7012
        %v7527 = vpop.f32.mrf.mxu0
        %v7528 = vadd.f32 %v7514, %v7527
        %v7529 = vpop.f32.mrf.mxu0
        %v7530 = vadd.f32 %v7516, %v7529
        %7531 = vdwg.mxu0
        %7532 = vmatpush.bf16.msra.mxu0 %v7323
        %7533 = vmatpush.bf16.msra.mxu0 %v7321
        %7534 = vmatpush.bf16.msra.mxu0 %v7319
        %7535 = vmatpush.bf16.msra.mxu0 %v7317
        %7536 = vmatpush.bf16.msra.mxu0 %v7315
        %7537 = vmatpush.bf16.msra.mxu0 %v7313
        %7538 = vmatpush.bf16.msra.mxu0 %v7311
        %7539 = vmatpush.bf16.msra.mxu0 %v7309
        %7540 = vmatmul.bf16.gmra.mxu0 %v7013
        %v7541 = vpop.f32.mrf.mxu0
        %v7542 = vadd.f32 %v7528, %v7541
        %v7543 = vpop.f32.mrf.mxu0
        %v7544 = vadd.f32 %v7530, %v7543
        %7545 = vdwg.mxu0
        %7546 = vmatpush.bf16.msra.mxu0 %v7339
        %7547 = vmatpush.bf16.msra.mxu0 %v7337
        %7548 = vmatpush.bf16.msra.mxu0 %v7335
        %7549 = vmatpush.bf16.msra.mxu0 %v7333
        %7550 = vmatpush.bf16.msra.mxu0 %v7331
        %7551 = vmatpush.bf16.msra.mxu0 %v7329
        %7552 = vmatpush.bf16.msra.mxu0 %v7327
        %7553 = vmatpush.bf16.msra.mxu0 %v7325
        %7554 = vmatmul.bf16.gmra.mxu0 %v7014
        %v7555 = vpop.f32.mrf.mxu0
        %v7556 = vadd.f32 %v7542, %v7555
        %v7557 = vpop.f32.mrf.mxu0
        %v7558 = vadd.f32 %v7544, %v7557
        %7559 = vdwg.mxu0
        %v7560 = vmax.f32 %v7486, %v7556
        %v7561 = vmax.f32 %v7488, %v7558
        %v7562 = vld [vmem:[#allocation2 + $0x1c] sm:$0xff]
        %v7563 = vld [vmem:[#allocation2 + $0x24] sm:$0xff]
        %v7564 = vld [vmem:[#allocation2 + $0x2c] sm:$0xf]
        %v7565 = vld [vmem:[#allocation2 + $0x4c] sm:$0xff]
        %v7566 = vld [vmem:[#allocation2 + $0x54] sm:$0xff]
        %v7567 = vld [vmem:[#allocation2 + $0x5c] sm:$0xf]
        %v7574 = vunpack.c.l.b16 %v7562
        %v7575 = vunpack.c.h.b16 %v7562
        %v7576 = vunpack.c.l.b16 %v7563
        %v7577 = vunpack.c.h.b16 %v7563
        %v7578 = vunpack.c.l.b16 %v7564
        %v7579 = vunpack.c.l.b16 %v7565
        %v7580 = vunpack.c.h.b16 %v7565
        %v7581 = vunpack.c.l.b16 %v7566
        %v7582 = vunpack.c.h.b16 %v7566
        %v7583 = vunpack.c.l.b16 %v7567
        %v7584 = vpack.c.b16 %v7579, %v7574
        %v7585 = vpack.c.b16 %v7580, %v7575
        %v7586 = vpack.c.b16 %v7581, %v7576
        %v7587 = vpack.c.b16 %v7582, %v7577
        %v7588 = vpack.c.b16 %v7583, %v7578
        %7594 = vmatpush.bf16.msra.mxu0 %v7274
        %7595 = vmatpush.bf16.msra.mxu0 %v7272
        %7596 = vmatpush.bf16.msra.mxu0 %v7270
        %7597 = vmatpush.bf16.msra.mxu0 %v7268
        %7598 = vmatpush.bf16.msra.mxu0 %v7266
        %7599 = vmatpush.bf16.msra.mxu0 %v7264
        %7600 = vmatpush.bf16.msra.mxu0 %v7262
        %7601 = vmatpush.bf16.msra.mxu0 %v7260
        %7602 = vmatmul.bf16.gmra.mxu0 %v7584
        %v7603 = vpop.f32.mrf.mxu0
        %v7604 = vadd.f32 0.0, %v7603
        %v7605 = vpop.f32.mrf.mxu0
        %v7606 = vadd.f32 0.0, %v7605
        %7607 = vdwg.mxu0
        %7608 = vmatpush.bf16.msra.mxu0 %v7290
        %7609 = vmatpush.bf16.msra.mxu0 %v7288
        %7610 = vmatpush.bf16.msra.mxu0 %v7286
        %7611 = vmatpush.bf16.msra.mxu0 %v7284
        %7612 = vmatpush.bf16.msra.mxu0 %v7282
        %7613 = vmatpush.bf16.msra.mxu0 %v7280
        %7614 = vmatpush.bf16.msra.mxu0 %v7278
        %7615 = vmatpush.bf16.msra.mxu0 %v7276
        %7616 = vmatmul.bf16.gmra.mxu0 %v7585
        %v7617 = vpop.f32.mrf.mxu0
        %v7618 = vadd.f32 %v7604, %v7617
        %v7619 = vpop.f32.mrf.mxu0
        %v7620 = vadd.f32 %v7606, %v7619
        %7621 = vdwg.mxu0
        %7622 = vmatpush.bf16.msra.mxu0 %v7306
        %7623 = vmatpush.bf16.msra.mxu0 %v7304
        %7624 = vmatpush.bf16.msra.mxu0 %v7302
        %7625 = vmatpush.bf16.msra.mxu0 %v7300
        %7626 = vmatpush.bf16.msra.mxu0 %v7298
        %7627 = vmatpush.bf16.msra.mxu0 %v7296
        %7628 = vmatpush.bf16.msra.mxu0 %v7294
        %7629 = vmatpush.bf16.msra.mxu0 %v7292
        %7630 = vmatmul.bf16.gmra.mxu0 %v7586
        %v7631 = vpop.f32.mrf.mxu0
        %v7632 = vadd.f32 %v7618, %v7631
        %v7633 = vpop.f32.mrf.mxu0
        %v7634 = vadd.f32 %v7620, %v7633
        %7635 = vdwg.mxu0
        %7636 = vmatpush.bf16.msra.mxu0 %v7322
        %7637 = vmatpush.bf16.msra.mxu0 %v7320
        %7638 = vmatpush.bf16.msra.mxu0 %v7318
        %7639 = vmatpush.bf16.msra.mxu0 %v7316
        %7640 = vmatpush.bf16.msra.mxu0 %v7314
        %7641 = vmatpush.bf16.msra.mxu0 %v7312
        %7642 = vmatpush.bf16.msra.mxu0 %v7310
        %7643 = vmatpush.bf16.msra.mxu0 %v7308
        %7644 = vmatmul.bf16.gmra.mxu0 %v7587
        %v7645 = vpop.f32.mrf.mxu0
        %v7646 = vadd.f32 %v7632, %v7645
        %v7647 = vpop.f32.mrf.mxu0
        %v7648 = vadd.f32 %v7634, %v7647
        %7649 = vdwg.mxu0
        %7650 = vmatpush.bf16.msra.mxu0 %v7338
        %7651 = vmatpush.bf16.msra.mxu0 %v7336
        %7652 = vmatpush.bf16.msra.mxu0 %v7334
        %7653 = vmatpush.bf16.msra.mxu0 %v7332
        %7654 = vmatpush.bf16.msra.mxu0 %v7330
        %7655 = vmatpush.bf16.msra.mxu0 %v7328
        %7656 = vmatpush.bf16.msra.mxu0 %v7326
        %7657 = vmatpush.bf16.msra.mxu0 %v7324
        %7658 = vmatmul.bf16.gmra.mxu0 %v7588
        %v7659 = vpop.f32.mrf.mxu0
        %v7660 = vadd.f32 %v7646, %v7659
        %v7661 = vpop.f32.mrf.mxu0
        %v7662 = vadd.f32 %v7648, %v7661
        %7663 = vdwg.mxu0
        %7664 = vmatpush.bf16.msra.mxu0 %v7275
        %7665 = vmatpush.bf16.msra.mxu0 %v7273
        %7666 = vmatpush.bf16.msra.mxu0 %v7271
        %7667 = vmatpush.bf16.msra.mxu0 %v7269
        %7668 = vmatpush.bf16.msra.mxu0 %v7267
        %7669 = vmatpush.bf16.msra.mxu0 %v7265
        %7670 = vmatpush.bf16.msra.mxu0 %v7263
        %7671 = vmatpush.bf16.msra.mxu0 %v7261
        %7672 = vmatmul.bf16.gmra.mxu0 %v7584
        %v7673 = vpop.f32.mrf.mxu0
        %v7674 = vadd.f32 0.0, %v7673
        %v7675 = vpop.f32.mrf.mxu0
        %v7676 = vadd.f32 0.0, %v7675
        %7677 = vdwg.mxu0
        %7678 = vmatpush.bf16.msra.mxu0 %v7291
        %7679 = vmatpush.bf16.msra.mxu0 %v7289
        %7680 = vmatpush.bf16.msra.mxu0 %v7287
        %7681 = vmatpush.bf16.msra.mxu0 %v7285
        %7682 = vmatpush.bf16.msra.mxu0 %v7283
        %7683 = vmatpush.bf16.msra.mxu0 %v7281
        %7684 = vmatpush.bf16.msra.mxu0 %v7279
        %7685 = vmatpush.bf16.msra.mxu0 %v7277
        %7686 = vmatmul.bf16.gmra.mxu0 %v7585
        %v7687 = vpop.f32.mrf.mxu0
        %v7688 = vadd.f32 %v7674, %v7687
        %v7689 = vpop.f32.mrf.mxu0
        %v7690 = vadd.f32 %v7676, %v7689
        %7691 = vdwg.mxu0
        %7692 = vmatpush.bf16.msra.mxu0 %v7307
        %7693 = vmatpush.bf16.msra.mxu0 %v7305
        %7694 = vmatpush.bf16.msra.mxu0 %v7303
        %7695 = vmatpush.bf16.msra.mxu0 %v7301
        %7696 = vmatpush.bf16.msra.mxu0 %v7299
        %7697 = vmatpush.bf16.msra.mxu0 %v7297
        %7698 = vmatpush.bf16.msra.mxu0 %v7295
        %7699 = vmatpush.bf16.msra.mxu0 %v7293
        %7700 = vmatmul.bf16.gmra.mxu0 %v7586
        %v7701 = vpop.f32.mrf.mxu0
        %v7702 = vadd.f32 %v7688, %v7701
        %v7703 = vpop.f32.mrf.mxu0
        %v7704 = vadd.f32 %v7690, %v7703
        %7705 = vdwg.mxu0
        %7706 = vmatpush.bf16.msra.mxu0 %v7323
        %7707 = vmatpush.bf16.msra.mxu0 %v7321
        %7708 = vmatpush.bf16.msra.mxu0 %v7319
        %7709 = vmatpush.bf16.msra.mxu0 %v7317
        %7710 = vmatpush.bf16.msra.mxu0 %v7315
        %7711 = vmatpush.bf16.msra.mxu0 %v7313
        %7712 = vmatpush.bf16.msra.mxu0 %v7311
        %7713 = vmatpush.bf16.msra.mxu0 %v7309
        %7714 = vmatmul.bf16.gmra.mxu0 %v7587
        %v7715 = vpop.f32.mrf.mxu0
        %v7716 = vadd.f32 %v7702, %v7715
        %v7717 = vpop.f32.mrf.mxu0
        %v7718 = vadd.f32 %v7704, %v7717
        %7719 = vdwg.mxu0
        %7720 = vmatpush.bf16.msra.mxu0 %v7339
        %7721 = vmatpush.bf16.msra.mxu0 %v7337
        %7722 = vmatpush.bf16.msra.mxu0 %v7335
        %7723 = vmatpush.bf16.msra.mxu0 %v7333
        %7724 = vmatpush.bf16.msra.mxu0 %v7331
        %7725 = vmatpush.bf16.msra.mxu0 %v7329
        %7726 = vmatpush.bf16.msra.mxu0 %v7327
        %7727 = vmatpush.bf16.msra.mxu0 %v7325
        %7728 = vmatmul.bf16.gmra.mxu0 %v7588
        %v7729 = vpop.f32.mrf.mxu0
        %v7730 = vadd.f32 %v7716, %v7729
        %v7731 = vpop.f32.mrf.mxu0
        %v7732 = vadd.f32 %v7718, %v7731
        %7733 = vdwg.mxu0
        %v7734 = vmax.f32 %v7660, %v7730
        %v7735 = vmax.f32 %v7662, %v7732
        %v7736 = vmax.f32 %v7560, %v7734
        %v7737 = vmax.f32 %v7561, %v7735
        %v7738 = vadd.f32 %v7736, %v4935
        %v7739 = vadd.f32 %v7737, %v4935
        %vm7740 = vcmp.gt.f32.partialorder %v7738, 0.0
        %vm7741 = vcmp.gt.f32.partialorder %v7739, 0.0
        %v7742 = vmin.f32 %v7738, 0.0
        %v7743 = vmin.f32 %v7739, 0.0
        %v7744 = vmul.f32 %v7742, 1.442695
        %v7745 = vpow.pop %v7744
        %v7746 = vmul.f32 %v7743, 1.442695
        %v7747 = vpow.pop %v7746
        %v7748 = vsub.f32 %v7745, 1.0
        %v7749 = vsub.f32 %v7747, 1.0
        %v7750 = vmul.f32 %v7748, 1.6732632
        %v7751 = vmul.f32 %v7749, 1.6732632
        %v7752 = vsel %vm7740, %v7738, %v7750
        %v7753 = vsel %vm7741, %v7739, %v7751
        %v7754 = vmul.f32 %v7752, 1.050701
        %v7755 = vmul.f32 %v7753, 1.050701
        %v7756 = vpack.c.bf16 %v7755, %v7754
        %v7757 = vld [vmem:[#allocation3] sm:$0xff]
        %v7758 = vld [vmem:[#allocation3 + $0x8] sm:$0xff]
        %s7759 = scalar_lea.vmem %s3, 192
        %v7760 = vld [vmem:[%s7759] sm:$0xf]
        %v7761 = vld [vmem:[%s7759 + $0x4] sm:$0xf]
        %v7762 = vld [vmem:[%s7759 + $0x8] sm:$0xf]
        %v7763 = vld [vmem:[%s7759 + $0xc] sm:$0xf]
        %v7764 = vld [vmem:[%s7759 + $0x10] sm:$0xf]
        %v7765 = vld [vmem:[%s7759 + $0x14] sm:$0xf]
        %v7766 = vld [vmem:[%s7759 + $0x18] sm:$0xf]
        %v7767 = vld [vmem:[%s7759 + $0x1c] sm:$0xf]
        %v7768 = vld [vmem:[%s7759 + $0x20] sm:$0xf]
        %v7769 = vld [vmem:[%s7759 + $0x24] sm:$0xf]
        %v7770 = vld [vmem:[%s7759 + $0x28] sm:$0xf]
        %v7771 = vld [vmem:[%s7759 + $0x2c] sm:$0xf]
        %v7772 = vld [vmem:[%s7759 + $0x30] sm:$0xf]
        %v7773 = vld [vmem:[%s7759 + $0x34] sm:$0xf]
        %v7774 = vld [vmem:[%s7759 + $0x38] sm:$0xf]
        %v7775 = vld [vmem:[%s7759 + $0x3c] sm:$0xf]
        %v7792 = vunpack.c.l.b16 %v7760
        %v7793 = vunpack.c.l.b16 %v7761
        %v7794 = vunpack.c.l.b16 %v7762
        %v7795 = vunpack.c.l.b16 %v7763
        %v7796 = vunpack.c.l.b16 %v7764
        %v7797 = vunpack.c.l.b16 %v7765
        %v7798 = vunpack.c.l.b16 %v7766
        %v7799 = vunpack.c.l.b16 %v7767
        %v7800 = vunpack.c.l.b16 %v7768
        %v7801 = vunpack.c.l.b16 %v7769
        %v7802 = vunpack.c.l.b16 %v7770
        %v7803 = vunpack.c.l.b16 %v7771
        %v7804 = vunpack.c.l.b16 %v7772
        %v7805 = vunpack.c.l.b16 %v7773
        %v7806 = vunpack.c.l.b16 %v7774
        %v7807 = vunpack.c.l.b16 %v7775
        %v7808 = vpack.c.b16 %v7793, %v7792
        %v7809 = vpack.c.b16 %v7795, %v7794
        %v7810 = vpack.c.b16 %v7797, %v7796
        %v7811 = vpack.c.b16 %v7799, %v7798
        %v7812 = vpack.c.b16 %v7801, %v7800
        %v7813 = vpack.c.b16 %v7803, %v7802
        %v7814 = vpack.c.b16 %v7805, %v7804
        %v7815 = vpack.c.b16 %v7807, %v7806
        %7824 = vmatpush.bf16.msra.mxu0 %v7815
        %7825 = vmatpush.bf16.msra.mxu0 %v7814
        %7826 = vmatpush.bf16.msra.mxu0 %v7813
        %7827 = vmatpush.bf16.msra.mxu0 %v7812
        %7828 = vmatpush.bf16.msra.mxu0 %v7811
        %7829 = vmatpush.bf16.msra.mxu0 %v7810
        %7830 = vmatpush.bf16.msra.mxu0 %v7809
        %7831 = vmatpush.bf16.msra.mxu0 %v7808
        %7832 = vmatmul.bf16.gmra.mxu0 %v7756
        %v7833 = vpop.f32.mrf.mxu0
        %v7834 = vadd.f32 0.0, %v7833
        %v7835 = vpop.f32.mrf.mxu0
        %v7836 = vadd.f32 0.0, %v7835
        %7837 = vdwg.mxu0
        %v7838 = vadd.f32 %v7757, %v7834
        %v7839 = vadd.f32 %v7758, %v7836
        %7840 = vst [vmem:[#allocation3] sm:$0xff] %v7838
        %7841 = vst [vmem:[#allocation3 + $0x8] sm:$0xff] %v7839
        %v7842 = vld [vmem:[#allocation3] sm:$0xff]
        %v7843 = vld [vmem:[#allocation3 + $0x8] sm:$0xff]
        %v7844 = vld [vmem:[%s9] sm:$0x1]
        %v7846 = vperm.slane %v7844, 0
        %v7848 = vadd.f32 %v7842, %v7846
        %v7849 = vadd.f32 %v7843, %v7846
        %vm7850 = vcmp.gt.f32.partialorder %v7848, 0.0
        %vm7851 = vcmp.gt.f32.partialorder %v7849, 0.0
        %v7852 = vmin.f32 %v7848, 0.0
        %v7853 = vmin.f32 %v7849, 0.0
        %v7854 = vmul.f32 %v7852, 1.442695
        %v7855 = vpow.pop %v7854
        %v7856 = vmul.f32 %v7853, 1.442695
        %v7857 = vpow.pop %v7856
        %v7858 = vsub.f32 %v7855, 1.0
        %v7859 = vsub.f32 %v7857, 1.0
        %v7860 = vmul.f32 %v7858, 1.6732632
        %v7861 = vmul.f32 %v7859, 1.6732632
        %v7862 = vsel %vm7850, %v7848, %v7860
        %v7863 = vsel %vm7851, %v7849, %v7861
        %v7864 = vmul.f32 %v7862, 1.050701
        %v7865 = vmul.f32 %v7863, 1.050701
        %v7866 = vpack.c.bf16 %v7865, %v7864
        %v7867 = vld [vmem:[%s4] sm:$0xf]
        %v7868 = vld [vmem:[%s4 + $0x4] sm:$0xf]
        %v7869 = vld [vmem:[%s4 + $0x8] sm:$0xf]
        %v7870 = vld [vmem:[%s4 + $0xc] sm:$0xf]
        %v7871 = vld [vmem:[%s4 + $0x10] sm:$0xf]
        %v7872 = vld [vmem:[%s4 + $0x14] sm:$0xf]
        %v7873 = vld [vmem:[%s4 + $0x18] sm:$0xf]
        %v7874 = vld [vmem:[%s4 + $0x1c] sm:$0xf]
        %v7875 = vld [vmem:[%s4 + $0x20] sm:$0xf]
        %v7876 = vld [vmem:[%s4 + $0x24] sm:$0xf]
        %v7877 = vld [vmem:[%s4 + $0x28] sm:$0xf]
        %v7878 = vld [vmem:[%s4 + $0x2c] sm:$0xf]
        %v7879 = vld [vmem:[%s4 + $0x30] sm:$0xf]
        %v7880 = vld [vmem:[%s4 + $0x34] sm:$0xf]
        %v7881 = vld [vmem:[%s4 + $0x38] sm:$0xf]
        %v7882 = vld [vmem:[%s4 + $0x3c] sm:$0xf]
        %v7883 = vld [vmem:[%s10] sm:$0x1]
        %v7885 = vperm.slane %v7883, 0
        %v7903 = vunpack.c.l.b16 %v7867
        %v7904 = vunpack.c.l.b16 %v7868
        %v7905 = vunpack.c.l.b16 %v7869
        %v7906 = vunpack.c.l.b16 %v7870
        %v7907 = vunpack.c.l.b16 %v7871
        %v7908 = vunpack.c.l.b16 %v7872
        %v7909 = vunpack.c.l.b16 %v7873
        %v7910 = vunpack.c.l.b16 %v7874
        %v7911 = vunpack.c.l.b16 %v7875
        %v7912 = vunpack.c.l.b16 %v7876
        %v7913 = vunpack.c.l.b16 %v7877
        %v7914 = vunpack.c.l.b16 %v7878
        %v7915 = vunpack.c.l.b16 %v7879
        %v7916 = vunpack.c.l.b16 %v7880
        %v7917 = vunpack.c.l.b16 %v7881
        %v7918 = vunpack.c.l.b16 %v7882
        %v7919 = vpack.c.b16 %v7904, %v7903
        %v7920 = vpack.c.b16 %v7906, %v7905
        %v7921 = vpack.c.b16 %v7908, %v7907
        %v7922 = vpack.c.b16 %v7910, %v7909
        %v7923 = vpack.c.b16 %v7912, %v7911
        %v7924 = vpack.c.b16 %v7914, %v7913
        %v7925 = vpack.c.b16 %v7916, %v7915
        %v7926 = vpack.c.b16 %v7918, %v7917
        %7935 = vmatpush.bf16.msra.mxu0 %v7926
        %7936 = vmatpush.bf16.msra.mxu0 %v7925
        %7937 = vmatpush.bf16.msra.mxu0 %v7924
        %7938 = vmatpush.bf16.msra.mxu0 %v7923
        %7939 = vmatpush.bf16.msra.mxu0 %v7922
        %7940 = vmatpush.bf16.msra.mxu0 %v7921
        %7941 = vmatpush.bf16.msra.mxu0 %v7920
        %7942 = vmatpush.bf16.msra.mxu0 %v7919
        %7943 = vmatmul.bf16.gmra.mxu0 %v7866
        %v7944 = vpop.f32.mrf.mxu0
        %v7945 = vadd.f32 %v7885, %v7944
        %v7946 = vpop.f32.mrf.mxu0
        %v7947 = vadd.f32 %v7885, %v7946
        %7948 = vdwg.mxu0
        %7949 = vst [vmem:[%s709] sm:$0xff] %v7945
        %7950 = vst [vmem:[%s709 + $0x8] sm:$0xff] %v7947
        %v7951 = vpack.c.bf16 %v7947, %v7945
        %v7952 = vld [vmem:[%s5] sm:$0xff]
        %v7953 = vld [vmem:[%s5 + $0x8] sm:$0xff]
        %v7954 = vld [vmem:[%s5 + $0x10] sm:$0xff]
        %v7955 = vld [vmem:[%s5 + $0x18] sm:$0xff]
        %v7956 = vld [vmem:[%s5 + $0x20] sm:$0xff]
        %v7957 = vld [vmem:[%s5 + $0x28] sm:$0xff]
        %v7958 = vld [vmem:[%s5 + $0x30] sm:$0xff]
        %v7959 = vld [vmem:[%s5 + $0x38] sm:$0xff]
        %v7960 = vld [vmem:[%s5 + $0x40] sm:$0xff]
        %v7961 = vld [vmem:[%s5 + $0x48] sm:$0xff]
        %v7962 = vld [vmem:[%s5 + $0x50] sm:$0xff]
        %v7963 = vld [vmem:[%s5 + $0x58] sm:$0xff]
        %v7964 = vld [vmem:[%s5 + $0x60] sm:$0xff]
        %v7965 = vld [vmem:[%s5 + $0x68] sm:$0xff]
        %v7966 = vld [vmem:[%s5 + $0x70] sm:$0xff]
        %v7967 = vld [vmem:[%s5 + $0x78] sm:$0xff]
        %v7968 = vld [vmem:[%s11] sm:$0x3]
        %v7970 = vperm.slane %v7968, 0
        %v7971 = vperm.slane %v7968, 1
        %v7990 = vunpack.c.l.b16 %v7952
        %v7991 = vunpack.c.h.b16 %v7952
        %v7992 = vunpack.c.l.b16 %v7953
        %v7993 = vunpack.c.h.b16 %v7953
        %v7994 = vunpack.c.l.b16 %v7954
        %v7995 = vunpack.c.h.b16 %v7954
        %v7996 = vunpack.c.l.b16 %v7955
        %v7997 = vunpack.c.h.b16 %v7955
        %v7998 = vunpack.c.l.b16 %v7956
        %v7999 = vunpack.c.h.b16 %v7956
        %v8000 = vunpack.c.l.b16 %v7957
        %v8001 = vunpack.c.h.b16 %v7957
        %v8002 = vunpack.c.l.b16 %v7958
        %v8003 = vunpack.c.h.b16 %v7958
        %v8004 = vunpack.c.l.b16 %v7959
        %v8005 = vunpack.c.h.b16 %v7959
        %v8006 = vunpack.c.l.b16 %v7960
        %v8007 = vunpack.c.h.b16 %v7960
        %v8008 = vunpack.c.l.b16 %v7961
        %v8009 = vunpack.c.h.b16 %v7961
        %v8010 = vunpack.c.l.b16 %v7962
        %v8011 = vunpack.c.h.b16 %v7962
        %v8012 = vunpack.c.l.b16 %v7963
        %v8013 = vunpack.c.h.b16 %v7963
        %v8014 = vunpack.c.l.b16 %v7964
        %v8015 = vunpack.c.h.b16 %v7964
        %v8016 = vunpack.c.l.b16 %v7965
        %v8017 = vunpack.c.h.b16 %v7965
        %v8018 = vunpack.c.l.b16 %v7966
        %v8019 = vunpack.c.h.b16 %v7966
        %v8020 = vunpack.c.l.b16 %v7967
        %v8021 = vunpack.c.h.b16 %v7967
        %v8022 = vpack.c.b16 %v7992, %v7990
        %v8023 = vpack.c.b16 %v7993, %v7991
        %v8024 = vpack.c.b16 %v7996, %v7994
        %v8025 = vpack.c.b16 %v7997, %v7995
        %v8026 = vpack.c.b16 %v8000, %v7998
        %v8027 = vpack.c.b16 %v8001, %v7999
        %v8028 = vpack.c.b16 %v8004, %v8002
        %v8029 = vpack.c.b16 %v8005, %v8003
        %v8030 = vpack.c.b16 %v8008, %v8006
        %v8031 = vpack.c.b16 %v8009, %v8007
        %v8032 = vpack.c.b16 %v8012, %v8010
        %v8033 = vpack.c.b16 %v8013, %v8011
        %v8034 = vpack.c.b16 %v8016, %v8014
        %v8035 = vpack.c.b16 %v8017, %v8015
        %v8036 = vpack.c.b16 %v8020, %v8018
        %v8037 = vpack.c.b16 %v8021, %v8019
        %8054 = vmatpush.bf16.msra.mxu0 %v8036
        %8055 = vmatpush.bf16.msra.mxu0 %v8034
        %8056 = vmatpush.bf16.msra.mxu0 %v8032
        %8057 = vmatpush.bf16.msra.mxu0 %v8030
        %8058 = vmatpush.bf16.msra.mxu0 %v8028
        %8059 = vmatpush.bf16.msra.mxu0 %v8026
        %8060 = vmatpush.bf16.msra.mxu0 %v8024
        %8061 = vmatpush.bf16.msra.mxu0 %v8022
        %8062 = vmatmul.bf16.gmra.mxu0 %v7951
        %v8063 = vpop.f32.mrf.mxu0
        %v8064 = vadd.f32 %v7970, %v8063
        %v8065 = vpop.f32.mrf.mxu0
        %v8066 = vadd.f32 %v7970, %v8065
        %8067 = vdwg.mxu0
        %8068 = vmatpush.bf16.msra.mxu0 %v8037
        %8069 = vmatpush.bf16.msra.mxu0 %v8035
        %8070 = vmatpush.bf16.msra.mxu0 %v8033
        %8071 = vmatpush.bf16.msra.mxu0 %v8031
        %8072 = vmatpush.bf16.msra.mxu0 %v8029
        %8073 = vmatpush.bf16.msra.mxu0 %v8027
        %8074 = vmatpush.bf16.msra.mxu0 %v8025
        %8075 = vmatpush.bf16.msra.mxu0 %v8023
        %8076 = vmatmul.bf16.gmra.mxu0 %v7951
        %v8077 = vpop.f32.mrf.mxu0
        %v8078 = vadd.f32 %v7971, %v8077
        %v8079 = vpop.f32.mrf.mxu0
        %v8080 = vadd.f32 %v7971, %v8079
        %8081 = vdwg.mxu0
        %vm8082 = vcmp.gt.f32.partialorder %v8064, 0.0
        %vm8083 = vcmp.gt.f32.partialorder %v8078, 0.0
        %vm8084 = vcmp.gt.f32.partialorder %v8066, 0.0
        %vm8085 = vcmp.gt.f32.partialorder %v8080, 0.0
        %v8086 = vmin.f32 %v8064, 0.0
        %v8087 = vmin.f32 %v8078, 0.0
        %v8088 = vmin.f32 %v8066, 0.0
        %v8089 = vmin.f32 %v8080, 0.0
        %v8090 = vmul.f32 %v8086, 1.442695
        %v8091 = vpow.pop %v8090
        %v8092 = vmul.f32 %v8087, 1.442695
        %v8093 = vpow.pop %v8092
        %v8094 = vmul.f32 %v8088, 1.442695
        %v8095 = vpow.pop %v8094
        %v8096 = vmul.f32 %v8089, 1.442695
        %v8097 = vpow.pop %v8096
        %v8098 = vsub.f32 %v8091, 1.0
        %v8099 = vsub.f32 %v8093, 1.0
        %v8100 = vsub.f32 %v8095, 1.0
        %v8101 = vsub.f32 %v8097, 1.0
        %v8102 = vmul.f32 %v8098, 1.6732632
        %v8103 = vmul.f32 %v8099, 1.6732632
        %v8104 = vmul.f32 %v8100, 1.6732632
        %v8105 = vmul.f32 %v8101, 1.6732632
        %v8106 = vsel %vm8082, %v8064, %v8102
        %v8107 = vsel %vm8083, %v8078, %v8103
        %v8108 = vsel %vm8084, %v8066, %v8104
        %v8109 = vsel %vm8085, %v8080, %v8105
        %v8110 = vmul.f32 %v8106, 1.050701
        %v8111 = vmul.f32 %v8107, 1.050701
        %v8112 = vmul.f32 %v8108, 1.050701
        %v8113 = vmul.f32 %v8109, 1.050701
        %v8114 = vpack.c.bf16 %v8112, %v8110
        %v8115 = vpack.c.bf16 %v8113, %v8111
        %v8116 = vld [vmem:[%s6] sm:$0xff]
        %v8117 = vld [vmem:[%s6 + $0x8] sm:$0xff]
        %v8118 = vld [vmem:[%s6 + $0x10] sm:$0xff]
        %v8119 = vld [vmem:[%s6 + $0x18] sm:$0xf]
        %v8120 = vld [vmem:[%s6 + $0x1c] sm:$0xff]
        %v8121 = vld [vmem:[%s6 + $0x24] sm:$0xff]
        %v8122 = vld [vmem:[%s6 + $0x2c] sm:$0xff]
        %v8123 = vld [vmem:[%s6 + $0x34] sm:$0xf]
        %v8124 = vld [vmem:[%s6 + $0x38] sm:$0xff]
        %v8125 = vld [vmem:[%s6 + $0x40] sm:$0xff]
        %v8126 = vld [vmem:[%s6 + $0x48] sm:$0xff]
        %v8127 = vld [vmem:[%s6 + $0x50] sm:$0xf]
        %v8128 = vld [vmem:[%s6 + $0x54] sm:$0xff]
        %v8129 = vld [vmem:[%s6 + $0x5c] sm:$0xff]
        %v8130 = vld [vmem:[%s6 + $0x64] sm:$0xff]
        %v8131 = vld [vmem:[%s6 + $0x6c] sm:$0xf]
        %v8132 = vld [vmem:[%s6 + $0x70] sm:$0xff]
        %v8133 = vld [vmem:[%s6 + $0x78] sm:$0xff]
        %v8134 = vld [vmem:[%s6 + $0x80] sm:$0xff]
        %v8135 = vld [vmem:[%s6 + $0x88] sm:$0xf]
        %v8136 = vld [vmem:[%s6 + $0x8c] sm:$0xff]
        %v8137 = vld [vmem:[%s6 + $0x94] sm:$0xff]
        %v8138 = vld [vmem:[%s6 + $0x9c] sm:$0xff]
        %v8139 = vld [vmem:[%s6 + $0xa4] sm:$0xf]
        %v8140 = vld [vmem:[%s6 + $0xa8] sm:$0xff]
        %v8141 = vld [vmem:[%s6 + $0xb0] sm:$0xff]
        %v8142 = vld [vmem:[%s6 + $0xb8] sm:$0xff]
        %v8143 = vld [vmem:[%s6 + $0xc0] sm:$0xf]
        %v8144 = vld [vmem:[%s6 + $0xc4] sm:$0xff]
        %v8145 = vld [vmem:[%s6 + $0xcc] sm:$0xff]
        %v8146 = vld [vmem:[%s6 + $0xd4] sm:$0xff]
        %v8147 = vld [vmem:[%s6 + $0xdc] sm:$0xf]
        %v8148 = vld [vmem:[%s6 + $0xe0] sm:$0xff]
        %v8149 = vld [vmem:[%s6 + $0xe8] sm:$0xff]
        %v8150 = vld [vmem:[%s6 + $0xf0] sm:$0xff]
        %v8151 = vld [vmem:[%s6 + $0xf8] sm:$0xf]
        %v8152 = vld [vmem:[%s6 + $0xfc] sm:$0xff]
        %v8153 = vld [vmem:[%s6 + $0x104] sm:$0xff]
        %v8154 = vld [vmem:[%s6 + $0x10c] sm:$0xff]
        %v8155 = vld [vmem:[%s6 + $0x114] sm:$0xf]
        %v8156 = vld [vmem:[%s6 + $0x118] sm:$0xff]
        %v8157 = vld [vmem:[%s6 + $0x120] sm:$0xff]
        %v8158 = vld [vmem:[%s6 + $0x128] sm:$0xff]
        %v8159 = vld [vmem:[%s6 + $0x130] sm:$0xf]
        %v8160 = vld [vmem:[%s6 + $0x134] sm:$0xff]
        %v8161 = vld [vmem:[%s6 + $0x13c] sm:$0xff]
        %v8162 = vld [vmem:[%s6 + $0x144] sm:$0xff]
        %v8163 = vld [vmem:[%s6 + $0x14c] sm:$0xf]
        %v8164 = vld [vmem:[%s6 + $0x150] sm:$0xff]
        %v8165 = vld [vmem:[%s6 + $0x158] sm:$0xff]
        %v8166 = vld [vmem:[%s6 + $0x160] sm:$0xff]
        %v8167 = vld [vmem:[%s6 + $0x168] sm:$0xf]
        %v8168 = vld [vmem:[%s6 + $0x16c] sm:$0xff]
        %v8169 = vld [vmem:[%s6 + $0x174] sm:$0xff]
        %v8170 = vld [vmem:[%s6 + $0x17c] sm:$0xff]
        %v8171 = vld [vmem:[%s6 + $0x184] sm:$0xf]
        %v8172 = vld [vmem:[%s6 + $0x188] sm:$0xff]
        %v8173 = vld [vmem:[%s6 + $0x190] sm:$0xff]
        %v8174 = vld [vmem:[%s6 + $0x198] sm:$0xff]
        %v8175 = vld [vmem:[%s6 + $0x1a0] sm:$0xf]
        %v8176 = vld [vmem:[%s6 + $0x1a4] sm:$0xff]
        %v8177 = vld [vmem:[%s6 + $0x1ac] sm:$0xff]
        %v8178 = vld [vmem:[%s6 + $0x1b4] sm:$0xff]
        %v8179 = vld [vmem:[%s6 + $0x1bc] sm:$0xf]
        %v8180 = vld [vmem:[%s6 + $0x1c0] sm:$0xff]
        %v8181 = vld [vmem:[%s6 + $0x1c8] sm:$0xff]
        %v8182 = vld [vmem:[%s6 + $0x1d0] sm:$0xff]
        %v8183 = vld [vmem:[%s6 + $0x1d8] sm:$0xf]
        %v8184 = vld [vmem:[%s6 + $0x1dc] sm:$0xff]
        %v8185 = vld [vmem:[%s6 + $0x1e4] sm:$0xff]
        %v8186 = vld [vmem:[%s6 + $0x1ec] sm:$0xff]
        %v8187 = vld [vmem:[%s6 + $0x1f4] sm:$0xf]
        %v8188 = vld [vmem:[%s6 + $0x1f8] sm:$0xff]
        %v8189 = vld [vmem:[%s6 + $0x200] sm:$0xff]
        %v8190 = vld [vmem:[%s6 + $0x208] sm:$0xff]
        %v8191 = vld [vmem:[%s6 + $0x210] sm:$0xf]
        %v8192 = vld [vmem:[%s6 + $0x214] sm:$0xff]
        %v8193 = vld [vmem:[%s6 + $0x21c] sm:$0xff]
        %v8194 = vld [vmem:[%s6 + $0x224] sm:$0xff]
        %v8195 = vld [vmem:[%s6 + $0x22c] sm:$0xf]
        %v8196 = vld [vmem:[%s12] sm:$0x7f]
        %v8198 = vperm.slane %v8196, 0
        %v8199 = vperm.slane %v8196, 1
        %v8200 = vperm.slane %v8196, 2
        %v8201 = vperm.slane %v8196, 3
        %v8202 = vperm.slane %v8196, 4
        %v8203 = vperm.slane %v8196, 5
        %v8204 = vperm.slane %v8196, 6
        %v8292 = vunpack.c.l.b16 %v8116
        %v8293 = vunpack.c.h.b16 %v8116
        %v8294 = vunpack.c.l.b16 %v8117
        %v8295 = vunpack.c.h.b16 %v8117
        %v8296 = vunpack.c.l.b16 %v8118
        %v8297 = vunpack.c.h.b16 %v8118
        %v8298 = vunpack.c.l.b16 %v8119
        %v8299 = vunpack.c.l.b16 %v8120
        %v8300 = vunpack.c.h.b16 %v8120
        %v8301 = vunpack.c.l.b16 %v8121
        %v8302 = vunpack.c.h.b16 %v8121
        %v8303 = vunpack.c.l.b16 %v8122
        %v8304 = vunpack.c.h.b16 %v8122
        %v8305 = vunpack.c.l.b16 %v8123
        %v8306 = vunpack.c.l.b16 %v8124
        %v8307 = vunpack.c.h.b16 %v8124
        %v8308 = vunpack.c.l.b16 %v8125
        %v8309 = vunpack.c.h.b16 %v8125
        %v8310 = vunpack.c.l.b16 %v8126
        %v8311 = vunpack.c.h.b16 %v8126
        %v8312 = vunpack.c.l.b16 %v8127
        %v8313 = vunpack.c.l.b16 %v8128
        %v8314 = vunpack.c.h.b16 %v8128
        %v8315 = vunpack.c.l.b16 %v8129
        %v8316 = vunpack.c.h.b16 %v8129
        %v8317 = vunpack.c.l.b16 %v8130
        %v8318 = vunpack.c.h.b16 %v8130
        %v8319 = vunpack.c.l.b16 %v8131
        %v8320 = vunpack.c.l.b16 %v8132
        %v8321 = vunpack.c.h.b16 %v8132
        %v8322 = vunpack.c.l.b16 %v8133
        %v8323 = vunpack.c.h.b16 %v8133
        %v8324 = vunpack.c.l.b16 %v8134
        %v8325 = vunpack.c.h.b16 %v8134
        %v8326 = vunpack.c.l.b16 %v8135
        %v8327 = vunpack.c.l.b16 %v8136
        %v8328 = vunpack.c.h.b16 %v8136
        %v8329 = vunpack.c.l.b16 %v8137
        %v8330 = vunpack.c.h.b16 %v8137
        %v8331 = vunpack.c.l.b16 %v8138
        %v8332 = vunpack.c.h.b16 %v8138
        %v8333 = vunpack.c.l.b16 %v8139
        %v8334 = vunpack.c.l.b16 %v8140
        %v8335 = vunpack.c.h.b16 %v8140
        %v8336 = vunpack.c.l.b16 %v8141
        %v8337 = vunpack.c.h.b16 %v8141
        %v8338 = vunpack.c.l.b16 %v8142
        %v8339 = vunpack.c.h.b16 %v8142
        %v8340 = vunpack.c.l.b16 %v8143
        %v8341 = vunpack.c.l.b16 %v8144
        %v8342 = vunpack.c.h.b16 %v8144
        %v8343 = vunpack.c.l.b16 %v8145
        %v8344 = vunpack.c.h.b16 %v8145
        %v8345 = vunpack.c.l.b16 %v8146
        %v8346 = vunpack.c.h.b16 %v8146
        %v8347 = vunpack.c.l.b16 %v8147
        %v8348 = vunpack.c.l.b16 %v8148
        %v8349 = vunpack.c.h.b16 %v8148
        %v8350 = vunpack.c.l.b16 %v8149
        %v8351 = vunpack.c.h.b16 %v8149
        %v8352 = vunpack.c.l.b16 %v8150
        %v8353 = vunpack.c.h.b16 %v8150
        %v8354 = vunpack.c.l.b16 %v8151
        %v8355 = vunpack.c.l.b16 %v8152
        %v8356 = vunpack.c.h.b16 %v8152
        %v8357 = vunpack.c.l.b16 %v8153
        %v8358 = vunpack.c.h.b16 %v8153
        %v8359 = vunpack.c.l.b16 %v8154
        %v8360 = vunpack.c.h.b16 %v8154
        %v8361 = vunpack.c.l.b16 %v8155
        %v8362 = vunpack.c.l.b16 %v8156
        %v8363 = vunpack.c.h.b16 %v8156
        %v8364 = vunpack.c.l.b16 %v8157
        %v8365 = vunpack.c.h.b16 %v8157
        %v8366 = vunpack.c.l.b16 %v8158
        %v8367 = vunpack.c.h.b16 %v8158
        %v8368 = vunpack.c.l.b16 %v8159
        %v8369 = vunpack.c.l.b16 %v8160
        %v8370 = vunpack.c.h.b16 %v8160
        %v8371 = vunpack.c.l.b16 %v8161
        %v8372 = vunpack.c.h.b16 %v8161
        %v8373 = vunpack.c.l.b16 %v8162
        %v8374 = vunpack.c.h.b16 %v8162
        %v8375 = vunpack.c.l.b16 %v8163
        %v8376 = vunpack.c.l.b16 %v8164
        %v8377 = vunpack.c.h.b16 %v8164
        %v8378 = vunpack.c.l.b16 %v8165
        %v8379 = vunpack.c.h.b16 %v8165
        %v8380 = vunpack.c.l.b16 %v8166
        %v8381 = vunpack.c.h.b16 %v8166
        %v8382 = vunpack.c.l.b16 %v8167
        %v8383 = vunpack.c.l.b16 %v8168
        %v8384 = vunpack.c.h.b16 %v8168
        %v8385 = vunpack.c.l.b16 %v8169
        %v8386 = vunpack.c.h.b16 %v8169
        %v8387 = vunpack.c.l.b16 %v8170
        %v8388 = vunpack.c.h.b16 %v8170
        %v8389 = vunpack.c.l.b16 %v8171
        %v8390 = vunpack.c.l.b16 %v8172
        %v8391 = vunpack.c.h.b16 %v8172
        %v8392 = vunpack.c.l.b16 %v8173
        %v8393 = vunpack.c.h.b16 %v8173
        %v8394 = vunpack.c.l.b16 %v8174
        %v8395 = vunpack.c.h.b16 %v8174
        %v8396 = vunpack.c.l.b16 %v8175
        %v8397 = vunpack.c.l.b16 %v8176
        %v8398 = vunpack.c.h.b16 %v8176
        %v8399 = vunpack.c.l.b16 %v8177
        %v8400 = vunpack.c.h.b16 %v8177
        %v8401 = vunpack.c.l.b16 %v8178
        %v8402 = vunpack.c.h.b16 %v8178
        %v8403 = vunpack.c.l.b16 %v8179
        %v8404 = vunpack.c.l.b16 %v8180
        %v8405 = vunpack.c.h.b16 %v8180
        %v8406 = vunpack.c.l.b16 %v8181
        %v8407 = vunpack.c.h.b16 %v8181
        %v8408 = vunpack.c.l.b16 %v8182
        %v8409 = vunpack.c.h.b16 %v8182
        %v8410 = vunpack.c.l.b16 %v8183
        %v8411 = vunpack.c.l.b16 %v8184
        %v8412 = vunpack.c.h.b16 %v8184
        %v8413 = vunpack.c.l.b16 %v8185
        %v8414 = vunpack.c.h.b16 %v8185
        %v8415 = vunpack.c.l.b16 %v8186
        %v8416 = vunpack.c.h.b16 %v8186
        %v8417 = vunpack.c.l.b16 %v8187
        %v8418 = vunpack.c.l.b16 %v8188
        %v8419 = vunpack.c.h.b16 %v8188
        %v8420 = vunpack.c.l.b16 %v8189
        %v8421 = vunpack.c.h.b16 %v8189
        %v8422 = vunpack.c.l.b16 %v8190
        %v8423 = vunpack.c.h.b16 %v8190
        %v8424 = vunpack.c.l.b16 %v8191
        %v8425 = vunpack.c.l.b16 %v8192
        %v8426 = vunpack.c.h.b16 %v8192
        %v8427 = vunpack.c.l.b16 %v8193
        %v8428 = vunpack.c.h.b16 %v8193
        %v8429 = vunpack.c.l.b16 %v8194
        %v8430 = vunpack.c.h.b16 %v8194
        %v8431 = vunpack.c.l.b16 %v8195
        %v8432 = vpack.c.b16 %v8299, %v8292
        %v8433 = vpack.c.b16 %v8300, %v8293
        %v8434 = vpack.c.b16 %v8301, %v8294
        %v8435 = vpack.c.b16 %v8302, %v8295
        %v8436 = vpack.c.b16 %v8303, %v8296
        %v8437 = vpack.c.b16 %v8304, %v8297
        %v8438 = vpack.c.b16 %v8305, %v8298
        %v8439 = vpack.c.b16 %v8313, %v8306
        %v8440 = vpack.c.b16 %v8314, %v8307
        %v8441 = vpack.c.b16 %v8315, %v8308
        %v8442 = vpack.c.b16 %v8316, %v8309
        %v8443 = vpack.c.b16 %v8317, %v8310
        %v8444 = vpack.c.b16 %v8318, %v8311
        %v8445 = vpack.c.b16 %v8319, %v8312
        %v8446 = vpack.c.b16 %v8327, %v8320
        %v8447 = vpack.c.b16 %v8328, %v8321
        %v8448 = vpack.c.b16 %v8329, %v8322
        %v8449 = vpack.c.b16 %v8330, %v8323
        %v8450 = vpack.c.b16 %v8331, %v8324
        %v8451 = vpack.c.b16 %v8332, %v8325
        %v8452 = vpack.c.b16 %v8333, %v8326
        %v8453 = vpack.c.b16 %v8341, %v8334
        %v8454 = vpack.c.b16 %v8342, %v8335
        %v8455 = vpack.c.b16 %v8343, %v8336
        %v8456 = vpack.c.b16 %v8344, %v8337
        %v8457 = vpack.c.b16 %v8345, %v8338
        %v8458 = vpack.c.b16 %v8346, %v8339
        %v8459 = vpack.c.b16 %v8347, %v8340
        %v8460 = vpack.c.b16 %v8355, %v8348
        %v8461 = vpack.c.b16 %v8356, %v8349
        %v8462 = vpack.c.b16 %v8357, %v8350
        %v8463 = vpack.c.b16 %v8358, %v8351
        %v8464 = vpack.c.b16 %v8359, %v8352
        %v8465 = vpack.c.b16 %v8360, %v8353
        %v8466 = vpack.c.b16 %v8361, %v8354
        %v8467 = vpack.c.b16 %v8369, %v8362
        %v8468 = vpack.c.b16 %v8370, %v8363
        %v8469 = vpack.c.b16 %v8371, %v8364
        %v8470 = vpack.c.b16 %v8372, %v8365
        %v8471 = vpack.c.b16 %v8373, %v8366
        %v8472 = vpack.c.b16 %v8374, %v8367
        %v8473 = vpack.c.b16 %v8375, %v8368
        %v8474 = vpack.c.b16 %v8383, %v8376
        %v8475 = vpack.c.b16 %v8384, %v8377
        %v8476 = vpack.c.b16 %v8385, %v8378
        %v8477 = vpack.c.b16 %v8386, %v8379
        %v8478 = vpack.c.b16 %v8387, %v8380
        %v8479 = vpack.c.b16 %v8388, %v8381
        %v8480 = vpack.c.b16 %v8389, %v8382
        %v8481 = vpack.c.b16 %v8397, %v8390
        %v8482 = vpack.c.b16 %v8398, %v8391
        %v8483 = vpack.c.b16 %v8399, %v8392
        %v8484 = vpack.c.b16 %v8400, %v8393
        %v8485 = vpack.c.b16 %v8401, %v8394
        %v8486 = vpack.c.b16 %v8402, %v8395
        %v8487 = vpack.c.b16 %v8403, %v8396
        %v8488 = vpack.c.b16 %v8411, %v8404
        %v8489 = vpack.c.b16 %v8412, %v8405
        %v8490 = vpack.c.b16 %v8413, %v8406
        %v8491 = vpack.c.b16 %v8414, %v8407
        %v8492 = vpack.c.b16 %v8415, %v8408
        %v8493 = vpack.c.b16 %v8416, %v8409
        %v8494 = vpack.c.b16 %v8417, %v8410
        %v8495 = vpack.c.b16 %v8425, %v8418
        %v8496 = vpack.c.b16 %v8426, %v8419
        %v8497 = vpack.c.b16 %v8427, %v8420
        %v8498 = vpack.c.b16 %v8428, %v8421
        %v8499 = vpack.c.b16 %v8429, %v8422
        %v8500 = vpack.c.b16 %v8430, %v8423
        %v8501 = vpack.c.b16 %v8431, %v8424
        %vm8572 = vcmask 261120
        %v8574 = vsel %vm8572, %v8115, 0
        %8576 = vmatpush.bf16.msra.mxu0 %v8481
        %8577 = vmatpush.bf16.msra.mxu0 %v8474
        %8578 = vmatpush.bf16.msra.mxu0 %v8467
        %8579 = vmatpush.bf16.msra.mxu0 %v8460
        %8580 = vmatpush.bf16.msra.mxu0 %v8453
        %8581 = vmatpush.bf16.msra.mxu0 %v8446
        %8582 = vmatpush.bf16.msra.mxu0 %v8439
        %8583 = vmatpush.bf16.msra.mxu0 %v8432
        %8584 = vmatmul.bf16.gmra.mxu0 %v8114
        %v8585 = vpop.f32.mrf.mxu0
        %v8586 = vadd.f32 %v8198, %v8585
        %v8587 = vpop.f32.mrf.mxu0
        %v8588 = vadd.f32 %v8198, %v8587
        %8589 = vdwg.mxu0
        %8590 = vmatpush.bf16.msra.mxu0 0
        %8591 = vmatpush.bf16.msra.mxu0 0
        %8592 = vmatpush.bf16.msra.mxu0 0
        %8593 = vmatpush.bf16.msra.mxu0 0
        %8594 = vmatpush.bf16.msra.mxu0 0
        %8595 = vmatpush.bf16.msra.mxu0 0
        %8596 = vmatpush.bf16.msra.mxu0 %v8495
        %8597 = vmatpush.bf16.msra.mxu0 %v8488
        %8598 = vmatmul.bf16.gmra.mxu0 %v8574
        %v8599 = vpop.f32.mrf.mxu0
        %v8600 = vadd.f32 %v8586, %v8599
        %v8601 = vpop.f32.mrf.mxu0
        %v8602 = vadd.f32 %v8588, %v8601
        %8603 = vdwg.mxu0
        %8604 = vmatpush.bf16.msra.mxu0 %v8482
        %8605 = vmatpush.bf16.msra.mxu0 %v8475
        %8606 = vmatpush.bf16.msra.mxu0 %v8468
        %8607 = vmatpush.bf16.msra.mxu0 %v8461
        %8608 = vmatpush.bf16.msra.mxu0 %v8454
        %8609 = vmatpush.bf16.msra.mxu0 %v8447
        %8610 = vmatpush.bf16.msra.mxu0 %v8440
        %8611 = vmatpush.bf16.msra.mxu0 %v8433
        %8612 = vmatmul.bf16.gmra.mxu0 %v8114
        %v8613 = vpop.f32.mrf.mxu0
        %v8614 = vadd.f32 %v8199, %v8613
        %v8615 = vpop.f32.mrf.mxu0
        %v8616 = vadd.f32 %v8199, %v8615
        %8617 = vdwg.mxu0
        %8618 = vmatpush.bf16.msra.mxu0 0
        %8619 = vmatpush.bf16.msra.mxu0 0
        %8620 = vmatpush.bf16.msra.mxu0 0
        %8621 = vmatpush.bf16.msra.mxu0 0
        %8622 = vmatpush.bf16.msra.mxu0 0
        %8623 = vmatpush.bf16.msra.mxu0 0
        %8624 = vmatpush.bf16.msra.mxu0 %v8496
        %8625 = vmatpush.bf16.msra.mxu0 %v8489
        %8626 = vmatmul.bf16.gmra.mxu0 %v8574
        %v8627 = vpop.f32.mrf.mxu0
        %v8628 = vadd.f32 %v8614, %v8627
        %v8629 = vpop.f32.mrf.mxu0
        %v8630 = vadd.f32 %v8616, %v8629
        %8631 = vdwg.mxu0
        %8632 = vmatpush.bf16.msra.mxu0 %v8483
        %8633 = vmatpush.bf16.msra.mxu0 %v8476
        %8634 = vmatpush.bf16.msra.mxu0 %v8469
        %8635 = vmatpush.bf16.msra.mxu0 %v8462
        %8636 = vmatpush.bf16.msra.mxu0 %v8455
        %8637 = vmatpush.bf16.msra.mxu0 %v8448
        %8638 = vmatpush.bf16.msra.mxu0 %v8441
        %8639 = vmatpush.bf16.msra.mxu0 %v8434
        %8640 = vmatmul.bf16.gmra.mxu0 %v8114
        %v8641 = vpop.f32.mrf.mxu0
        %v8642 = vadd.f32 %v8200, %v8641
        %v8643 = vpop.f32.mrf.mxu0
        %v8644 = vadd.f32 %v8200, %v8643
        %8645 = vdwg.mxu0
        %8646 = vmatpush.bf16.msra.mxu0 0
        %8647 = vmatpush.bf16.msra.mxu0 0
        %8648 = vmatpush.bf16.msra.mxu0 0
        %8649 = vmatpush.bf16.msra.mxu0 0
        %8650 = vmatpush.bf16.msra.mxu0 0
        %8651 = vmatpush.bf16.msra.mxu0 0
        %8652 = vmatpush.bf16.msra.mxu0 %v8497
        %8653 = vmatpush.bf16.msra.mxu0 %v8490
        %8654 = vmatmul.bf16.gmra.mxu0 %v8574
        %v8655 = vpop.f32.mrf.mxu0
        %v8656 = vadd.f32 %v8642, %v8655
        %v8657 = vpop.f32.mrf.mxu0
        %v8658 = vadd.f32 %v8644, %v8657
        %8659 = vdwg.mxu0
        %8660 = vmatpush.bf16.msra.mxu0 %v8484
        %8661 = vmatpush.bf16.msra.mxu0 %v8477
        %8662 = vmatpush.bf16.msra.mxu0 %v8470
        %8663 = vmatpush.bf16.msra.mxu0 %v8463
        %8664 = vmatpush.bf16.msra.mxu0 %v8456
        %8665 = vmatpush.bf16.msra.mxu0 %v8449
        %8666 = vmatpush.bf16.msra.mxu0 %v8442
        %8667 = vmatpush.bf16.msra.mxu0 %v8435
        %8668 = vmatmul.bf16.gmra.mxu0 %v8114
        %v8669 = vpop.f32.mrf.mxu0
        %v8670 = vadd.f32 %v8201, %v8669
        %v8671 = vpop.f32.mrf.mxu0
        %v8672 = vadd.f32 %v8201, %v8671
        %8673 = vdwg.mxu0
        %8674 = vmatpush.bf16.msra.mxu0 0
        %8675 = vmatpush.bf16.msra.mxu0 0
        %8676 = vmatpush.bf16.msra.mxu0 0
        %8677 = vmatpush.bf16.msra.mxu0 0
        %8678 = vmatpush.bf16.msra.mxu0 0
        %8679 = vmatpush.bf16.msra.mxu0 0
        %8680 = vmatpush.bf16.msra.mxu0 %v8498
        %8681 = vmatpush.bf16.msra.mxu0 %v8491
        %8682 = vmatmul.bf16.gmra.mxu0 %v8574
        %v8683 = vpop.f32.mrf.mxu0
        %v8684 = vadd.f32 %v8670, %v8683
        %v8685 = vpop.f32.mrf.mxu0
        %v8686 = vadd.f32 %v8672, %v8685
        %8687 = vdwg.mxu0
        %8688 = vmatpush.bf16.msra.mxu0 %v8485
        %8689 = vmatpush.bf16.msra.mxu0 %v8478
        %8690 = vmatpush.bf16.msra.mxu0 %v8471
        %8691 = vmatpush.bf16.msra.mxu0 %v8464
        %8692 = vmatpush.bf16.msra.mxu0 %v8457
        %8693 = vmatpush.bf16.msra.mxu0 %v8450
        %8694 = vmatpush.bf16.msra.mxu0 %v8443
        %8695 = vmatpush.bf16.msra.mxu0 %v8436
        %8696 = vmatmul.bf16.gmra.mxu0 %v8114
        %v8697 = vpop.f32.mrf.mxu0
        %v8698 = vadd.f32 %v8202, %v8697
        %v8699 = vpop.f32.mrf.mxu0
        %v8700 = vadd.f32 %v8202, %v8699
        %8701 = vdwg.mxu0
        %8702 = vmatpush.bf16.msra.mxu0 0
        %8703 = vmatpush.bf16.msra.mxu0 0
        %8704 = vmatpush.bf16.msra.mxu0 0
        %8705 = vmatpush.bf16.msra.mxu0 0
        %8706 = vmatpush.bf16.msra.mxu0 0
        %8707 = vmatpush.bf16.msra.mxu0 0
        %8708 = vmatpush.bf16.msra.mxu0 %v8499
        %8709 = vmatpush.bf16.msra.mxu0 %v8492
        %8710 = vmatmul.bf16.gmra.mxu0 %v8574
        %v8711 = vpop.f32.mrf.mxu0
        %v8712 = vadd.f32 %v8698, %v8711
        %v8713 = vpop.f32.mrf.mxu0
        %v8714 = vadd.f32 %v8700, %v8713
        %8715 = vdwg.mxu0
        %8716 = vmatpush.bf16.msra.mxu0 %v8486
        %8717 = vmatpush.bf16.msra.mxu0 %v8479
        %8718 = vmatpush.bf16.msra.mxu0 %v8472
        %8719 = vmatpush.bf16.msra.mxu0 %v8465
        %8720 = vmatpush.bf16.msra.mxu0 %v8458
        %8721 = vmatpush.bf16.msra.mxu0 %v8451
        %8722 = vmatpush.bf16.msra.mxu0 %v8444
        %8723 = vmatpush.bf16.msra.mxu0 %v8437
        %8724 = vmatmul.bf16.gmra.mxu0 %v8114
        %v8725 = vpop.f32.mrf.mxu0
        %v8726 = vadd.f32 %v8203, %v8725
        %v8727 = vpop.f32.mrf.mxu0
        %v8728 = vadd.f32 %v8203, %v8727
        %8729 = vdwg.mxu0
        %8730 = vmatpush.bf16.msra.mxu0 0
        %8731 = vmatpush.bf16.msra.mxu0 0
        %8732 = vmatpush.bf16.msra.mxu0 0
        %8733 = vmatpush.bf16.msra.mxu0 0
        %8734 = vmatpush.bf16.msra.mxu0 0
        %8735 = vmatpush.bf16.msra.mxu0 0
        %8736 = vmatpush.bf16.msra.mxu0 %v8500
        %8737 = vmatpush.bf16.msra.mxu0 %v8493
        %8738 = vmatmul.bf16.gmra.mxu0 %v8574
        %v8739 = vpop.f32.mrf.mxu0
        %v8740 = vadd.f32 %v8726, %v8739
        %v8741 = vpop.f32.mrf.mxu0
        %v8742 = vadd.f32 %v8728, %v8741
        %8743 = vdwg.mxu0
        %8744 = vmatpush.bf16.msra.mxu0 %v8487
        %8745 = vmatpush.bf16.msra.mxu0 %v8480
        %8746 = vmatpush.bf16.msra.mxu0 %v8473
        %8747 = vmatpush.bf16.msra.mxu0 %v8466
        %8748 = vmatpush.bf16.msra.mxu0 %v8459
        %8749 = vmatpush.bf16.msra.mxu0 %v8452
        %8750 = vmatpush.bf16.msra.mxu0 %v8445
        %8751 = vmatpush.bf16.msra.mxu0 %v8438
        %8752 = vmatmul.bf16.gmra.mxu0 %v8114
        %v8753 = vpop.f32.mrf.mxu0
        %v8754 = vadd.f32 %v8204, %v8753
        %v8755 = vpop.f32.mrf.mxu0
        %v8756 = vadd.f32 %v8204, %v8755
        %8757 = vdwg.mxu0
        %8758 = vmatpush.bf16.msra.mxu0 0
        %8759 = vmatpush.bf16.msra.mxu0 0
        %8760 = vmatpush.bf16.msra.mxu0 0
        %8761 = vmatpush.bf16.msra.mxu0 0
        %8762 = vmatpush.bf16.msra.mxu0 0
        %8763 = vmatpush.bf16.msra.mxu0 0
        %8764 = vmatpush.bf16.msra.mxu0 %v8501
        %8765 = vmatpush.bf16.msra.mxu0 %v8494
        %8766 = vmatmul.bf16.gmra.mxu0 %v8574
        %v8767 = vpop.f32.mrf.mxu0
        %v8768 = vadd.f32 %v8754, %v8767
        %v8769 = vpop.f32.mrf.mxu0
        %v8770 = vadd.f32 %v8756, %v8769
        %8771 = vdwg.mxu0
        %v8772 = vmul.f32 %v8600, 0.5
        %v8773 = vmul.f32 %v8628, 0.5
        %v8774 = vmul.f32 %v8656, 0.5
        %v8775 = vmul.f32 %v8684, 0.5
        %v8776 = vmul.f32 %v8712, 0.5
        %v8777 = vmul.f32 %v8740, 0.5
        %v8778 = vmul.f32 %v8768, 0.5
        %v8779 = vmul.f32 %v8602, 0.5
        %v8780 = vmul.f32 %v8630, 0.5
        %v8781 = vmul.f32 %v8658, 0.5
        %v8782 = vmul.f32 %v8686, 0.5
        %v8783 = vmul.f32 %v8714, 0.5
        %v8784 = vmul.f32 %v8742, 0.5
        %v8785 = vmul.f32 %v8770, 0.5
        %v8786 = vtanh.pop %v8772
        %v8787 = vtanh.pop %v8773
        %v8788 = vtanh.pop %v8774
        %v8789 = vtanh.pop %v8775
        %v8790 = vtanh.pop %v8776
        %v8791 = vtanh.pop %v8777
        %v8792 = vtanh.pop %v8778
        %v8793 = vtanh.pop %v8779
        %v8794 = vtanh.pop %v8780
        %v8795 = vtanh.pop %v8781
        %v8796 = vtanh.pop %v8782
        %v8797 = vtanh.pop %v8783
        %v8798 = vtanh.pop %v8784
        %v8799 = vtanh.pop %v8785
        %v8800 = vmul.f32 %v8786, 0.5
        %v8801 = vmul.f32 %v8787, 0.5
        %v8802 = vmul.f32 %v8788, 0.5
        %v8803 = vmul.f32 %v8789, 0.5
        %v8804 = vmul.f32 %v8790, 0.5
        %v8805 = vmul.f32 %v8791, 0.5
        %v8806 = vmul.f32 %v8792, 0.5
        %v8807 = vmul.f32 %v8793, 0.5
        %v8808 = vmul.f32 %v8794, 0.5
        %v8809 = vmul.f32 %v8795, 0.5
        %v8810 = vmul.f32 %v8796, 0.5
        %v8811 = vmul.f32 %v8797, 0.5
        %v8812 = vmul.f32 %v8798, 0.5
        %v8813 = vmul.f32 %v8799, 0.5
        %v8814 = vadd.f32 %v8800, 0.5
        %v8815 = vadd.f32 %v8801, 0.5
        %v8816 = vadd.f32 %v8802, 0.5
        %v8817 = vadd.f32 %v8803, 0.5
        %v8818 = vadd.f32 %v8804, 0.5
        %v8819 = vadd.f32 %v8805, 0.5
        %v8820 = vadd.f32 %v8806, 0.5
        %v8821 = vadd.f32 %v8807, 0.5
        %v8822 = vadd.f32 %v8808, 0.5
        %v8823 = vadd.f32 %v8809, 0.5
        %v8824 = vadd.f32 %v8810, 0.5
        %v8825 = vadd.f32 %v8811, 0.5
        %v8826 = vadd.f32 %v8812, 0.5
        %v8827 = vadd.f32 %v8813, 0.5
        %8828 = vst [vmem:[%s703] sm:$0xff] %v8814
        %8829 = vst [vmem:[%s703 + $0x8] sm:$0xff] %v8815
        %8830 = vst [vmem:[%s703 + $0x10] sm:$0xff] %v8816
        %8831 = vst [vmem:[%s703 + $0x18] sm:$0xff] %v8817
        %8832 = vst [vmem:[%s703 + $0x20] sm:$0xff] %v8818
        %8833 = vst [vmem:[%s703 + $0x28] sm:$0xff] %v8819
        %vm8834 = vcmask 130048
        %8835 = vst.msk [vmem:[%s703 + $0x30] sm:$0xff] %vm8834, %v8820
        %8836 = vst [vmem:[%s703 + $0x38] sm:$0xff] %v8821
        %8837 = vst [vmem:[%s703 + $0x40] sm:$0xff] %v8822
        %8838 = vst [vmem:[%s703 + $0x48] sm:$0xff] %v8823
        %8839 = vst [vmem:[%s703 + $0x50] sm:$0xff] %v8824
        %8840 = vst [vmem:[%s703 + $0x58] sm:$0xff] %v8825
        %8841 = vst [vmem:[%s703 + $0x60] sm:$0xff] %v8826
        %8842 = vst.msk [vmem:[%s703 + $0x68] sm:$0xff] %vm8834, %v8827
        %s8843 = smul.u32 2, %s26
        %p8844 = scmp.lt.s32.totalorder %s8843, 3
        %s8845 = scalar_select %p8844, %s8843, 3
        %s8846 = smul.addr %s8845, 7
        %s8847 = smul.addr %s8846, 8
        %s8848 = scalar_lea.vmem %s13, %s8847
        %s8849 = smul.u32 2, %s26
        %p8850 = scmp.lt.s32.totalorder %s8849, 3
        %s8851 = scalar_select %p8850, %s8849, 3
        %s8852 = smul.addr %s8851, 8
        %s8853 = scalar_lea.vmem %s14, %s8852
        // Predicated region
        $region111: #{_lambda_.1} parent=105 // pred_check
          %p8854 = pneg %p322
        $region112: #{_lambda_.1} parent=105 // pred_check_branch
          %8856 = sbr.rel (%p8854) target = $region114
        $region113: #{_lambda_.1} parent=105 // pred_region
          %s8857 = smul.u32 2, %s26
        $region114: #{_lambda_.1} parent=105 // pred_fallthru
          _
        // Predicated region
        $region115: #{_lambda_.1} parent=105 // pred_check
          %p8858 = pneg %p348
        $region116: #{_lambda_.1} parent=105 // pred_check_branch
          %8860 = sbr.rel (%p8858) target = $region118
        $region117: #{_lambda_.1} parent=105 // pred_region
          %s8861 = smul.u32 2, %s26
        $region118: #{_lambda_.1} parent=105 // pred_fallthru
          _
      $region106: #{_lambda_.1} parent=5 // pred_fallthru
        _
      %p8862 = scmp.le.s32.totalorder 2, %s21
      // Predicated region
      $region119: #{_lambda_.1} parent=5 // pred_check
        %p8863 = pneg %p8862
      $region120: #{_lambda_.1} parent=5 // pred_check_branch
        %8865 = sbr.rel (%p8863) target = $region122
      $region121: #{_lambda_.1} parent=5 // pred_region
        %s8866 = ssub.s32 %s21, 2
        // Predicated region
        $region123: #{_lambda_.1} parent=121 // pred_check
          %p8867 = pneg %p328
        $region124: #{_lambda_.1} parent=121 // pred_check_branch
          %8869 = sbr.rel (%p8867) target = $region126
        $region125: #{_lambda_.1} parent=121 // pred_region
          %s8870 = smul.u32 2, %s27
          %p8871 = scmp.lt.s32.totalorder %s8870, 3
          %s8872 = scalar_select %p8871, %s8870, 3
          %s8873 = smul.addr %s8872, 7
          %s8874 = smul.addr %s8873, 8
          %s8875 = scalar_lea.vmem %s13, %s8874
        $region126: #{_lambda_.1} parent=121 // pred_fallthru
          _
        // Predicated region
        $region127: #{_lambda_.1} parent=121 // pred_check
          %p8876 = pneg %p354
        $region128: #{_lambda_.1} parent=121 // pred_check_branch
          %8878 = sbr.rel (%p8876) target = $region130
        $region129: #{_lambda_.1} parent=121 // pred_region
          %s8879 = smul.u32 2, %s27
          %p8880 = scmp.lt.s32.totalorder %s8879, 3
          %s8881 = scalar_select %p8880, %s8879, 3
          %s8882 = smul.addr %s8881, 8
          %s8883 = scalar_lea.vmem %s14, %s8882
        $region130: #{_lambda_.1} parent=121 // pred_fallthru
          _
      $region122: #{_lambda_.1} parent=5 // pred_fallthru
        _
    $region6: #{_lambda_.1} parent=1 // loop_footer
      %s25 = sadd.s32 1, %s21
    $region7: #{_lambda_.1} parent=1 // loop_footer_branch
      %20 = sbr.rel target = $region3
    $region8: #{_lambda_.1} parent=1 // loop_exit
      _

</llo_original>
